<compile_context>
chip_gen: v6e
topology: v6e:2x2x1
jax: 0.10.0
libtpu: 0.0.40
codegen_flags: <defaults>
</compile_context>

<pallas_src>
import functools

import jax
import jax.numpy as jnp
import numpy as np
from jax.experimental import pallas as pl
from jax.experimental.pallas import tpu as pltpu


# --------------------------------- kernel -----------------------------------

def _decoder_kernel(x_ref, S_ref, mask_ref,
                    w1_ref, s1_ref, b1_ref,
                    w2_ref, s2_ref, b2_ref,
                    w3_ref, s3_ref, b3_ref,
                    w4_ref, s4_ref, b4_ref,
                    o_ref, *,
                    H1, Wp1, base1, H2, Wp2, base2, FL2):
    """Whole decoder for one batch element, fully VMEM-resident.

    Layout: an activation is (C, flat) where flat indexes its zero-padded
    (H+2, W+2) image row-major and interior pixel (i, j) lives at
    base + i*Wp + j.  A 3x3 'same' conv is then 9 contiguous lane-shifted
    slices of length H*Wp (im2col on the sublane axis) and one MXU matmul.
    The 2 "garbage" lanes per row are masked to zero so they double as the
    next layer's left/right zero padding.
    """

    def conv3x3(x_flat, w_ref, s_ref, b_ref, H, Wp, base, leaky):
        L = H * Wp
        taps = []
        for ky in range(3):
            for kx in range(3):
                start = base - Wp - 1 + ky * Wp + kx   # static offsets
                taps.append(x_flat[:, start:start + L])
        patches = jnp.concatenate(taps, axis=0)               # (9*Cin, L) bf16
        y = jnp.dot(w_ref[...], patches,                       # (Cout, L) f32
                    preferred_element_type=jnp.float32)
        y = y * s_ref[...] + b_ref[...]       # folded conv-bias / eval-mode BN
        if leaky:
            y = jnp.maximum(y, 0.01 * y)                       # nn.LeakyReLU
        return y

    L2 = H2 * Wp2

    def repad(y):
        # Zero the 2 garbage columns per row (next layer's pad columns) and
        # re-insert the zero borders at lane offset base2.
        ym = (y * mask_ref[...]).astype(jnp.bfloat16)
        c = ym.shape[0]
        left = jnp.zeros((c, base2), jnp.bfloat16)
        right = jnp.zeros((c, FL2 - base2 - L2), jnp.bfloat16)
        return jnp.concatenate([left, ym, right], axis=1)      # (C, FL2) bf16

    # --- ConvTranspose2d(in,out) + Dropout(eval: identity) + LeakyReLU -------
    x1 = x_ref[...]                                            # (Cin, FL1) bf16
    y1 = conv3x3(x1, w1_ref, s1_ref, b1_ref, H1, Wp1, base1, leaky=True)

    # --- Upsample(scale_factor=2, nearest) + zero-pad + placement ------------
    # S is a constant 0/1 selection matrix -> a single small MXU matmul.
    x2 = jnp.dot(y1.astype(jnp.bfloat16), S_ref[...],
                 preferred_element_type=jnp.float32).astype(jnp.bfloat16)

    # --- ConvTranspose2d(out,64) + BatchNorm2d(64) + LeakyReLU ---------------
    y2 = conv3x3(x2, w2_ref, s2_ref, b2_ref, H2, Wp2, base2, leaky=True)
    x3 = repad(y2)

    # --- ConvTranspose2d(64,32) + BatchNorm2d(32)  (no activation) -----------
    y3 = conv3x3(x3, w3_ref, s3_ref, b3_ref, H2, Wp2, base2, leaky=False)
    x4 = repad(y3)

    # --- ConvTranspose2d(32, final_out) --------------------------------------
    y4 = conv3x3(x4, w4_ref, s4_ref, b4_ref, H2, Wp2, base2, leaky=False)
    o_ref[...] = y4.astype(o_ref.dtype)                        # (Cf, H2*Wp2)


# ----------------------------- host-side helpers -----------------------------

def _convT_to_imcol(wt):
    """ConvTranspose2d weight (Cin, Cout, 3, 3) -> im2col weight (Cout, 9*Cin).

    ConvT(k=3, s=1, p=1) == 'same' correlation with the spatially flipped
    kernel and in/out channels swapped.  Row ordering matches the kernel's
    patch concatenation: column = (ky*3 + kx)*Cin + cin.
    """
    w_hwio = jnp.transpose(wt[:, :, ::-1, ::-1], (2, 3, 0, 1))      # (3,3,Ci,Co)
    cout = w_hwio.shape[-1]
    return jnp.transpose(w_hwio, (3, 0, 1, 2)).reshape(cout, -1)    # (Co, 9*Ci)


def _fold_bn(conv_bias, gamma, beta, mean, var, eps=1e-5):
    s = gamma / jnp.sqrt(var + eps)
    b = (conv_bias - mean) * s + beta
    return s, b


def _upsample_matrix(H1, W1, Wp1, H2, W2, Wp2, base2, FL2):
    """0/1 matrix: layer-1 output flat (H1*Wp1) -> padded upsampled buffer (FL2)."""
    i2 = np.arange(H2)[:, None]
    j2 = np.arange(W2)[None, :]
    src = (i2 // 2) * Wp1 + (j2 // 2)             # nearest-neighbour source
    dst = base2 + i2 * Wp2 + j2                   # interior position in FL2
    S = np.zeros((H1 * Wp1, FL2), np.float32)
    S[src.ravel(), dst.ravel()] = 1.0
    return S


def _column_mask(H2, W2, Wp2):
    cols = np.arange(H2 * Wp2) % Wp2
    return (cols < W2).astype(np.float32).reshape(1, -1)


# ------------------------------- parameters ----------------------------------

def init_decoder_raw_params(key, in_channel, out_channel, final_out):
    """Raw parameters in PyTorch layout (for the reference and the kernel)."""
    ks = jax.random.split(key, 16)

    def wT(k, cin, cout):
        return jax.random.normal(k, (cin, cout, 3, 3), jnp.float32) * 0.1

    def bias(k, c):
        return jax.random.normal(k, (c,), jnp.float32) * 0.05

    raw = {
        "w1": wT(ks[0], in_channel, out_channel), "b1": bias(ks[1], out_channel),
        "w2": wT(ks[2], out_channel, 64), "b2": bias(ks[3], 64),
        "g2": 1.0 + 0.1 * jax.random.normal(ks[4], (64,), jnp.float32),
        "be2": 0.05 * jax.random.normal(ks[5], (64,), jnp.float32),
        "m2": 0.05 * jax.random.normal(ks[6], (64,), jnp.float32),
        "v2": 0.5 + jnp.abs(jax.random.normal(ks[7], (64,), jnp.float32)) * 0.1,
        "w3": wT(ks[8], 64, 32), "b3": bias(ks[9], 32),
        "g3": 1.0 + 0.1 * jax.random.normal(ks[10], (32,), jnp.float32),
        "be3": 0.05 * jax.random.normal(ks[11], (32,), jnp.float32),
        "m3": 0.05 * jax.random.normal(ks[12], (32,), jnp.float32),
        "v3": 0.5 + jnp.abs(jax.random.normal(ks[13], (32,), jnp.float32)) * 0.1,
        "w4": wT(ks[14], 32, final_out), "b4": bias(ks[15], final_out),
    }
    return raw


def prepare_kernel_params(raw):
    """Fold biases / eval-mode BN and convert weights to im2col bf16 form."""
    def col(v):
        return v.reshape(-1, 1).astype(jnp.float32)

    p = {}
    p["w1"] = _convT_to_imcol(raw["w1"]).astype(jnp.bfloat16)
    p["s1"] = col(jnp.ones_like(raw["b1"]))
    p["b1"] = col(raw["b1"])

    s2, b2 = _fold_bn(raw["b2"], raw["g2"], raw["be2"], raw["m2"], raw["v2"])
    p["w2"] = _convT_to_imcol(raw["w2"]).astype(jnp.bfloat16)
    p["s2"], p["b2"] = col(s2), col(b2)

    s3, b3 = _fold_bn(raw["b3"], raw["g3"], raw["be3"], raw["m3"], raw["v3"])
    p["w3"] = _convT_to_imcol(raw["w3"]).astype(jnp.bfloat16)
    p["s3"], p["b3"] = col(s3), col(b3)

    p["w4"] = _convT_to_imcol(raw["w4"]).astype(jnp.bfloat16)
    p["s4"] = col(jnp.ones_like(raw["b4"]))
    p["b4"] = col(raw["b4"])
    return p


# ------------------------------- forward pass ---------------------------------

@jax.jit
def decoder_forward(x_nchw, params):
    N, Cin, H, W = x_nchw.shape
    H2, W2 = 2 * H, 2 * W
    Wp1, Wp2 = W + 2, W2 + 2
    L1, L2 = H * Wp1, H2 * Wp2
    base1 = Wp1 + 1
    base2 = ((Wp2 + 1 + 127) // 128) * 128   # lane-aligned interior start
    FL1 = base1 + L1 + Wp1 + 2               # flat length incl. pads + slack
    FL2 = base2 + L2 + Wp2 + 2
    Cf = params["w4"].shape[0]

    # Trace-time constants (baked into the program).
    S = jnp.asarray(_upsample_matrix(H, W, Wp1, H2, W2, Wp2, base2, FL2),
                    jnp.bfloat16)
    colmask = jnp.asarray(_column_mask(H2, W2, Wp2), jnp.float32)

    # Zero-padded, flattened layer-1 input (padded image starts at flat 0,
    # interior pixel (i, j) at base1 + i*Wp1 + j).  Tiny XLA op.
    xp = jnp.pad(x_nchw.astype(jnp.float32), ((0, 0), (0, 0), (1, 1), (1, 1)))
    xp = xp.reshape(N, Cin, (H + 2) * Wp1)
    xp = jnp.pad(xp, ((0, 0), (0, 0), (0, FL1 - (H + 2) * Wp1)))
    xp = xp.astype(jnp.bfloat16)

    def _const(arr):
        # Constant block index => DMA'd once, stays resident across grid steps.
        return pl.BlockSpec(tuple(arr.shape), lambda n: (0, 0))

    kernel = functools.partial(
        _decoder_kernel, H1=H, Wp1=Wp1, base1=base1,
        H2=H2, Wp2=Wp2, base2=base2, FL2=FL2)

    out_flat = pl.pallas_call(
        kernel,
        out_shape=jax.ShapeDtypeStruct((N, Cf, L2), jnp.float32),
        grid_spec=pltpu.PrefetchScalarGridSpec(
            num_scalar_prefetch=0,
            grid=(N,),
            in_specs=[
                pl.BlockSpec((pl.Squeezed(), Cin, FL1), lambda n: (n, 0, 0)),
                _const(S),
                _const(colmask),
                _const(params["w1"]), _const(params["s1"]), _const(params["b1"]),
                _const(params["w2"]), _const(params["s2"]), _const(params["b2"]),
                _const(params["w3"]), _const(params["s3"]), _const(params["b3"]),
                _const(params["w4"]), _const(params["s4"]), _const(params["b4"]),
            ],
            out_specs=pl.BlockSpec((pl.Squeezed(), Cf, L2), lambda n: (n, 0, 0)),
        ),
        compiler_params=pltpu.CompilerParams(
            dimension_semantics=("parallel",),
            vmem_limit_bytes=32 * 1024 * 1024),
    )(xp, S, colmask,
      params["w1"], params["s1"], params["b1"],
      params["w2"], params["s2"], params["b2"],
      params["w3"], params["s3"], params["b3"],
      params["w4"], params["s4"], params["b4"])

    # Drop the 2 pad columns per row: (N, Cf, H2*Wp2) -> (N, Cf, H2, W2), NCHW.
    return out_flat.reshape(N, Cf, H2, Wp2)[:, :, :, :W2]


# ----------------------- pure-JAX reference (f32, independent) ----------------

def _convT3x3_ref(x, w, b):
    """ConvTranspose2d(k=3, s=1, p=1) straight from its definition."""
    N, Ci, H, W = x.shape
    Co = w.shape[1]
    xp = jnp.pad(x, ((0, 0), (0, 0), (1, 1), (1, 1)))
    y = jnp.zeros((N, Co, H, W), jnp.float32)
    for ky in range(3):
        for kx in range(3):
            patch = xp[:, :, 2 - ky:2 - ky + H, 2 - kx:2 - kx + W]
            y = y + jnp.einsum('ncij,co->noij', patch, w[:, :, ky, kx],
                               precision=jax.lax.Precision.HIGHEST)
    return y + b[None, :, None, None]


def _bn_ref(x, g, be, m, v, eps=1e-5):
    inv = g / jnp.sqrt(v + eps)
    return (x - m[None, :, None, None]) * inv[None, :, None, None] \
        + be[None, :, None, None]


def decoder_reference(x, raw):
    y = _convT3x3_ref(x, raw["w1"], raw["b1"])
    y = jnp.where(y > 0, y, 0.01 * y)                       # Dropout eval = id
    y = jnp.repeat(jnp.repeat(y, 2, axis=2), 2, axis=3)     # nearest x2
    y = _convT3x3_ref(y, raw["w2"], raw["b2"])
    y = _bn_ref(y, raw["g2"], raw["be2"], raw["m2"], raw["v2"])
    y = jnp.where(y > 0, y, 0.01 * y)
    y = _convT3x3_ref(y, raw["w3"], raw["b3"])
    y = _bn_ref(y, raw["g3"], raw["be3"], raw["m3"], raw["v3"])
    y = _convT3x3_ref(y, raw["w4"], raw["b4"])
    return y


# ----------------------------------- main --------------------------------------

if __name__ == "__main__":
    in_channel, out_channel, final_out = 4, 8, 3
    N, H, W = 2, 16, 16

    key = jax.random.PRNGKey(0)
    k_x, k_p = jax.random.split(key)
    x = jax.random.normal(k_x, (N, in_channel, H, W), jnp.float32)

    raw = init_decoder_raw_params(k_p, in_channel, out_channel, final_out)
    params = prepare_kernel_params(raw)

    out = decoder_forward(x, params)
    out = jax.block_until_ready(out)

    expected_shape = (N, final_out, 2 * H, 2 * W)
    assert out.shape == expected_shape, (out.shape, expected_shape)
    assert bool(jnp.all(jnp.isfinite(out)))

    # Validate against an independent f32 reference (kernel uses bf16 MXU
    # operands, so tolerance is loose but far below any real-bug signature).
    ref = jax.block_until_ready(decoder_reference(x, raw))
    err = float(jnp.max(jnp.abs(out - ref)))
    scale = float(jnp.max(jnp.abs(ref)))
    assert err <= 0.05 * scale + 0.05, (err, scale)

    print("KERNEL_OK")
</pallas_src>

<mosaic_0001>
module attributes {stable_mosaic.version = 11 : i64} {
  func.func @_decoder_kernel(%arg0: i32, %arg1: memref<1x4x327xbf16, #tpu.memory_space<vmem>>, %arg2: memref<288x1252xbf16, #tpu.memory_space<vmem>>, %arg3: memref<1x1088xf32, #tpu.memory_space<vmem>>, %arg4: memref<8x36xbf16, #tpu.memory_space<vmem>>, %arg5: memref<8x1xf32, #tpu.memory_space<vmem>>, %arg6: memref<8x1xf32, #tpu.memory_space<vmem>>, %arg7: memref<64x72xbf16, #tpu.memory_space<vmem>>, %arg8: memref<64x1xf32, #tpu.memory_space<vmem>>, %arg9: memref<64x1xf32, #tpu.memory_space<vmem>>, %arg10: memref<32x576xbf16, #tpu.memory_space<vmem>>, %arg11: memref<32x1xf32, #tpu.memory_space<vmem>>, %arg12: memref<32x1xf32, #tpu.memory_space<vmem>>, %arg13: memref<3x288xbf16, #tpu.memory_space<vmem>>, %arg14: memref<3x1xf32, #tpu.memory_space<vmem>>, %arg15: memref<3x1xf32, #tpu.memory_space<vmem>>, %arg16: memref<1x3x1088xf32, #tpu.memory_space<vmem>>) attributes {dimension_semantics = [#tpu.dimension_semantics<parallel>], iteration_bounds = array<i64: 2>, scalar_prefetch = 0 : i64, scratch_operands = 0 : i64, tpu.core_type = #tpu.core_type<tc>, window_params = [{transform_indices = @transform_0, window_bounds = array<i64: 1, 4, 327>}, {pipeline_mode = #tpu.pipeline_mode<synchronous>, transform_indices = @transform_1, window_bounds = array<i64: 288, 1252>}, {pipeline_mode = #tpu.pipeline_mode<synchronous>, transform_indices = @transform_2, window_bounds = array<i64: 1, 1088>}, {pipeline_mode = #tpu.pipeline_mode<synchronous>, transform_indices = @transform_3, window_bounds = array<i64: 8, 36>}, {pipeline_mode = #tpu.pipeline_mode<synchronous>, transform_indices = @transform_4, window_bounds = array<i64: 8, 1>}, {pipeline_mode = #tpu.pipeline_mode<synchronous>, transform_indices = @transform_5, window_bounds = array<i64: 8, 1>}, {pipeline_mode = #tpu.pipeline_mode<synchronous>, transform_indices = @transform_6, window_bounds = array<i64: 64, 72>}, {pipeline_mode = #tpu.pipeline_mode<synchronous>, transform_indices = @transform_7, window_bounds = array<i64: 64, 1>}, {pipeline_mode = #tpu.pipeline_mode<synchronous>, transform_indices = @transform_8, window_bounds = array<i64: 64, 1>}, {pipeline_mode = #tpu.pipeline_mode<synchronous>, transform_indices = @transform_9, window_bounds = array<i64: 32, 576>}, {pipeline_mode = #tpu.pipeline_mode<synchronous>, transform_indices = @transform_10, window_bounds = array<i64: 32, 1>}, {pipeline_mode = #tpu.pipeline_mode<synchronous>, transform_indices = @transform_11, window_bounds = array<i64: 32, 1>}, {pipeline_mode = #tpu.pipeline_mode<synchronous>, transform_indices = @transform_12, window_bounds = array<i64: 3, 288>}, {pipeline_mode = #tpu.pipeline_mode<synchronous>, transform_indices = @transform_13, window_bounds = array<i64: 3, 1>}, {pipeline_mode = #tpu.pipeline_mode<synchronous>, transform_indices = @transform_14, window_bounds = array<i64: 3, 1>}, {transform_indices = @transform_15, window_bounds = array<i64: 1, 3, 1088>}]} {
    %c0 = arith.constant 0 : index
    %c0_0 = arith.constant 0 : index
    %c0_1 = arith.constant 0 : index
    %0 = vector.load %arg1[%c0, %c0_0, %c0_1] : memref<1x4x327xbf16, #tpu.memory_space<vmem>>, vector<1x4x327xbf16>
    %1 = vector.shape_cast %0 : vector<1x4x327xbf16> to vector<4x327xbf16>
    %2 = vector.extract_strided_slice %1 {offsets = [0, 0], sizes = [4, 288], strides = [1, 1]} : vector<4x327xbf16> to vector<4x288xbf16>
    %3 = vector.extract_strided_slice %1 {offsets = [0, 1], sizes = [4, 288], strides = [1, 1]} : vector<4x327xbf16> to vector<4x288xbf16>
    %4 = vector.extract_strided_slice %1 {offsets = [0, 2], sizes = [4, 288], strides = [1, 1]} : vector<4x327xbf16> to vector<4x288xbf16>
    %5 = vector.extract_strided_slice %1 {offsets = [0, 18], sizes = [4, 288], strides = [1, 1]} : vector<4x327xbf16> to vector<4x288xbf16>
    %6 = vector.extract_strided_slice %1 {offsets = [0, 19], sizes = [4, 288], strides = [1, 1]} : vector<4x327xbf16> to vector<4x288xbf16>
    %7 = vector.extract_strided_slice %1 {offsets = [0, 20], sizes = [4, 288], strides = [1, 1]} : vector<4x327xbf16> to vector<4x288xbf16>
    %8 = vector.extract_strided_slice %1 {offsets = [0, 36], sizes = [4, 288], strides = [1, 1]} : vector<4x327xbf16> to vector<4x288xbf16>
    %9 = vector.extract_strided_slice %1 {offsets = [0, 37], sizes = [4, 288], strides = [1, 1]} : vector<4x327xbf16> to vector<4x288xbf16>
    %10 = vector.extract_strided_slice %1 {offsets = [0, 38], sizes = [4, 288], strides = [1, 1]} : vector<4x327xbf16> to vector<4x288xbf16>
    %11 = tpu.concatenate %2, %3, %4, %5, %6, %7, %8, %9, %10 in 0 : vector<4x288xbf16>, vector<4x288xbf16>, vector<4x288xbf16>, vector<4x288xbf16>, vector<4x288xbf16>, vector<4x288xbf16>, vector<4x288xbf16>, vector<4x288xbf16>, vector<4x288xbf16> -> vector<36x288xbf16>
    %c0_2 = arith.constant 0 : index
    %c0_3 = arith.constant 0 : index
    %12 = vector.load %arg4[%c0_2, %c0_3] : memref<8x36xbf16, #tpu.memory_space<vmem>>, vector<8x36xbf16>
    %cst = arith.constant dense<0.000000e+00> : vector<8x288xf32>
    %13 = tpu.matmul %12, %11, %cst {dimension_numbers = #tpu.dot_dimension_numbers<[1], [0], [0], [1], [0, 0, 1, 1], [], []>} : vector<8x36xbf16>, vector<36x288xbf16>, vector<8x288xf32> -> vector<8x288xf32>
    %c0_4 = arith.constant 0 : index
    %c0_5 = arith.constant 0 : index
    %14 = vector.load %arg5[%c0_4, %c0_5] : memref<8x1xf32, #tpu.memory_space<vmem>>, vector<8x1xf32>
    %15 = vector.broadcast %14 : vector<8x1xf32> to vector<8x288xf32>
    %16 = arith.mulf %13, %15 : vector<8x288xf32>
    %c0_6 = arith.constant 0 : index
    %c0_7 = arith.constant 0 : index
    %17 = vector.load %arg6[%c0_6, %c0_7] : memref<8x1xf32, #tpu.memory_space<vmem>>, vector<8x1xf32>
    %18 = vector.broadcast %17 : vector<8x1xf32> to vector<8x288xf32>
    %19 = arith.addf %16, %18 : vector<8x288xf32>
    %cst_8 = arith.constant 0.00999999977 : f32
    %20 = vector.broadcast %cst_8 : f32 to vector<8x288xf32>
    %21 = arith.mulf %20, %19 : vector<8x288xf32>
    %22 = arith.maximumf %19, %21 : vector<8x288xf32>
    %23 = arith.truncf %22 : vector<8x288xf32> to vector<8x288xbf16>
    %c0_9 = arith.constant 0 : index
    %c0_10 = arith.constant 0 : index
    %24 = vector.load %arg2[%c0_9, %c0_10] : memref<288x1252xbf16, #tpu.memory_space<vmem>>, vector<288x1252xbf16>
    %cst_11 = arith.constant dense<0.000000e+00> : vector<8x1252xf32>
    %25 = tpu.matmul %23, %24, %cst_11 {dimension_numbers = #tpu.dot_dimension_numbers<[1], [0], [0], [1], [0, 0, 1, 1], [], []>} : vector<8x288xbf16>, vector<288x1252xbf16>, vector<8x1252xf32> -> vector<8x1252xf32>
    %26 = arith.truncf %25 : vector<8x1252xf32> to vector<8x1252xbf16>
    %27 = vector.extract_strided_slice %26 {offsets = [0, 93], sizes = [8, 1088], strides = [1, 1]} : vector<8x1252xbf16> to vector<8x1088xbf16>
    %28 = vector.extract_strided_slice %26 {offsets = [0, 94], sizes = [8, 1088], strides = [1, 1]} : vector<8x1252xbf16> to vector<8x1088xbf16>
    %29 = vector.extract_strided_slice %26 {offsets = [0, 95], sizes = [8, 1088], strides = [1, 1]} : vector<8x1252xbf16> to vector<8x1088xbf16>
    %30 = vector.extract_strided_slice %26 {offsets = [0, 127], sizes = [8, 1088], strides = [1, 1]} : vector<8x1252xbf16> to vector<8x1088xbf16>
    %31 = vector.extract_strided_slice %26 {offsets = [0, 128], sizes = [8, 1088], strides = [1, 1]} : vector<8x1252xbf16> to vector<8x1088xbf16>
    %32 = vector.extract_strided_slice %26 {offsets = [0, 129], sizes = [8, 1088], strides = [1, 1]} : vector<8x1252xbf16> to vector<8x1088xbf16>
    %33 = vector.extract_strided_slice %26 {offsets = [0, 161], sizes = [8, 1088], strides = [1, 1]} : vector<8x1252xbf16> to vector<8x1088xbf16>
    %34 = vector.extract_strided_slice %26 {offsets = [0, 162], sizes = [8, 1088], strides = [1, 1]} : vector<8x1252xbf16> to vector<8x1088xbf16>
    %35 = vector.extract_strided_slice %26 {offsets = [0, 163], sizes = [8, 1088], strides = [1, 1]} : vector<8x1252xbf16> to vector<8x1088xbf16>
    %36 = tpu.concatenate %27, %28, %29, %30, %31, %32, %33, %34, %35 in 0 : vector<8x1088xbf16>, vector<8x1088xbf16>, vector<8x1088xbf16>, vector<8x1088xbf16>, vector<8x1088xbf16>, vector<8x1088xbf16>, vector<8x1088xbf16>, vector<8x1088xbf16>, vector<8x1088xbf16> -> vector<72x1088xbf16>
    %c0_12 = arith.constant 0 : index
    %c0_13 = arith.constant 0 : index
    %37 = vector.load %arg7[%c0_12, %c0_13] : memref<64x72xbf16, #tpu.memory_space<vmem>>, vector<64x72xbf16>
    %cst_14 = arith.constant dense<0.000000e+00> : vector<64x1088xf32>
    %38 = tpu.matmul %37, %36, %cst_14 {dimension_numbers = #tpu.dot_dimension_numbers<[1], [0], [0], [1], [0, 0, 1, 1], [], []>} : vector<64x72xbf16>, vector<72x1088xbf16>, vector<64x1088xf32> -> vector<64x1088xf32>
    %c0_15 = arith.constant 0 : index
    %c0_16 = arith.constant 0 : index
    %39 = vector.load %arg8[%c0_15, %c0_16] : memref<64x1xf32, #tpu.memory_space<vmem>>, vector<64x1xf32>
    %40 = vector.broadcast %39 : vector<64x1xf32> to vector<64x1088xf32>
    %41 = arith.mulf %38, %40 : vector<64x1088xf32>
    %c0_17 = arith.constant 0 : index
    %c0_18 = arith.constant 0 : index
    %42 = vector.load %arg9[%c0_17, %c0_18] : memref<64x1xf32, #tpu.memory_space<vmem>>, vector<64x1xf32>
    %43 = vector.broadcast %42 : vector<64x1xf32> to vector<64x1088xf32>
    %44 = arith.addf %41, %43 : vector<64x1088xf32>
    %cst_19 = arith.constant 0.00999999977 : f32
    %45 = vector.broadcast %cst_19 : f32 to vector<64x1088xf32>
    %46 = arith.mulf %45, %44 : vector<64x1088xf32>
    %47 = arith.maximumf %44, %46 : vector<64x1088xf32>
    %c0_20 = arith.constant 0 : index
    %c0_21 = arith.constant 0 : index
    %48 = vector.load %arg3[%c0_20, %c0_21] : memref<1x1088xf32, #tpu.memory_space<vmem>>, vector<1x1088xf32>
    %49 = vector.broadcast %48 : vector<1x1088xf32> to vector<64x1088xf32>
    %50 = arith.mulf %47, %49 : vector<64x1088xf32>
    %51 = arith.truncf %50 : vector<64x1088xf32> to vector<64x1088xbf16>
    %cst_22 = arith.constant 0.000000e+00 : bf16
    %52 = vector.broadcast %cst_22 : bf16 to vector<64x128xbf16>
    %cst_23 = arith.constant 0.000000e+00 : bf16
    %53 = vector.broadcast %cst_23 : bf16 to vector<64x36xbf16>
    %54 = tpu.concatenate %52, %51, %53 in 1 : vector<64x128xbf16>, vector<64x1088xbf16>, vector<64x36xbf16> -> vector<64x1252xbf16>
    %55 = vector.extract_strided_slice %54 {offsets = [0, 93], sizes = [64, 1088], strides = [1, 1]} : vector<64x1252xbf16> to vector<64x1088xbf16>
    %56 = vector.extract_strided_slice %54 {offsets = [0, 94], sizes = [64, 1088], strides = [1, 1]} : vector<64x1252xbf16> to vector<64x1088xbf16>
    %57 = vector.extract_strided_slice %54 {offsets = [0, 95], sizes = [64, 1088], strides = [1, 1]} : vector<64x1252xbf16> to vector<64x1088xbf16>
    %58 = vector.extract_strided_slice %54 {offsets = [0, 127], sizes = [64, 1088], strides = [1, 1]} : vector<64x1252xbf16> to vector<64x1088xbf16>
    %59 = vector.extract_strided_slice %54 {offsets = [0, 128], sizes = [64, 1088], strides = [1, 1]} : vector<64x1252xbf16> to vector<64x1088xbf16>
    %60 = vector.extract_strided_slice %54 {offsets = [0, 129], sizes = [64, 1088], strides = [1, 1]} : vector<64x1252xbf16> to vector<64x1088xbf16>
    %61 = vector.extract_strided_slice %54 {offsets = [0, 161], sizes = [64, 1088], strides = [1, 1]} : vector<64x1252xbf16> to vector<64x1088xbf16>
    %62 = vector.extract_strided_slice %54 {offsets = [0, 162], sizes = [64, 1088], strides = [1, 1]} : vector<64x1252xbf16> to vector<64x1088xbf16>
    %63 = vector.extract_strided_slice %54 {offsets = [0, 163], sizes = [64, 1088], strides = [1, 1]} : vector<64x1252xbf16> to vector<64x1088xbf16>
    %64 = tpu.concatenate %55, %56, %57, %58, %59, %60, %61, %62, %63 in 0 : vector<64x1088xbf16>, vector<64x1088xbf16>, vector<64x1088xbf16>, vector<64x1088xbf16>, vector<64x1088xbf16>, vector<64x1088xbf16>, vector<64x1088xbf16>, vector<64x1088xbf16>, vector<64x1088xbf16> -> vector<576x1088xbf16>
    %c0_24 = arith.constant 0 : index
    %c0_25 = arith.constant 0 : index
    %65 = vector.load %arg10[%c0_24, %c0_25] : memref<32x576xbf16, #tpu.memory_space<vmem>>, vector<32x576xbf16>
    %cst_26 = arith.constant dense<0.000000e+00> : vector<32x1088xf32>
    %66 = tpu.matmul %65, %64, %cst_26 {dimension_numbers = #tpu.dot_dimension_numbers<[1], [0], [0], [1], [0, 0, 1, 1], [], []>} : vector<32x576xbf16>, vector<576x1088xbf16>, vector<32x1088xf32> -> vector<32x1088xf32>
    %c0_27 = arith.constant 0 : index
    %c0_28 = arith.constant 0 : index
    %67 = vector.load %arg11[%c0_27, %c0_28] : memref<32x1xf32, #tpu.memory_space<vmem>>, vector<32x1xf32>
    %68 = vector.broadcast %67 : vector<32x1xf32> to vector<32x1088xf32>
    %69 = arith.mulf %66, %68 : vector<32x1088xf32>
    %c0_29 = arith.constant 0 : index
    %c0_30 = arith.constant 0 : index
    %70 = vector.load %arg12[%c0_29, %c0_30] : memref<32x1xf32, #tpu.memory_space<vmem>>, vector<32x1xf32>
    %71 = vector.broadcast %70 : vector<32x1xf32> to vector<32x1088xf32>
    %72 = arith.addf %69, %71 : vector<32x1088xf32>
    %c0_31 = arith.constant 0 : index
    %c0_32 = arith.constant 0 : index
    %73 = vector.load %arg3[%c0_31, %c0_32] : memref<1x1088xf32, #tpu.memory_space<vmem>>, vector<1x1088xf32>
    %74 = vector.broadcast %73 : vector<1x1088xf32> to vector<32x1088xf32>
    %75 = arith.mulf %72, %74 : vector<32x1088xf32>
    %76 = arith.truncf %75 : vector<32x1088xf32> to vector<32x1088xbf16>
    %cst_33 = arith.constant 0.000000e+00 : bf16
    %77 = vector.broadcast %cst_33 : bf16 to vector<32x128xbf16>
    %cst_34 = arith.constant 0.000000e+00 : bf16
    %78 = vector.broadcast %cst_34 : bf16 to vector<32x36xbf16>
    %79 = tpu.concatenate %77, %76, %78 in 1 : vector<32x128xbf16>, vector<32x1088xbf16>, vector<32x36xbf16> -> vector<32x1252xbf16>
    %80 = vector.extract_strided_slice %79 {offsets = [0, 93], sizes = [32, 1088], strides = [1, 1]} : vector<32x1252xbf16> to vector<32x1088xbf16>
    %81 = vector.extract_strided_slice %79 {offsets = [0, 94], sizes = [32, 1088], strides = [1, 1]} : vector<32x1252xbf16> to vector<32x1088xbf16>
    %82 = vector.extract_strided_slice %79 {offsets = [0, 95], sizes = [32, 1088], strides = [1, 1]} : vector<32x1252xbf16> to vector<32x1088xbf16>
    %83 = vector.extract_strided_slice %79 {offsets = [0, 127], sizes = [32, 1088], strides = [1, 1]} : vector<32x1252xbf16> to vector<32x1088xbf16>
    %84 = vector.extract_strided_slice %79 {offsets = [0, 128], sizes = [32, 1088], strides = [1, 1]} : vector<32x1252xbf16> to vector<32x1088xbf16>
    %85 = vector.extract_strided_slice %79 {offsets = [0, 129], sizes = [32, 1088], strides = [1, 1]} : vector<32x1252xbf16> to vector<32x1088xbf16>
    %86 = vector.extract_strided_slice %79 {offsets = [0, 161], sizes = [32, 1088], strides = [1, 1]} : vector<32x1252xbf16> to vector<32x1088xbf16>
    %87 = vector.extract_strided_slice %79 {offsets = [0, 162], sizes = [32, 1088], strides = [1, 1]} : vector<32x1252xbf16> to vector<32x1088xbf16>
    %88 = vector.extract_strided_slice %79 {offsets = [0, 163], sizes = [32, 1088], strides = [1, 1]} : vector<32x1252xbf16> to vector<32x1088xbf16>
    %89 = tpu.concatenate %80, %81, %82, %83, %84, %85, %86, %87, %88 in 0 : vector<32x1088xbf16>, vector<32x1088xbf16>, vector<32x1088xbf16>, vector<32x1088xbf16>, vector<32x1088xbf16>, vector<32x1088xbf16>, vector<32x1088xbf16>, vector<32x1088xbf16>, vector<32x1088xbf16> -> vector<288x1088xbf16>
    %c0_35 = arith.constant 0 : index
    %c0_36 = arith.constant 0 : index
    %90 = vector.load %arg13[%c0_35, %c0_36] : memref<3x288xbf16, #tpu.memory_space<vmem>>, vector<3x288xbf16>
    %cst_37 = arith.constant dense<0.000000e+00> : vector<3x1088xf32>
    %91 = tpu.matmul %90, %89, %cst_37 {dimension_numbers = #tpu.dot_dimension_numbers<[1], [0], [0], [1], [0, 0, 1, 1], [], []>} : vector<3x288xbf16>, vector<288x1088xbf16>, vector<3x1088xf32> -> vector<3x1088xf32>
    %c0_38 = arith.constant 0 : index
    %c0_39 = arith.constant 0 : index
    %92 = vector.load %arg14[%c0_38, %c0_39] : memref<3x1xf32, #tpu.memory_space<vmem>>, vector<3x1xf32>
    %93 = vector.broadcast %92 : vector<3x1xf32> to vector<3x1088xf32>
    %94 = arith.mulf %91, %93 : vector<3x1088xf32>
    %c0_40 = arith.constant 0 : index
    %c0_41 = arith.constant 0 : index
    %95 = vector.load %arg15[%c0_40, %c0_41] : memref<3x1xf32, #tpu.memory_space<vmem>>, vector<3x1xf32>
    %96 = vector.broadcast %95 : vector<3x1xf32> to vector<3x1088xf32>
    %97 = arith.addf %94, %96 : vector<3x1088xf32>
    %c0_42 = arith.constant 0 : index
    %c0_43 = arith.constant 0 : index
    %c0_44 = arith.constant 0 : index
    %98 = vector.load %arg16[%c0_42, %c0_43, %c0_44] : memref<1x3x1088xf32, #tpu.memory_space<vmem>>, vector<1x3x1088xf32>
    %99 = vector.shape_cast %98 : vector<1x3x1088xf32> to vector<3x1088xf32>
    %100 = vector.shape_cast %97 : vector<3x1088xf32> to vector<1x3x1088xf32>
    tpu.vector_store %arg16[%c0_42, %c0_43, %c0_44], %100 {strides = array<i32>} : memref<1x3x1088xf32, #tpu.memory_space<vmem>>, vector<1x3x1088xf32>,
    return
  }
  func.func @transform_0(%arg0: i32) -> (i32, i32, i32) {
    %c0_i32 = arith.constant 0 : i32
    %c0_i32_0 = arith.constant 0 : i32
    %c0_i32_1 = arith.constant 0 : i32
    return %arg0, %c0_i32, %c0_i32_0 : i32, i32, i32
  }
  func.func @transform_1(%arg0: i32) -> (i32, i32) {
    %c0_i32 = arith.constant 0 : i32
    %c0_i32_0 = arith.constant 0 : i32
    %c0_i32_1 = arith.constant 0 : i32
    return %c0_i32, %c0_i32_0 : i32, i32
  }
  func.func @transform_2(%arg0: i32) -> (i32, i32) {
    %c0_i32 = arith.constant 0 : i32
    %c0_i32_0 = arith.constant 0 : i32
    %c0_i32_1 = arith.constant 0 : i32
    return %c0_i32, %c0_i32_0 : i32, i32
  }
  func.func @transform_3(%arg0: i32) -> (i32, i32) {
    %c0_i32 = arith.constant 0 : i32
    %c0_i32_0 = arith.constant 0 : i32
    %c0_i32_1 = arith.constant 0 : i32
    return %c0_i32, %c0_i32_0 : i32, i32
  }
  func.func @transform_4(%arg0: i32) -> (i32, i32) {
    %c0_i32 = arith.constant 0 : i32
    %c0_i32_0 = arith.constant 0 : i32
    %c0_i32_1 = arith.constant 0 : i32
    return %c0_i32, %c0_i32_0 : i32, i32
  }
  func.func @transform_5(%arg0: i32) -> (i32, i32) {
    %c0_i32 = arith.constant 0 : i32
    %c0_i32_0 = arith.constant 0 : i32
    %c0_i32_1 = arith.constant 0 : i32
    return %c0_i32, %c0_i32_0 : i32, i32
  }
  func.func @transform_6(%arg0: i32) -> (i32, i32) {
    %c0_i32 = arith.constant 0 : i32
    %c0_i32_0 = arith.constant 0 : i32
    %c0_i32_1 = arith.constant 0 : i32
    return %c0_i32, %c0_i32_0 : i32, i32
  }
  func.func @transform_7(%arg0: i32) -> (i32, i32) {
    %c0_i32 = arith.constant 0 : i32
    %c0_i32_0 = arith.constant 0 : i32
    %c0_i32_1 = arith.constant 0 : i32
    return %c0_i32, %c0_i32_0 : i32, i32
  }
  func.func @transform_8(%arg0: i32) -> (i32, i32) {
    %c0_i32 = arith.constant 0 : i32
    %c0_i32_0 = arith.constant 0 : i32
    %c0_i32_1 = arith.constant 0 : i32
    return %c0_i32, %c0_i32_0 : i32, i32
  }
  func.func @transform_9(%arg0: i32) -> (i32, i32) {
    %c0_i32 = arith.constant 0 : i32
    %c0_i32_0 = arith.constant 0 : i32
    %c0_i32_1 = arith.constant 0 : i32
    return %c0_i32, %c0_i32_0 : i32, i32
  }
  func.func @transform_10(%arg0: i32) -> (i32, i32) {
    %c0_i32 = arith.constant 0 : i32
    %c0_i32_0 = arith.constant 0 : i32
    %c0_i32_1 = arith.constant 0 : i32
    return %c0_i32, %c0_i32_0 : i32, i32
  }
  func.func @transform_11(%arg0: i32) -> (i32, i32) {
    %c0_i32 = arith.constant 0 : i32
    %c0_i32_0 = arith.constant 0 : i32
    %c0_i32_1 = arith.constant 0 : i32
    return %c0_i32, %c0_i32_0 : i32, i32
  }
  func.func @transform_12(%arg0: i32) -> (i32, i32) {
    %c0_i32 = arith.constant 0 : i32
    %c0_i32_0 = arith.constant 0 : i32
    %c0_i32_1 = arith.constant 0 : i32
    return %c0_i32, %c0_i32_0 : i32, i32
  }
  func.func @transform_13(%arg0: i32) -> (i32, i32) {
    %c0_i32 = arith.constant 0 : i32
    %c0_i32_0 = arith.constant 0 : i32
    %c0_i32_1 = arith.constant 0 : i32
    return %c0_i32, %c0_i32_0 : i32, i32
  }
  func.func @transform_14(%arg0: i32) -> (i32, i32) {
    %c0_i32 = arith.constant 0 : i32
    %c0_i32_0 = arith.constant 0 : i32
    %c0_i32_1 = arith.constant 0 : i32
    return %c0_i32, %c0_i32_0 : i32, i32
  }
  func.func @transform_15(%arg0: i32) -> (i32, i32, i32) {
    %c0_i32 = arith.constant 0 : i32
    %c0_i32_0 = arith.constant 0 : i32
    %c0_i32_1 = arith.constant 0 : i32
    return %arg0, %c0_i32, %c0_i32_0 : i32, i32, i32
  }
}

</mosaic_0001>

<llo_original>
// kernel: decoder_forward.1
$region0: #{decoder_forward.1}
  #allocation0 [shape = 'u32[]', space=smem, size = 0x4, offset = 0x4, fixed_abs, tag = 'smem constant byte address 0x4 - core index']
  #allocation1 [shape = 'u32[144,128]{1,0:T(1,128)}', space=vmem, size = 0x12000, scoped, tag = 'internal scratch']
  %s0 = inlined_call_operand.vmem [shape: bf16[2,4,327], index: 0, kind: input, shape index: {}]
  %s1 = inlined_call_operand.hbm [shape: bf16[288,1252], index: 1, kind: input, shape index: {}]
  %s2 = inlined_call_operand.vmem [shape: f32[1,1088], index: 2, kind: input, shape index: {}]
  %s3 = inlined_call_operand.vmem [shape: bf16[8,36], index: 3, kind: input, shape index: {}]
  %s4 = inlined_call_operand.vmem [shape: f32[8,1], index: 4, kind: input, shape index: {}]
  %s5 = inlined_call_operand.vmem [shape: f32[8,1], index: 5, kind: input, shape index: {}]
  %s6 = inlined_call_operand.vmem [shape: bf16[64,72], index: 6, kind: input, shape index: {}]
  %s7 = inlined_call_operand.vmem [shape: f32[64,1], index: 7, kind: input, shape index: {}]
  %s8 = inlined_call_operand.vmem [shape: f32[64,1], index: 8, kind: input, shape index: {}]
  %s9 = inlined_call_operand.vmem [shape: bf16[32,576], index: 9, kind: input, shape index: {}]
  %s10 = inlined_call_operand.vmem [shape: f32[32,1], index: 10, kind: input, shape index: {}]
  %s11 = inlined_call_operand.vmem [shape: f32[32,1], index: 11, kind: input, shape index: {}]
  %s12 = inlined_call_operand.vmem [shape: bf16[3,288], index: 12, kind: input, shape index: {}]
  %s13 = inlined_call_operand.vmem [shape: f32[3,1], index: 13, kind: input, shape index: {}]
  %s14 = inlined_call_operand.vmem [shape: f32[3,1], index: 14, kind: input, shape index: {}]
  %s15 = inlined_call_operand.vmem [shape: f32[2,3,1088], index: 15, kind: output, shape index: {}]
  %s16 = sld [smem:[#allocation0]]
  $region97: #{decoder_forward.1} parent=0
    _
  %s18 = ssub.s32 1, %s16
  %s19 = scalar_select 0, %s18, %s16
  $region1: #{decoder_forward.1} parent=0
    #allocation2 [shape = 'u8[737280]{0}', space=vmem, size = 0xb4000, scoped, tag = 'input window, operand 1, single buffered']
    #allocation3 [shape = 's32[2]{0}', space=sflag, size = 0x8, scoped, tag = 'scoped memory for decoder_forward.1']
    %20 = vsyncpa [#allocation3], 0
    loop: start=0, step=1, limit=4
    $region2: #{decoder_forward.1} parent=1 // loop_pre_header
      _
    $region3: #{decoder_forward.1} parent=1 // loop_header
      %s22 = sphi 0, %s26
      %p23 = scmp.ge.s32.totalorder %s22, 4
      %s32 = sphi 0, %s34
      %s35 = sphi 0, %s32
      %s36 = sphi 0, %s35
      %s52 = sphi 0, %s36
      %s56 = sphi 0, %s56
      %s58 = sphi 0, %s56
      %s59 = sphi 0, %s58
      %s73 = sphi 0, %s59
      %s77 = sphi 0, %s77
      %s79 = sphi 0, %s77
      %s80 = sphi 0, %s79
      %s94 = sphi 0, %s80
      %s98 = sphi 0, %s98
      %s100 = sphi 0, %s98
      %s101 = sphi 0, %s100
      %s115 = sphi 0, %s101
      %s119 = sphi 0, %s119
      %s121 = sphi 0, %s119
      %s122 = sphi 0, %s121
      %s136 = sphi 0, %s122
      %s140 = sphi 0, %s140
      %s142 = sphi 0, %s140
      %s143 = sphi 0, %s142
      %s157 = sphi 0, %s143
      %s161 = sphi 0, %s161
      %s163 = sphi 0, %s161
      %s164 = sphi 0, %s163
      %s178 = sphi 0, %s164
      %s182 = sphi 0, %s182
      %s184 = sphi 0, %s182
      %s185 = sphi 0, %s184
      %s199 = sphi 0, %s185
      %s203 = sphi 0, %s203
      %s205 = sphi 0, %s203
      %s206 = sphi 0, %s205
      %s220 = sphi 0, %s206
      %s224 = sphi 0, %s224
      %s226 = sphi 0, %s224
      %s227 = sphi 0, %s226
      %s241 = sphi 0, %s227
      %s245 = sphi 0, %s245
      %s247 = sphi 0, %s245
      %s248 = sphi 0, %s247
      %s262 = sphi 0, %s248
      %s266 = sphi 0, %s266
      %s268 = sphi 0, %s266
      %s269 = sphi 0, %s268
      %s283 = sphi 0, %s269
      %s287 = sphi 0, %s287
      %s289 = sphi 0, %s287
      %s290 = sphi 0, %s289
      %s304 = sphi 0, %s290
      %s308 = sphi 0, %s308
      %s310 = sphi 0, %s308
      %s311 = sphi 0, %s310
      %s325 = sphi 0, %s311
      %s329 = sphi 0, %s329
      %s331 = sphi 0, %s329
      %s332 = sphi 0, %s331
      %s346 = sphi 0, %s332
      %s352 = sphi 0, %s354
      %s355 = sphi 0, %s352
      %s356 = sphi 0, %s355
      %s372 = sphi 0, %s356
    $region4: #{decoder_forward.1} parent=1 // loop_header_branch
      %25 = sbr.rel (%p23) target = $region8
    $region5: #{decoder_forward.1} parent=1 // loop_body
      %s27 = ssub.s32 %s22, 1
      %s28 = ssub.s32 %s22, 2
      %s29 = sadd.s32 %s22, 1
      %s30 = ssub.s32 %s22, %s29
      %p31 = scmp.eq.s32.totalorder %s30, 0
      %s33 = sadd.s32 %s32, 1
      %s34 = scalar_select %p31, %s32, %s33
      %p37 = pneg %p31
      %p38 = scmp.eq.s32.totalorder %s22, 1
      %p39 = por %p37, %p38
      %p40 = scmp.ne.s32.totalorder %s32, %s35
      %p41 = scmp.eq.s32.totalorder %s22, 0
      %p42 = por %p40, %p41
      %p43 = scmp.ne.s32.totalorder %s32, %s35
      %p44 = scmp.eq.s32.totalorder %s27, 1
      %p45 = por %p43, %p44
      %p46 = scmp.ne.s32.totalorder %s35, %s36
      %p47 = scmp.eq.s32.totalorder %s27, 0
      %p48 = por %p46, %p47
      %p49 = scmp.ne.s32.totalorder %s35, %s36
      %p50 = scmp.eq.s32.totalorder %s28, 1
      %p51 = por %p49, %p50
      %p53 = scmp.ne.s32.totalorder %s36, %s52
      %p54 = scmp.eq.s32.totalorder %s28, 0
      %p55 = por %p53, %p54
      %s57 = sadd.s32 %s56, 1
      %p60 = scmp.eq.s32.totalorder %s22, 1
      %p61 = scmp.ne.s32.totalorder %s56, %s58
      %p62 = scmp.eq.s32.totalorder %s22, 0
      %p63 = por %p61, %p62
      %p64 = scmp.ne.s32.totalorder %s56, %s58
      %p65 = scmp.eq.s32.totalorder %s27, 1
      %p66 = por %p64, %p65
      %p67 = scmp.ne.s32.totalorder %s58, %s59
      %p68 = scmp.eq.s32.totalorder %s27, 0
      %p69 = por %p67, %p68
      %p70 = scmp.ne.s32.totalorder %s58, %s59
      %p71 = scmp.eq.s32.totalorder %s28, 1
      %p72 = por %p70, %p71
      %p74 = scmp.ne.s32.totalorder %s59, %s73
      %p75 = scmp.eq.s32.totalorder %s28, 0
      %p76 = por %p74, %p75
      %s78 = sadd.s32 %s77, 1
      %p81 = scmp.eq.s32.totalorder %s22, 1
      %p82 = scmp.ne.s32.totalorder %s77, %s79
      %p83 = scmp.eq.s32.totalorder %s22, 0
      %p84 = por %p82, %p83
      %p85 = scmp.ne.s32.totalorder %s77, %s79
      %p86 = scmp.eq.s32.totalorder %s27, 1
      %p87 = por %p85, %p86
      %p88 = scmp.ne.s32.totalorder %s79, %s80
      %p89 = scmp.eq.s32.totalorder %s27, 0
      %p90 = por %p88, %p89
      %p91 = scmp.ne.s32.totalorder %s79, %s80
      %p92 = scmp.eq.s32.totalorder %s28, 1
      %p93 = por %p91, %p92
      %p95 = scmp.ne.s32.totalorder %s80, %s94
      %p96 = scmp.eq.s32.totalorder %s28, 0
      %p97 = por %p95, %p96
      %s99 = sadd.s32 %s98, 1
      %p102 = scmp.eq.s32.totalorder %s22, 1
      %p103 = scmp.ne.s32.totalorder %s98, %s100
      %p104 = scmp.eq.s32.totalorder %s22, 0
      %p105 = por %p103, %p104
      %p106 = scmp.ne.s32.totalorder %s98, %s100
      %p107 = scmp.eq.s32.totalorder %s27, 1
      %p108 = por %p106, %p107
      %p109 = scmp.ne.s32.totalorder %s100, %s101
      %p110 = scmp.eq.s32.totalorder %s27, 0
      %p111 = por %p109, %p110
      %p112 = scmp.ne.s32.totalorder %s100, %s101
      %p113 = scmp.eq.s32.totalorder %s28, 1
      %p114 = por %p112, %p113
      %p116 = scmp.ne.s32.totalorder %s101, %s115
      %p117 = scmp.eq.s32.totalorder %s28, 0
      %p118 = por %p116, %p117
      %s120 = sadd.s32 %s119, 1
      %p123 = scmp.eq.s32.totalorder %s22, 1
      %p124 = scmp.ne.s32.totalorder %s119, %s121
      %p125 = scmp.eq.s32.totalorder %s22, 0
      %p126 = por %p124, %p125
      %p127 = scmp.ne.s32.totalorder %s119, %s121
      %p128 = scmp.eq.s32.totalorder %s27, 1
      %p129 = por %p127, %p128
      %p130 = scmp.ne.s32.totalorder %s121, %s122
      %p131 = scmp.eq.s32.totalorder %s27, 0
      %p132 = por %p130, %p131
      %p133 = scmp.ne.s32.totalorder %s121, %s122
      %p134 = scmp.eq.s32.totalorder %s28, 1
      %p135 = por %p133, %p134
      %p137 = scmp.ne.s32.totalorder %s122, %s136
      %p138 = scmp.eq.s32.totalorder %s28, 0
      %p139 = por %p137, %p138
      %s141 = sadd.s32 %s140, 1
      %p144 = scmp.eq.s32.totalorder %s22, 1
      %p145 = scmp.ne.s32.totalorder %s140, %s142
      %p146 = scmp.eq.s32.totalorder %s22, 0
      %p147 = por %p145, %p146
      %p148 = scmp.ne.s32.totalorder %s140, %s142
      %p149 = scmp.eq.s32.totalorder %s27, 1
      %p150 = por %p148, %p149
      %p151 = scmp.ne.s32.totalorder %s142, %s143
      %p152 = scmp.eq.s32.totalorder %s27, 0
      %p153 = por %p151, %p152
      %p154 = scmp.ne.s32.totalorder %s142, %s143
      %p155 = scmp.eq.s32.totalorder %s28, 1
      %p156 = por %p154, %p155
      %p158 = scmp.ne.s32.totalorder %s143, %s157
      %p159 = scmp.eq.s32.totalorder %s28, 0
      %p160 = por %p158, %p159
      %s162 = sadd.s32 %s161, 1
      %p165 = scmp.eq.s32.totalorder %s22, 1
      %p166 = scmp.ne.s32.totalorder %s161, %s163
      %p167 = scmp.eq.s32.totalorder %s22, 0
      %p168 = por %p166, %p167
      %p169 = scmp.ne.s32.totalorder %s161, %s163
      %p170 = scmp.eq.s32.totalorder %s27, 1
      %p171 = por %p169, %p170
      %p172 = scmp.ne.s32.totalorder %s163, %s164
      %p173 = scmp.eq.s32.totalorder %s27, 0
      %p174 = por %p172, %p173
      %p175 = scmp.ne.s32.totalorder %s163, %s164
      %p176 = scmp.eq.s32.totalorder %s28, 1
      %p177 = por %p175, %p176
      %p179 = scmp.ne.s32.totalorder %s164, %s178
      %p180 = scmp.eq.s32.totalorder %s28, 0
      %p181 = por %p179, %p180
      %s183 = sadd.s32 %s182, 1
      %p186 = scmp.eq.s32.totalorder %s22, 1
      %p187 = scmp.ne.s32.totalorder %s182, %s184
      %p188 = scmp.eq.s32.totalorder %s22, 0
      %p189 = por %p187, %p188
      %p190 = scmp.ne.s32.totalorder %s182, %s184
      %p191 = scmp.eq.s32.totalorder %s27, 1
      %p192 = por %p190, %p191
      %p193 = scmp.ne.s32.totalorder %s184, %s185
      %p194 = scmp.eq.s32.totalorder %s27, 0
      %p195 = por %p193, %p194
      %p196 = scmp.ne.s32.totalorder %s184, %s185
      %p197 = scmp.eq.s32.totalorder %s28, 1
      %p198 = por %p196, %p197
      %p200 = scmp.ne.s32.totalorder %s185, %s199
      %p201 = scmp.eq.s32.totalorder %s28, 0
      %p202 = por %p200, %p201
      %s204 = sadd.s32 %s203, 1
      %p207 = scmp.eq.s32.totalorder %s22, 1
      %p208 = scmp.ne.s32.totalorder %s203, %s205
      %p209 = scmp.eq.s32.totalorder %s22, 0
      %p210 = por %p208, %p209
      %p211 = scmp.ne.s32.totalorder %s203, %s205
      %p212 = scmp.eq.s32.totalorder %s27, 1
      %p213 = por %p211, %p212
      %p214 = scmp.ne.s32.totalorder %s205, %s206
      %p215 = scmp.eq.s32.totalorder %s27, 0
      %p216 = por %p214, %p215
      %p217 = scmp.ne.s32.totalorder %s205, %s206
      %p218 = scmp.eq.s32.totalorder %s28, 1
      %p219 = por %p217, %p218
      %p221 = scmp.ne.s32.totalorder %s206, %s220
      %p222 = scmp.eq.s32.totalorder %s28, 0
      %p223 = por %p221, %p222
      %s225 = sadd.s32 %s224, 1
      %p228 = scmp.eq.s32.totalorder %s22, 1
      %p229 = scmp.ne.s32.totalorder %s224, %s226
      %p230 = scmp.eq.s32.totalorder %s22, 0
      %p231 = por %p229, %p230
      %p232 = scmp.ne.s32.totalorder %s224, %s226
      %p233 = scmp.eq.s32.totalorder %s27, 1
      %p234 = por %p232, %p233
      %p235 = scmp.ne.s32.totalorder %s226, %s227
      %p236 = scmp.eq.s32.totalorder %s27, 0
      %p237 = por %p235, %p236
      %p238 = scmp.ne.s32.totalorder %s226, %s227
      %p239 = scmp.eq.s32.totalorder %s28, 1
      %p240 = por %p238, %p239
      %p242 = scmp.ne.s32.totalorder %s227, %s241
      %p243 = scmp.eq.s32.totalorder %s28, 0
      %p244 = por %p242, %p243
      %s246 = sadd.s32 %s245, 1
      %p249 = scmp.eq.s32.totalorder %s22, 1
      %p250 = scmp.ne.s32.totalorder %s245, %s247
      %p251 = scmp.eq.s32.totalorder %s22, 0
      %p252 = por %p250, %p251
      %p253 = scmp.ne.s32.totalorder %s245, %s247
      %p254 = scmp.eq.s32.totalorder %s27, 1
      %p255 = por %p253, %p254
      %p256 = scmp.ne.s32.totalorder %s247, %s248
      %p257 = scmp.eq.s32.totalorder %s27, 0
      %p258 = por %p256, %p257
      %p259 = scmp.ne.s32.totalorder %s247, %s248
      %p260 = scmp.eq.s32.totalorder %s28, 1
      %p261 = por %p259, %p260
      %p263 = scmp.ne.s32.totalorder %s248, %s262
      %p264 = scmp.eq.s32.totalorder %s28, 0
      %p265 = por %p263, %p264
      %s267 = sadd.s32 %s266, 1
      %p270 = scmp.eq.s32.totalorder %s22, 1
      %p271 = scmp.ne.s32.totalorder %s266, %s268
      %p272 = scmp.eq.s32.totalorder %s22, 0
      %p273 = por %p271, %p272
      %p274 = scmp.ne.s32.totalorder %s266, %s268
      %p275 = scmp.eq.s32.totalorder %s27, 1
      %p276 = por %p274, %p275
      %p277 = scmp.ne.s32.totalorder %s268, %s269
      %p278 = scmp.eq.s32.totalorder %s27, 0
      %p279 = por %p277, %p278
      %p280 = scmp.ne.s32.totalorder %s268, %s269
      %p281 = scmp.eq.s32.totalorder %s28, 1
      %p282 = por %p280, %p281
      %p284 = scmp.ne.s32.totalorder %s269, %s283
      %p285 = scmp.eq.s32.totalorder %s28, 0
      %p286 = por %p284, %p285
      %s288 = sadd.s32 %s287, 1
      %p291 = scmp.eq.s32.totalorder %s22, 1
      %p292 = scmp.ne.s32.totalorder %s287, %s289
      %p293 = scmp.eq.s32.totalorder %s22, 0
      %p294 = por %p292, %p293
      %p295 = scmp.ne.s32.totalorder %s287, %s289
      %p296 = scmp.eq.s32.totalorder %s27, 1
      %p297 = por %p295, %p296
      %p298 = scmp.ne.s32.totalorder %s289, %s290
      %p299 = scmp.eq.s32.totalorder %s27, 0
      %p300 = por %p298, %p299
      %p301 = scmp.ne.s32.totalorder %s289, %s290
      %p302 = scmp.eq.s32.totalorder %s28, 1
      %p303 = por %p301, %p302
      %p305 = scmp.ne.s32.totalorder %s290, %s304
      %p306 = scmp.eq.s32.totalorder %s28, 0
      %p307 = por %p305, %p306
      %s309 = sadd.s32 %s308, 1
      %p312 = scmp.eq.s32.totalorder %s22, 1
      %p313 = scmp.ne.s32.totalorder %s308, %s310
      %p314 = scmp.eq.s32.totalorder %s22, 0
      %p315 = por %p313, %p314
      %p316 = scmp.ne.s32.totalorder %s308, %s310
      %p317 = scmp.eq.s32.totalorder %s27, 1
      %p318 = por %p316, %p317
      %p319 = scmp.ne.s32.totalorder %s310, %s311
      %p320 = scmp.eq.s32.totalorder %s27, 0
      %p321 = por %p319, %p320
      %p322 = scmp.ne.s32.totalorder %s310, %s311
      %p323 = scmp.eq.s32.totalorder %s28, 1
      %p324 = por %p322, %p323
      %p326 = scmp.ne.s32.totalorder %s311, %s325
      %p327 = scmp.eq.s32.totalorder %s28, 0
      %p328 = por %p326, %p327
      %s330 = sadd.s32 %s329, 1
      %p333 = scmp.eq.s32.totalorder %s22, 1
      %p334 = scmp.ne.s32.totalorder %s329, %s331
      %p335 = scmp.eq.s32.totalorder %s22, 0
      %p336 = por %p334, %p335
      %p337 = scmp.ne.s32.totalorder %s329, %s331
      %p338 = scmp.eq.s32.totalorder %s27, 1
      %p339 = por %p337, %p338
      %p340 = scmp.ne.s32.totalorder %s331, %s332
      %p341 = scmp.eq.s32.totalorder %s27, 0
      %p342 = por %p340, %p341
      %p343 = scmp.ne.s32.totalorder %s331, %s332
      %p344 = scmp.eq.s32.totalorder %s28, 1
      %p345 = por %p343, %p344
      %p347 = scmp.ne.s32.totalorder %s332, %s346
      %p348 = scmp.eq.s32.totalorder %s28, 0
      %p349 = por %p347, %p348
      %s350 = ssub.s32 %s22, %s29
      %p351 = scmp.eq.s32.totalorder %s350, 0
      %s353 = sadd.s32 %s352, 1
      %s354 = scalar_select %p351, %s352, %s353
      %p357 = pneg %p351
      %p358 = scmp.eq.s32.totalorder %s22, 1
      %p359 = por %p357, %p358
      %p360 = scmp.ne.s32.totalorder %s352, %s355
      %p361 = scmp.eq.s32.totalorder %s22, 0
      %p362 = por %p360, %p361
      %p363 = scmp.ne.s32.totalorder %s352, %s355
      %p364 = scmp.eq.s32.totalorder %s27, 1
      %p365 = por %p363, %p364
      %p366 = scmp.ne.s32.totalorder %s355, %s356
      %p367 = scmp.eq.s32.totalorder %s27, 0
      %p368 = por %p366, %p367
      %p369 = scmp.ne.s32.totalorder %s355, %s356
      %p370 = scmp.eq.s32.totalorder %s28, 1
      %p371 = por %p369, %p370
      %p373 = scmp.ne.s32.totalorder %s356, %s372
      %p374 = scmp.eq.s32.totalorder %s28, 0
      %p375 = por %p373, %p374
      %p376 = scmp.le.s32.totalorder 1, %s22
      %p377 = scmp.lt.s32.totalorder %s22, 3
      %p378 = pnand %p376, %p377
      %p379 = pneg %p378
      // Predicated region
      $region9: #{decoder_forward.1} parent=5 // pred_check
        _
      $region10: #{decoder_forward.1} parent=5 // pred_check_branch
        %381 = sbr.rel (%p378) target = $region12
      $region11: #{decoder_forward.1} parent=5 // pred_region
        %s382 = ssub.s32 %s22, 1
        // Predicated region
        $region13: #{decoder_forward.1} parent=11 // pred_check
          %p383 = pneg %p69
        $region14: #{decoder_forward.1} parent=11 // pred_check_branch
          %385 = sbr.rel (%p383) target = $region16
        $region15: #{decoder_forward.1} parent=11 // pred_region
          %s387 = ssub.s32 23040, 23040
          %388 = vsyncadd [#allocation3], %s387
          %s389 = sshll.u32 [#allocation2], 4
          %s390 = int_to_ptr.vmem [resolvable:$true] %s389
          %395 = dma.hbm_to_vmem [thread:$0]  %s1, 23040, %s390, [#allocation3], 640, 640, 40
        $region16: #{decoder_forward.1} parent=11 // pred_fallthru
          _
        // Predicated region
        $region17: #{decoder_forward.1} parent=11 // pred_check
          %p396 = pneg %p90
        $region18: #{decoder_forward.1} parent=11 // pred_check_branch
          %398 = sbr.rel (%p396) target = $region20
        $region19: #{decoder_forward.1} parent=11 // pred_region
          _
        $region20: #{decoder_forward.1} parent=11 // pred_fallthru
          _
        // Predicated region
        $region21: #{decoder_forward.1} parent=11 // pred_check
          %p399 = pneg %p111
        $region22: #{decoder_forward.1} parent=11 // pred_check_branch
          %401 = sbr.rel (%p399) target = $region24
        $region23: #{decoder_forward.1} parent=11 // pred_region
          _
        $region24: #{decoder_forward.1} parent=11 // pred_fallthru
          _
        // Predicated region
        $region25: #{decoder_forward.1} parent=11 // pred_check
          %p402 = pneg %p132
        $region26: #{decoder_forward.1} parent=11 // pred_check_branch
          %404 = sbr.rel (%p402) target = $region28
        $region27: #{decoder_forward.1} parent=11 // pred_region
          _
        $region28: #{decoder_forward.1} parent=11 // pred_fallthru
          _
        // Predicated region
        $region29: #{decoder_forward.1} parent=11 // pred_check
          %p405 = pneg %p153
        $region30: #{decoder_forward.1} parent=11 // pred_check_branch
          %407 = sbr.rel (%p405) target = $region32
        $region31: #{decoder_forward.1} parent=11 // pred_region
          _
        $region32: #{decoder_forward.1} parent=11 // pred_fallthru
          _
        // Predicated region
        $region33: #{decoder_forward.1} parent=11 // pred_check
          %p408 = pneg %p174
        $region34: #{decoder_forward.1} parent=11 // pred_check_branch
          %410 = sbr.rel (%p408) target = $region36
        $region35: #{decoder_forward.1} parent=11 // pred_region
          _
        $region36: #{decoder_forward.1} parent=11 // pred_fallthru
          _
        // Predicated region
        $region37: #{decoder_forward.1} parent=11 // pred_check
          %p411 = pneg %p195
        $region38: #{decoder_forward.1} parent=11 // pred_check_branch
          %413 = sbr.rel (%p411) target = $region40
        $region39: #{decoder_forward.1} parent=11 // pred_region
          _
        $region40: #{decoder_forward.1} parent=11 // pred_fallthru
          _
        // Predicated region
        $region41: #{decoder_forward.1} parent=11 // pred_check
          %p414 = pneg %p216
        $region42: #{decoder_forward.1} parent=11 // pred_check_branch
          %416 = sbr.rel (%p414) target = $region44
        $region43: #{decoder_forward.1} parent=11 // pred_region
          _
        $region44: #{decoder_forward.1} parent=11 // pred_fallthru
          _
        // Predicated region
        $region45: #{decoder_forward.1} parent=11 // pred_check
          %p417 = pneg %p237
        $region46: #{decoder_forward.1} parent=11 // pred_check_branch
          %419 = sbr.rel (%p417) target = $region48
        $region47: #{decoder_forward.1} parent=11 // pred_region
          _
        $region48: #{decoder_forward.1} parent=11 // pred_fallthru
          _
        // Predicated region
        $region49: #{decoder_forward.1} parent=11 // pred_check
          %p420 = pneg %p258
        $region50: #{decoder_forward.1} parent=11 // pred_check_branch
          %422 = sbr.rel (%p420) target = $region52
        $region51: #{decoder_forward.1} parent=11 // pred_region
          _
        $region52: #{decoder_forward.1} parent=11 // pred_fallthru
          _
        // Predicated region
        $region53: #{decoder_forward.1} parent=11 // pred_check
          %p423 = pneg %p279
        $region54: #{decoder_forward.1} parent=11 // pred_check_branch
          %425 = sbr.rel (%p423) target = $region56
        $region55: #{decoder_forward.1} parent=11 // pred_region
          _
        $region56: #{decoder_forward.1} parent=11 // pred_fallthru
          _
        // Predicated region
        $region57: #{decoder_forward.1} parent=11 // pred_check
          %p426 = pneg %p300
        $region58: #{decoder_forward.1} parent=11 // pred_check_branch
          %428 = sbr.rel (%p426) target = $region60
        $region59: #{decoder_forward.1} parent=11 // pred_region
          _
        $region60: #{decoder_forward.1} parent=11 // pred_fallthru
          _
        // Predicated region
        $region61: #{decoder_forward.1} parent=11 // pred_check
          %p429 = pneg %p321
        $region62: #{decoder_forward.1} parent=11 // pred_check_branch
          %431 = sbr.rel (%p429) target = $region64
        $region63: #{decoder_forward.1} parent=11 // pred_region
          _
        $region64: #{decoder_forward.1} parent=11 // pred_fallthru
          _
        // Predicated region
        $region65: #{decoder_forward.1} parent=11 // pred_check
          %p432 = pneg %p342
        $region66: #{decoder_forward.1} parent=11 // pred_check_branch
          %434 = sbr.rel (%p432) target = $region68
        $region67: #{decoder_forward.1} parent=11 // pred_region
          _
        $region68: #{decoder_forward.1} parent=11 // pred_fallthru
          _
      $region12: #{decoder_forward.1} parent=5 // pred_fallthru
        _
      %p435 = scmp.lt.s32.totalorder %s22, 2
      // Predicated region
      $region69: #{decoder_forward.1} parent=5 // pred_check
        %p436 = pneg %p435
      $region70: #{decoder_forward.1} parent=5 // pred_check_branch
        %438 = sbr.rel (%p436) target = $region72
      $region71: #{decoder_forward.1} parent=5 // pred_region
        // Predicated region
        $region73: #{decoder_forward.1} parent=71 // pred_check
          %p439 = pneg %p42
        $region74: #{decoder_forward.1} parent=71 // pred_check_branch
          %441 = sbr.rel (%p439) target = $region76
        $region75: #{decoder_forward.1} parent=71 // pred_region
          %p442 = scmp.lt.s32.totalorder %s22, 1
          %s443 = scalar_select %p442, %s22, 1
          %s444 = smul.addr %s443, 3
          %s445 = smul.addr %s444, 2
          %s446 = scalar_lea.vmem %s0, %s445
        $region76: #{decoder_forward.1} parent=71 // pred_fallthru
          _
      $region72: #{decoder_forward.1} parent=5 // pred_fallthru
        _
      %p447 = scmp.le.s32.totalorder 1, %s22
      %p448 = scmp.lt.s32.totalorder %s22, 3
      %p449 = pnand %p447, %p448
      %p450 = pneg %p449
      // Predicated region
      $region77: #{decoder_forward.1} parent=5 // pred_check
        _
      $region78: #{decoder_forward.1} parent=5 // pred_check_branch
        %452 = sbr.rel (%p449) target = $region80
      $region79: #{decoder_forward.1} parent=5 // pred_region
        %s453 = ssub.s32 %s22, 1
        // Predicated region
        $region81: #{decoder_forward.1} parent=79 // pred_check
          %p454 = pneg %p69
        $region82: #{decoder_forward.1} parent=79 // pred_check_branch
          %456 = sbr.rel (%p454) target = $region84
        $region83: #{decoder_forward.1} parent=79 // pred_region
          %457 = dma.done [#allocation3], 23040
        $region84: #{decoder_forward.1} parent=79 // pred_fallthru
          _
        %p458 = scmp.lt.s32.totalorder %s27, 1
        %s459 = scalar_select %p458, %s27, 1
        %s460 = smul.addr %s459, 3
        %s461 = smul.addr %s460, 2
        %s462 = scalar_lea.vmem %s0, %s461
        %p463 = pneg %p48
        %p464 = pneg %p45
        %p465 = pneg %p69
        %p466 = pneg %p66
        %p467 = pneg %p90
        %p468 = pneg %p87
        %p469 = pneg %p111
        %p470 = pneg %p108
        %p471 = pneg %p132
        %p472 = pneg %p129
        %p473 = pneg %p153
        %p474 = pneg %p150
        %p475 = pneg %p174
        %p476 = pneg %p171
        %p477 = pneg %p195
        %p478 = pneg %p192
        %p479 = pneg %p216
        %p480 = pneg %p213
        %p481 = pneg %p237
        %p482 = pneg %p234
        %p483 = pneg %p258
        %p484 = pneg %p255
        %p485 = pneg %p279
        %p486 = pneg %p276
        %p487 = pneg %p300
        %p488 = pneg %p297
        %p489 = pneg %p321
        %p490 = pneg %p318
        %p491 = pneg %p342
        %p492 = pneg %p339
        %p493 = pneg %p368
        %p494 = pneg %p365
        %p495 = scmp.lt.s32.totalorder %s27, 1
        %s496 = scalar_select %p495, %s27, 1
        %s497 = smul.addr %s496, 9
        %s498 = smul.addr %s497, 4
        %s499 = scalar_lea.vmem %s15, %s498
        %p500 = scmp.lt.s32.totalorder %s27, 1
        %s501 = scalar_select %p500, %s27, 1
        %s502 = smul.addr %s501, 3
        %s503 = smul.addr %s502, 2
        %s504 = scalar_lea.vmem %s0, %s503
        %p505 = scmp.lt.s32.totalorder %s27, 1
        %s506 = scalar_select %p505, %s27, 1
        %s507 = smul.addr %s506, 9
        %s508 = smul.addr %s507, 4
        %s509 = scalar_lea.vmem %s15, %s508
        %v511 = vld [vmem:[%s504] sm:$0x3f]
        %v513 = vcombine.high %v511, %v511
        %v515 = vunpack.c.l.s4 1983009808
        %v516 = vunpack.c.0.s8 %v515
        %v517 = vlaneseq
        %v518 = vshrl.u32 %v517, 7
        %v519 = vsub.s32 %v516, %v518
        %v520 = vrot.slane %v511, %v519
        %v522 = vunpack.c.l.s4 1983009808
        %v523 = vunpack.c.0.s8 %v522
        %v524 = vlaneseq
        %v525 = vshrl.u32 %v524, 7
        %v526 = vsub.s32 %v523, %v525
        %v527 = vrot.slane %v513, %v526
        %v528 = vcombine.high %v520, %v520
        %v529 = vcombine.low %v511, %v511
        %v531 = vunpack.c.l.s4 1983009808
        %v532 = vunpack.c.0.s8 %v531
        %v533 = vlaneseq
        %v534 = vshrl.u32 %v533, 7
        %v535 = vsub.s32 %v532, %v534
        %v536 = vrot.slane %v529, %v535
        %v537 = vcombine.high %v536, %v536
        %538 = vrot.lane.b32.xlu0 %v536, 127
        %v539 = vpop.permute.xlu0 %538
        %540 = vrot.lane.b32.xlu0 %v537, 127
        %v541 = vpop.permute.xlu0 %540
        %542 = vrot.lane.b32.xlu0 %v520, 127
        %v543 = vpop.permute.xlu0 %542
        %vm544 = vcmask 1039360
        %v545 = vsel %vm544, %v539, %v541
        %v546 = vsel %vm544, %v541, %v543
        %v547 = vcombine.low %v520, %v520
        %v548 = vcombine.low %v527, %v527
        %549 = vrot.lane.b32.xlu0 %v547, 126
        %v550 = vpop.permute.xlu0 %549
        %551 = vrot.lane.b32.xlu0 %v520, 126
        %v552 = vpop.permute.xlu0 %551
        %553 = vrot.lane.b32.xlu0 %v548, 126
        %v554 = vpop.permute.xlu0 %553
        %vm555 = vcmask 1031168
        %v556 = vsel %vm555, %v550, %v552
        %v557 = vsel %vm555, %v552, %v554
        %v558 = vcombine.low %v536, %v536
        %559 = vrot.lane.b32.xlu0 %v558, 110
        %v560 = vpop.permute.xlu0 %559
        %561 = vrot.lane.b32.xlu0 %v536, 110
        %v562 = vpop.permute.xlu0 %561
        %563 = vrot.lane.b32.xlu0 %v547, 110
        %v564 = vpop.permute.xlu0 %563
        %vm565 = vcmask 900096
        %v566 = vsel %vm565, %v560, %v562
        %v567 = vsel %vm565, %v562, %v564
        %568 = vrot.lane.b32.xlu0 %v520, 109
        %v569 = vpop.permute.xlu0 %568
        %570 = vrot.lane.b32.xlu0 %v528, 109
        %v571 = vpop.permute.xlu0 %570
        %572 = vrot.lane.b32.xlu0 %v527, 109
        %v573 = vpop.permute.xlu0 %572
        %vm574 = vcmask 891904
        %v575 = vsel %vm574, %v569, %v571
        %v576 = vsel %vm574, %v571, %v573
        %577 = vrot.lane.b32.xlu0 %v536, 108
        %v578 = vpop.permute.xlu0 %577
        %579 = vrot.lane.b32.xlu0 %v537, 108
        %v580 = vpop.permute.xlu0 %579
        %581 = vrot.lane.b32.xlu0 %v520, 108
        %v582 = vpop.permute.xlu0 %581
        %vm583 = vcmask 883712
        %v584 = vsel %vm583, %v578, %v580
        %v585 = vsel %vm583, %v580, %v582
        %586 = vrot.lane.b32.xlu0 %v547, 92
        %v587 = vpop.permute.xlu0 %586
        %588 = vrot.lane.b32.xlu0 %v520, 92
        %v589 = vpop.permute.xlu0 %588
        %590 = vrot.lane.b32.xlu0 %v548, 92
        %v591 = vpop.permute.xlu0 %590
        %vm592 = vcmask 752640
        %v593 = vsel %vm592, %v587, %v589
        %v594 = vsel %vm592, %v589, %v591
        %595 = vrot.lane.b32.xlu0 %v558, 91
        %v596 = vpop.permute.xlu0 %595
        %597 = vrot.lane.b32.xlu0 %v536, 91
        %v598 = vpop.permute.xlu0 %597
        %599 = vrot.lane.b32.xlu0 %v547, 91
        %v600 = vpop.permute.xlu0 %599
        %vm601 = vcmask 744448
        %v602 = vsel %vm601, %v596, %v598
        %v603 = vsel %vm601, %v598, %v600
        %604 = vrot.lane.b32.xlu0 %v520, 90
        %v605 = vpop.permute.xlu0 %604
        %606 = vrot.lane.b32.xlu0 %v528, 90
        %v607 = vpop.permute.xlu0 %606
        %608 = vrot.lane.b32.xlu0 %v527, 90
        %v609 = vpop.permute.xlu0 %608
        %vm610 = vcmask 736256
        %v611 = vsel %vm610, %v605, %v607
        %v612 = vsel %vm610, %v607, %v609
        %vm613 = vcmask 1041408
        %v616 = vsel %vm613, %v520, %v545
        %v619 = vsel %vm613, %v528, %v546
        %v622 = vsel %vm613, %v527, %v543
        %vm623 = vcmask 1043456
        %v625 = vsel %vm623, %v616, %v556
        %v627 = vsel %vm623, %v619, %v557
        %v629 = vsel %vm623, %v622, %v554
        %vm630 = vcmask 1045504
        %v632 = vsel %vm630, %v625, %v566
        %v635 = vsel %vm630, %v627, %v567
        %v638 = vsel %vm630, %v629, %v564
        %v642 = vsel %vm613, %v575, %v584
        %v645 = vsel %vm613, %v576, %v585
        %v648 = vsel %vm613, %v573, %v582
        %v650 = vsel %vm623, %v642, %v593
        %v652 = vsel %vm623, %v645, %v594
        %v654 = vsel %vm623, %v648, %v591
        %v656 = vsel %vm630, %v650, %v602
        %v659 = vsel %vm630, %v652, %v603
        %v662 = vsel %vm630, %v654, %v600
        %v664 = vld [vmem:[%s3] sm:$0xf]
        %vm665 = vcmask 293888
        %v667 = vsel %vm665, %v664, 0
        %v670 = vsel %vm613, %v611, 0
        %v673 = vsel %vm613, %v612, 0
        %v676 = vsel %vm613, %v609, 0
        %678 = vmatprep.subr.bf16.mxu0 0
        %679 = vmatpush1.bf16.msra.mxu0 0
        %680 = vmatprep.subr.bf16.mxu0 0
        %681 = vmatpush1.bf16.msra.mxu0 0
        %682 = vmatprep.subr.bf16.mxu0 0
        %683 = vmatpush1.bf16.msra.mxu0 0
        %684 = vmatprep.subr.bf16.mxu0 0
        %685 = vmatpush1.bf16.msra.mxu0 0
        %686 = vmatprep.subr.bf16.mxu0 0
        %687 = vmatpush1.bf16.msra.mxu0 0
        %688 = vmatprep.subr.bf16.mxu0 %v673
        %689 = vmatpush1.bf16.msra.mxu0 %v670
        %690 = vmatprep.subr.bf16.mxu0 %v659
        %691 = vmatpush1.bf16.msra.mxu0 %v656
        %692 = vmatprep.subr.bf16.mxu0 %v635
        %693 = vmatpush1.bf16.msra.mxu0 %v632
        %694 = vmatprep.subr.bf16.mxu0 0
        %695 = vmatpush2.bf16.msra.mxu0 0
        %696 = vmatprep.subr.bf16.mxu0 0
        %697 = vmatpush2.bf16.msra.mxu0 0
        %698 = vmatprep.subr.bf16.mxu0 0
        %699 = vmatpush2.bf16.msra.mxu0 0
        %700 = vmatprep.subr.bf16.mxu0 0
        %701 = vmatpush2.bf16.msra.mxu0 0
        %702 = vmatprep.subr.bf16.mxu0 0
        %703 = vmatpush2.bf16.msra.mxu0 0
        %704 = vmatprep.subr.bf16.mxu0 0
        %705 = vmatpush2.bf16.msra.mxu0 0
        %706 = vmatprep.subr.bf16.mxu0 0
        %707 = vmatpush2.bf16.msra.mxu0 0
        %708 = vmatprep.subr.bf16.mxu0 0
        %709 = vmatpush2.bf16.msra.mxu0 0
        %710 = vmatprep.mubr.bf16.mxu0 0
        %711 = vmatmul.mubr.bf16.gmra.mxu0 %v667
        %v712 = vpop.f32.mrf.mxu0
        %v713 = vadd.f32 0.0, %v712
        %v714 = vpop.f32.mrf.mxu0
        %v715 = vadd.f32 0.0, %v714
        %v716 = vpop.f32.mrf.mxu0
        %v717 = vpop.f32.mrf.mxu0
        %718 = vdwg.mxu0
        %719 = vmatprep.subr.bf16.mxu0 0
        %720 = vmatpush1.bf16.msra.mxu0 0
        %721 = vmatprep.subr.bf16.mxu0 0
        %722 = vmatpush1.bf16.msra.mxu0 0
        %723 = vmatprep.subr.bf16.mxu0 0
        %724 = vmatpush1.bf16.msra.mxu0 0
        %725 = vmatprep.subr.bf16.mxu0 0
        %726 = vmatpush1.bf16.msra.mxu0 0
        %727 = vmatprep.subr.bf16.mxu0 0
        %728 = vmatpush1.bf16.msra.mxu0 0
        %729 = vmatprep.subr.bf16.mxu0 0
        %730 = vmatpush1.bf16.msra.mxu0 %v676
        %731 = vmatprep.subr.bf16.mxu0 0
        %732 = vmatpush1.bf16.msra.mxu0 %v662
        %733 = vmatprep.subr.bf16.mxu0 0
        %734 = vmatpush1.bf16.msra.mxu0 %v638
        %735 = vmatprep.subr.bf16.mxu0 0
        %736 = vmatpush2.bf16.msra.mxu0 0
        %737 = vmatprep.subr.bf16.mxu0 0
        %738 = vmatpush2.bf16.msra.mxu0 0
        %739 = vmatprep.subr.bf16.mxu0 0
        %740 = vmatpush2.bf16.msra.mxu0 0
        %741 = vmatprep.subr.bf16.mxu0 0
        %742 = vmatpush2.bf16.msra.mxu0 0
        %743 = vmatprep.subr.bf16.mxu0 0
        %744 = vmatpush2.bf16.msra.mxu0 0
        %745 = vmatprep.subr.bf16.mxu0 0
        %746 = vmatpush2.bf16.msra.mxu0 0
        %747 = vmatprep.subr.bf16.mxu0 0
        %748 = vmatpush2.bf16.msra.mxu0 0
        %749 = vmatprep.subr.bf16.mxu0 0
        %750 = vmatpush2.bf16.msra.mxu0 0
        %751 = vmatprep.mubr.bf16.mxu0 0
        %752 = vmatmul.mubr.bf16.gmra.mxu0 %v667
        %v753 = vpop.f32.mrf.mxu0
        %v754 = vadd.f32 0.0, %v753
        %v755 = vpop.f32.mrf.mxu0
        %v756 = vpop.f32.mrf.mxu0
        %v757 = vpop.f32.mrf.mxu0
        %758 = vdwg.mxu0
        %v759 = vld [vmem:[%s4] sm:$0xff]
        %761 = vset.pattern.permute.xlu0 0
        %762 = vperm.xlu0 %761, %v759
        %v763 = vpop.permute.xlu0 %762
        %v765 = vmul.f32 %v713, %v763
        %v766 = vmul.f32 %v715, %v763
        %v767 = vmul.f32 %v754, %v763
        %v768 = vld [vmem:[%s5] sm:$0xff]
        %770 = vset.pattern.permute.xlu0 0
        %771 = vperm.xlu0 %770, %v768
        %v772 = vpop.permute.xlu0 %771
        %v774 = vadd.f32 %v765, %v772
        %v775 = vadd.f32 %v766, %v772
        %v776 = vadd.f32 %v767, %v772
        %v777 = vmul.f32 %v774, 0.01
        %v778 = vmul.f32 %v775, 0.01
        %v779 = vmul.f32 %v776, 0.01
        %v780 = vmax.f32 %v774, %v777
        %v781 = vmax.f32 %v775, %v778
        %v782 = vmax.f32 %v776, %v779
        %v783 = vpack.c.bf16 %v780, %v780
        %v784 = vpack.c.bf16 %v781, %v781
        %v785 = vpack.c.bf16 %v782, %v782
        %v786 = vld [vmem:[#allocation2] sm:$0xff]
        %v787 = vld [vmem:[#allocation2 + $0x8] sm:$0xff]
        %v788 = vld [vmem:[#allocation2 + $0x10] sm:$0xff]
        %v789 = vld [vmem:[#allocation2 + $0x18] sm:$0xff]
        %v790 = vld [vmem:[#allocation2 + $0x20] sm:$0xff]
        %v791 = vld [vmem:[#allocation2 + $0x28] sm:$0xff]
        %v792 = vld [vmem:[#allocation2 + $0x30] sm:$0xff]
        %v793 = vld [vmem:[#allocation2 + $0x38] sm:$0xff]
        %v794 = vld [vmem:[#allocation2 + $0x40] sm:$0xff]
        %v795 = vld [vmem:[#allocation2 + $0x48] sm:$0xff]
        %v796 = vld [vmem:[#allocation2 + $0x50] sm:$0xff]
        %v797 = vld [vmem:[#allocation2 + $0x58] sm:$0xff]
        %v798 = vld [vmem:[#allocation2 + $0x60] sm:$0xff]
        %v799 = vld [vmem:[#allocation2 + $0x68] sm:$0xff]
        %v800 = vld [vmem:[#allocation2 + $0x70] sm:$0xff]
        %v801 = vld [vmem:[#allocation2 + $0x78] sm:$0xff]
        %v802 = vld [vmem:[#allocation2 + $0x80] sm:$0xff]
        %v803 = vld [vmem:[#allocation2 + $0x88] sm:$0xff]
        %v804 = vld [vmem:[#allocation2 + $0x90] sm:$0xff]
        %v805 = vld [vmem:[#allocation2 + $0x98] sm:$0xff]
        %v806 = vld [vmem:[#allocation2 + $0xa0] sm:$0xff]
        %v807 = vld [vmem:[#allocation2 + $0xa8] sm:$0xff]
        %v808 = vld [vmem:[#allocation2 + $0xb0] sm:$0xff]
        %v809 = vld [vmem:[#allocation2 + $0xb8] sm:$0xff]
        %v810 = vld [vmem:[#allocation2 + $0xc0] sm:$0xff]
        %v811 = vld [vmem:[#allocation2 + $0xc8] sm:$0xff]
        %v812 = vld [vmem:[#allocation2 + $0xd0] sm:$0xff]
        %v813 = vld [vmem:[#allocation2 + $0xd8] sm:$0xff]
        %v814 = vld [vmem:[#allocation2 + $0xe0] sm:$0xff]
        %v815 = vld [vmem:[#allocation2 + $0xe8] sm:$0xff]
        %v816 = vld [vmem:[#allocation2 + $0xf0] sm:$0xff]
        %v817 = vld [vmem:[#allocation2 + $0xf8] sm:$0xff]
        %v818 = vld [vmem:[#allocation2 + $0x100] sm:$0xff]
        %v819 = vld [vmem:[#allocation2 + $0x108] sm:$0xff]
        %v820 = vld [vmem:[#allocation2 + $0x110] sm:$0xff]
        %v821 = vld [vmem:[#allocation2 + $0x118] sm:$0xff]
        %v822 = vld [vmem:[#allocation2 + $0x120] sm:$0xff]
        %v823 = vld [vmem:[#allocation2 + $0x128] sm:$0xff]
        %v824 = vld [vmem:[#allocation2 + $0x130] sm:$0xff]
        %v825 = vld [vmem:[#allocation2 + $0x138] sm:$0xff]
        %v826 = vld [vmem:[#allocation2 + $0x140] sm:$0xff]
        %v827 = vld [vmem:[#allocation2 + $0x148] sm:$0xff]
        %v828 = vld [vmem:[#allocation2 + $0x150] sm:$0xff]
        %v829 = vld [vmem:[#allocation2 + $0x158] sm:$0xff]
        %v830 = vld [vmem:[#allocation2 + $0x160] sm:$0xff]
        %v831 = vld [vmem:[#allocation2 + $0x168] sm:$0xff]
        %v832 = vld [vmem:[#allocation2 + $0x170] sm:$0xff]
        %v833 = vld [vmem:[#allocation2 + $0x178] sm:$0xff]
        %v834 = vld [vmem:[#allocation2 + $0x180] sm:$0xff]
        %v835 = vld [vmem:[#allocation2 + $0x188] sm:$0xff]
        %v836 = vld [vmem:[#allocation2 + $0x190] sm:$0xff]
        %v837 = vld [vmem:[#allocation2 + $0x198] sm:$0xff]
        %v838 = vld [vmem:[#allocation2 + $0x1a0] sm:$0xff]
        %v839 = vld [vmem:[#allocation2 + $0x1a8] sm:$0xff]
        %v840 = vld [vmem:[#allocation2 + $0x1b0] sm:$0xff]
        %v841 = vld [vmem:[#allocation2 + $0x1b8] sm:$0xff]
        %v842 = vld [vmem:[#allocation2 + $0x1c0] sm:$0xff]
        %v843 = vld [vmem:[#allocation2 + $0x1c8] sm:$0xff]
        %v844 = vld [vmem:[#allocation2 + $0x1d0] sm:$0xff]
        %v845 = vld [vmem:[#allocation2 + $0x1d8] sm:$0xff]
        %v846 = vld [vmem:[#allocation2 + $0x1e0] sm:$0xff]
        %v847 = vld [vmem:[#allocation2 + $0x1e8] sm:$0xff]
        %v848 = vld [vmem:[#allocation2 + $0x1f0] sm:$0xff]
        %v849 = vld [vmem:[#allocation2 + $0x1f8] sm:$0xff]
        %v850 = vld [vmem:[#allocation2 + $0x200] sm:$0xff]
        %v851 = vld [vmem:[#allocation2 + $0x208] sm:$0xff]
        %v852 = vld [vmem:[#allocation2 + $0x210] sm:$0xff]
        %v853 = vld [vmem:[#allocation2 + $0x218] sm:$0xff]
        %v854 = vld [vmem:[#allocation2 + $0x220] sm:$0xff]
        %v855 = vld [vmem:[#allocation2 + $0x228] sm:$0xff]
        %v856 = vld [vmem:[#allocation2 + $0x230] sm:$0xff]
        %v857 = vld [vmem:[#allocation2 + $0x238] sm:$0xff]
        %v858 = vld [vmem:[#allocation2 + $0x240] sm:$0xff]
        %v859 = vld [vmem:[#allocation2 + $0x248] sm:$0xff]
        %v860 = vld [vmem:[#allocation2 + $0x250] sm:$0xff]
        %v861 = vld [vmem:[#allocation2 + $0x258] sm:$0xff]
        %v862 = vld [vmem:[#allocation2 + $0x260] sm:$0xff]
        %v863 = vld [vmem:[#allocation2 + $0x268] sm:$0xff]
        %v864 = vld [vmem:[#allocation2 + $0x270] sm:$0xff]
        %v865 = vld [vmem:[#allocation2 + $0x278] sm:$0xff]
        %v866 = vld [vmem:[#allocation2 + $0x280] sm:$0xff]
        %v867 = vld [vmem:[#allocation2 + $0x288] sm:$0xff]
        %v868 = vld [vmem:[#allocation2 + $0x290] sm:$0xff]
        %v869 = vld [vmem:[#allocation2 + $0x298] sm:$0xff]
        %v870 = vld [vmem:[#allocation2 + $0x2a0] sm:$0xff]
        %v871 = vld [vmem:[#allocation2 + $0x2a8] sm:$0xff]
        %v872 = vld [vmem:[#allocation2 + $0x2b0] sm:$0xff]
        %v873 = vld [vmem:[#allocation2 + $0x2b8] sm:$0xff]
        %v874 = vld [vmem:[#allocation2 + $0x2c0] sm:$0xff]
        %v875 = vld [vmem:[#allocation2 + $0x2c8] sm:$0xff]
        %v876 = vld [vmem:[#allocation2 + $0x2d0] sm:$0xff]
        %v877 = vld [vmem:[#allocation2 + $0x2d8] sm:$0xff]
        %v878 = vld [vmem:[#allocation2 + $0x2e0] sm:$0xff]
        %v879 = vld [vmem:[#allocation2 + $0x2e8] sm:$0xff]
        %v880 = vld [vmem:[#allocation2 + $0x2f0] sm:$0xff]
        %v881 = vld [vmem:[#allocation2 + $0x2f8] sm:$0xff]
        %v882 = vld [vmem:[#allocation2 + $0x300] sm:$0xff]
        %v883 = vld [vmem:[#allocation2 + $0x308] sm:$0xff]
        %v884 = vld [vmem:[#allocation2 + $0x310] sm:$0xff]
        %v885 = vld [vmem:[#allocation2 + $0x318] sm:$0xff]
        %v886 = vld [vmem:[#allocation2 + $0x320] sm:$0xff]
        %v887 = vld [vmem:[#allocation2 + $0x328] sm:$0xff]
        %v888 = vld [vmem:[#allocation2 + $0x330] sm:$0xff]
        %v889 = vld [vmem:[#allocation2 + $0x338] sm:$0xff]
        %v890 = vld [vmem:[#allocation2 + $0x340] sm:$0xff]
        %v891 = vld [vmem:[#allocation2 + $0x348] sm:$0xff]
        %v892 = vld [vmem:[#allocation2 + $0x350] sm:$0xff]
        %v893 = vld [vmem:[#allocation2 + $0x358] sm:$0xff]
        %v894 = vld [vmem:[#allocation2 + $0x360] sm:$0xff]
        %v895 = vld [vmem:[#allocation2 + $0x368] sm:$0xff]
        %v896 = vld [vmem:[#allocation2 + $0x370] sm:$0xff]
        %v897 = vld [vmem:[#allocation2 + $0x378] sm:$0xff]
        %v898 = vld [vmem:[#allocation2 + $0x380] sm:$0xff]
        %v899 = vld [vmem:[#allocation2 + $0x388] sm:$0xff]
        %v900 = vld [vmem:[#allocation2 + $0x390] sm:$0xff]
        %v901 = vld [vmem:[#allocation2 + $0x398] sm:$0xff]
        %v902 = vld [vmem:[#allocation2 + $0x3a0] sm:$0xff]
        %v903 = vld [vmem:[#allocation2 + $0x3a8] sm:$0xff]
        %v904 = vld [vmem:[#allocation2 + $0x3b0] sm:$0xff]
        %v905 = vld [vmem:[#allocation2 + $0x3b8] sm:$0xff]
        %v906 = vld [vmem:[#allocation2 + $0x3c0] sm:$0xff]
        %v907 = vld [vmem:[#allocation2 + $0x3c8] sm:$0xff]
        %v908 = vld [vmem:[#allocation2 + $0x3d0] sm:$0xff]
        %v909 = vld [vmem:[#allocation2 + $0x3d8] sm:$0xff]
        %v910 = vld [vmem:[#allocation2 + $0x3e0] sm:$0xff]
        %v911 = vld [vmem:[#allocation2 + $0x3e8] sm:$0xff]
        %v912 = vld [vmem:[#allocation2 + $0x3f0] sm:$0xff]
        %v913 = vld [vmem:[#allocation2 + $0x3f8] sm:$0xff]
        %v914 = vld [vmem:[#allocation2 + $0x400] sm:$0xff]
        %v915 = vld [vmem:[#allocation2 + $0x408] sm:$0xff]
        %v916 = vld [vmem:[#allocation2 + $0x410] sm:$0xff]
        %v917 = vld [vmem:[#allocation2 + $0x418] sm:$0xff]
        %v918 = vld [vmem:[#allocation2 + $0x420] sm:$0xff]
        %v919 = vld [vmem:[#allocation2 + $0x428] sm:$0xff]
        %v920 = vld [vmem:[#allocation2 + $0x430] sm:$0xff]
        %v921 = vld [vmem:[#allocation2 + $0x438] sm:$0xff]
        %v922 = vld [vmem:[#allocation2 + $0x440] sm:$0xff]
        %v923 = vld [vmem:[#allocation2 + $0x448] sm:$0xff]
        %v924 = vld [vmem:[#allocation2 + $0x450] sm:$0xff]
        %v925 = vld [vmem:[#allocation2 + $0x458] sm:$0xff]
        %v926 = vld [vmem:[#allocation2 + $0x460] sm:$0xff]
        %v927 = vld [vmem:[#allocation2 + $0x468] sm:$0xff]
        %v928 = vld [vmem:[#allocation2 + $0x470] sm:$0xff]
        %v929 = vld [vmem:[#allocation2 + $0x478] sm:$0xff]
        %v930 = vld [vmem:[#allocation2 + $0x480] sm:$0xff]
        %v931 = vld [vmem:[#allocation2 + $0x488] sm:$0xff]
        %v932 = vld [vmem:[#allocation2 + $0x490] sm:$0xff]
        %v933 = vld [vmem:[#allocation2 + $0x498] sm:$0xff]
        %v934 = vld [vmem:[#allocation2 + $0x4a0] sm:$0xff]
        %v935 = vld [vmem:[#allocation2 + $0x4a8] sm:$0xff]
        %v936 = vld [vmem:[#allocation2 + $0x4b0] sm:$0xff]
        %v937 = vld [vmem:[#allocation2 + $0x4b8] sm:$0xff]
        %v938 = vld [vmem:[#allocation2 + $0x4c0] sm:$0xff]
        %v939 = vld [vmem:[#allocation2 + $0x4c8] sm:$0xff]
        %v940 = vld [vmem:[#allocation2 + $0x4d0] sm:$0xff]
        %v941 = vld [vmem:[#allocation2 + $0x4d8] sm:$0xff]
        %v942 = vld [vmem:[#allocation2 + $0x4e0] sm:$0xff]
        %v943 = vld [vmem:[#allocation2 + $0x4e8] sm:$0xff]
        %v944 = vld [vmem:[#allocation2 + $0x4f0] sm:$0xff]
        %v945 = vld [vmem:[#allocation2 + $0x4f8] sm:$0xff]
        %v946 = vld [vmem:[#allocation2 + $0x500] sm:$0xff]
        %v947 = vld [vmem:[#allocation2 + $0x508] sm:$0xff]
        %v948 = vld [vmem:[#allocation2 + $0x510] sm:$0xff]
        %v949 = vld [vmem:[#allocation2 + $0x518] sm:$0xff]
        %v950 = vld [vmem:[#allocation2 + $0x520] sm:$0xff]
        %v951 = vld [vmem:[#allocation2 + $0x528] sm:$0xff]
        %v952 = vld [vmem:[#allocation2 + $0x530] sm:$0xff]
        %v953 = vld [vmem:[#allocation2 + $0x538] sm:$0xff]
        %v954 = vld [vmem:[#allocation2 + $0x540] sm:$0xff]
        %v955 = vld [vmem:[#allocation2 + $0x548] sm:$0xff]
        %v956 = vld [vmem:[#allocation2 + $0x550] sm:$0xff]
        %v957 = vld [vmem:[#allocation2 + $0x558] sm:$0xff]
        %v958 = vld [vmem:[#allocation2 + $0x560] sm:$0xff]
        %v959 = vld [vmem:[#allocation2 + $0x568] sm:$0xff]
        %v960 = vld [vmem:[#allocation2 + $0x570] sm:$0xff]
        %v961 = vld [vmem:[#allocation2 + $0x578] sm:$0xff]
        %v962 = vld [vmem:[#allocation2 + $0x580] sm:$0xff]
        %v963 = vld [vmem:[#allocation2 + $0x588] sm:$0xff]
        %v964 = vld [vmem:[#allocation2 + $0x590] sm:$0xff]
        %v965 = vld [vmem:[#allocation2 + $0x598] sm:$0xff]
        %v1146 = vunpack.c.l.b16 %v786
        %v1147 = vunpack.c.h.b16 %v786
        %v1148 = vunpack.c.l.b16 %v787
        %v1149 = vunpack.c.h.b16 %v787
        %v1150 = vunpack.c.l.b16 %v788
        %v1151 = vunpack.c.h.b16 %v788
        %v1152 = vunpack.c.l.b16 %v789
        %v1153 = vunpack.c.h.b16 %v789
        %v1154 = vunpack.c.l.b16 %v790
        %v1155 = vunpack.c.h.b16 %v790
        %v1156 = vunpack.c.l.b16 %v791
        %v1157 = vunpack.c.h.b16 %v791
        %v1158 = vunpack.c.l.b16 %v792
        %v1159 = vunpack.c.h.b16 %v792
        %v1160 = vunpack.c.l.b16 %v793
        %v1161 = vunpack.c.h.b16 %v793
        %v1162 = vunpack.c.l.b16 %v794
        %v1163 = vunpack.c.h.b16 %v794
        %v1164 = vunpack.c.l.b16 %v795
        %v1165 = vunpack.c.h.b16 %v795
        %v1166 = vunpack.c.l.b16 %v796
        %v1167 = vunpack.c.h.b16 %v796
        %v1168 = vunpack.c.l.b16 %v797
        %v1169 = vunpack.c.h.b16 %v797
        %v1170 = vunpack.c.l.b16 %v798
        %v1171 = vunpack.c.h.b16 %v798
        %v1172 = vunpack.c.l.b16 %v799
        %v1173 = vunpack.c.h.b16 %v799
        %v1174 = vunpack.c.l.b16 %v800
        %v1175 = vunpack.c.h.b16 %v800
        %v1176 = vunpack.c.l.b16 %v801
        %v1177 = vunpack.c.h.b16 %v801
        %v1178 = vunpack.c.l.b16 %v802
        %v1179 = vunpack.c.h.b16 %v802
        %v1180 = vunpack.c.l.b16 %v803
        %v1181 = vunpack.c.h.b16 %v803
        %v1182 = vunpack.c.l.b16 %v804
        %v1183 = vunpack.c.h.b16 %v804
        %v1184 = vunpack.c.l.b16 %v805
        %v1185 = vunpack.c.h.b16 %v805
        %v1186 = vunpack.c.l.b16 %v806
        %v1187 = vunpack.c.h.b16 %v806
        %v1188 = vunpack.c.l.b16 %v807
        %v1189 = vunpack.c.h.b16 %v807
        %v1190 = vunpack.c.l.b16 %v808
        %v1191 = vunpack.c.h.b16 %v808
        %v1192 = vunpack.c.l.b16 %v809
        %v1193 = vunpack.c.h.b16 %v809
        %v1194 = vunpack.c.l.b16 %v810
        %v1195 = vunpack.c.h.b16 %v810
        %v1196 = vunpack.c.l.b16 %v811
        %v1197 = vunpack.c.h.b16 %v811
        %v1198 = vunpack.c.l.b16 %v812
        %v1199 = vunpack.c.h.b16 %v812
        %v1200 = vunpack.c.l.b16 %v813
        %v1201 = vunpack.c.h.b16 %v813
        %v1202 = vunpack.c.l.b16 %v814
        %v1203 = vunpack.c.h.b16 %v814
        %v1204 = vunpack.c.l.b16 %v815
        %v1205 = vunpack.c.h.b16 %v815
        %v1206 = vunpack.c.l.b16 %v816
        %v1207 = vunpack.c.h.b16 %v816
        %v1208 = vunpack.c.l.b16 %v817
        %v1209 = vunpack.c.h.b16 %v817
        %v1210 = vunpack.c.l.b16 %v818
        %v1211 = vunpack.c.h.b16 %v818
        %v1212 = vunpack.c.l.b16 %v819
        %v1213 = vunpack.c.h.b16 %v819
        %v1214 = vunpack.c.l.b16 %v820
        %v1215 = vunpack.c.h.b16 %v820
        %v1216 = vunpack.c.l.b16 %v821
        %v1217 = vunpack.c.h.b16 %v821
        %v1218 = vunpack.c.l.b16 %v822
        %v1219 = vunpack.c.h.b16 %v822
        %v1220 = vunpack.c.l.b16 %v823
        %v1221 = vunpack.c.h.b16 %v823
        %v1222 = vunpack.c.l.b16 %v824
        %v1223 = vunpack.c.h.b16 %v824
        %v1224 = vunpack.c.l.b16 %v825
        %v1225 = vunpack.c.h.b16 %v825
        %v1226 = vunpack.c.l.b16 %v826
        %v1227 = vunpack.c.h.b16 %v826
        %v1228 = vunpack.c.l.b16 %v827
        %v1229 = vunpack.c.h.b16 %v827
        %v1230 = vunpack.c.l.b16 %v828
        %v1231 = vunpack.c.h.b16 %v828
        %v1232 = vunpack.c.l.b16 %v829
        %v1233 = vunpack.c.h.b16 %v829
        %v1234 = vunpack.c.l.b16 %v830
        %v1235 = vunpack.c.h.b16 %v830
        %v1236 = vunpack.c.l.b16 %v831
        %v1237 = vunpack.c.h.b16 %v831
        %v1238 = vunpack.c.l.b16 %v832
        %v1239 = vunpack.c.h.b16 %v832
        %v1240 = vunpack.c.l.b16 %v833
        %v1241 = vunpack.c.h.b16 %v833
        %v1242 = vunpack.c.l.b16 %v834
        %v1243 = vunpack.c.h.b16 %v834
        %v1244 = vunpack.c.l.b16 %v835
        %v1245 = vunpack.c.h.b16 %v835
        %v1246 = vunpack.c.l.b16 %v836
        %v1247 = vunpack.c.h.b16 %v836
        %v1248 = vunpack.c.l.b16 %v837
        %v1249 = vunpack.c.h.b16 %v837
        %v1250 = vunpack.c.l.b16 %v838
        %v1251 = vunpack.c.h.b16 %v838
        %v1252 = vunpack.c.l.b16 %v839
        %v1253 = vunpack.c.h.b16 %v839
        %v1254 = vunpack.c.l.b16 %v840
        %v1255 = vunpack.c.h.b16 %v840
        %v1256 = vunpack.c.l.b16 %v841
        %v1257 = vunpack.c.h.b16 %v841
        %v1258 = vunpack.c.l.b16 %v842
        %v1259 = vunpack.c.h.b16 %v842
        %v1260 = vunpack.c.l.b16 %v843
        %v1261 = vunpack.c.h.b16 %v843
        %v1262 = vunpack.c.l.b16 %v844
        %v1263 = vunpack.c.h.b16 %v844
        %v1264 = vunpack.c.l.b16 %v845
        %v1265 = vunpack.c.h.b16 %v845
        %v1266 = vunpack.c.l.b16 %v846
        %v1267 = vunpack.c.h.b16 %v846
        %v1268 = vunpack.c.l.b16 %v847
        %v1269 = vunpack.c.h.b16 %v847
        %v1270 = vunpack.c.l.b16 %v848
        %v1271 = vunpack.c.h.b16 %v848
        %v1272 = vunpack.c.l.b16 %v849
        %v1273 = vunpack.c.h.b16 %v849
        %v1274 = vunpack.c.l.b16 %v850
        %v1275 = vunpack.c.h.b16 %v850
        %v1276 = vunpack.c.l.b16 %v851
        %v1277 = vunpack.c.h.b16 %v851
        %v1278 = vunpack.c.l.b16 %v852
        %v1279 = vunpack.c.h.b16 %v852
        %v1280 = vunpack.c.l.b16 %v853
        %v1281 = vunpack.c.h.b16 %v853
        %v1282 = vunpack.c.l.b16 %v854
        %v1283 = vunpack.c.h.b16 %v854
        %v1284 = vunpack.c.l.b16 %v855
        %v1285 = vunpack.c.h.b16 %v855
        %v1286 = vunpack.c.l.b16 %v856
        %v1287 = vunpack.c.h.b16 %v856
        %v1288 = vunpack.c.l.b16 %v857
        %v1289 = vunpack.c.h.b16 %v857
        %v1290 = vunpack.c.l.b16 %v858
        %v1291 = vunpack.c.h.b16 %v858
        %v1292 = vunpack.c.l.b16 %v859
        %v1293 = vunpack.c.h.b16 %v859
        %v1294 = vunpack.c.l.b16 %v860
        %v1295 = vunpack.c.h.b16 %v860
        %v1296 = vunpack.c.l.b16 %v861
        %v1297 = vunpack.c.h.b16 %v861
        %v1298 = vunpack.c.l.b16 %v862
        %v1299 = vunpack.c.h.b16 %v862
        %v1300 = vunpack.c.l.b16 %v863
        %v1301 = vunpack.c.h.b16 %v863
        %v1302 = vunpack.c.l.b16 %v864
        %v1303 = vunpack.c.h.b16 %v864
        %v1304 = vunpack.c.l.b16 %v865
        %v1305 = vunpack.c.h.b16 %v865
        %v1306 = vunpack.c.l.b16 %v866
        %v1307 = vunpack.c.h.b16 %v866
        %v1308 = vunpack.c.l.b16 %v867
        %v1309 = vunpack.c.h.b16 %v867
        %v1310 = vunpack.c.l.b16 %v868
        %v1311 = vunpack.c.h.b16 %v868
        %v1312 = vunpack.c.l.b16 %v869
        %v1313 = vunpack.c.h.b16 %v869
        %v1314 = vunpack.c.l.b16 %v870
        %v1315 = vunpack.c.h.b16 %v870
        %v1316 = vunpack.c.l.b16 %v871
        %v1317 = vunpack.c.h.b16 %v871
        %v1318 = vunpack.c.l.b16 %v872
        %v1319 = vunpack.c.h.b16 %v872
        %v1320 = vunpack.c.l.b16 %v873
        %v1321 = vunpack.c.h.b16 %v873
        %v1322 = vunpack.c.l.b16 %v874
        %v1323 = vunpack.c.h.b16 %v874
        %v1324 = vunpack.c.l.b16 %v875
        %v1325 = vunpack.c.h.b16 %v875
        %v1326 = vunpack.c.l.b16 %v876
        %v1327 = vunpack.c.h.b16 %v876
        %v1328 = vunpack.c.l.b16 %v877
        %v1329 = vunpack.c.h.b16 %v877
        %v1330 = vunpack.c.l.b16 %v878
        %v1331 = vunpack.c.h.b16 %v878
        %v1332 = vunpack.c.l.b16 %v879
        %v1333 = vunpack.c.h.b16 %v879
        %v1334 = vunpack.c.l.b16 %v880
        %v1335 = vunpack.c.h.b16 %v880
        %v1336 = vunpack.c.l.b16 %v881
        %v1337 = vunpack.c.h.b16 %v881
        %v1338 = vunpack.c.l.b16 %v882
        %v1339 = vunpack.c.h.b16 %v882
        %v1340 = vunpack.c.l.b16 %v883
        %v1341 = vunpack.c.h.b16 %v883
        %v1342 = vunpack.c.l.b16 %v884
        %v1343 = vunpack.c.h.b16 %v884
        %v1344 = vunpack.c.l.b16 %v885
        %v1345 = vunpack.c.h.b16 %v885
        %v1346 = vunpack.c.l.b16 %v886
        %v1347 = vunpack.c.h.b16 %v886
        %v1348 = vunpack.c.l.b16 %v887
        %v1349 = vunpack.c.h.b16 %v887
        %v1350 = vunpack.c.l.b16 %v888
        %v1351 = vunpack.c.h.b16 %v888
        %v1352 = vunpack.c.l.b16 %v889
        %v1353 = vunpack.c.h.b16 %v889
        %v1354 = vunpack.c.l.b16 %v890
        %v1355 = vunpack.c.h.b16 %v890
        %v1356 = vunpack.c.l.b16 %v891
        %v1357 = vunpack.c.h.b16 %v891
        %v1358 = vunpack.c.l.b16 %v892
        %v1359 = vunpack.c.h.b16 %v892
        %v1360 = vunpack.c.l.b16 %v893
        %v1361 = vunpack.c.h.b16 %v893
        %v1362 = vunpack.c.l.b16 %v894
        %v1363 = vunpack.c.h.b16 %v894
        %v1364 = vunpack.c.l.b16 %v895
        %v1365 = vunpack.c.h.b16 %v895
        %v1366 = vunpack.c.l.b16 %v896
        %v1367 = vunpack.c.h.b16 %v896
        %v1368 = vunpack.c.l.b16 %v897
        %v1369 = vunpack.c.h.b16 %v897
        %v1370 = vunpack.c.l.b16 %v898
        %v1371 = vunpack.c.h.b16 %v898
        %v1372 = vunpack.c.l.b16 %v899
        %v1373 = vunpack.c.h.b16 %v899
        %v1374 = vunpack.c.l.b16 %v900
        %v1375 = vunpack.c.h.b16 %v900
        %v1376 = vunpack.c.l.b16 %v901
        %v1377 = vunpack.c.h.b16 %v901
        %v1378 = vunpack.c.l.b16 %v902
        %v1379 = vunpack.c.h.b16 %v902
        %v1380 = vunpack.c.l.b16 %v903
        %v1381 = vunpack.c.h.b16 %v903
        %v1382 = vunpack.c.l.b16 %v904
        %v1383 = vunpack.c.h.b16 %v904
        %v1384 = vunpack.c.l.b16 %v905
        %v1385 = vunpack.c.h.b16 %v905
        %v1386 = vunpack.c.l.b16 %v906
        %v1387 = vunpack.c.h.b16 %v906
        %v1388 = vunpack.c.l.b16 %v907
        %v1389 = vunpack.c.h.b16 %v907
        %v1390 = vunpack.c.l.b16 %v908
        %v1391 = vunpack.c.h.b16 %v908
        %v1392 = vunpack.c.l.b16 %v909
        %v1393 = vunpack.c.h.b16 %v909
        %v1394 = vunpack.c.l.b16 %v910
        %v1395 = vunpack.c.h.b16 %v910
        %v1396 = vunpack.c.l.b16 %v911
        %v1397 = vunpack.c.h.b16 %v911
        %v1398 = vunpack.c.l.b16 %v912
        %v1399 = vunpack.c.h.b16 %v912
        %v1400 = vunpack.c.l.b16 %v913
        %v1401 = vunpack.c.h.b16 %v913
        %v1402 = vunpack.c.l.b16 %v914
        %v1403 = vunpack.c.h.b16 %v914
        %v1404 = vunpack.c.l.b16 %v915
        %v1405 = vunpack.c.h.b16 %v915
        %v1406 = vunpack.c.l.b16 %v916
        %v1407 = vunpack.c.h.b16 %v916
        %v1408 = vunpack.c.l.b16 %v917
        %v1409 = vunpack.c.h.b16 %v917
        %v1410 = vunpack.c.l.b16 %v918
        %v1411 = vunpack.c.h.b16 %v918
        %v1412 = vunpack.c.l.b16 %v919
        %v1413 = vunpack.c.h.b16 %v919
        %v1414 = vunpack.c.l.b16 %v920
        %v1415 = vunpack.c.h.b16 %v920
        %v1416 = vunpack.c.l.b16 %v921
        %v1417 = vunpack.c.h.b16 %v921
        %v1418 = vunpack.c.l.b16 %v922
        %v1419 = vunpack.c.h.b16 %v922
        %v1420 = vunpack.c.l.b16 %v923
        %v1421 = vunpack.c.h.b16 %v923
        %v1422 = vunpack.c.l.b16 %v924
        %v1423 = vunpack.c.h.b16 %v924
        %v1424 = vunpack.c.l.b16 %v925
        %v1425 = vunpack.c.h.b16 %v925
        %v1426 = vunpack.c.l.b16 %v926
        %v1427 = vunpack.c.h.b16 %v926
        %v1428 = vunpack.c.l.b16 %v927
        %v1429 = vunpack.c.h.b16 %v927
        %v1430 = vunpack.c.l.b16 %v928
        %v1431 = vunpack.c.h.b16 %v928
        %v1432 = vunpack.c.l.b16 %v929
        %v1433 = vunpack.c.h.b16 %v929
        %v1434 = vunpack.c.l.b16 %v930
        %v1435 = vunpack.c.h.b16 %v930
        %v1436 = vunpack.c.l.b16 %v931
        %v1437 = vunpack.c.h.b16 %v931
        %v1438 = vunpack.c.l.b16 %v932
        %v1439 = vunpack.c.h.b16 %v932
        %v1440 = vunpack.c.l.b16 %v933
        %v1441 = vunpack.c.h.b16 %v933
        %v1442 = vunpack.c.l.b16 %v934
        %v1443 = vunpack.c.h.b16 %v934
        %v1444 = vunpack.c.l.b16 %v935
        %v1445 = vunpack.c.h.b16 %v935
        %v1446 = vunpack.c.l.b16 %v936
        %v1447 = vunpack.c.h.b16 %v936
        %v1448 = vunpack.c.l.b16 %v937
        %v1449 = vunpack.c.h.b16 %v937
        %v1450 = vunpack.c.l.b16 %v938
        %v1451 = vunpack.c.h.b16 %v938
        %v1452 = vunpack.c.l.b16 %v939
        %v1453 = vunpack.c.h.b16 %v939
        %v1454 = vunpack.c.l.b16 %v940
        %v1455 = vunpack.c.h.b16 %v940
        %v1456 = vunpack.c.l.b16 %v941
        %v1457 = vunpack.c.h.b16 %v941
        %v1458 = vunpack.c.l.b16 %v942
        %v1459 = vunpack.c.h.b16 %v942
        %v1460 = vunpack.c.l.b16 %v943
        %v1461 = vunpack.c.h.b16 %v943
        %v1462 = vunpack.c.l.b16 %v944
        %v1463 = vunpack.c.h.b16 %v944
        %v1464 = vunpack.c.l.b16 %v945
        %v1465 = vunpack.c.h.b16 %v945
        %v1466 = vunpack.c.l.b16 %v946
        %v1467 = vunpack.c.h.b16 %v946
        %v1468 = vunpack.c.l.b16 %v947
        %v1469 = vunpack.c.h.b16 %v947
        %v1470 = vunpack.c.l.b16 %v948
        %v1471 = vunpack.c.h.b16 %v948
        %v1472 = vunpack.c.l.b16 %v949
        %v1473 = vunpack.c.h.b16 %v949
        %v1474 = vunpack.c.l.b16 %v950
        %v1475 = vunpack.c.h.b16 %v950
        %v1476 = vunpack.c.l.b16 %v951
        %v1477 = vunpack.c.h.b16 %v951
        %v1478 = vunpack.c.l.b16 %v952
        %v1479 = vunpack.c.h.b16 %v952
        %v1480 = vunpack.c.l.b16 %v953
        %v1481 = vunpack.c.h.b16 %v953
        %v1482 = vunpack.c.l.b16 %v954
        %v1483 = vunpack.c.h.b16 %v954
        %v1484 = vunpack.c.l.b16 %v955
        %v1485 = vunpack.c.h.b16 %v955
        %v1486 = vunpack.c.l.b16 %v956
        %v1487 = vunpack.c.h.b16 %v956
        %v1488 = vunpack.c.l.b16 %v957
        %v1489 = vunpack.c.h.b16 %v957
        %v1490 = vunpack.c.l.b16 %v958
        %v1491 = vunpack.c.h.b16 %v958
        %v1492 = vunpack.c.l.b16 %v959
        %v1493 = vunpack.c.h.b16 %v959
        %v1494 = vunpack.c.l.b16 %v960
        %v1495 = vunpack.c.h.b16 %v960
        %v1496 = vunpack.c.l.b16 %v961
        %v1497 = vunpack.c.h.b16 %v961
        %v1498 = vunpack.c.l.b16 %v962
        %v1499 = vunpack.c.h.b16 %v962
        %v1500 = vunpack.c.l.b16 %v963
        %v1501 = vunpack.c.h.b16 %v963
        %v1502 = vunpack.c.l.b16 %v964
        %v1503 = vunpack.c.h.b16 %v964
        %v1504 = vunpack.c.l.b16 %v965
        %v1505 = vunpack.c.h.b16 %v965
        %v1506 = vpack.c.b16 %v1156, %v1146
        %v1507 = vpack.c.b16 %v1157, %v1147
        %v1508 = vpack.c.b16 %v1158, %v1148
        %v1509 = vpack.c.b16 %v1159, %v1149
        %v1510 = vpack.c.b16 %v1160, %v1150
        %v1511 = vpack.c.b16 %v1161, %v1151
        %v1512 = vpack.c.b16 %v1162, %v1152
        %v1513 = vpack.c.b16 %v1163, %v1153
        %v1514 = vpack.c.b16 %v1164, %v1154
        %v1515 = vpack.c.b16 %v1165, %v1155
        %v1516 = vpack.c.b16 %v1176, %v1166
        %v1517 = vpack.c.b16 %v1177, %v1167
        %v1518 = vpack.c.b16 %v1178, %v1168
        %v1519 = vpack.c.b16 %v1179, %v1169
        %v1520 = vpack.c.b16 %v1180, %v1170
        %v1521 = vpack.c.b16 %v1181, %v1171
        %v1522 = vpack.c.b16 %v1182, %v1172
        %v1523 = vpack.c.b16 %v1183, %v1173
        %v1524 = vpack.c.b16 %v1184, %v1174
        %v1525 = vpack.c.b16 %v1185, %v1175
        %v1526 = vpack.c.b16 %v1196, %v1186
        %v1527 = vpack.c.b16 %v1197, %v1187
        %v1528 = vpack.c.b16 %v1198, %v1188
        %v1529 = vpack.c.b16 %v1199, %v1189
        %v1530 = vpack.c.b16 %v1200, %v1190
        %v1531 = vpack.c.b16 %v1201, %v1191
        %v1532 = vpack.c.b16 %v1202, %v1192
        %v1533 = vpack.c.b16 %v1203, %v1193
        %v1534 = vpack.c.b16 %v1204, %v1194
        %v1535 = vpack.c.b16 %v1205, %v1195
        %v1536 = vpack.c.b16 %v1216, %v1206
        %v1537 = vpack.c.b16 %v1217, %v1207
        %v1538 = vpack.c.b16 %v1218, %v1208
        %v1539 = vpack.c.b16 %v1219, %v1209
        %v1540 = vpack.c.b16 %v1220, %v1210
        %v1541 = vpack.c.b16 %v1221, %v1211
        %v1542 = vpack.c.b16 %v1222, %v1212
        %v1543 = vpack.c.b16 %v1223, %v1213
        %v1544 = vpack.c.b16 %v1224, %v1214
        %v1545 = vpack.c.b16 %v1225, %v1215
        %v1546 = vpack.c.b16 %v1236, %v1226
        %v1547 = vpack.c.b16 %v1237, %v1227
        %v1548 = vpack.c.b16 %v1238, %v1228
        %v1549 = vpack.c.b16 %v1239, %v1229
        %v1550 = vpack.c.b16 %v1240, %v1230
        %v1551 = vpack.c.b16 %v1241, %v1231
        %v1552 = vpack.c.b16 %v1242, %v1232
        %v1553 = vpack.c.b16 %v1243, %v1233
        %v1554 = vpack.c.b16 %v1244, %v1234
        %v1555 = vpack.c.b16 %v1245, %v1235
        %v1556 = vpack.c.b16 %v1256, %v1246
        %v1557 = vpack.c.b16 %v1257, %v1247
        %v1558 = vpack.c.b16 %v1258, %v1248
        %v1559 = vpack.c.b16 %v1259, %v1249
        %v1560 = vpack.c.b16 %v1260, %v1250
        %v1561 = vpack.c.b16 %v1261, %v1251
        %v1562 = vpack.c.b16 %v1262, %v1252
        %v1563 = vpack.c.b16 %v1263, %v1253
        %v1564 = vpack.c.b16 %v1264, %v1254
        %v1565 = vpack.c.b16 %v1265, %v1255
        %v1566 = vpack.c.b16 %v1276, %v1266
        %v1567 = vpack.c.b16 %v1277, %v1267
        %v1568 = vpack.c.b16 %v1278, %v1268
        %v1569 = vpack.c.b16 %v1279, %v1269
        %v1570 = vpack.c.b16 %v1280, %v1270
        %v1571 = vpack.c.b16 %v1281, %v1271
        %v1572 = vpack.c.b16 %v1282, %v1272
        %v1573 = vpack.c.b16 %v1283, %v1273
        %v1574 = vpack.c.b16 %v1284, %v1274
        %v1575 = vpack.c.b16 %v1285, %v1275
        %v1576 = vpack.c.b16 %v1296, %v1286
        %v1577 = vpack.c.b16 %v1297, %v1287
        %v1578 = vpack.c.b16 %v1298, %v1288
        %v1579 = vpack.c.b16 %v1299, %v1289
        %v1580 = vpack.c.b16 %v1300, %v1290
        %v1581 = vpack.c.b16 %v1301, %v1291
        %v1582 = vpack.c.b16 %v1302, %v1292
        %v1583 = vpack.c.b16 %v1303, %v1293
        %v1584 = vpack.c.b16 %v1304, %v1294
        %v1585 = vpack.c.b16 %v1305, %v1295
        %v1586 = vpack.c.b16 %v1316, %v1306
        %v1587 = vpack.c.b16 %v1317, %v1307
        %v1588 = vpack.c.b16 %v1318, %v1308
        %v1589 = vpack.c.b16 %v1319, %v1309
        %v1590 = vpack.c.b16 %v1320, %v1310
        %v1591 = vpack.c.b16 %v1321, %v1311
        %v1592 = vpack.c.b16 %v1322, %v1312
        %v1593 = vpack.c.b16 %v1323, %v1313
        %v1594 = vpack.c.b16 %v1324, %v1314
        %v1595 = vpack.c.b16 %v1325, %v1315
        %v1596 = vpack.c.b16 %v1336, %v1326
        %v1597 = vpack.c.b16 %v1337, %v1327
        %v1598 = vpack.c.b16 %v1338, %v1328
        %v1599 = vpack.c.b16 %v1339, %v1329
        %v1600 = vpack.c.b16 %v1340, %v1330
        %v1601 = vpack.c.b16 %v1341, %v1331
        %v1602 = vpack.c.b16 %v1342, %v1332
        %v1603 = vpack.c.b16 %v1343, %v1333
        %v1604 = vpack.c.b16 %v1344, %v1334
        %v1605 = vpack.c.b16 %v1345, %v1335
        %v1606 = vpack.c.b16 %v1356, %v1346
        %v1607 = vpack.c.b16 %v1357, %v1347
        %v1608 = vpack.c.b16 %v1358, %v1348
        %v1609 = vpack.c.b16 %v1359, %v1349
        %v1610 = vpack.c.b16 %v1360, %v1350
        %v1611 = vpack.c.b16 %v1361, %v1351
        %v1612 = vpack.c.b16 %v1362, %v1352
        %v1613 = vpack.c.b16 %v1363, %v1353
        %v1614 = vpack.c.b16 %v1364, %v1354
        %v1615 = vpack.c.b16 %v1365, %v1355
        %v1616 = vpack.c.b16 %v1376, %v1366
        %v1617 = vpack.c.b16 %v1377, %v1367
        %v1618 = vpack.c.b16 %v1378, %v1368
        %v1619 = vpack.c.b16 %v1379, %v1369
        %v1620 = vpack.c.b16 %v1380, %v1370
        %v1621 = vpack.c.b16 %v1381, %v1371
        %v1622 = vpack.c.b16 %v1382, %v1372
        %v1623 = vpack.c.b16 %v1383, %v1373
        %v1624 = vpack.c.b16 %v1384, %v1374
        %v1625 = vpack.c.b16 %v1385, %v1375
        %v1626 = vpack.c.b16 %v1396, %v1386
        %v1627 = vpack.c.b16 %v1397, %v1387
        %v1628 = vpack.c.b16 %v1398, %v1388
        %v1629 = vpack.c.b16 %v1399, %v1389
        %v1630 = vpack.c.b16 %v1400, %v1390
        %v1631 = vpack.c.b16 %v1401, %v1391
        %v1632 = vpack.c.b16 %v1402, %v1392
        %v1633 = vpack.c.b16 %v1403, %v1393
        %v1634 = vpack.c.b16 %v1404, %v1394
        %v1635 = vpack.c.b16 %v1405, %v1395
        %v1636 = vpack.c.b16 %v1416, %v1406
        %v1637 = vpack.c.b16 %v1417, %v1407
        %v1638 = vpack.c.b16 %v1418, %v1408
        %v1639 = vpack.c.b16 %v1419, %v1409
        %v1640 = vpack.c.b16 %v1420, %v1410
        %v1641 = vpack.c.b16 %v1421, %v1411
        %v1642 = vpack.c.b16 %v1422, %v1412
        %v1643 = vpack.c.b16 %v1423, %v1413
        %v1644 = vpack.c.b16 %v1424, %v1414
        %v1645 = vpack.c.b16 %v1425, %v1415
        %v1646 = vpack.c.b16 %v1436, %v1426
        %v1647 = vpack.c.b16 %v1437, %v1427
        %v1648 = vpack.c.b16 %v1438, %v1428
        %v1649 = vpack.c.b16 %v1439, %v1429
        %v1650 = vpack.c.b16 %v1440, %v1430
        %v1651 = vpack.c.b16 %v1441, %v1431
        %v1652 = vpack.c.b16 %v1442, %v1432
        %v1653 = vpack.c.b16 %v1443, %v1433
        %v1654 = vpack.c.b16 %v1444, %v1434
        %v1655 = vpack.c.b16 %v1445, %v1435
        %v1656 = vpack.c.b16 %v1456, %v1446
        %v1657 = vpack.c.b16 %v1457, %v1447
        %v1658 = vpack.c.b16 %v1458, %v1448
        %v1659 = vpack.c.b16 %v1459, %v1449
        %v1660 = vpack.c.b16 %v1460, %v1450
        %v1661 = vpack.c.b16 %v1461, %v1451
        %v1662 = vpack.c.b16 %v1462, %v1452
        %v1663 = vpack.c.b16 %v1463, %v1453
        %v1664 = vpack.c.b16 %v1464, %v1454
        %v1665 = vpack.c.b16 %v1465, %v1455
        %v1666 = vpack.c.b16 %v1476, %v1466
        %v1667 = vpack.c.b16 %v1477, %v1467
        %v1668 = vpack.c.b16 %v1478, %v1468
        %v1669 = vpack.c.b16 %v1479, %v1469
        %v1670 = vpack.c.b16 %v1480, %v1470
        %v1671 = vpack.c.b16 %v1481, %v1471
        %v1672 = vpack.c.b16 %v1482, %v1472
        %v1673 = vpack.c.b16 %v1483, %v1473
        %v1674 = vpack.c.b16 %v1484, %v1474
        %v1675 = vpack.c.b16 %v1485, %v1475
        %v1676 = vpack.c.b16 %v1496, %v1486
        %v1677 = vpack.c.b16 %v1497, %v1487
        %v1678 = vpack.c.b16 %v1498, %v1488
        %v1679 = vpack.c.b16 %v1499, %v1489
        %v1680 = vpack.c.b16 %v1500, %v1490
        %v1681 = vpack.c.b16 %v1501, %v1491
        %v1682 = vpack.c.b16 %v1502, %v1492
        %v1683 = vpack.c.b16 %v1503, %v1493
        %v1684 = vpack.c.b16 %v1504, %v1494
        %v1685 = vpack.c.b16 %v1505, %v1495
        %vm1866 = vcmask 261120
        %v1868 = vsel %vm1866, %v785, 0
        %1870 = vmatprep.subr.bf16.mxu0 %v1577
        %1871 = vmatpush1.bf16.msra.mxu0 %v1576
        %1872 = vmatprep.subr.bf16.mxu0 %v1567
        %1873 = vmatpush1.bf16.msra.mxu0 %v1566
        %1874 = vmatprep.subr.bf16.mxu0 %v1557
        %1875 = vmatpush1.bf16.msra.mxu0 %v1556
        %1876 = vmatprep.subr.bf16.mxu0 %v1547
        %1877 = vmatpush1.bf16.msra.mxu0 %v1546
        %1878 = vmatprep.subr.bf16.mxu0 %v1537
        %1879 = vmatpush1.bf16.msra.mxu0 %v1536
        %1880 = vmatprep.subr.bf16.mxu0 %v1527
        %1881 = vmatpush1.bf16.msra.mxu0 %v1526
        %1882 = vmatprep.subr.bf16.mxu0 %v1517
        %1883 = vmatpush1.bf16.msra.mxu0 %v1516
        %1884 = vmatprep.subr.bf16.mxu0 %v1507
        %1885 = vmatpush1.bf16.msra.mxu0 %v1506
        %1886 = vmatprep.subr.bf16.mxu0 %v1657
        %1887 = vmatpush2.bf16.msra.mxu0 %v1656
        %1888 = vmatprep.subr.bf16.mxu0 %v1647
        %1889 = vmatpush2.bf16.msra.mxu0 %v1646
        %1890 = vmatprep.subr.bf16.mxu0 %v1637
        %1891 = vmatpush2.bf16.msra.mxu0 %v1636
        %1892 = vmatprep.subr.bf16.mxu0 %v1627
        %1893 = vmatpush2.bf16.msra.mxu0 %v1626
        %1894 = vmatprep.subr.bf16.mxu0 %v1617
        %1895 = vmatpush2.bf16.msra.mxu0 %v1616
        %1896 = vmatprep.subr.bf16.mxu0 %v1607
        %1897 = vmatpush2.bf16.msra.mxu0 %v1606
        %1898 = vmatprep.subr.bf16.mxu0 %v1597
        %1899 = vmatpush2.bf16.msra.mxu0 %v1596
        %1900 = vmatprep.subr.bf16.mxu0 %v1587
        %1901 = vmatpush2.bf16.msra.mxu0 %v1586
        %1902 = vmatprep.mubr.bf16.mxu0 %v784
        %1903 = vmatmul.mubr.bf16.gmra.mxu0 %v783
        %v1904 = vpop.f32.mrf.mxu0
        %v1905 = vadd.f32 0.0, %v1904
        %v1906 = vpop.f32.mrf.mxu0
        %v1907 = vadd.f32 0.0, %v1906
        %v1908 = vpop.f32.mrf.mxu0
        %v1909 = vpop.f32.mrf.mxu0
        %1910 = vdwg.mxu0
        %1911 = vmatprep.subr.bf16.mxu0 0
        %1912 = vmatpush1.bf16.msra.mxu0 0
        %1913 = vmatprep.subr.bf16.mxu0 0
        %1914 = vmatpush1.bf16.msra.mxu0 0
        %1915 = vmatprep.subr.bf16.mxu0 0
        %1916 = vmatpush1.bf16.msra.mxu0 0
        %1917 = vmatprep.subr.bf16.mxu0 0
        %1918 = vmatpush1.bf16.msra.mxu0 0
        %1919 = vmatprep.subr.bf16.mxu0 0
        %1920 = vmatpush1.bf16.msra.mxu0 0
        %1921 = vmatprep.subr.bf16.mxu0 0
        %1922 = vmatpush1.bf16.msra.mxu0 0
        %1923 = vmatprep.subr.bf16.mxu0 %v1677
        %1924 = vmatpush1.bf16.msra.mxu0 %v1676
        %1925 = vmatprep.subr.bf16.mxu0 %v1667
        %1926 = vmatpush1.bf16.msra.mxu0 %v1666
        %1927 = vmatprep.subr.bf16.mxu0 0
        %1928 = vmatpush2.bf16.msra.mxu0 0
        %1929 = vmatprep.subr.bf16.mxu0 0
        %1930 = vmatpush2.bf16.msra.mxu0 0
        %1931 = vmatprep.subr.bf16.mxu0 0
        %1932 = vmatpush2.bf16.msra.mxu0 0
        %1933 = vmatprep.subr.bf16.mxu0 0
        %1934 = vmatpush2.bf16.msra.mxu0 0
        %1935 = vmatprep.subr.bf16.mxu0 0
        %1936 = vmatpush2.bf16.msra.mxu0 0
        %1937 = vmatprep.subr.bf16.mxu0 0
        %1938 = vmatpush2.bf16.msra.mxu0 0
        %1939 = vmatprep.subr.bf16.mxu0 0
        %1940 = vmatpush2.bf16.msra.mxu0 0
        %1941 = vmatprep.subr.bf16.mxu0 0
        %1942 = vmatpush2.bf16.msra.mxu0 0
        %1943 = vmatprep.mubr.bf16.mxu0 0
        %1944 = vmatmul.mubr.bf16.gmra.mxu0 %v1868
        %v1945 = vpop.f32.mrf.mxu0
        %v1946 = vadd.f32 %v1905, %v1945
        %v1947 = vpop.f32.mrf.mxu0
        %v1948 = vadd.f32 %v1907, %v1947
        %v1949 = vpop.f32.mrf.mxu0
        %v1950 = vpop.f32.mrf.mxu0
        %1951 = vdwg.mxu0
        %1952 = vmatprep.subr.bf16.mxu0 %v1579
        %1953 = vmatpush1.bf16.msra.mxu0 %v1578
        %1954 = vmatprep.subr.bf16.mxu0 %v1569
        %1955 = vmatpush1.bf16.msra.mxu0 %v1568
        %1956 = vmatprep.subr.bf16.mxu0 %v1559
        %1957 = vmatpush1.bf16.msra.mxu0 %v1558
        %1958 = vmatprep.subr.bf16.mxu0 %v1549
        %1959 = vmatpush1.bf16.msra.mxu0 %v1548
        %1960 = vmatprep.subr.bf16.mxu0 %v1539
        %1961 = vmatpush1.bf16.msra.mxu0 %v1538
        %1962 = vmatprep.subr.bf16.mxu0 %v1529
        %1963 = vmatpush1.bf16.msra.mxu0 %v1528
        %1964 = vmatprep.subr.bf16.mxu0 %v1519
        %1965 = vmatpush1.bf16.msra.mxu0 %v1518
        %1966 = vmatprep.subr.bf16.mxu0 %v1509
        %1967 = vmatpush1.bf16.msra.mxu0 %v1508
        %1968 = vmatprep.subr.bf16.mxu0 %v1659
        %1969 = vmatpush2.bf16.msra.mxu0 %v1658
        %1970 = vmatprep.subr.bf16.mxu0 %v1649
        %1971 = vmatpush2.bf16.msra.mxu0 %v1648
        %1972 = vmatprep.subr.bf16.mxu0 %v1639
        %1973 = vmatpush2.bf16.msra.mxu0 %v1638
        %1974 = vmatprep.subr.bf16.mxu0 %v1629
        %1975 = vmatpush2.bf16.msra.mxu0 %v1628
        %1976 = vmatprep.subr.bf16.mxu0 %v1619
        %1977 = vmatpush2.bf16.msra.mxu0 %v1618
        %1978 = vmatprep.subr.bf16.mxu0 %v1609
        %1979 = vmatpush2.bf16.msra.mxu0 %v1608
        %1980 = vmatprep.subr.bf16.mxu0 %v1599
        %1981 = vmatpush2.bf16.msra.mxu0 %v1598
        %1982 = vmatprep.subr.bf16.mxu0 %v1589
        %1983 = vmatpush2.bf16.msra.mxu0 %v1588
        %1984 = vmatprep.mubr.bf16.mxu0 %v784
        %1985 = vmatmul.mubr.bf16.gmra.mxu0 %v783
        %v1986 = vpop.f32.mrf.mxu0
        %v1987 = vadd.f32 0.0, %v1986
        %v1988 = vpop.f32.mrf.mxu0
        %v1989 = vadd.f32 0.0, %v1988
        %v1990 = vpop.f32.mrf.mxu0
        %v1991 = vpop.f32.mrf.mxu0
        %1992 = vdwg.mxu0
        %1993 = vmatprep.subr.bf16.mxu0 0
        %1994 = vmatpush1.bf16.msra.mxu0 0
        %1995 = vmatprep.subr.bf16.mxu0 0
        %1996 = vmatpush1.bf16.msra.mxu0 0
        %1997 = vmatprep.subr.bf16.mxu0 0
        %1998 = vmatpush1.bf16.msra.mxu0 0
        %1999 = vmatprep.subr.bf16.mxu0 0
        %2000 = vmatpush1.bf16.msra.mxu0 0
        %2001 = vmatprep.subr.bf16.mxu0 0
        %2002 = vmatpush1.bf16.msra.mxu0 0
        %2003 = vmatprep.subr.bf16.mxu0 0
        %2004 = vmatpush1.bf16.msra.mxu0 0
        %2005 = vmatprep.subr.bf16.mxu0 %v1679
        %2006 = vmatpush1.bf16.msra.mxu0 %v1678
        %2007 = vmatprep.subr.bf16.mxu0 %v1669
        %2008 = vmatpush1.bf16.msra.mxu0 %v1668
        %2009 = vmatprep.subr.bf16.mxu0 0
        %2010 = vmatpush2.bf16.msra.mxu0 0
        %2011 = vmatprep.subr.bf16.mxu0 0
        %2012 = vmatpush2.bf16.msra.mxu0 0
        %2013 = vmatprep.subr.bf16.mxu0 0
        %2014 = vmatpush2.bf16.msra.mxu0 0
        %2015 = vmatprep.subr.bf16.mxu0 0
        %2016 = vmatpush2.bf16.msra.mxu0 0
        %2017 = vmatprep.subr.bf16.mxu0 0
        %2018 = vmatpush2.bf16.msra.mxu0 0
        %2019 = vmatprep.subr.bf16.mxu0 0
        %2020 = vmatpush2.bf16.msra.mxu0 0
        %2021 = vmatprep.subr.bf16.mxu0 0
        %2022 = vmatpush2.bf16.msra.mxu0 0
        %2023 = vmatprep.subr.bf16.mxu0 0
        %2024 = vmatpush2.bf16.msra.mxu0 0
        %2025 = vmatprep.mubr.bf16.mxu0 0
        %2026 = vmatmul.mubr.bf16.gmra.mxu0 %v1868
        %v2027 = vpop.f32.mrf.mxu0
        %v2028 = vadd.f32 %v1987, %v2027
        %v2029 = vpop.f32.mrf.mxu0
        %v2030 = vadd.f32 %v1989, %v2029
        %v2031 = vpop.f32.mrf.mxu0
        %v2032 = vpop.f32.mrf.mxu0
        %2033 = vdwg.mxu0
        %2034 = vmatprep.subr.bf16.mxu0 %v1581
        %2035 = vmatpush1.bf16.msra.mxu0 %v1580
        %2036 = vmatprep.subr.bf16.mxu0 %v1571
        %2037 = vmatpush1.bf16.msra.mxu0 %v1570
        %2038 = vmatprep.subr.bf16.mxu0 %v1561
        %2039 = vmatpush1.bf16.msra.mxu0 %v1560
        %2040 = vmatprep.subr.bf16.mxu0 %v1551
        %2041 = vmatpush1.bf16.msra.mxu0 %v1550
        %2042 = vmatprep.subr.bf16.mxu0 %v1541
        %2043 = vmatpush1.bf16.msra.mxu0 %v1540
        %2044 = vmatprep.subr.bf16.mxu0 %v1531
        %2045 = vmatpush1.bf16.msra.mxu0 %v1530
        %2046 = vmatprep.subr.bf16.mxu0 %v1521
        %2047 = vmatpush1.bf16.msra.mxu0 %v1520
        %2048 = vmatprep.subr.bf16.mxu0 %v1511
        %2049 = vmatpush1.bf16.msra.mxu0 %v1510
        %2050 = vmatprep.subr.bf16.mxu0 %v1661
        %2051 = vmatpush2.bf16.msra.mxu0 %v1660
        %2052 = vmatprep.subr.bf16.mxu0 %v1651
        %2053 = vmatpush2.bf16.msra.mxu0 %v1650
        %2054 = vmatprep.subr.bf16.mxu0 %v1641
        %2055 = vmatpush2.bf16.msra.mxu0 %v1640
        %2056 = vmatprep.subr.bf16.mxu0 %v1631
        %2057 = vmatpush2.bf16.msra.mxu0 %v1630
        %2058 = vmatprep.subr.bf16.mxu0 %v1621
        %2059 = vmatpush2.bf16.msra.mxu0 %v1620
        %2060 = vmatprep.subr.bf16.mxu0 %v1611
        %2061 = vmatpush2.bf16.msra.mxu0 %v1610
        %2062 = vmatprep.subr.bf16.mxu0 %v1601
        %2063 = vmatpush2.bf16.msra.mxu0 %v1600
        %2064 = vmatprep.subr.bf16.mxu0 %v1591
        %2065 = vmatpush2.bf16.msra.mxu0 %v1590
        %2066 = vmatprep.mubr.bf16.mxu0 %v784
        %2067 = vmatmul.mubr.bf16.gmra.mxu0 %v783
        %v2068 = vpop.f32.mrf.mxu0
        %v2069 = vadd.f32 0.0, %v2068
        %v2070 = vpop.f32.mrf.mxu0
        %v2071 = vadd.f32 0.0, %v2070
        %v2072 = vpop.f32.mrf.mxu0
        %v2073 = vpop.f32.mrf.mxu0
        %2074 = vdwg.mxu0
        %2075 = vmatprep.subr.bf16.mxu0 0
        %2076 = vmatpush1.bf16.msra.mxu0 0
        %2077 = vmatprep.subr.bf16.mxu0 0
        %2078 = vmatpush1.bf16.msra.mxu0 0
        %2079 = vmatprep.subr.bf16.mxu0 0
        %2080 = vmatpush1.bf16.msra.mxu0 0
        %2081 = vmatprep.subr.bf16.mxu0 0
        %2082 = vmatpush1.bf16.msra.mxu0 0
        %2083 = vmatprep.subr.bf16.mxu0 0
        %2084 = vmatpush1.bf16.msra.mxu0 0
        %2085 = vmatprep.subr.bf16.mxu0 0
        %2086 = vmatpush1.bf16.msra.mxu0 0
        %2087 = vmatprep.subr.bf16.mxu0 %v1681
        %2088 = vmatpush1.bf16.msra.mxu0 %v1680
        %2089 = vmatprep.subr.bf16.mxu0 %v1671
        %2090 = vmatpush1.bf16.msra.mxu0 %v1670
        %2091 = vmatprep.subr.bf16.mxu0 0
        %2092 = vmatpush2.bf16.msra.mxu0 0
        %2093 = vmatprep.subr.bf16.mxu0 0
        %2094 = vmatpush2.bf16.msra.mxu0 0
        %2095 = vmatprep.subr.bf16.mxu0 0
        %2096 = vmatpush2.bf16.msra.mxu0 0
        %2097 = vmatprep.subr.bf16.mxu0 0
        %2098 = vmatpush2.bf16.msra.mxu0 0
        %2099 = vmatprep.subr.bf16.mxu0 0
        %2100 = vmatpush2.bf16.msra.mxu0 0
        %2101 = vmatprep.subr.bf16.mxu0 0
        %2102 = vmatpush2.bf16.msra.mxu0 0
        %2103 = vmatprep.subr.bf16.mxu0 0
        %2104 = vmatpush2.bf16.msra.mxu0 0
        %2105 = vmatprep.subr.bf16.mxu0 0
        %2106 = vmatpush2.bf16.msra.mxu0 0
        %2107 = vmatprep.mubr.bf16.mxu0 0
        %2108 = vmatmul.mubr.bf16.gmra.mxu0 %v1868
        %v2109 = vpop.f32.mrf.mxu0
        %v2110 = vadd.f32 %v2069, %v2109
        %v2111 = vpop.f32.mrf.mxu0
        %v2112 = vadd.f32 %v2071, %v2111
        %v2113 = vpop.f32.mrf.mxu0
        %v2114 = vpop.f32.mrf.mxu0
        %2115 = vdwg.mxu0
        %2116 = vmatprep.subr.bf16.mxu0 %v1583
        %2117 = vmatpush1.bf16.msra.mxu0 %v1582
        %2118 = vmatprep.subr.bf16.mxu0 %v1573
        %2119 = vmatpush1.bf16.msra.mxu0 %v1572
        %2120 = vmatprep.subr.bf16.mxu0 %v1563
        %2121 = vmatpush1.bf16.msra.mxu0 %v1562
        %2122 = vmatprep.subr.bf16.mxu0 %v1553
        %2123 = vmatpush1.bf16.msra.mxu0 %v1552
        %2124 = vmatprep.subr.bf16.mxu0 %v1543
        %2125 = vmatpush1.bf16.msra.mxu0 %v1542
        %2126 = vmatprep.subr.bf16.mxu0 %v1533
        %2127 = vmatpush1.bf16.msra.mxu0 %v1532
        %2128 = vmatprep.subr.bf16.mxu0 %v1523
        %2129 = vmatpush1.bf16.msra.mxu0 %v1522
        %2130 = vmatprep.subr.bf16.mxu0 %v1513
        %2131 = vmatpush1.bf16.msra.mxu0 %v1512
        %2132 = vmatprep.subr.bf16.mxu0 %v1663
        %2133 = vmatpush2.bf16.msra.mxu0 %v1662
        %2134 = vmatprep.subr.bf16.mxu0 %v1653
        %2135 = vmatpush2.bf16.msra.mxu0 %v1652
        %2136 = vmatprep.subr.bf16.mxu0 %v1643
        %2137 = vmatpush2.bf16.msra.mxu0 %v1642
        %2138 = vmatprep.subr.bf16.mxu0 %v1633
        %2139 = vmatpush2.bf16.msra.mxu0 %v1632
        %2140 = vmatprep.subr.bf16.mxu0 %v1623
        %2141 = vmatpush2.bf16.msra.mxu0 %v1622
        %2142 = vmatprep.subr.bf16.mxu0 %v1613
        %2143 = vmatpush2.bf16.msra.mxu0 %v1612
        %2144 = vmatprep.subr.bf16.mxu0 %v1603
        %2145 = vmatpush2.bf16.msra.mxu0 %v1602
        %2146 = vmatprep.subr.bf16.mxu0 %v1593
        %2147 = vmatpush2.bf16.msra.mxu0 %v1592
        %2148 = vmatprep.mubr.bf16.mxu0 %v784
        %2149 = vmatmul.mubr.bf16.gmra.mxu0 %v783
        %v2150 = vpop.f32.mrf.mxu0
        %v2151 = vadd.f32 0.0, %v2150
        %v2152 = vpop.f32.mrf.mxu0
        %v2153 = vadd.f32 0.0, %v2152
        %v2154 = vpop.f32.mrf.mxu0
        %v2155 = vpop.f32.mrf.mxu0
        %2156 = vdwg.mxu0
        %2157 = vmatprep.subr.bf16.mxu0 0
        %2158 = vmatpush1.bf16.msra.mxu0 0
        %2159 = vmatprep.subr.bf16.mxu0 0
        %2160 = vmatpush1.bf16.msra.mxu0 0
        %2161 = vmatprep.subr.bf16.mxu0 0
        %2162 = vmatpush1.bf16.msra.mxu0 0
        %2163 = vmatprep.subr.bf16.mxu0 0
        %2164 = vmatpush1.bf16.msra.mxu0 0
        %2165 = vmatprep.subr.bf16.mxu0 0
        %2166 = vmatpush1.bf16.msra.mxu0 0
        %2167 = vmatprep.subr.bf16.mxu0 0
        %2168 = vmatpush1.bf16.msra.mxu0 0
        %2169 = vmatprep.subr.bf16.mxu0 %v1683
        %2170 = vmatpush1.bf16.msra.mxu0 %v1682
        %2171 = vmatprep.subr.bf16.mxu0 %v1673
        %2172 = vmatpush1.bf16.msra.mxu0 %v1672
        %2173 = vmatprep.subr.bf16.mxu0 0
        %2174 = vmatpush2.bf16.msra.mxu0 0
        %2175 = vmatprep.subr.bf16.mxu0 0
        %2176 = vmatpush2.bf16.msra.mxu0 0
        %2177 = vmatprep.subr.bf16.mxu0 0
        %2178 = vmatpush2.bf16.msra.mxu0 0
        %2179 = vmatprep.subr.bf16.mxu0 0
        %2180 = vmatpush2.bf16.msra.mxu0 0
        %2181 = vmatprep.subr.bf16.mxu0 0
        %2182 = vmatpush2.bf16.msra.mxu0 0
        %2183 = vmatprep.subr.bf16.mxu0 0
        %2184 = vmatpush2.bf16.msra.mxu0 0
        %2185 = vmatprep.subr.bf16.mxu0 0
        %2186 = vmatpush2.bf16.msra.mxu0 0
        %2187 = vmatprep.subr.bf16.mxu0 0
        %2188 = vmatpush2.bf16.msra.mxu0 0
        %2189 = vmatprep.mubr.bf16.mxu0 0
        %2190 = vmatmul.mubr.bf16.gmra.mxu0 %v1868
        %v2191 = vpop.f32.mrf.mxu0
        %v2192 = vadd.f32 %v2151, %v2191
        %v2193 = vpop.f32.mrf.mxu0
        %v2194 = vadd.f32 %v2153, %v2193
        %v2195 = vpop.f32.mrf.mxu0
        %v2196 = vpop.f32.mrf.mxu0
        %2197 = vdwg.mxu0
        %2198 = vmatprep.subr.bf16.mxu0 %v1585
        %2199 = vmatpush1.bf16.msra.mxu0 %v1584
        %2200 = vmatprep.subr.bf16.mxu0 %v1575
        %2201 = vmatpush1.bf16.msra.mxu0 %v1574
        %2202 = vmatprep.subr.bf16.mxu0 %v1565
        %2203 = vmatpush1.bf16.msra.mxu0 %v1564
        %2204 = vmatprep.subr.bf16.mxu0 %v1555
        %2205 = vmatpush1.bf16.msra.mxu0 %v1554
        %2206 = vmatprep.subr.bf16.mxu0 %v1545
        %2207 = vmatpush1.bf16.msra.mxu0 %v1544
        %2208 = vmatprep.subr.bf16.mxu0 %v1535
        %2209 = vmatpush1.bf16.msra.mxu0 %v1534
        %2210 = vmatprep.subr.bf16.mxu0 %v1525
        %2211 = vmatpush1.bf16.msra.mxu0 %v1524
        %2212 = vmatprep.subr.bf16.mxu0 %v1515
        %2213 = vmatpush1.bf16.msra.mxu0 %v1514
        %2214 = vmatprep.subr.bf16.mxu0 %v1665
        %2215 = vmatpush2.bf16.msra.mxu0 %v1664
        %2216 = vmatprep.subr.bf16.mxu0 %v1655
        %2217 = vmatpush2.bf16.msra.mxu0 %v1654
        %2218 = vmatprep.subr.bf16.mxu0 %v1645
        %2219 = vmatpush2.bf16.msra.mxu0 %v1644
        %2220 = vmatprep.subr.bf16.mxu0 %v1635
        %2221 = vmatpush2.bf16.msra.mxu0 %v1634
        %2222 = vmatprep.subr.bf16.mxu0 %v1625
        %2223 = vmatpush2.bf16.msra.mxu0 %v1624
        %2224 = vmatprep.subr.bf16.mxu0 %v1615
        %2225 = vmatpush2.bf16.msra.mxu0 %v1614
        %2226 = vmatprep.subr.bf16.mxu0 %v1605
        %2227 = vmatpush2.bf16.msra.mxu0 %v1604
        %2228 = vmatprep.subr.bf16.mxu0 %v1595
        %2229 = vmatpush2.bf16.msra.mxu0 %v1594
        %2230 = vmatprep.mubr.bf16.mxu0 %v784
        %2231 = vmatmul.mubr.bf16.gmra.mxu0 %v783
        %v2232 = vpop.f32.mrf.mxu0
        %v2233 = vadd.f32 0.0, %v2232
        %v2234 = vpop.f32.mrf.mxu0
        %v2235 = vadd.f32 0.0, %v2234
        %v2236 = vpop.f32.mrf.mxu0
        %v2237 = vpop.f32.mrf.mxu0
        %2238 = vdwg.mxu0
        %2239 = vmatprep.subr.bf16.mxu0 0
        %2240 = vmatpush1.bf16.msra.mxu0 0
        %2241 = vmatprep.subr.bf16.mxu0 0
        %2242 = vmatpush1.bf16.msra.mxu0 0
        %2243 = vmatprep.subr.bf16.mxu0 0
        %2244 = vmatpush1.bf16.msra.mxu0 0
        %2245 = vmatprep.subr.bf16.mxu0 0
        %2246 = vmatpush1.bf16.msra.mxu0 0
        %2247 = vmatprep.subr.bf16.mxu0 0
        %2248 = vmatpush1.bf16.msra.mxu0 0
        %2249 = vmatprep.subr.bf16.mxu0 0
        %2250 = vmatpush1.bf16.msra.mxu0 0
        %2251 = vmatprep.subr.bf16.mxu0 %v1685
        %2252 = vmatpush1.bf16.msra.mxu0 %v1684
        %2253 = vmatprep.subr.bf16.mxu0 %v1675
        %2254 = vmatpush1.bf16.msra.mxu0 %v1674
        %2255 = vmatprep.subr.bf16.mxu0 0
        %2256 = vmatpush2.bf16.msra.mxu0 0
        %2257 = vmatprep.subr.bf16.mxu0 0
        %2258 = vmatpush2.bf16.msra.mxu0 0
        %2259 = vmatprep.subr.bf16.mxu0 0
        %2260 = vmatpush2.bf16.msra.mxu0 0
        %2261 = vmatprep.subr.bf16.mxu0 0
        %2262 = vmatpush2.bf16.msra.mxu0 0
        %2263 = vmatprep.subr.bf16.mxu0 0
        %2264 = vmatpush2.bf16.msra.mxu0 0
        %2265 = vmatprep.subr.bf16.mxu0 0
        %2266 = vmatpush2.bf16.msra.mxu0 0
        %2267 = vmatprep.subr.bf16.mxu0 0
        %2268 = vmatpush2.bf16.msra.mxu0 0
        %2269 = vmatprep.subr.bf16.mxu0 0
        %2270 = vmatpush2.bf16.msra.mxu0 0
        %2271 = vmatprep.mubr.bf16.mxu0 0
        %2272 = vmatmul.mubr.bf16.gmra.mxu0 %v1868
        %v2273 = vpop.f32.mrf.mxu0
        %v2274 = vadd.f32 %v2233, %v2273
        %v2275 = vpop.f32.mrf.mxu0
        %v2276 = vadd.f32 %v2235, %v2275
        %v2277 = vpop.f32.mrf.mxu0
        %v2278 = vpop.f32.mrf.mxu0
        %2279 = vdwg.mxu0
        %v2280 = vpack.c.bf16 %v1946, %v1946
        %v2281 = vpack.c.bf16 %v1948, %v1948
        %v2282 = vpack.c.bf16 %v2028, %v2028
        %v2283 = vpack.c.bf16 %v2030, %v2030
        %v2284 = vpack.c.bf16 %v2110, %v2110
        %v2285 = vpack.c.bf16 %v2112, %v2112
        %v2286 = vpack.c.bf16 %v2192, %v2192
        %v2287 = vpack.c.bf16 %v2194, %v2194
        %v2288 = vpack.c.bf16 %v2274, %v2274
        %v2289 = vpack.c.bf16 %v2276, %v2276
        %v2300 = vrot.slane %v2280, 4
        %v2301 = vrot.slane %v2281, 4
        %v2302 = vrot.slane %v2282, 4
        %v2303 = vrot.slane %v2283, 4
        %v2304 = vrot.slane %v2284, 4
        %v2305 = vrot.slane %v2285, 4
        %v2306 = vrot.slane %v2286, 4
        %v2307 = vrot.slane %v2287, 4
        %v2308 = vrot.slane %v2288, 4
        %v2309 = vrot.slane %v2289, 4
        %2310 = vrot.lane.b32.xlu0 %v2300, 127
        %v2311 = vpop.permute.xlu0 %2310
        %2312 = vrot.lane.b32.xlu0 %v2301, 127
        %v2313 = vpop.permute.xlu0 %2312
        %2314 = vrot.lane.b32.xlu0 %v2302, 127
        %v2315 = vpop.permute.xlu0 %2314
        %2316 = vrot.lane.b32.xlu0 %v2303, 127
        %v2317 = vpop.permute.xlu0 %2316
        %2318 = vrot.lane.b32.xlu0 %v2304, 127
        %v2319 = vpop.permute.xlu0 %2318
        %2320 = vrot.lane.b32.xlu0 %v2305, 127
        %v2321 = vpop.permute.xlu0 %2320
        %2322 = vrot.lane.b32.xlu0 %v2306, 127
        %v2323 = vpop.permute.xlu0 %2322
        %2324 = vrot.lane.b32.xlu0 %v2307, 127
        %v2325 = vpop.permute.xlu0 %2324
        %2326 = vrot.lane.b32.xlu0 %v2308, 127
        %v2327 = vpop.permute.xlu0 %2326
        %2328 = vrot.lane.b32.xlu0 %v2309, 127
        %v2329 = vpop.permute.xlu0 %2328
        %v2330 = vsel %vm544, %v2311, %v2313
        %v2331 = vsel %vm544, %v2313, %v2315
        %v2332 = vsel %vm544, %v2315, %v2317
        %v2333 = vsel %vm544, %v2317, %v2319
        %v2334 = vsel %vm544, %v2319, %v2321
        %v2335 = vsel %vm544, %v2321, %v2323
        %v2336 = vsel %vm544, %v2323, %v2325
        %v2337 = vsel %vm544, %v2325, %v2327
        %v2338 = vsel %vm544, %v2327, %v2329
        %2339 = vrot.lane.b32.xlu0 %v2280, 126
        %v2340 = vpop.permute.xlu0 %2339
        %2341 = vrot.lane.b32.xlu0 %v2281, 126
        %v2342 = vpop.permute.xlu0 %2341
        %2343 = vrot.lane.b32.xlu0 %v2282, 126
        %v2344 = vpop.permute.xlu0 %2343
        %2345 = vrot.lane.b32.xlu0 %v2283, 126
        %v2346 = vpop.permute.xlu0 %2345
        %2347 = vrot.lane.b32.xlu0 %v2284, 126
        %v2348 = vpop.permute.xlu0 %2347
        %2349 = vrot.lane.b32.xlu0 %v2285, 126
        %v2350 = vpop.permute.xlu0 %2349
        %2351 = vrot.lane.b32.xlu0 %v2286, 126
        %v2352 = vpop.permute.xlu0 %2351
        %2353 = vrot.lane.b32.xlu0 %v2287, 126
        %v2354 = vpop.permute.xlu0 %2353
        %2355 = vrot.lane.b32.xlu0 %v2288, 126
        %v2356 = vpop.permute.xlu0 %2355
        %2357 = vrot.lane.b32.xlu0 %v2289, 126
        %v2358 = vpop.permute.xlu0 %2357
        %v2359 = vsel %vm555, %v2340, %v2342
        %v2360 = vsel %vm555, %v2342, %v2344
        %v2361 = vsel %vm555, %v2344, %v2346
        %v2362 = vsel %vm555, %v2346, %v2348
        %v2363 = vsel %vm555, %v2348, %v2350
        %v2364 = vsel %vm555, %v2350, %v2352
        %v2365 = vsel %vm555, %v2352, %v2354
        %v2366 = vsel %vm555, %v2354, %v2356
        %v2367 = vsel %vm555, %v2356, %v2358
        %2368 = vrot.lane.b32.xlu0 %v2300, 94
        %v2369 = vpop.permute.xlu0 %2368
        %2370 = vrot.lane.b32.xlu0 %v2301, 94
        %v2371 = vpop.permute.xlu0 %2370
        %2372 = vrot.lane.b32.xlu0 %v2302, 94
        %v2373 = vpop.permute.xlu0 %2372
        %2374 = vrot.lane.b32.xlu0 %v2303, 94
        %v2375 = vpop.permute.xlu0 %2374
        %2376 = vrot.lane.b32.xlu0 %v2304, 94
        %v2377 = vpop.permute.xlu0 %2376
        %2378 = vrot.lane.b32.xlu0 %v2305, 94
        %v2379 = vpop.permute.xlu0 %2378
        %2380 = vrot.lane.b32.xlu0 %v2306, 94
        %v2381 = vpop.permute.xlu0 %2380
        %2382 = vrot.lane.b32.xlu0 %v2307, 94
        %v2383 = vpop.permute.xlu0 %2382
        %2384 = vrot.lane.b32.xlu0 %v2308, 94
        %v2385 = vpop.permute.xlu0 %2384
        %2386 = vrot.lane.b32.xlu0 %v2309, 94
        %v2387 = vpop.permute.xlu0 %2386
        %vm2388 = vcmask 769024
        %v2389 = vsel %vm2388, %v2369, %v2371
        %v2390 = vsel %vm2388, %v2371, %v2373
        %v2391 = vsel %vm2388, %v2373, %v2375
        %v2392 = vsel %vm2388, %v2375, %v2377
        %v2393 = vsel %vm2388, %v2377, %v2379
        %v2394 = vsel %vm2388, %v2379, %v2381
        %v2395 = vsel %vm2388, %v2381, %v2383
        %v2396 = vsel %vm2388, %v2383, %v2385
        %v2397 = vsel %vm2388, %v2385, %v2387
        %2398 = vrot.lane.b32.xlu0 %v2281, 93
        %v2399 = vpop.permute.xlu0 %2398
        %2400 = vrot.lane.b32.xlu0 %v2282, 93
        %v2401 = vpop.permute.xlu0 %2400
        %2402 = vrot.lane.b32.xlu0 %v2283, 93
        %v2403 = vpop.permute.xlu0 %2402
        %2404 = vrot.lane.b32.xlu0 %v2284, 93
        %v2405 = vpop.permute.xlu0 %2404
        %2406 = vrot.lane.b32.xlu0 %v2285, 93
        %v2407 = vpop.permute.xlu0 %2406
        %2408 = vrot.lane.b32.xlu0 %v2286, 93
        %v2409 = vpop.permute.xlu0 %2408
        %2410 = vrot.lane.b32.xlu0 %v2287, 93
        %v2411 = vpop.permute.xlu0 %2410
        %2412 = vrot.lane.b32.xlu0 %v2288, 93
        %v2413 = vpop.permute.xlu0 %2412
        %2414 = vrot.lane.b32.xlu0 %v2289, 93
        %v2415 = vpop.permute.xlu0 %2414
        %vm2416 = vcmask 760832
        %v2417 = vsel %vm2416, %v2399, %v2401
        %v2418 = vsel %vm2416, %v2401, %v2403
        %v2419 = vsel %vm2416, %v2403, %v2405
        %v2420 = vsel %vm2416, %v2405, %v2407
        %v2421 = vsel %vm2416, %v2407, %v2409
        %v2422 = vsel %vm2416, %v2409, %v2411
        %v2423 = vsel %vm2416, %v2411, %v2413
        %v2424 = vsel %vm2416, %v2413, %v2415
        %2425 = vrot.lane.b32.xlu0 %v2301, 92
        %v2426 = vpop.permute.xlu0 %2425
        %2427 = vrot.lane.b32.xlu0 %v2302, 92
        %v2428 = vpop.permute.xlu0 %2427
        %2429 = vrot.lane.b32.xlu0 %v2303, 92
        %v2430 = vpop.permute.xlu0 %2429
        %2431 = vrot.lane.b32.xlu0 %v2304, 92
        %v2432 = vpop.permute.xlu0 %2431
        %2433 = vrot.lane.b32.xlu0 %v2305, 92
        %v2434 = vpop.permute.xlu0 %2433
        %2435 = vrot.lane.b32.xlu0 %v2306, 92
        %v2436 = vpop.permute.xlu0 %2435
        %2437 = vrot.lane.b32.xlu0 %v2307, 92
        %v2438 = vpop.permute.xlu0 %2437
        %2439 = vrot.lane.b32.xlu0 %v2308, 92
        %v2440 = vpop.permute.xlu0 %2439
        %2441 = vrot.lane.b32.xlu0 %v2309, 92
        %v2442 = vpop.permute.xlu0 %2441
        %v2443 = vsel %vm592, %v2426, %v2428
        %v2444 = vsel %vm592, %v2428, %v2430
        %v2445 = vsel %vm592, %v2430, %v2432
        %v2446 = vsel %vm592, %v2432, %v2434
        %v2447 = vsel %vm592, %v2434, %v2436
        %v2448 = vsel %vm592, %v2436, %v2438
        %v2449 = vsel %vm592, %v2438, %v2440
        %v2450 = vsel %vm592, %v2440, %v2442
        %2451 = vrot.lane.b32.xlu0 %v2281, 60
        %v2452 = vpop.permute.xlu0 %2451
        %2453 = vrot.lane.b32.xlu0 %v2282, 60
        %v2454 = vpop.permute.xlu0 %2453
        %2455 = vrot.lane.b32.xlu0 %v2283, 60
        %v2456 = vpop.permute.xlu0 %2455
        %2457 = vrot.lane.b32.xlu0 %v2284, 60
        %v2458 = vpop.permute.xlu0 %2457
        %2459 = vrot.lane.b32.xlu0 %v2285, 60
        %v2460 = vpop.permute.xlu0 %2459
        %2461 = vrot.lane.b32.xlu0 %v2286, 60
        %v2462 = vpop.permute.xlu0 %2461
        %2463 = vrot.lane.b32.xlu0 %v2287, 60
        %v2464 = vpop.permute.xlu0 %2463
        %2465 = vrot.lane.b32.xlu0 %v2288, 60
        %v2466 = vpop.permute.xlu0 %2465
        %2467 = vrot.lane.b32.xlu0 %v2289, 60
        %v2468 = vpop.permute.xlu0 %2467
        %vm2469 = vcmask 490496
        %v2470 = vsel %vm2469, %v2452, %v2454
        %v2471 = vsel %vm2469, %v2454, %v2456
        %v2472 = vsel %vm2469, %v2456, %v2458
        %v2473 = vsel %vm2469, %v2458, %v2460
        %v2474 = vsel %vm2469, %v2460, %v2462
        %v2475 = vsel %vm2469, %v2462, %v2464
        %v2476 = vsel %vm2469, %v2464, %v2466
        %v2477 = vsel %vm2469, %v2466, %v2468
        %2478 = vrot.lane.b32.xlu0 %v2301, 59
        %v2479 = vpop.permute.xlu0 %2478
        %2480 = vrot.lane.b32.xlu0 %v2302, 59
        %v2481 = vpop.permute.xlu0 %2480
        %2482 = vrot.lane.b32.xlu0 %v2303, 59
        %v2483 = vpop.permute.xlu0 %2482
        %2484 = vrot.lane.b32.xlu0 %v2304, 59
        %v2485 = vpop.permute.xlu0 %2484
        %2486 = vrot.lane.b32.xlu0 %v2305, 59
        %v2487 = vpop.permute.xlu0 %2486
        %2488 = vrot.lane.b32.xlu0 %v2306, 59
        %v2489 = vpop.permute.xlu0 %2488
        %2490 = vrot.lane.b32.xlu0 %v2307, 59
        %v2491 = vpop.permute.xlu0 %2490
        %2492 = vrot.lane.b32.xlu0 %v2308, 59
        %v2493 = vpop.permute.xlu0 %2492
        %2494 = vrot.lane.b32.xlu0 %v2309, 59
        %v2495 = vpop.permute.xlu0 %2494
        %vm2496 = vcmask 482304
        %v2497 = vsel %vm2496, %v2479, %v2481
        %v2498 = vsel %vm2496, %v2481, %v2483
        %v2499 = vsel %vm2496, %v2483, %v2485
        %v2500 = vsel %vm2496, %v2485, %v2487
        %v2501 = vsel %vm2496, %v2487, %v2489
        %v2502 = vsel %vm2496, %v2489, %v2491
        %v2503 = vsel %vm2496, %v2491, %v2493
        %v2504 = vsel %vm2496, %v2493, %v2495
        %2505 = vrot.lane.b32.xlu0 %v2281, 58
        %v2506 = vpop.permute.xlu0 %2505
        %2507 = vrot.lane.b32.xlu0 %v2282, 58
        %v2508 = vpop.permute.xlu0 %2507
        %2509 = vrot.lane.b32.xlu0 %v2283, 58
        %v2510 = vpop.permute.xlu0 %2509
        %2511 = vrot.lane.b32.xlu0 %v2284, 58
        %v2512 = vpop.permute.xlu0 %2511
        %2513 = vrot.lane.b32.xlu0 %v2285, 58
        %v2514 = vpop.permute.xlu0 %2513
        %2515 = vrot.lane.b32.xlu0 %v2286, 58
        %v2516 = vpop.permute.xlu0 %2515
        %2517 = vrot.lane.b32.xlu0 %v2287, 58
        %v2518 = vpop.permute.xlu0 %2517
        %2519 = vrot.lane.b32.xlu0 %v2288, 58
        %v2520 = vpop.permute.xlu0 %2519
        %2521 = vrot.lane.b32.xlu0 %v2289, 58
        %v2522 = vpop.permute.xlu0 %2521
        %vm2523 = vcmask 474112
        %v2524 = vsel %vm2523, %v2506, %v2508
        %v2525 = vsel %vm2523, %v2508, %v2510
        %v2526 = vsel %vm2523, %v2510, %v2512
        %v2527 = vsel %vm2523, %v2512, %v2514
        %v2528 = vsel %vm2523, %v2514, %v2516
        %v2529 = vsel %vm2523, %v2516, %v2518
        %v2530 = vsel %vm2523, %v2518, %v2520
        %v2531 = vsel %vm2523, %v2520, %v2522
        %v2534 = vsel %vm623, %v2280, %v2330
        %v2537 = vsel %vm623, %v2281, %v2331
        %v2540 = vsel %vm623, %v2282, %v2332
        %v2543 = vsel %vm623, %v2283, %v2333
        %v2546 = vsel %vm623, %v2284, %v2334
        %v2549 = vsel %vm623, %v2285, %v2335
        %v2552 = vsel %vm623, %v2286, %v2336
        %v2555 = vsel %vm623, %v2287, %v2337
        %v2558 = vsel %vm623, %v2288, %v2338
        %v2561 = vsel %vm623, %v2289, %v2329
        %v2564 = vsel %vm623, %v2359, %v2389
        %v2567 = vsel %vm623, %v2360, %v2390
        %v2570 = vsel %vm623, %v2361, %v2391
        %v2573 = vsel %vm623, %v2362, %v2392
        %v2576 = vsel %vm623, %v2363, %v2393
        %v2579 = vsel %vm623, %v2364, %v2394
        %v2582 = vsel %vm623, %v2365, %v2395
        %v2585 = vsel %vm623, %v2366, %v2396
        %v2588 = vsel %vm623, %v2367, %v2397
        %v2591 = vsel %vm623, %v2358, %v2387
        %v2594 = vsel %vm623, %v2399, %v2426
        %v2597 = vsel %vm623, %v2417, %v2443
        %v2600 = vsel %vm623, %v2418, %v2444
        %v2603 = vsel %vm623, %v2419, %v2445
        %v2606 = vsel %vm623, %v2420, %v2446
        %v2609 = vsel %vm623, %v2421, %v2447
        %v2612 = vsel %vm623, %v2422, %v2448
        %v2615 = vsel %vm623, %v2423, %v2449
        %v2618 = vsel %vm623, %v2424, %v2450
        %v2621 = vsel %vm623, %v2415, %v2442
        %v2624 = vsel %vm623, %v2452, %v2479
        %v2627 = vsel %vm623, %v2470, %v2497
        %v2630 = vsel %vm623, %v2471, %v2498
        %v2633 = vsel %vm623, %v2472, %v2499
        %v2636 = vsel %vm623, %v2473, %v2500
        %v2639 = vsel %vm623, %v2474, %v2501
        %v2642 = vsel %vm623, %v2475, %v2502
        %v2645 = vsel %vm623, %v2476, %v2503
        %v2648 = vsel %vm623, %v2477, %v2504
        %v2651 = vsel %vm623, %v2468, %v2495
        %v2652 = vld [vmem:[%s6] sm:$0xf]
        %v2653 = vld [vmem:[%s6 + $0x4] sm:$0xf]
        %v2654 = vld [vmem:[%s6 + $0x8] sm:$0xf]
        %v2655 = vld [vmem:[%s6 + $0xc] sm:$0xf]
        %v2656 = vld [vmem:[%s6 + $0x10] sm:$0xf]
        %v2657 = vld [vmem:[%s6 + $0x14] sm:$0xf]
        %v2658 = vld [vmem:[%s6 + $0x18] sm:$0xf]
        %v2659 = vld [vmem:[%s6 + $0x1c] sm:$0xf]
        %v2668 = vunpack.c.l.b16 %v2652
        %v2669 = vunpack.c.l.b16 %v2653
        %v2670 = vunpack.c.l.b16 %v2654
        %v2671 = vunpack.c.l.b16 %v2655
        %v2672 = vunpack.c.l.b16 %v2656
        %v2673 = vunpack.c.l.b16 %v2657
        %v2674 = vunpack.c.l.b16 %v2658
        %v2675 = vunpack.c.l.b16 %v2659
        %v2676 = vpack.c.b16 %v2669, %v2668
        %v2677 = vpack.c.b16 %v2671, %v2670
        %v2678 = vpack.c.b16 %v2673, %v2672
        %v2679 = vpack.c.b16 %v2675, %v2674
        %2720 = vrot.lane.b32.xlu0 %v2534, 35
        %v2721 = vpop.permute.xlu0 %2720
        %2722 = vrot.lane.b32.xlu0 %v2537, 35
        %v2723 = vpop.permute.xlu0 %2722
        %2724 = vrot.lane.b32.xlu0 %v2540, 35
        %v2725 = vpop.permute.xlu0 %2724
        %2726 = vrot.lane.b32.xlu0 %v2543, 35
        %v2727 = vpop.permute.xlu0 %2726
        %2728 = vrot.lane.b32.xlu0 %v2546, 35
        %v2729 = vpop.permute.xlu0 %2728
        %2730 = vrot.lane.b32.xlu0 %v2549, 35
        %v2731 = vpop.permute.xlu0 %2730
        %2732 = vrot.lane.b32.xlu0 %v2552, 35
        %v2733 = vpop.permute.xlu0 %2732
        %2734 = vrot.lane.b32.xlu0 %v2555, 35
        %v2735 = vpop.permute.xlu0 %2734
        %2736 = vrot.lane.b32.xlu0 %v2558, 35
        %v2737 = vpop.permute.xlu0 %2736
        %2738 = vrot.lane.b32.xlu0 %v2561, 35
        %v2739 = vpop.permute.xlu0 %2738
        %2740 = vrot.lane.b32.xlu0 %v2564, 35
        %v2741 = vpop.permute.xlu0 %2740
        %2742 = vrot.lane.b32.xlu0 %v2567, 35
        %v2743 = vpop.permute.xlu0 %2742
        %2744 = vrot.lane.b32.xlu0 %v2570, 35
        %v2745 = vpop.permute.xlu0 %2744
        %2746 = vrot.lane.b32.xlu0 %v2573, 35
        %v2747 = vpop.permute.xlu0 %2746
        %2748 = vrot.lane.b32.xlu0 %v2576, 35
        %v2749 = vpop.permute.xlu0 %2748
        %2750 = vrot.lane.b32.xlu0 %v2579, 35
        %v2751 = vpop.permute.xlu0 %2750
        %2752 = vrot.lane.b32.xlu0 %v2582, 35
        %v2753 = vpop.permute.xlu0 %2752
        %2754 = vrot.lane.b32.xlu0 %v2585, 35
        %v2755 = vpop.permute.xlu0 %2754
        %2756 = vrot.lane.b32.xlu0 %v2588, 35
        %v2757 = vpop.permute.xlu0 %2756
        %2758 = vrot.lane.b32.xlu0 %v2591, 35
        %v2759 = vpop.permute.xlu0 %2758
        %2760 = vrot.lane.b32.xlu0 %v2594, 35
        %v2761 = vpop.permute.xlu0 %2760
        %2762 = vrot.lane.b32.xlu0 %v2597, 35
        %v2763 = vpop.permute.xlu0 %2762
        %2764 = vrot.lane.b32.xlu0 %v2600, 35
        %v2765 = vpop.permute.xlu0 %2764
        %2766 = vrot.lane.b32.xlu0 %v2603, 35
        %v2767 = vpop.permute.xlu0 %2766
        %2768 = vrot.lane.b32.xlu0 %v2606, 35
        %v2769 = vpop.permute.xlu0 %2768
        %2770 = vrot.lane.b32.xlu0 %v2609, 35
        %v2771 = vpop.permute.xlu0 %2770
        %2772 = vrot.lane.b32.xlu0 %v2612, 35
        %v2773 = vpop.permute.xlu0 %2772
        %2774 = vrot.lane.b32.xlu0 %v2615, 35
        %v2775 = vpop.permute.xlu0 %2774
        %2776 = vrot.lane.b32.xlu0 %v2618, 35
        %v2777 = vpop.permute.xlu0 %2776
        %2778 = vrot.lane.b32.xlu0 %v2621, 35
        %v2779 = vpop.permute.xlu0 %2778
        %2780 = vrot.lane.b32.xlu0 %v2624, 35
        %v2781 = vpop.permute.xlu0 %2780
        %2782 = vrot.lane.b32.xlu0 %v2627, 35
        %v2783 = vpop.permute.xlu0 %2782
        %2784 = vrot.lane.b32.xlu0 %v2630, 35
        %v2785 = vpop.permute.xlu0 %2784
        %2786 = vrot.lane.b32.xlu0 %v2633, 35
        %v2787 = vpop.permute.xlu0 %2786
        %2788 = vrot.lane.b32.xlu0 %v2636, 35
        %v2789 = vpop.permute.xlu0 %2788
        %2790 = vrot.lane.b32.xlu0 %v2639, 35
        %v2791 = vpop.permute.xlu0 %2790
        %2792 = vrot.lane.b32.xlu0 %v2642, 35
        %v2793 = vpop.permute.xlu0 %2792
        %2794 = vrot.lane.b32.xlu0 %v2645, 35
        %v2795 = vpop.permute.xlu0 %2794
        %2796 = vrot.lane.b32.xlu0 %v2648, 35
        %v2797 = vpop.permute.xlu0 %2796
        %2798 = vrot.lane.b32.xlu0 %v2651, 35
        %v2799 = vpop.permute.xlu0 %2798
        %2800 = vrot.lane.b32.xlu0 %v2506, 35
        %v2801 = vpop.permute.xlu0 %2800
        %2802 = vrot.lane.b32.xlu0 %v2524, 35
        %v2803 = vpop.permute.xlu0 %2802
        %2804 = vrot.lane.b32.xlu0 %v2525, 35
        %v2805 = vpop.permute.xlu0 %2804
        %2806 = vrot.lane.b32.xlu0 %v2526, 35
        %v2807 = vpop.permute.xlu0 %2806
        %2808 = vrot.lane.b32.xlu0 %v2527, 35
        %v2809 = vpop.permute.xlu0 %2808
        %2810 = vrot.lane.b32.xlu0 %v2528, 35
        %v2811 = vpop.permute.xlu0 %2810
        %2812 = vrot.lane.b32.xlu0 %v2529, 35
        %v2813 = vpop.permute.xlu0 %2812
        %2814 = vrot.lane.b32.xlu0 %v2530, 35
        %v2815 = vpop.permute.xlu0 %2814
        %2816 = vrot.lane.b32.xlu0 %v2531, 35
        %v2817 = vpop.permute.xlu0 %2816
        %2818 = vrot.lane.b32.xlu0 %v2522, 35
        %v2819 = vpop.permute.xlu0 %2818
        %vm2820 = vcmask 285696
        %v2821 = vsel %vm2820, %v2721, %v2723
        %v2822 = vsel %vm2820, %v2723, %v2725
        %v2823 = vsel %vm2820, %v2725, %v2727
        %v2824 = vsel %vm2820, %v2727, %v2729
        %v2825 = vsel %vm2820, %v2729, %v2731
        %v2826 = vsel %vm2820, %v2731, %v2733
        %v2827 = vsel %vm2820, %v2733, %v2735
        %v2828 = vsel %vm2820, %v2735, %v2737
        %v2829 = vsel %vm2820, %v2737, %v2739
        %v2830 = vsel %vm2820, %v2741, %v2743
        %v2831 = vsel %vm2820, %v2743, %v2745
        %v2832 = vsel %vm2820, %v2745, %v2747
        %v2833 = vsel %vm2820, %v2747, %v2749
        %v2834 = vsel %vm2820, %v2749, %v2751
        %v2835 = vsel %vm2820, %v2751, %v2753
        %v2836 = vsel %vm2820, %v2753, %v2755
        %v2837 = vsel %vm2820, %v2755, %v2757
        %v2838 = vsel %vm2820, %v2757, %v2759
        %v2839 = vsel %vm2820, %v2761, %v2763
        %v2840 = vsel %vm2820, %v2763, %v2765
        %v2841 = vsel %vm2820, %v2765, %v2767
        %v2842 = vsel %vm2820, %v2767, %v2769
        %v2843 = vsel %vm2820, %v2769, %v2771
        %v2844 = vsel %vm2820, %v2771, %v2773
        %v2845 = vsel %vm2820, %v2773, %v2775
        %v2846 = vsel %vm2820, %v2775, %v2777
        %v2847 = vsel %vm2820, %v2777, %v2779
        %v2848 = vsel %vm2820, %v2781, %v2783
        %v2849 = vsel %vm2820, %v2783, %v2785
        %v2850 = vsel %vm2820, %v2785, %v2787
        %v2851 = vsel %vm2820, %v2787, %v2789
        %v2852 = vsel %vm2820, %v2789, %v2791
        %v2853 = vsel %vm2820, %v2791, %v2793
        %v2854 = vsel %vm2820, %v2793, %v2795
        %v2855 = vsel %vm2820, %v2795, %v2797
        %v2856 = vsel %vm2820, %v2797, %v2799
        %v2857 = vsel %vm2820, %v2801, %v2803
        %v2858 = vsel %vm2820, %v2803, %v2805
        %v2859 = vsel %vm2820, %v2805, %v2807
        %v2860 = vsel %vm2820, %v2807, %v2809
        %v2861 = vsel %vm2820, %v2809, %v2811
        %v2862 = vsel %vm2820, %v2811, %v2813
        %v2863 = vsel %vm2820, %v2813, %v2815
        %v2864 = vsel %vm2820, %v2815, %v2817
        %v2865 = vsel %vm2820, %v2817, %v2819
        %vm2902 = vcmask 588800
        %v2904 = vsel %vm2902, %v2676, 0
        %v2907 = vsel %vm2902, %v2677, 0
        %v2910 = vsel %vm2902, %v2678, 0
        %v2913 = vsel %vm2902, %v2679, 0
        %v2916 = vsel %vm623, %v2857, 0
        %v2919 = vsel %vm623, %v2858, 0
        %v2922 = vsel %vm623, %v2859, 0
        %v2925 = vsel %vm623, %v2860, 0
        %v2928 = vsel %vm623, %v2861, 0
        %v2931 = vsel %vm623, %v2862, 0
        %v2934 = vsel %vm623, %v2863, 0
        %v2937 = vsel %vm623, %v2864, 0
        %v2940 = vsel %vm623, %v2865, 0
        %2942 = vmatprep.subr.bf16.mxu0 0
        %2943 = vmatpush1.bf16.msra.mxu0 0
        %2944 = vmatprep.subr.bf16.mxu0 0
        %2945 = vmatpush1.bf16.msra.mxu0 0
        %2946 = vmatprep.subr.bf16.mxu0 0
        %2947 = vmatpush1.bf16.msra.mxu0 0
        %2948 = vmatprep.subr.bf16.mxu0 %v2919
        %2949 = vmatpush1.bf16.msra.mxu0 %v2916
        %2950 = vmatprep.subr.bf16.mxu0 %v2849
        %2951 = vmatpush1.bf16.msra.mxu0 %v2848
        %2952 = vmatprep.subr.bf16.mxu0 %v2840
        %2953 = vmatpush1.bf16.msra.mxu0 %v2839
        %2954 = vmatprep.subr.bf16.mxu0 %v2831
        %2955 = vmatpush1.bf16.msra.mxu0 %v2830
        %2956 = vmatprep.subr.bf16.mxu0 %v2822
        %2957 = vmatpush1.bf16.msra.mxu0 %v2821
        %2958 = vmatprep.subr.bf16.mxu0 0
        %2959 = vmatpush2.bf16.msra.mxu0 0
        %2960 = vmatprep.subr.bf16.mxu0 0
        %2961 = vmatpush2.bf16.msra.mxu0 0
        %2962 = vmatprep.subr.bf16.mxu0 0
        %2963 = vmatpush2.bf16.msra.mxu0 0
        %2964 = vmatprep.subr.bf16.mxu0 0
        %2965 = vmatpush2.bf16.msra.mxu0 0
        %2966 = vmatprep.subr.bf16.mxu0 0
        %2967 = vmatpush2.bf16.msra.mxu0 0
        %2968 = vmatprep.subr.bf16.mxu0 0
        %2969 = vmatpush2.bf16.msra.mxu0 0
        %2970 = vmatprep.subr.bf16.mxu0 0
        %2971 = vmatpush2.bf16.msra.mxu0 0
        %2972 = vmatprep.subr.bf16.mxu0 0
        %2973 = vmatpush2.bf16.msra.mxu0 0
        %2974 = vmatprep.mubr.bf16.mxu0 0
        %2975 = vmatmul.mubr.bf16.gmra.mxu0 %v2904
        %v2976 = vpop.f32.mrf.mxu0
        %v2977 = vadd.f32 0.0, %v2976
        %v2978 = vpop.f32.mrf.mxu0
        %v2979 = vadd.f32 0.0, %v2978
        %v2980 = vpop.f32.mrf.mxu0
        %v2981 = vadd.f32 0.0, %v2980
        %v2982 = vpop.f32.mrf.mxu0
        %v2983 = vadd.f32 0.0, %v2982
        %2984 = vmatprep.mubr.bf16.mxu0 0
        %2985 = vmatmul.mubr.bf16.gmra.mxu0 %v2907
        %v2986 = vpop.f32.mrf.mxu0
        %v2987 = vadd.f32 0.0, %v2986
        %v2988 = vpop.f32.mrf.mxu0
        %v2989 = vadd.f32 0.0, %v2988
        %v2990 = vpop.f32.mrf.mxu0
        %v2991 = vadd.f32 0.0, %v2990
        %v2992 = vpop.f32.mrf.mxu0
        %v2993 = vadd.f32 0.0, %v2992
        %2994 = vmatprep.mubr.bf16.mxu0 0
        %2995 = vmatmul.mubr.bf16.gmra.mxu0 %v2910
        %v2996 = vpop.f32.mrf.mxu0
        %v2997 = vadd.f32 0.0, %v2996
        %v2998 = vpop.f32.mrf.mxu0
        %v2999 = vadd.f32 0.0, %v2998
        %v3000 = vpop.f32.mrf.mxu0
        %v3001 = vadd.f32 0.0, %v3000
        %v3002 = vpop.f32.mrf.mxu0
        %v3003 = vadd.f32 0.0, %v3002
        %3004 = vmatprep.mubr.bf16.mxu0 0
        %3005 = vmatmul.mubr.bf16.gmra.mxu0 %v2913
        %v3006 = vpop.f32.mrf.mxu0
        %v3007 = vadd.f32 0.0, %v3006
        %v3008 = vpop.f32.mrf.mxu0
        %v3009 = vadd.f32 0.0, %v3008
        %v3010 = vpop.f32.mrf.mxu0
        %v3011 = vadd.f32 0.0, %v3010
        %v3012 = vpop.f32.mrf.mxu0
        %v3013 = vadd.f32 0.0, %v3012
        %3014 = vdwg.mxu0
        %3015 = vmatprep.subr.bf16.mxu0 0
        %3016 = vmatpush1.bf16.msra.mxu0 0
        %3017 = vmatprep.subr.bf16.mxu0 0
        %3018 = vmatpush1.bf16.msra.mxu0 0
        %3019 = vmatprep.subr.bf16.mxu0 0
        %3020 = vmatpush1.bf16.msra.mxu0 0
        %3021 = vmatprep.subr.bf16.mxu0 %v2925
        %3022 = vmatpush1.bf16.msra.mxu0 %v2922
        %3023 = vmatprep.subr.bf16.mxu0 %v2851
        %3024 = vmatpush1.bf16.msra.mxu0 %v2850
        %3025 = vmatprep.subr.bf16.mxu0 %v2842
        %3026 = vmatpush1.bf16.msra.mxu0 %v2841
        %3027 = vmatprep.subr.bf16.mxu0 %v2833
        %3028 = vmatpush1.bf16.msra.mxu0 %v2832
        %3029 = vmatprep.subr.bf16.mxu0 %v2824
        %3030 = vmatpush1.bf16.msra.mxu0 %v2823
        %3031 = vmatprep.subr.bf16.mxu0 0
        %3032 = vmatpush2.bf16.msra.mxu0 0
        %3033 = vmatprep.subr.bf16.mxu0 0
        %3034 = vmatpush2.bf16.msra.mxu0 0
        %3035 = vmatprep.subr.bf16.mxu0 0
        %3036 = vmatpush2.bf16.msra.mxu0 0
        %3037 = vmatprep.subr.bf16.mxu0 0
        %3038 = vmatpush2.bf16.msra.mxu0 0
        %3039 = vmatprep.subr.bf16.mxu0 0
        %3040 = vmatpush2.bf16.msra.mxu0 0
        %3041 = vmatprep.subr.bf16.mxu0 0
        %3042 = vmatpush2.bf16.msra.mxu0 0
        %3043 = vmatprep.subr.bf16.mxu0 0
        %3044 = vmatpush2.bf16.msra.mxu0 0
        %3045 = vmatprep.subr.bf16.mxu0 0
        %3046 = vmatpush2.bf16.msra.mxu0 0
        %3047 = vmatprep.mubr.bf16.mxu0 0
        %3048 = vmatmul.mubr.bf16.gmra.mxu0 %v2904
        %v3049 = vpop.f32.mrf.mxu0
        %v3050 = vadd.f32 0.0, %v3049
        %v3051 = vpop.f32.mrf.mxu0
        %v3052 = vadd.f32 0.0, %v3051
        %v3053 = vpop.f32.mrf.mxu0
        %v3054 = vadd.f32 0.0, %v3053
        %v3055 = vpop.f32.mrf.mxu0
        %v3056 = vadd.f32 0.0, %v3055
        %3057 = vmatprep.mubr.bf16.mxu0 0
        %3058 = vmatmul.mubr.bf16.gmra.mxu0 %v2907
        %v3059 = vpop.f32.mrf.mxu0
        %v3060 = vadd.f32 0.0, %v3059
        %v3061 = vpop.f32.mrf.mxu0
        %v3062 = vadd.f32 0.0, %v3061
        %v3063 = vpop.f32.mrf.mxu0
        %v3064 = vadd.f32 0.0, %v3063
        %v3065 = vpop.f32.mrf.mxu0
        %v3066 = vadd.f32 0.0, %v3065
        %3067 = vmatprep.mubr.bf16.mxu0 0
        %3068 = vmatmul.mubr.bf16.gmra.mxu0 %v2910
        %v3069 = vpop.f32.mrf.mxu0
        %v3070 = vadd.f32 0.0, %v3069
        %v3071 = vpop.f32.mrf.mxu0
        %v3072 = vadd.f32 0.0, %v3071
        %v3073 = vpop.f32.mrf.mxu0
        %v3074 = vadd.f32 0.0, %v3073
        %v3075 = vpop.f32.mrf.mxu0
        %v3076 = vadd.f32 0.0, %v3075
        %3077 = vmatprep.mubr.bf16.mxu0 0
        %3078 = vmatmul.mubr.bf16.gmra.mxu0 %v2913
        %v3079 = vpop.f32.mrf.mxu0
        %v3080 = vadd.f32 0.0, %v3079
        %v3081 = vpop.f32.mrf.mxu0
        %v3082 = vadd.f32 0.0, %v3081
        %v3083 = vpop.f32.mrf.mxu0
        %v3084 = vadd.f32 0.0, %v3083
        %v3085 = vpop.f32.mrf.mxu0
        %v3086 = vadd.f32 0.0, %v3085
        %3087 = vdwg.mxu0
        %3088 = vmatprep.subr.bf16.mxu0 0
        %3089 = vmatpush1.bf16.msra.mxu0 0
        %3090 = vmatprep.subr.bf16.mxu0 0
        %3091 = vmatpush1.bf16.msra.mxu0 0
        %3092 = vmatprep.subr.bf16.mxu0 0
        %3093 = vmatpush1.bf16.msra.mxu0 0
        %3094 = vmatprep.subr.bf16.mxu0 %v2931
        %3095 = vmatpush1.bf16.msra.mxu0 %v2928
        %3096 = vmatprep.subr.bf16.mxu0 %v2853
        %3097 = vmatpush1.bf16.msra.mxu0 %v2852
        %3098 = vmatprep.subr.bf16.mxu0 %v2844
        %3099 = vmatpush1.bf16.msra.mxu0 %v2843
        %3100 = vmatprep.subr.bf16.mxu0 %v2835
        %3101 = vmatpush1.bf16.msra.mxu0 %v2834
        %3102 = vmatprep.subr.bf16.mxu0 %v2826
        %3103 = vmatpush1.bf16.msra.mxu0 %v2825
        %3104 = vmatprep.subr.bf16.mxu0 0
        %3105 = vmatpush2.bf16.msra.mxu0 0
        %3106 = vmatprep.subr.bf16.mxu0 0
        %3107 = vmatpush2.bf16.msra.mxu0 0
        %3108 = vmatprep.subr.bf16.mxu0 0
        %3109 = vmatpush2.bf16.msra.mxu0 0
        %3110 = vmatprep.subr.bf16.mxu0 0
        %3111 = vmatpush2.bf16.msra.mxu0 0
        %3112 = vmatprep.subr.bf16.mxu0 0
        %3113 = vmatpush2.bf16.msra.mxu0 0
        %3114 = vmatprep.subr.bf16.mxu0 0
        %3115 = vmatpush2.bf16.msra.mxu0 0
        %3116 = vmatprep.subr.bf16.mxu0 0
        %3117 = vmatpush2.bf16.msra.mxu0 0
        %3118 = vmatprep.subr.bf16.mxu0 0
        %3119 = vmatpush2.bf16.msra.mxu0 0
        %3120 = vmatprep.mubr.bf16.mxu0 0
        %3121 = vmatmul.mubr.bf16.gmra.mxu0 %v2904
        %v3122 = vpop.f32.mrf.mxu0
        %v3123 = vadd.f32 0.0, %v3122
        %v3124 = vpop.f32.mrf.mxu0
        %v3125 = vadd.f32 0.0, %v3124
        %v3126 = vpop.f32.mrf.mxu0
        %v3127 = vadd.f32 0.0, %v3126
        %v3128 = vpop.f32.mrf.mxu0
        %v3129 = vadd.f32 0.0, %v3128
        %3130 = vmatprep.mubr.bf16.mxu0 0
        %3131 = vmatmul.mubr.bf16.gmra.mxu0 %v2907
        %v3132 = vpop.f32.mrf.mxu0
        %v3133 = vadd.f32 0.0, %v3132
        %v3134 = vpop.f32.mrf.mxu0
        %v3135 = vadd.f32 0.0, %v3134
        %v3136 = vpop.f32.mrf.mxu0
        %v3137 = vadd.f32 0.0, %v3136
        %v3138 = vpop.f32.mrf.mxu0
        %v3139 = vadd.f32 0.0, %v3138
        %3140 = vmatprep.mubr.bf16.mxu0 0
        %3141 = vmatmul.mubr.bf16.gmra.mxu0 %v2910
        %v3142 = vpop.f32.mrf.mxu0
        %v3143 = vadd.f32 0.0, %v3142
        %v3144 = vpop.f32.mrf.mxu0
        %v3145 = vadd.f32 0.0, %v3144
        %v3146 = vpop.f32.mrf.mxu0
        %v3147 = vadd.f32 0.0, %v3146
        %v3148 = vpop.f32.mrf.mxu0
        %v3149 = vadd.f32 0.0, %v3148
        %3150 = vmatprep.mubr.bf16.mxu0 0
        %3151 = vmatmul.mubr.bf16.gmra.mxu0 %v2913
        %v3152 = vpop.f32.mrf.mxu0
        %v3153 = vadd.f32 0.0, %v3152
        %v3154 = vpop.f32.mrf.mxu0
        %v3155 = vadd.f32 0.0, %v3154
        %v3156 = vpop.f32.mrf.mxu0
        %v3157 = vadd.f32 0.0, %v3156
        %v3158 = vpop.f32.mrf.mxu0
        %v3159 = vadd.f32 0.0, %v3158
        %3160 = vdwg.mxu0
        %3161 = vmatprep.subr.bf16.mxu0 0
        %3162 = vmatpush1.bf16.msra.mxu0 0
        %3163 = vmatprep.subr.bf16.mxu0 0
        %3164 = vmatpush1.bf16.msra.mxu0 0
        %3165 = vmatprep.subr.bf16.mxu0 0
        %3166 = vmatpush1.bf16.msra.mxu0 0
        %3167 = vmatprep.subr.bf16.mxu0 %v2937
        %3168 = vmatpush1.bf16.msra.mxu0 %v2934
        %3169 = vmatprep.subr.bf16.mxu0 %v2855
        %3170 = vmatpush1.bf16.msra.mxu0 %v2854
        %3171 = vmatprep.subr.bf16.mxu0 %v2846
        %3172 = vmatpush1.bf16.msra.mxu0 %v2845
        %3173 = vmatprep.subr.bf16.mxu0 %v2837
        %3174 = vmatpush1.bf16.msra.mxu0 %v2836
        %3175 = vmatprep.subr.bf16.mxu0 %v2828
        %3176 = vmatpush1.bf16.msra.mxu0 %v2827
        %3177 = vmatprep.subr.bf16.mxu0 0
        %3178 = vmatpush2.bf16.msra.mxu0 0
        %3179 = vmatprep.subr.bf16.mxu0 0
        %3180 = vmatpush2.bf16.msra.mxu0 0
        %3181 = vmatprep.subr.bf16.mxu0 0
        %3182 = vmatpush2.bf16.msra.mxu0 0
        %3183 = vmatprep.subr.bf16.mxu0 0
        %3184 = vmatpush2.bf16.msra.mxu0 0
        %3185 = vmatprep.subr.bf16.mxu0 0
        %3186 = vmatpush2.bf16.msra.mxu0 0
        %3187 = vmatprep.subr.bf16.mxu0 0
        %3188 = vmatpush2.bf16.msra.mxu0 0
        %3189 = vmatprep.subr.bf16.mxu0 0
        %3190 = vmatpush2.bf16.msra.mxu0 0
        %3191 = vmatprep.subr.bf16.mxu0 0
        %3192 = vmatpush2.bf16.msra.mxu0 0
        %3193 = vmatprep.mubr.bf16.mxu0 0
        %3194 = vmatmul.mubr.bf16.gmra.mxu0 %v2904
        %v3195 = vpop.f32.mrf.mxu0
        %v3196 = vadd.f32 0.0, %v3195
        %v3197 = vpop.f32.mrf.mxu0
        %v3198 = vadd.f32 0.0, %v3197
        %v3199 = vpop.f32.mrf.mxu0
        %v3200 = vadd.f32 0.0, %v3199
        %v3201 = vpop.f32.mrf.mxu0
        %v3202 = vadd.f32 0.0, %v3201
        %3203 = vmatprep.mubr.bf16.mxu0 0
        %3204 = vmatmul.mubr.bf16.gmra.mxu0 %v2907
        %v3205 = vpop.f32.mrf.mxu0
        %v3206 = vadd.f32 0.0, %v3205
        %v3207 = vpop.f32.mrf.mxu0
        %v3208 = vadd.f32 0.0, %v3207
        %v3209 = vpop.f32.mrf.mxu0
        %v3210 = vadd.f32 0.0, %v3209
        %v3211 = vpop.f32.mrf.mxu0
        %v3212 = vadd.f32 0.0, %v3211
        %3213 = vmatprep.mubr.bf16.mxu0 0
        %3214 = vmatmul.mubr.bf16.gmra.mxu0 %v2910
        %v3215 = vpop.f32.mrf.mxu0
        %v3216 = vadd.f32 0.0, %v3215
        %v3217 = vpop.f32.mrf.mxu0
        %v3218 = vadd.f32 0.0, %v3217
        %v3219 = vpop.f32.mrf.mxu0
        %v3220 = vadd.f32 0.0, %v3219
        %v3221 = vpop.f32.mrf.mxu0
        %v3222 = vadd.f32 0.0, %v3221
        %3223 = vmatprep.mubr.bf16.mxu0 0
        %3224 = vmatmul.mubr.bf16.gmra.mxu0 %v2913
        %v3225 = vpop.f32.mrf.mxu0
        %v3226 = vadd.f32 0.0, %v3225
        %v3227 = vpop.f32.mrf.mxu0
        %v3228 = vadd.f32 0.0, %v3227
        %v3229 = vpop.f32.mrf.mxu0
        %v3230 = vadd.f32 0.0, %v3229
        %v3231 = vpop.f32.mrf.mxu0
        %v3232 = vadd.f32 0.0, %v3231
        %3233 = vdwg.mxu0
        %3234 = vmatprep.subr.bf16.mxu0 0
        %3235 = vmatpush1.bf16.msra.mxu0 0
        %3236 = vmatprep.subr.bf16.mxu0 0
        %3237 = vmatpush1.bf16.msra.mxu0 0
        %3238 = vmatprep.subr.bf16.mxu0 0
        %3239 = vmatpush1.bf16.msra.mxu0 0
        %3240 = vmatprep.subr.bf16.mxu0 0
        %3241 = vmatpush1.bf16.msra.mxu0 %v2940
        %3242 = vmatprep.subr.bf16.mxu0 0
        %3243 = vmatpush1.bf16.msra.mxu0 %v2856
        %3244 = vmatprep.subr.bf16.mxu0 0
        %3245 = vmatpush1.bf16.msra.mxu0 %v2847
        %3246 = vmatprep.subr.bf16.mxu0 0
        %3247 = vmatpush1.bf16.msra.mxu0 %v2838
        %3248 = vmatprep.subr.bf16.mxu0 0
        %3249 = vmatpush1.bf16.msra.mxu0 %v2829
        %3250 = vmatprep.subr.bf16.mxu0 0
        %3251 = vmatpush2.bf16.msra.mxu0 0
        %3252 = vmatprep.subr.bf16.mxu0 0
        %3253 = vmatpush2.bf16.msra.mxu0 0
        %3254 = vmatprep.subr.bf16.mxu0 0
        %3255 = vmatpush2.bf16.msra.mxu0 0
        %3256 = vmatprep.subr.bf16.mxu0 0
        %3257 = vmatpush2.bf16.msra.mxu0 0
        %3258 = vmatprep.subr.bf16.mxu0 0
        %3259 = vmatpush2.bf16.msra.mxu0 0
        %3260 = vmatprep.subr.bf16.mxu0 0
        %3261 = vmatpush2.bf16.msra.mxu0 0
        %3262 = vmatprep.subr.bf16.mxu0 0
        %3263 = vmatpush2.bf16.msra.mxu0 0
        %3264 = vmatprep.subr.bf16.mxu0 0
        %3265 = vmatpush2.bf16.msra.mxu0 0
        %3266 = vmatprep.mubr.bf16.mxu0 0
        %3267 = vmatmul.mubr.bf16.gmra.mxu0 %v2904
        %v3268 = vpop.f32.mrf.mxu0
        %v3269 = vadd.f32 0.0, %v3268
        %v3270 = vpop.f32.mrf.mxu0
        %v3271 = vpop.f32.mrf.mxu0
        %v3272 = vadd.f32 0.0, %v3271
        %v3273 = vpop.f32.mrf.mxu0
        %3274 = vmatprep.mubr.bf16.mxu0 0
        %3275 = vmatmul.mubr.bf16.gmra.mxu0 %v2907
        %v3276 = vpop.f32.mrf.mxu0
        %v3277 = vadd.f32 0.0, %v3276
        %v3278 = vpop.f32.mrf.mxu0
        %v3279 = vpop.f32.mrf.mxu0
        %v3280 = vadd.f32 0.0, %v3279
        %v3281 = vpop.f32.mrf.mxu0
        %3282 = vmatprep.mubr.bf16.mxu0 0
        %3283 = vmatmul.mubr.bf16.gmra.mxu0 %v2910
        %v3284 = vpop.f32.mrf.mxu0
        %v3285 = vadd.f32 0.0, %v3284
        %v3286 = vpop.f32.mrf.mxu0
        %v3287 = vpop.f32.mrf.mxu0
        %v3288 = vadd.f32 0.0, %v3287
        %v3289 = vpop.f32.mrf.mxu0
        %3290 = vmatprep.mubr.bf16.mxu0 0
        %3291 = vmatmul.mubr.bf16.gmra.mxu0 %v2913
        %v3292 = vpop.f32.mrf.mxu0
        %v3293 = vadd.f32 0.0, %v3292
        %v3294 = vpop.f32.mrf.mxu0
        %v3295 = vpop.f32.mrf.mxu0
        %v3296 = vadd.f32 0.0, %v3295
        %v3297 = vpop.f32.mrf.mxu0
        %3298 = vdwg.mxu0
        %v3299 = vld [vmem:[%s7] sm:$0xff]
        %v3300 = vld [vmem:[%s7 + $0x8] sm:$0xff]
        %v3301 = vld [vmem:[%s7 + $0x10] sm:$0xff]
        %v3302 = vld [vmem:[%s7 + $0x18] sm:$0xff]
        %v3303 = vld [vmem:[%s7 + $0x20] sm:$0xff]
        %v3304 = vld [vmem:[%s7 + $0x28] sm:$0xff]
        %v3305 = vld [vmem:[%s7 + $0x30] sm:$0xff]
        %v3306 = vld [vmem:[%s7 + $0x38] sm:$0xff]
        %3308 = vset.pattern.permute.xlu0 0
        %3309 = vperm.xlu0 %3308, %v3299
        %v3310 = vpop.permute.xlu0 %3309
        %3313 = vset.pattern.permute.xlu0 0
        %3314 = vperm.xlu0 %3313, %v3300
        %v3315 = vpop.permute.xlu0 %3314
        %3318 = vset.pattern.permute.xlu0 0
        %3319 = vperm.xlu0 %3318, %v3301
        %v3320 = vpop.permute.xlu0 %3319
        %3323 = vset.pattern.permute.xlu0 0
        %3324 = vperm.xlu0 %3323, %v3302
        %v3325 = vpop.permute.xlu0 %3324
        %3328 = vset.pattern.permute.xlu0 0
        %3329 = vperm.xlu0 %3328, %v3303
        %v3330 = vpop.permute.xlu0 %3329
        %3333 = vset.pattern.permute.xlu0 0
        %3334 = vperm.xlu0 %3333, %v3304
        %v3335 = vpop.permute.xlu0 %3334
        %3338 = vset.pattern.permute.xlu0 0
        %3339 = vperm.xlu0 %3338, %v3305
        %v3340 = vpop.permute.xlu0 %3339
        %3343 = vset.pattern.permute.xlu0 0
        %3344 = vperm.xlu0 %3343, %v3306
        %v3345 = vpop.permute.xlu0 %3344
        %v3347 = vmul.f32 %v2977, %v3310
        %v3348 = vmul.f32 %v2979, %v3310
        %v3349 = vmul.f32 %v3050, %v3310
        %v3350 = vmul.f32 %v3052, %v3310
        %v3351 = vmul.f32 %v3123, %v3310
        %v3352 = vmul.f32 %v3125, %v3310
        %v3353 = vmul.f32 %v3196, %v3310
        %v3354 = vmul.f32 %v3198, %v3310
        %v3355 = vmul.f32 %v3269, %v3310
        %v3356 = vmul.f32 %v2981, %v3315
        %v3357 = vmul.f32 %v2983, %v3315
        %v3358 = vmul.f32 %v3054, %v3315
        %v3359 = vmul.f32 %v3056, %v3315
        %v3360 = vmul.f32 %v3127, %v3315
        %v3361 = vmul.f32 %v3129, %v3315
        %v3362 = vmul.f32 %v3200, %v3315
        %v3363 = vmul.f32 %v3202, %v3315
        %v3364 = vmul.f32 %v3272, %v3315
        %v3365 = vmul.f32 %v2987, %v3320
        %v3366 = vmul.f32 %v2989, %v3320
        %v3367 = vmul.f32 %v3060, %v3320
        %v3368 = vmul.f32 %v3062, %v3320
        %v3369 = vmul.f32 %v3133, %v3320
        %v3370 = vmul.f32 %v3135, %v3320
        %v3371 = vmul.f32 %v3206, %v3320
        %v3372 = vmul.f32 %v3208, %v3320
        %v3373 = vmul.f32 %v3277, %v3320
        %v3374 = vmul.f32 %v2991, %v3325
        %v3375 = vmul.f32 %v2993, %v3325
        %v3376 = vmul.f32 %v3064, %v3325
        %v3377 = vmul.f32 %v3066, %v3325
        %v3378 = vmul.f32 %v3137, %v3325
        %v3379 = vmul.f32 %v3139, %v3325
        %v3380 = vmul.f32 %v3210, %v3325
        %v3381 = vmul.f32 %v3212, %v3325
        %v3382 = vmul.f32 %v3280, %v3325
        %v3383 = vmul.f32 %v2997, %v3330
        %v3384 = vmul.f32 %v2999, %v3330
        %v3385 = vmul.f32 %v3070, %v3330
        %v3386 = vmul.f32 %v3072, %v3330
        %v3387 = vmul.f32 %v3143, %v3330
        %v3388 = vmul.f32 %v3145, %v3330
        %v3389 = vmul.f32 %v3216, %v3330
        %v3390 = vmul.f32 %v3218, %v3330
        %v3391 = vmul.f32 %v3285, %v3330
        %v3392 = vmul.f32 %v3001, %v3335
        %v3393 = vmul.f32 %v3003, %v3335
        %v3394 = vmul.f32 %v3074, %v3335
        %v3395 = vmul.f32 %v3076, %v3335
        %v3396 = vmul.f32 %v3147, %v3335
        %v3397 = vmul.f32 %v3149, %v3335
        %v3398 = vmul.f32 %v3220, %v3335
        %v3399 = vmul.f32 %v3222, %v3335
        %v3400 = vmul.f32 %v3288, %v3335
        %v3401 = vmul.f32 %v3007, %v3340
        %v3402 = vmul.f32 %v3009, %v3340
        %v3403 = vmul.f32 %v3080, %v3340
        %v3404 = vmul.f32 %v3082, %v3340
        %v3405 = vmul.f32 %v3153, %v3340
        %v3406 = vmul.f32 %v3155, %v3340
        %v3407 = vmul.f32 %v3226, %v3340
        %v3408 = vmul.f32 %v3228, %v3340
        %v3409 = vmul.f32 %v3293, %v3340
        %v3410 = vmul.f32 %v3011, %v3345
        %v3411 = vmul.f32 %v3013, %v3345
        %v3412 = vmul.f32 %v3084, %v3345
        %v3413 = vmul.f32 %v3086, %v3345
        %v3414 = vmul.f32 %v3157, %v3345
        %v3415 = vmul.f32 %v3159, %v3345
        %v3416 = vmul.f32 %v3230, %v3345
        %v3417 = vmul.f32 %v3232, %v3345
        %v3418 = vmul.f32 %v3296, %v3345
        %v3419 = vld [vmem:[%s8] sm:$0xff]
        %v3420 = vld [vmem:[%s8 + $0x8] sm:$0xff]
        %v3421 = vld [vmem:[%s8 + $0x10] sm:$0xff]
        %v3422 = vld [vmem:[%s8 + $0x18] sm:$0xff]
        %v3423 = vld [vmem:[%s8 + $0x20] sm:$0xff]
        %v3424 = vld [vmem:[%s8 + $0x28] sm:$0xff]
        %v3425 = vld [vmem:[%s8 + $0x30] sm:$0xff]
        %v3426 = vld [vmem:[%s8 + $0x38] sm:$0xff]
        %3428 = vset.pattern.permute.xlu0 0
        %3429 = vperm.xlu0 %3428, %v3419
        %v3430 = vpop.permute.xlu0 %3429
        %3433 = vset.pattern.permute.xlu0 0
        %3434 = vperm.xlu0 %3433, %v3420
        %v3435 = vpop.permute.xlu0 %3434
        %3438 = vset.pattern.permute.xlu0 0
        %3439 = vperm.xlu0 %3438, %v3421
        %v3440 = vpop.permute.xlu0 %3439
        %3443 = vset.pattern.permute.xlu0 0
        %3444 = vperm.xlu0 %3443, %v3422
        %v3445 = vpop.permute.xlu0 %3444
        %3448 = vset.pattern.permute.xlu0 0
        %3449 = vperm.xlu0 %3448, %v3423
        %v3450 = vpop.permute.xlu0 %3449
        %3453 = vset.pattern.permute.xlu0 0
        %3454 = vperm.xlu0 %3453, %v3424
        %v3455 = vpop.permute.xlu0 %3454
        %3458 = vset.pattern.permute.xlu0 0
        %3459 = vperm.xlu0 %3458, %v3425
        %v3460 = vpop.permute.xlu0 %3459
        %3463 = vset.pattern.permute.xlu0 0
        %3464 = vperm.xlu0 %3463, %v3426
        %v3465 = vpop.permute.xlu0 %3464
        %v3467 = vadd.f32 %v3347, %v3430
        %v3468 = vadd.f32 %v3348, %v3430
        %v3469 = vadd.f32 %v3349, %v3430
        %v3470 = vadd.f32 %v3350, %v3430
        %v3471 = vadd.f32 %v3351, %v3430
        %v3472 = vadd.f32 %v3352, %v3430
        %v3473 = vadd.f32 %v3353, %v3430
        %v3474 = vadd.f32 %v3354, %v3430
        %v3475 = vadd.f32 %v3355, %v3430
        %v3476 = vadd.f32 %v3356, %v3435
        %v3477 = vadd.f32 %v3357, %v3435
        %v3478 = vadd.f32 %v3358, %v3435
        %v3479 = vadd.f32 %v3359, %v3435
        %v3480 = vadd.f32 %v3360, %v3435
        %v3481 = vadd.f32 %v3361, %v3435
        %v3482 = vadd.f32 %v3362, %v3435
        %v3483 = vadd.f32 %v3363, %v3435
        %v3484 = vadd.f32 %v3364, %v3435
        %v3485 = vadd.f32 %v3365, %v3440
        %v3486 = vadd.f32 %v3366, %v3440
        %v3487 = vadd.f32 %v3367, %v3440
        %v3488 = vadd.f32 %v3368, %v3440
        %v3489 = vadd.f32 %v3369, %v3440
        %v3490 = vadd.f32 %v3370, %v3440
        %v3491 = vadd.f32 %v3371, %v3440
        %v3492 = vadd.f32 %v3372, %v3440
        %v3493 = vadd.f32 %v3373, %v3440
        %v3494 = vadd.f32 %v3374, %v3445
        %v3495 = vadd.f32 %v3375, %v3445
        %v3496 = vadd.f32 %v3376, %v3445
        %v3497 = vadd.f32 %v3377, %v3445
        %v3498 = vadd.f32 %v3378, %v3445
        %v3499 = vadd.f32 %v3379, %v3445
        %v3500 = vadd.f32 %v3380, %v3445
        %v3501 = vadd.f32 %v3381, %v3445
        %v3502 = vadd.f32 %v3382, %v3445
        %v3503 = vadd.f32 %v3383, %v3450
        %v3504 = vadd.f32 %v3384, %v3450
        %v3505 = vadd.f32 %v3385, %v3450
        %v3506 = vadd.f32 %v3386, %v3450
        %v3507 = vadd.f32 %v3387, %v3450
        %v3508 = vadd.f32 %v3388, %v3450
        %v3509 = vadd.f32 %v3389, %v3450
        %v3510 = vadd.f32 %v3390, %v3450
        %v3511 = vadd.f32 %v3391, %v3450
        %v3512 = vadd.f32 %v3392, %v3455
        %v3513 = vadd.f32 %v3393, %v3455
        %v3514 = vadd.f32 %v3394, %v3455
        %v3515 = vadd.f32 %v3395, %v3455
        %v3516 = vadd.f32 %v3396, %v3455
        %v3517 = vadd.f32 %v3397, %v3455
        %v3518 = vadd.f32 %v3398, %v3455
        %v3519 = vadd.f32 %v3399, %v3455
        %v3520 = vadd.f32 %v3400, %v3455
        %v3521 = vadd.f32 %v3401, %v3460
        %v3522 = vadd.f32 %v3402, %v3460
        %v3523 = vadd.f32 %v3403, %v3460
        %v3524 = vadd.f32 %v3404, %v3460
        %v3525 = vadd.f32 %v3405, %v3460
        %v3526 = vadd.f32 %v3406, %v3460
        %v3527 = vadd.f32 %v3407, %v3460
        %v3528 = vadd.f32 %v3408, %v3460
        %v3529 = vadd.f32 %v3409, %v3460
        %v3530 = vadd.f32 %v3410, %v3465
        %v3531 = vadd.f32 %v3411, %v3465
        %v3532 = vadd.f32 %v3412, %v3465
        %v3533 = vadd.f32 %v3413, %v3465
        %v3534 = vadd.f32 %v3414, %v3465
        %v3535 = vadd.f32 %v3415, %v3465
        %v3536 = vadd.f32 %v3416, %v3465
        %v3537 = vadd.f32 %v3417, %v3465
        %v3538 = vadd.f32 %v3418, %v3465
        %v3539 = vmul.f32 %v3467, 0.01
        %v3540 = vmul.f32 %v3468, 0.01
        %v3541 = vmul.f32 %v3469, 0.01
        %v3542 = vmul.f32 %v3470, 0.01
        %v3543 = vmul.f32 %v3471, 0.01
        %v3544 = vmul.f32 %v3472, 0.01
        %v3545 = vmul.f32 %v3473, 0.01
        %v3546 = vmul.f32 %v3474, 0.01
        %v3547 = vmul.f32 %v3475, 0.01
        %v3548 = vmul.f32 %v3476, 0.01
        %v3549 = vmul.f32 %v3477, 0.01
        %v3550 = vmul.f32 %v3478, 0.01
        %v3551 = vmul.f32 %v3479, 0.01
        %v3552 = vmul.f32 %v3480, 0.01
        %v3553 = vmul.f32 %v3481, 0.01
        %v3554 = vmul.f32 %v3482, 0.01
        %v3555 = vmul.f32 %v3483, 0.01
        %v3556 = vmul.f32 %v3484, 0.01
        %v3557 = vmul.f32 %v3485, 0.01
        %v3558 = vmul.f32 %v3486, 0.01
        %v3559 = vmul.f32 %v3487, 0.01
        %v3560 = vmul.f32 %v3488, 0.01
        %v3561 = vmul.f32 %v3489, 0.01
        %v3562 = vmul.f32 %v3490, 0.01
        %v3563 = vmul.f32 %v3491, 0.01
        %v3564 = vmul.f32 %v3492, 0.01
        %v3565 = vmul.f32 %v3493, 0.01
        %v3566 = vmul.f32 %v3494, 0.01
        %v3567 = vmul.f32 %v3495, 0.01
        %v3568 = vmul.f32 %v3496, 0.01
        %v3569 = vmul.f32 %v3497, 0.01
        %v3570 = vmul.f32 %v3498, 0.01
        %v3571 = vmul.f32 %v3499, 0.01
        %v3572 = vmul.f32 %v3500, 0.01
        %v3573 = vmul.f32 %v3501, 0.01
        %v3574 = vmul.f32 %v3502, 0.01
        %v3575 = vmul.f32 %v3503, 0.01
        %v3576 = vmul.f32 %v3504, 0.01
        %v3577 = vmul.f32 %v3505, 0.01
        %v3578 = vmul.f32 %v3506, 0.01
        %v3579 = vmul.f32 %v3507, 0.01
        %v3580 = vmul.f32 %v3508, 0.01
        %v3581 = vmul.f32 %v3509, 0.01
        %v3582 = vmul.f32 %v3510, 0.01
        %v3583 = vmul.f32 %v3511, 0.01
        %v3584 = vmul.f32 %v3512, 0.01
        %v3585 = vmul.f32 %v3513, 0.01
        %v3586 = vmul.f32 %v3514, 0.01
        %v3587 = vmul.f32 %v3515, 0.01
        %v3588 = vmul.f32 %v3516, 0.01
        %v3589 = vmul.f32 %v3517, 0.01
        %v3590 = vmul.f32 %v3518, 0.01
        %v3591 = vmul.f32 %v3519, 0.01
        %v3592 = vmul.f32 %v3520, 0.01
        %v3593 = vmul.f32 %v3521, 0.01
        %v3594 = vmul.f32 %v3522, 0.01
        %v3595 = vmul.f32 %v3523, 0.01
        %v3596 = vmul.f32 %v3524, 0.01
        %v3597 = vmul.f32 %v3525, 0.01
        %v3598 = vmul.f32 %v3526, 0.01
        %v3599 = vmul.f32 %v3527, 0.01
        %v3600 = vmul.f32 %v3528, 0.01
        %v3601 = vmul.f32 %v3529, 0.01
        %v3602 = vmul.f32 %v3530, 0.01
        %v3603 = vmul.f32 %v3531, 0.01
        %v3604 = vmul.f32 %v3532, 0.01
        %v3605 = vmul.f32 %v3533, 0.01
        %v3606 = vmul.f32 %v3534, 0.01
        %v3607 = vmul.f32 %v3535, 0.01
        %v3608 = vmul.f32 %v3536, 0.01
        %v3609 = vmul.f32 %v3537, 0.01
        %v3610 = vmul.f32 %v3538, 0.01
        %v3611 = vmax.f32 %v3467, %v3539
        %v3612 = vmax.f32 %v3468, %v3540
        %v3613 = vmax.f32 %v3469, %v3541
        %v3614 = vmax.f32 %v3470, %v3542
        %v3615 = vmax.f32 %v3471, %v3543
        %v3616 = vmax.f32 %v3472, %v3544
        %v3617 = vmax.f32 %v3473, %v3545
        %v3618 = vmax.f32 %v3474, %v3546
        %v3619 = vmax.f32 %v3475, %v3547
        %v3620 = vmax.f32 %v3476, %v3548
        %v3621 = vmax.f32 %v3477, %v3549
        %v3622 = vmax.f32 %v3478, %v3550
        %v3623 = vmax.f32 %v3479, %v3551
        %v3624 = vmax.f32 %v3480, %v3552
        %v3625 = vmax.f32 %v3481, %v3553
        %v3626 = vmax.f32 %v3482, %v3554
        %v3627 = vmax.f32 %v3483, %v3555
        %v3628 = vmax.f32 %v3484, %v3556
        %v3629 = vmax.f32 %v3485, %v3557
        %v3630 = vmax.f32 %v3486, %v3558
        %v3631 = vmax.f32 %v3487, %v3559
        %v3632 = vmax.f32 %v3488, %v3560
        %v3633 = vmax.f32 %v3489, %v3561
        %v3634 = vmax.f32 %v3490, %v3562
        %v3635 = vmax.f32 %v3491, %v3563
        %v3636 = vmax.f32 %v3492, %v3564
        %v3637 = vmax.f32 %v3493, %v3565
        %v3638 = vmax.f32 %v3494, %v3566
        %v3639 = vmax.f32 %v3495, %v3567
        %v3640 = vmax.f32 %v3496, %v3568
        %v3641 = vmax.f32 %v3497, %v3569
        %v3642 = vmax.f32 %v3498, %v3570
        %v3643 = vmax.f32 %v3499, %v3571
        %v3644 = vmax.f32 %v3500, %v3572
        %v3645 = vmax.f32 %v3501, %v3573
        %v3646 = vmax.f32 %v3502, %v3574
        %v3647 = vmax.f32 %v3503, %v3575
        %v3648 = vmax.f32 %v3504, %v3576
        %v3649 = vmax.f32 %v3505, %v3577
        %v3650 = vmax.f32 %v3506, %v3578
        %v3651 = vmax.f32 %v3507, %v3579
        %v3652 = vmax.f32 %v3508, %v3580
        %v3653 = vmax.f32 %v3509, %v3581
        %v3654 = vmax.f32 %v3510, %v3582
        %v3655 = vmax.f32 %v3511, %v3583
        %v3656 = vmax.f32 %v3512, %v3584
        %v3657 = vmax.f32 %v3513, %v3585
        %v3658 = vmax.f32 %v3514, %v3586
        %v3659 = vmax.f32 %v3515, %v3587
        %v3660 = vmax.f32 %v3516, %v3588
        %v3661 = vmax.f32 %v3517, %v3589
        %v3662 = vmax.f32 %v3518, %v3590
        %v3663 = vmax.f32 %v3519, %v3591
        %v3664 = vmax.f32 %v3520, %v3592
        %v3665 = vmax.f32 %v3521, %v3593
        %v3666 = vmax.f32 %v3522, %v3594
        %v3667 = vmax.f32 %v3523, %v3595
        %v3668 = vmax.f32 %v3524, %v3596
        %v3669 = vmax.f32 %v3525, %v3597
        %v3670 = vmax.f32 %v3526, %v3598
        %v3671 = vmax.f32 %v3527, %v3599
        %v3672 = vmax.f32 %v3528, %v3600
        %v3673 = vmax.f32 %v3529, %v3601
        %v3674 = vmax.f32 %v3530, %v3602
        %v3675 = vmax.f32 %v3531, %v3603
        %v3676 = vmax.f32 %v3532, %v3604
        %v3677 = vmax.f32 %v3533, %v3605
        %v3678 = vmax.f32 %v3534, %v3606
        %v3679 = vmax.f32 %v3535, %v3607
        %v3680 = vmax.f32 %v3536, %v3608
        %v3681 = vmax.f32 %v3537, %v3609
        %v3682 = vmax.f32 %v3538, %v3610
        %v3683 = vld [vmem:[%s2] sm:$0xff]
        %v3684 = vld [vmem:[%s2 + $0x8] sm:$0x1]
        %v3687 = vlaneseq
        %v3688 = vshrl.u32 %v3687, 7
        %v3689 = vsub.s32 0, %v3688
        %v3690 = vrot.slane %v3683, %v3689
        %v3691 = vlaneseq
        %v3692 = vshrl.u32 %v3691, 7
        %v3693 = vsub.s32 1, %v3692
        %v3694 = vrot.slane %v3683, %v3693
        %v3695 = vlaneseq
        %v3696 = vshrl.u32 %v3695, 7
        %v3697 = vsub.s32 2, %v3696
        %v3698 = vrot.slane %v3683, %v3697
        %v3699 = vlaneseq
        %v3700 = vshrl.u32 %v3699, 7
        %v3701 = vsub.s32 3, %v3700
        %v3702 = vrot.slane %v3683, %v3701
        %v3703 = vlaneseq
        %v3704 = vshrl.u32 %v3703, 7
        %v3705 = vsub.s32 4, %v3704
        %v3706 = vrot.slane %v3683, %v3705
        %v3707 = vlaneseq
        %v3708 = vshrl.u32 %v3707, 7
        %v3709 = vsub.s32 5, %v3708
        %v3710 = vrot.slane %v3683, %v3709
        %v3711 = vlaneseq
        %v3712 = vshrl.u32 %v3711, 7
        %v3713 = vsub.s32 6, %v3712
        %v3714 = vrot.slane %v3683, %v3713
        %v3715 = vlaneseq
        %v3716 = vshrl.u32 %v3715, 7
        %v3717 = vsub.s32 7, %v3716
        %v3718 = vrot.slane %v3683, %v3717
        %v3719 = vlaneseq
        %v3720 = vshrl.u32 %v3719, 7
        %v3721 = vsub.s32 0, %v3720
        %v3722 = vrot.slane %v3684, %v3721
        %v3732 = vmul.f32 %v3611, %v3690
        %v3733 = vmul.f32 %v3612, %v3694
        %v3734 = vmul.f32 %v3613, %v3698
        %v3735 = vmul.f32 %v3614, %v3702
        %v3736 = vmul.f32 %v3615, %v3706
        %v3737 = vmul.f32 %v3616, %v3710
        %v3738 = vmul.f32 %v3617, %v3714
        %v3739 = vmul.f32 %v3618, %v3718
        %v3740 = vmul.f32 %v3619, %v3722
        %v3741 = vmul.f32 %v3620, %v3690
        %v3742 = vmul.f32 %v3621, %v3694
        %v3743 = vmul.f32 %v3622, %v3698
        %v3744 = vmul.f32 %v3623, %v3702
        %v3745 = vmul.f32 %v3624, %v3706
        %v3746 = vmul.f32 %v3625, %v3710
        %v3747 = vmul.f32 %v3626, %v3714
        %v3748 = vmul.f32 %v3627, %v3718
        %v3749 = vmul.f32 %v3628, %v3722
        %v3750 = vmul.f32 %v3629, %v3690
        %v3751 = vmul.f32 %v3630, %v3694
        %v3752 = vmul.f32 %v3631, %v3698
        %v3753 = vmul.f32 %v3632, %v3702
        %v3754 = vmul.f32 %v3633, %v3706
        %v3755 = vmul.f32 %v3634, %v3710
        %v3756 = vmul.f32 %v3635, %v3714
        %v3757 = vmul.f32 %v3636, %v3718
        %v3758 = vmul.f32 %v3637, %v3722
        %v3759 = vmul.f32 %v3638, %v3690
        %v3760 = vmul.f32 %v3639, %v3694
        %v3761 = vmul.f32 %v3640, %v3698
        %v3762 = vmul.f32 %v3641, %v3702
        %v3763 = vmul.f32 %v3642, %v3706
        %v3764 = vmul.f32 %v3643, %v3710
        %v3765 = vmul.f32 %v3644, %v3714
        %v3766 = vmul.f32 %v3645, %v3718
        %v3767 = vmul.f32 %v3646, %v3722
        %v3768 = vmul.f32 %v3647, %v3690
        %v3769 = vmul.f32 %v3648, %v3694
        %v3770 = vmul.f32 %v3649, %v3698
        %v3771 = vmul.f32 %v3650, %v3702
        %v3772 = vmul.f32 %v3651, %v3706
        %v3773 = vmul.f32 %v3652, %v3710
        %v3774 = vmul.f32 %v3653, %v3714
        %v3775 = vmul.f32 %v3654, %v3718
        %v3776 = vmul.f32 %v3655, %v3722
        %v3777 = vmul.f32 %v3656, %v3690
        %v3778 = vmul.f32 %v3657, %v3694
        %v3779 = vmul.f32 %v3658, %v3698
        %v3780 = vmul.f32 %v3659, %v3702
        %v3781 = vmul.f32 %v3660, %v3706
        %v3782 = vmul.f32 %v3661, %v3710
        %v3783 = vmul.f32 %v3662, %v3714
        %v3784 = vmul.f32 %v3663, %v3718
        %v3785 = vmul.f32 %v3664, %v3722
        %v3786 = vmul.f32 %v3665, %v3690
        %v3787 = vmul.f32 %v3666, %v3694
        %v3788 = vmul.f32 %v3667, %v3698
        %v3789 = vmul.f32 %v3668, %v3702
        %v3790 = vmul.f32 %v3669, %v3706
        %v3791 = vmul.f32 %v3670, %v3710
        %v3792 = vmul.f32 %v3671, %v3714
        %v3793 = vmul.f32 %v3672, %v3718
        %v3794 = vmul.f32 %v3673, %v3722
        %v3795 = vmul.f32 %v3674, %v3690
        %v3796 = vmul.f32 %v3675, %v3694
        %v3797 = vmul.f32 %v3676, %v3698
        %v3798 = vmul.f32 %v3677, %v3702
        %v3799 = vmul.f32 %v3678, %v3706
        %v3800 = vmul.f32 %v3679, %v3710
        %v3801 = vmul.f32 %v3680, %v3714
        %v3802 = vmul.f32 %v3681, %v3718
        %v3803 = vmul.f32 %v3682, %v3722
        %v3804 = vpack.c.bf16 %v3741, %v3732
        %v3805 = vpack.c.bf16 %v3742, %v3733
        %v3806 = vpack.c.bf16 %v3743, %v3734
        %v3807 = vpack.c.bf16 %v3744, %v3735
        %v3808 = vpack.c.bf16 %v3745, %v3736
        %v3809 = vpack.c.bf16 %v3746, %v3737
        %v3810 = vpack.c.bf16 %v3747, %v3738
        %v3811 = vpack.c.bf16 %v3748, %v3739
        %v3812 = vpack.c.bf16 %v3749, %v3740
        %v3813 = vpack.c.bf16 %v3759, %v3750
        %v3814 = vpack.c.bf16 %v3760, %v3751
        %v3815 = vpack.c.bf16 %v3761, %v3752
        %v3816 = vpack.c.bf16 %v3762, %v3753
        %v3817 = vpack.c.bf16 %v3763, %v3754
        %v3818 = vpack.c.bf16 %v3764, %v3755
        %v3819 = vpack.c.bf16 %v3765, %v3756
        %v3820 = vpack.c.bf16 %v3766, %v3757
        %v3821 = vpack.c.bf16 %v3767, %v3758
        %v3822 = vpack.c.bf16 %v3777, %v3768
        %v3823 = vpack.c.bf16 %v3778, %v3769
        %v3824 = vpack.c.bf16 %v3779, %v3770
        %v3825 = vpack.c.bf16 %v3780, %v3771
        %v3826 = vpack.c.bf16 %v3781, %v3772
        %v3827 = vpack.c.bf16 %v3782, %v3773
        %v3828 = vpack.c.bf16 %v3783, %v3774
        %v3829 = vpack.c.bf16 %v3784, %v3775
        %v3830 = vpack.c.bf16 %v3785, %v3776
        %v3831 = vpack.c.bf16 %v3795, %v3786
        %v3832 = vpack.c.bf16 %v3796, %v3787
        %v3833 = vpack.c.bf16 %v3797, %v3788
        %v3834 = vpack.c.bf16 %v3798, %v3789
        %v3835 = vpack.c.bf16 %v3799, %v3790
        %v3836 = vpack.c.bf16 %v3800, %v3791
        %v3837 = vpack.c.bf16 %v3801, %v3792
        %v3838 = vpack.c.bf16 %v3802, %v3793
        %v3839 = vpack.c.bf16 %v3803, %v3794
        %vm3840 = vcmask 523264
        %v3843 = vsel %vm3840, %v3812, 0
        %v3845 = vsel %vm3840, %v3821, 0
        %v3847 = vsel %vm3840, %v3830, 0
        %v3849 = vsel %vm3840, %v3839, 0
        %3887 = vrot.lane.b32.xlu0 0, 127
        %v3888 = vpop.permute.xlu0 %3887
        %3889 = vrot.lane.b32.xlu0 %v3804, 127
        %v3890 = vpop.permute.xlu0 %3889
        %3891 = vrot.lane.b32.xlu0 %v3805, 127
        %v3892 = vpop.permute.xlu0 %3891
        %3893 = vrot.lane.b32.xlu0 %v3806, 127
        %v3894 = vpop.permute.xlu0 %3893
        %3895 = vrot.lane.b32.xlu0 %v3807, 127
        %v3896 = vpop.permute.xlu0 %3895
        %3897 = vrot.lane.b32.xlu0 %v3808, 127
        %v3898 = vpop.permute.xlu0 %3897
        %3899 = vrot.lane.b32.xlu0 %v3809, 127
        %v3900 = vpop.permute.xlu0 %3899
        %3901 = vrot.lane.b32.xlu0 %v3810, 127
        %v3902 = vpop.permute.xlu0 %3901
        %3903 = vrot.lane.b32.xlu0 %v3811, 127
        %v3904 = vpop.permute.xlu0 %3903
        %3905 = vrot.lane.b32.xlu0 %v3843, 127
        %v3906 = vpop.permute.xlu0 %3905
        %3907 = vrot.lane.b32.xlu0 %v3813, 127
        %v3908 = vpop.permute.xlu0 %3907
        %3909 = vrot.lane.b32.xlu0 %v3814, 127
        %v3910 = vpop.permute.xlu0 %3909
        %3911 = vrot.lane.b32.xlu0 %v3815, 127
        %v3912 = vpop.permute.xlu0 %3911
        %3913 = vrot.lane.b32.xlu0 %v3816, 127
        %v3914 = vpop.permute.xlu0 %3913
        %3915 = vrot.lane.b32.xlu0 %v3817, 127
        %v3916 = vpop.permute.xlu0 %3915
        %3917 = vrot.lane.b32.xlu0 %v3818, 127
        %v3918 = vpop.permute.xlu0 %3917
        %3919 = vrot.lane.b32.xlu0 %v3819, 127
        %v3920 = vpop.permute.xlu0 %3919
        %3921 = vrot.lane.b32.xlu0 %v3820, 127
        %v3922 = vpop.permute.xlu0 %3921
        %3923 = vrot.lane.b32.xlu0 %v3845, 127
        %v3924 = vpop.permute.xlu0 %3923
        %3925 = vrot.lane.b32.xlu0 %v3822, 127
        %v3926 = vpop.permute.xlu0 %3925
        %3927 = vrot.lane.b32.xlu0 %v3823, 127
        %v3928 = vpop.permute.xlu0 %3927
        %3929 = vrot.lane.b32.xlu0 %v3824, 127
        %v3930 = vpop.permute.xlu0 %3929
        %3931 = vrot.lane.b32.xlu0 %v3825, 127
        %v3932 = vpop.permute.xlu0 %3931
        %3933 = vrot.lane.b32.xlu0 %v3826, 127
        %v3934 = vpop.permute.xlu0 %3933
        %3935 = vrot.lane.b32.xlu0 %v3827, 127
        %v3936 = vpop.permute.xlu0 %3935
        %3937 = vrot.lane.b32.xlu0 %v3828, 127
        %v3938 = vpop.permute.xlu0 %3937
        %3939 = vrot.lane.b32.xlu0 %v3829, 127
        %v3940 = vpop.permute.xlu0 %3939
        %3941 = vrot.lane.b32.xlu0 %v3847, 127
        %v3942 = vpop.permute.xlu0 %3941
        %3943 = vrot.lane.b32.xlu0 %v3831, 127
        %v3944 = vpop.permute.xlu0 %3943
        %3945 = vrot.lane.b32.xlu0 %v3832, 127
        %v3946 = vpop.permute.xlu0 %3945
        %3947 = vrot.lane.b32.xlu0 %v3833, 127
        %v3948 = vpop.permute.xlu0 %3947
        %3949 = vrot.lane.b32.xlu0 %v3834, 127
        %v3950 = vpop.permute.xlu0 %3949
        %3951 = vrot.lane.b32.xlu0 %v3835, 127
        %v3952 = vpop.permute.xlu0 %3951
        %3953 = vrot.lane.b32.xlu0 %v3836, 127
        %v3954 = vpop.permute.xlu0 %3953
        %3955 = vrot.lane.b32.xlu0 %v3837, 127
        %v3956 = vpop.permute.xlu0 %3955
        %3957 = vrot.lane.b32.xlu0 %v3838, 127
        %v3958 = vpop.permute.xlu0 %3957
        %3959 = vrot.lane.b32.xlu0 %v3849, 127
        %v3960 = vpop.permute.xlu0 %3959
        %v3961 = vsel %vm544, %v3888, %v3890
        %v3962 = vsel %vm544, %v3890, %v3892
        %v3963 = vsel %vm544, %v3892, %v3894
        %v3964 = vsel %vm544, %v3894, %v3896
        %v3965 = vsel %vm544, %v3896, %v3898
        %v3966 = vsel %vm544, %v3898, %v3900
        %v3967 = vsel %vm544, %v3900, %v3902
        %v3968 = vsel %vm544, %v3902, %v3904
        %v3969 = vsel %vm544, %v3904, %v3906
        %v3970 = vsel %vm544, %v3888, %v3908
        %v3971 = vsel %vm544, %v3908, %v3910
        %v3972 = vsel %vm544, %v3910, %v3912
        %v3973 = vsel %vm544, %v3912, %v3914
        %v3974 = vsel %vm544, %v3914, %v3916
        %v3975 = vsel %vm544, %v3916, %v3918
        %v3976 = vsel %vm544, %v3918, %v3920
        %v3977 = vsel %vm544, %v3920, %v3922
        %v3978 = vsel %vm544, %v3922, %v3924
        %v3979 = vsel %vm544, %v3888, %v3926
        %v3980 = vsel %vm544, %v3926, %v3928
        %v3981 = vsel %vm544, %v3928, %v3930
        %v3982 = vsel %vm544, %v3930, %v3932
        %v3983 = vsel %vm544, %v3932, %v3934
        %v3984 = vsel %vm544, %v3934, %v3936
        %v3985 = vsel %vm544, %v3936, %v3938
        %v3986 = vsel %vm544, %v3938, %v3940
        %v3987 = vsel %vm544, %v3940, %v3942
        %v3988 = vsel %vm544, %v3888, %v3944
        %v3989 = vsel %vm544, %v3944, %v3946
        %v3990 = vsel %vm544, %v3946, %v3948
        %v3991 = vsel %vm544, %v3948, %v3950
        %v3992 = vsel %vm544, %v3950, %v3952
        %v3993 = vsel %vm544, %v3952, %v3954
        %v3994 = vsel %vm544, %v3954, %v3956
        %v3995 = vsel %vm544, %v3956, %v3958
        %v3996 = vsel %vm544, %v3958, %v3960
        %3997 = vrot.lane.b32.xlu0 0, 126
        %v3998 = vpop.permute.xlu0 %3997
        %3999 = vrot.lane.b32.xlu0 %v3804, 126
        %v4000 = vpop.permute.xlu0 %3999
        %4001 = vrot.lane.b32.xlu0 %v3805, 126
        %v4002 = vpop.permute.xlu0 %4001
        %4003 = vrot.lane.b32.xlu0 %v3806, 126
        %v4004 = vpop.permute.xlu0 %4003
        %4005 = vrot.lane.b32.xlu0 %v3807, 126
        %v4006 = vpop.permute.xlu0 %4005
        %4007 = vrot.lane.b32.xlu0 %v3808, 126
        %v4008 = vpop.permute.xlu0 %4007
        %4009 = vrot.lane.b32.xlu0 %v3809, 126
        %v4010 = vpop.permute.xlu0 %4009
        %4011 = vrot.lane.b32.xlu0 %v3810, 126
        %v4012 = vpop.permute.xlu0 %4011
        %4013 = vrot.lane.b32.xlu0 %v3811, 126
        %v4014 = vpop.permute.xlu0 %4013
        %4015 = vrot.lane.b32.xlu0 %v3843, 126
        %v4016 = vpop.permute.xlu0 %4015
        %4017 = vrot.lane.b32.xlu0 %v3813, 126
        %v4018 = vpop.permute.xlu0 %4017
        %4019 = vrot.lane.b32.xlu0 %v3814, 126
        %v4020 = vpop.permute.xlu0 %4019
        %4021 = vrot.lane.b32.xlu0 %v3815, 126
        %v4022 = vpop.permute.xlu0 %4021
        %4023 = vrot.lane.b32.xlu0 %v3816, 126
        %v4024 = vpop.permute.xlu0 %4023
        %4025 = vrot.lane.b32.xlu0 %v3817, 126
        %v4026 = vpop.permute.xlu0 %4025
        %4027 = vrot.lane.b32.xlu0 %v3818, 126
        %v4028 = vpop.permute.xlu0 %4027
        %4029 = vrot.lane.b32.xlu0 %v3819, 126
        %v4030 = vpop.permute.xlu0 %4029
        %4031 = vrot.lane.b32.xlu0 %v3820, 126
        %v4032 = vpop.permute.xlu0 %4031
        %4033 = vrot.lane.b32.xlu0 %v3845, 126
        %v4034 = vpop.permute.xlu0 %4033
        %4035 = vrot.lane.b32.xlu0 %v3822, 126
        %v4036 = vpop.permute.xlu0 %4035
        %4037 = vrot.lane.b32.xlu0 %v3823, 126
        %v4038 = vpop.permute.xlu0 %4037
        %4039 = vrot.lane.b32.xlu0 %v3824, 126
        %v4040 = vpop.permute.xlu0 %4039
        %4041 = vrot.lane.b32.xlu0 %v3825, 126
        %v4042 = vpop.permute.xlu0 %4041
        %4043 = vrot.lane.b32.xlu0 %v3826, 126
        %v4044 = vpop.permute.xlu0 %4043
        %4045 = vrot.lane.b32.xlu0 %v3827, 126
        %v4046 = vpop.permute.xlu0 %4045
        %4047 = vrot.lane.b32.xlu0 %v3828, 126
        %v4048 = vpop.permute.xlu0 %4047
        %4049 = vrot.lane.b32.xlu0 %v3829, 126
        %v4050 = vpop.permute.xlu0 %4049
        %4051 = vrot.lane.b32.xlu0 %v3847, 126
        %v4052 = vpop.permute.xlu0 %4051
        %4053 = vrot.lane.b32.xlu0 %v3831, 126
        %v4054 = vpop.permute.xlu0 %4053
        %4055 = vrot.lane.b32.xlu0 %v3832, 126
        %v4056 = vpop.permute.xlu0 %4055
        %4057 = vrot.lane.b32.xlu0 %v3833, 126
        %v4058 = vpop.permute.xlu0 %4057
        %4059 = vrot.lane.b32.xlu0 %v3834, 126
        %v4060 = vpop.permute.xlu0 %4059
        %4061 = vrot.lane.b32.xlu0 %v3835, 126
        %v4062 = vpop.permute.xlu0 %4061
        %4063 = vrot.lane.b32.xlu0 %v3836, 126
        %v4064 = vpop.permute.xlu0 %4063
        %4065 = vrot.lane.b32.xlu0 %v3837, 126
        %v4066 = vpop.permute.xlu0 %4065
        %4067 = vrot.lane.b32.xlu0 %v3838, 126
        %v4068 = vpop.permute.xlu0 %4067
        %4069 = vrot.lane.b32.xlu0 %v3849, 126
        %v4070 = vpop.permute.xlu0 %4069
        %v4071 = vsel %vm555, %v3998, %v4000
        %v4072 = vsel %vm555, %v4000, %v4002
        %v4073 = vsel %vm555, %v4002, %v4004
        %v4074 = vsel %vm555, %v4004, %v4006
        %v4075 = vsel %vm555, %v4006, %v4008
        %v4076 = vsel %vm555, %v4008, %v4010
        %v4077 = vsel %vm555, %v4010, %v4012
        %v4078 = vsel %vm555, %v4012, %v4014
        %v4079 = vsel %vm555, %v4014, %v4016
        %v4080 = vsel %vm555, %v3998, %v4018
        %v4081 = vsel %vm555, %v4018, %v4020
        %v4082 = vsel %vm555, %v4020, %v4022
        %v4083 = vsel %vm555, %v4022, %v4024
        %v4084 = vsel %vm555, %v4024, %v4026
        %v4085 = vsel %vm555, %v4026, %v4028
        %v4086 = vsel %vm555, %v4028, %v4030
        %v4087 = vsel %vm555, %v4030, %v4032
        %v4088 = vsel %vm555, %v4032, %v4034
        %v4089 = vsel %vm555, %v3998, %v4036
        %v4090 = vsel %vm555, %v4036, %v4038
        %v4091 = vsel %vm555, %v4038, %v4040
        %v4092 = vsel %vm555, %v4040, %v4042
        %v4093 = vsel %vm555, %v4042, %v4044
        %v4094 = vsel %vm555, %v4044, %v4046
        %v4095 = vsel %vm555, %v4046, %v4048
        %v4096 = vsel %vm555, %v4048, %v4050
        %v4097 = vsel %vm555, %v4050, %v4052
        %v4098 = vsel %vm555, %v3998, %v4054
        %v4099 = vsel %vm555, %v4054, %v4056
        %v4100 = vsel %vm555, %v4056, %v4058
        %v4101 = vsel %vm555, %v4058, %v4060
        %v4102 = vsel %vm555, %v4060, %v4062
        %v4103 = vsel %vm555, %v4062, %v4064
        %v4104 = vsel %vm555, %v4064, %v4066
        %v4105 = vsel %vm555, %v4066, %v4068
        %v4106 = vsel %vm555, %v4068, %v4070
        %4107 = vrot.lane.b32.xlu0 0, 94
        %v4108 = vpop.permute.xlu0 %4107
        %4109 = vrot.lane.b32.xlu0 %v3804, 94
        %v4110 = vpop.permute.xlu0 %4109
        %4111 = vrot.lane.b32.xlu0 %v3805, 94
        %v4112 = vpop.permute.xlu0 %4111
        %4113 = vrot.lane.b32.xlu0 %v3806, 94
        %v4114 = vpop.permute.xlu0 %4113
        %4115 = vrot.lane.b32.xlu0 %v3807, 94
        %v4116 = vpop.permute.xlu0 %4115
        %4117 = vrot.lane.b32.xlu0 %v3808, 94
        %v4118 = vpop.permute.xlu0 %4117
        %4119 = vrot.lane.b32.xlu0 %v3809, 94
        %v4120 = vpop.permute.xlu0 %4119
        %4121 = vrot.lane.b32.xlu0 %v3810, 94
        %v4122 = vpop.permute.xlu0 %4121
        %4123 = vrot.lane.b32.xlu0 %v3811, 94
        %v4124 = vpop.permute.xlu0 %4123
        %4125 = vrot.lane.b32.xlu0 %v3843, 94
        %v4126 = vpop.permute.xlu0 %4125
        %4127 = vrot.lane.b32.xlu0 %v3813, 94
        %v4128 = vpop.permute.xlu0 %4127
        %4129 = vrot.lane.b32.xlu0 %v3814, 94
        %v4130 = vpop.permute.xlu0 %4129
        %4131 = vrot.lane.b32.xlu0 %v3815, 94
        %v4132 = vpop.permute.xlu0 %4131
        %4133 = vrot.lane.b32.xlu0 %v3816, 94
        %v4134 = vpop.permute.xlu0 %4133
        %4135 = vrot.lane.b32.xlu0 %v3817, 94
        %v4136 = vpop.permute.xlu0 %4135
        %4137 = vrot.lane.b32.xlu0 %v3818, 94
        %v4138 = vpop.permute.xlu0 %4137
        %4139 = vrot.lane.b32.xlu0 %v3819, 94
        %v4140 = vpop.permute.xlu0 %4139
        %4141 = vrot.lane.b32.xlu0 %v3820, 94
        %v4142 = vpop.permute.xlu0 %4141
        %4143 = vrot.lane.b32.xlu0 %v3845, 94
        %v4144 = vpop.permute.xlu0 %4143
        %4145 = vrot.lane.b32.xlu0 %v3822, 94
        %v4146 = vpop.permute.xlu0 %4145
        %4147 = vrot.lane.b32.xlu0 %v3823, 94
        %v4148 = vpop.permute.xlu0 %4147
        %4149 = vrot.lane.b32.xlu0 %v3824, 94
        %v4150 = vpop.permute.xlu0 %4149
        %4151 = vrot.lane.b32.xlu0 %v3825, 94
        %v4152 = vpop.permute.xlu0 %4151
        %4153 = vrot.lane.b32.xlu0 %v3826, 94
        %v4154 = vpop.permute.xlu0 %4153
        %4155 = vrot.lane.b32.xlu0 %v3827, 94
        %v4156 = vpop.permute.xlu0 %4155
        %4157 = vrot.lane.b32.xlu0 %v3828, 94
        %v4158 = vpop.permute.xlu0 %4157
        %4159 = vrot.lane.b32.xlu0 %v3829, 94
        %v4160 = vpop.permute.xlu0 %4159
        %4161 = vrot.lane.b32.xlu0 %v3847, 94
        %v4162 = vpop.permute.xlu0 %4161
        %4163 = vrot.lane.b32.xlu0 %v3831, 94
        %v4164 = vpop.permute.xlu0 %4163
        %4165 = vrot.lane.b32.xlu0 %v3832, 94
        %v4166 = vpop.permute.xlu0 %4165
        %4167 = vrot.lane.b32.xlu0 %v3833, 94
        %v4168 = vpop.permute.xlu0 %4167
        %4169 = vrot.lane.b32.xlu0 %v3834, 94
        %v4170 = vpop.permute.xlu0 %4169
        %4171 = vrot.lane.b32.xlu0 %v3835, 94
        %v4172 = vpop.permute.xlu0 %4171
        %4173 = vrot.lane.b32.xlu0 %v3836, 94
        %v4174 = vpop.permute.xlu0 %4173
        %4175 = vrot.lane.b32.xlu0 %v3837, 94
        %v4176 = vpop.permute.xlu0 %4175
        %4177 = vrot.lane.b32.xlu0 %v3838, 94
        %v4178 = vpop.permute.xlu0 %4177
        %4179 = vrot.lane.b32.xlu0 %v3849, 94
        %v4180 = vpop.permute.xlu0 %4179
        %v4181 = vsel %vm2388, %v4108, %v4110
        %v4182 = vsel %vm2388, %v4110, %v4112
        %v4183 = vsel %vm2388, %v4112, %v4114
        %v4184 = vsel %vm2388, %v4114, %v4116
        %v4185 = vsel %vm2388, %v4116, %v4118
        %v4186 = vsel %vm2388, %v4118, %v4120
        %v4187 = vsel %vm2388, %v4120, %v4122
        %v4188 = vsel %vm2388, %v4122, %v4124
        %v4189 = vsel %vm2388, %v4124, %v4126
        %v4190 = vsel %vm2388, %v4108, %v4128
        %v4191 = vsel %vm2388, %v4128, %v4130
        %v4192 = vsel %vm2388, %v4130, %v4132
        %v4193 = vsel %vm2388, %v4132, %v4134
        %v4194 = vsel %vm2388, %v4134, %v4136
        %v4195 = vsel %vm2388, %v4136, %v4138
        %v4196 = vsel %vm2388, %v4138, %v4140
        %v4197 = vsel %vm2388, %v4140, %v4142
        %v4198 = vsel %vm2388, %v4142, %v4144
        %v4199 = vsel %vm2388, %v4108, %v4146
        %v4200 = vsel %vm2388, %v4146, %v4148
        %v4201 = vsel %vm2388, %v4148, %v4150
        %v4202 = vsel %vm2388, %v4150, %v4152
        %v4203 = vsel %vm2388, %v4152, %v4154
        %v4204 = vsel %vm2388, %v4154, %v4156
        %v4205 = vsel %vm2388, %v4156, %v4158
        %v4206 = vsel %vm2388, %v4158, %v4160
        %v4207 = vsel %vm2388, %v4160, %v4162
        %v4208 = vsel %vm2388, %v4108, %v4164
        %v4209 = vsel %vm2388, %v4164, %v4166
        %v4210 = vsel %vm2388, %v4166, %v4168
        %v4211 = vsel %vm2388, %v4168, %v4170
        %v4212 = vsel %vm2388, %v4170, %v4172
        %v4213 = vsel %vm2388, %v4172, %v4174
        %v4214 = vsel %vm2388, %v4174, %v4176
        %v4215 = vsel %vm2388, %v4176, %v4178
        %v4216 = vsel %vm2388, %v4178, %v4180
        %4217 = vrot.lane.b32.xlu0 %v3804, 93
        %v4218 = vpop.permute.xlu0 %4217
        %4219 = vrot.lane.b32.xlu0 %v3805, 93
        %v4220 = vpop.permute.xlu0 %4219
        %4221 = vrot.lane.b32.xlu0 %v3806, 93
        %v4222 = vpop.permute.xlu0 %4221
        %4223 = vrot.lane.b32.xlu0 %v3807, 93
        %v4224 = vpop.permute.xlu0 %4223
        %4225 = vrot.lane.b32.xlu0 %v3808, 93
        %v4226 = vpop.permute.xlu0 %4225
        %4227 = vrot.lane.b32.xlu0 %v3809, 93
        %v4228 = vpop.permute.xlu0 %4227
        %4229 = vrot.lane.b32.xlu0 %v3810, 93
        %v4230 = vpop.permute.xlu0 %4229
        %4231 = vrot.lane.b32.xlu0 %v3811, 93
        %v4232 = vpop.permute.xlu0 %4231
        %4233 = vrot.lane.b32.xlu0 %v3843, 93
        %v4234 = vpop.permute.xlu0 %4233
        %4235 = vrot.lane.b32.xlu0 %v3813, 93
        %v4236 = vpop.permute.xlu0 %4235
        %4237 = vrot.lane.b32.xlu0 %v3814, 93
        %v4238 = vpop.permute.xlu0 %4237
        %4239 = vrot.lane.b32.xlu0 %v3815, 93
        %v4240 = vpop.permute.xlu0 %4239
        %4241 = vrot.lane.b32.xlu0 %v3816, 93
        %v4242 = vpop.permute.xlu0 %4241
        %4243 = vrot.lane.b32.xlu0 %v3817, 93
        %v4244 = vpop.permute.xlu0 %4243
        %4245 = vrot.lane.b32.xlu0 %v3818, 93
        %v4246 = vpop.permute.xlu0 %4245
        %4247 = vrot.lane.b32.xlu0 %v3819, 93
        %v4248 = vpop.permute.xlu0 %4247
        %4249 = vrot.lane.b32.xlu0 %v3820, 93
        %v4250 = vpop.permute.xlu0 %4249
        %4251 = vrot.lane.b32.xlu0 %v3845, 93
        %v4252 = vpop.permute.xlu0 %4251
        %4253 = vrot.lane.b32.xlu0 %v3822, 93
        %v4254 = vpop.permute.xlu0 %4253
        %4255 = vrot.lane.b32.xlu0 %v3823, 93
        %v4256 = vpop.permute.xlu0 %4255
        %4257 = vrot.lane.b32.xlu0 %v3824, 93
        %v4258 = vpop.permute.xlu0 %4257
        %4259 = vrot.lane.b32.xlu0 %v3825, 93
        %v4260 = vpop.permute.xlu0 %4259
        %4261 = vrot.lane.b32.xlu0 %v3826, 93
        %v4262 = vpop.permute.xlu0 %4261
        %4263 = vrot.lane.b32.xlu0 %v3827, 93
        %v4264 = vpop.permute.xlu0 %4263
        %4265 = vrot.lane.b32.xlu0 %v3828, 93
        %v4266 = vpop.permute.xlu0 %4265
        %4267 = vrot.lane.b32.xlu0 %v3829, 93
        %v4268 = vpop.permute.xlu0 %4267
        %4269 = vrot.lane.b32.xlu0 %v3847, 93
        %v4270 = vpop.permute.xlu0 %4269
        %4271 = vrot.lane.b32.xlu0 %v3831, 93
        %v4272 = vpop.permute.xlu0 %4271
        %4273 = vrot.lane.b32.xlu0 %v3832, 93
        %v4274 = vpop.permute.xlu0 %4273
        %4275 = vrot.lane.b32.xlu0 %v3833, 93
        %v4276 = vpop.permute.xlu0 %4275
        %4277 = vrot.lane.b32.xlu0 %v3834, 93
        %v4278 = vpop.permute.xlu0 %4277
        %4279 = vrot.lane.b32.xlu0 %v3835, 93
        %v4280 = vpop.permute.xlu0 %4279
        %4281 = vrot.lane.b32.xlu0 %v3836, 93
        %v4282 = vpop.permute.xlu0 %4281
        %4283 = vrot.lane.b32.xlu0 %v3837, 93
        %v4284 = vpop.permute.xlu0 %4283
        %4285 = vrot.lane.b32.xlu0 %v3838, 93
        %v4286 = vpop.permute.xlu0 %4285
        %4287 = vrot.lane.b32.xlu0 %v3849, 93
        %v4288 = vpop.permute.xlu0 %4287
        %v4289 = vsel %vm2416, %v4218, %v4220
        %v4290 = vsel %vm2416, %v4220, %v4222
        %v4291 = vsel %vm2416, %v4222, %v4224
        %v4292 = vsel %vm2416, %v4224, %v4226
        %v4293 = vsel %vm2416, %v4226, %v4228
        %v4294 = vsel %vm2416, %v4228, %v4230
        %v4295 = vsel %vm2416, %v4230, %v4232
        %v4296 = vsel %vm2416, %v4232, %v4234
        %v4297 = vsel %vm2416, %v4236, %v4238
        %v4298 = vsel %vm2416, %v4238, %v4240
        %v4299 = vsel %vm2416, %v4240, %v4242
        %v4300 = vsel %vm2416, %v4242, %v4244
        %v4301 = vsel %vm2416, %v4244, %v4246
        %v4302 = vsel %vm2416, %v4246, %v4248
        %v4303 = vsel %vm2416, %v4248, %v4250
        %v4304 = vsel %vm2416, %v4250, %v4252
        %v4305 = vsel %vm2416, %v4254, %v4256
        %v4306 = vsel %vm2416, %v4256, %v4258
        %v4307 = vsel %vm2416, %v4258, %v4260
        %v4308 = vsel %vm2416, %v4260, %v4262
        %v4309 = vsel %vm2416, %v4262, %v4264
        %v4310 = vsel %vm2416, %v4264, %v4266
        %v4311 = vsel %vm2416, %v4266, %v4268
        %v4312 = vsel %vm2416, %v4268, %v4270
        %v4313 = vsel %vm2416, %v4272, %v4274
        %v4314 = vsel %vm2416, %v4274, %v4276
        %v4315 = vsel %vm2416, %v4276, %v4278
        %v4316 = vsel %vm2416, %v4278, %v4280
        %v4317 = vsel %vm2416, %v4280, %v4282
        %v4318 = vsel %vm2416, %v4282, %v4284
        %v4319 = vsel %vm2416, %v4284, %v4286
        %v4320 = vsel %vm2416, %v4286, %v4288
        %4321 = vrot.lane.b32.xlu0 %v3804, 92
        %v4322 = vpop.permute.xlu0 %4321
        %4323 = vrot.lane.b32.xlu0 %v3805, 92
        %v4324 = vpop.permute.xlu0 %4323
        %4325 = vrot.lane.b32.xlu0 %v3806, 92
        %v4326 = vpop.permute.xlu0 %4325
        %4327 = vrot.lane.b32.xlu0 %v3807, 92
        %v4328 = vpop.permute.xlu0 %4327
        %4329 = vrot.lane.b32.xlu0 %v3808, 92
        %v4330 = vpop.permute.xlu0 %4329
        %4331 = vrot.lane.b32.xlu0 %v3809, 92
        %v4332 = vpop.permute.xlu0 %4331
        %4333 = vrot.lane.b32.xlu0 %v3810, 92
        %v4334 = vpop.permute.xlu0 %4333
        %4335 = vrot.lane.b32.xlu0 %v3811, 92
        %v4336 = vpop.permute.xlu0 %4335
        %4337 = vrot.lane.b32.xlu0 %v3843, 92
        %v4338 = vpop.permute.xlu0 %4337
        %4339 = vrot.lane.b32.xlu0 %v3813, 92
        %v4340 = vpop.permute.xlu0 %4339
        %4341 = vrot.lane.b32.xlu0 %v3814, 92
        %v4342 = vpop.permute.xlu0 %4341
        %4343 = vrot.lane.b32.xlu0 %v3815, 92
        %v4344 = vpop.permute.xlu0 %4343
        %4345 = vrot.lane.b32.xlu0 %v3816, 92
        %v4346 = vpop.permute.xlu0 %4345
        %4347 = vrot.lane.b32.xlu0 %v3817, 92
        %v4348 = vpop.permute.xlu0 %4347
        %4349 = vrot.lane.b32.xlu0 %v3818, 92
        %v4350 = vpop.permute.xlu0 %4349
        %4351 = vrot.lane.b32.xlu0 %v3819, 92
        %v4352 = vpop.permute.xlu0 %4351
        %4353 = vrot.lane.b32.xlu0 %v3820, 92
        %v4354 = vpop.permute.xlu0 %4353
        %4355 = vrot.lane.b32.xlu0 %v3845, 92
        %v4356 = vpop.permute.xlu0 %4355
        %4357 = vrot.lane.b32.xlu0 %v3822, 92
        %v4358 = vpop.permute.xlu0 %4357
        %4359 = vrot.lane.b32.xlu0 %v3823, 92
        %v4360 = vpop.permute.xlu0 %4359
        %4361 = vrot.lane.b32.xlu0 %v3824, 92
        %v4362 = vpop.permute.xlu0 %4361
        %4363 = vrot.lane.b32.xlu0 %v3825, 92
        %v4364 = vpop.permute.xlu0 %4363
        %4365 = vrot.lane.b32.xlu0 %v3826, 92
        %v4366 = vpop.permute.xlu0 %4365
        %4367 = vrot.lane.b32.xlu0 %v3827, 92
        %v4368 = vpop.permute.xlu0 %4367
        %4369 = vrot.lane.b32.xlu0 %v3828, 92
        %v4370 = vpop.permute.xlu0 %4369
        %4371 = vrot.lane.b32.xlu0 %v3829, 92
        %v4372 = vpop.permute.xlu0 %4371
        %4373 = vrot.lane.b32.xlu0 %v3847, 92
        %v4374 = vpop.permute.xlu0 %4373
        %4375 = vrot.lane.b32.xlu0 %v3831, 92
        %v4376 = vpop.permute.xlu0 %4375
        %4377 = vrot.lane.b32.xlu0 %v3832, 92
        %v4378 = vpop.permute.xlu0 %4377
        %4379 = vrot.lane.b32.xlu0 %v3833, 92
        %v4380 = vpop.permute.xlu0 %4379
        %4381 = vrot.lane.b32.xlu0 %v3834, 92
        %v4382 = vpop.permute.xlu0 %4381
        %4383 = vrot.lane.b32.xlu0 %v3835, 92
        %v4384 = vpop.permute.xlu0 %4383
        %4385 = vrot.lane.b32.xlu0 %v3836, 92
        %v4386 = vpop.permute.xlu0 %4385
        %4387 = vrot.lane.b32.xlu0 %v3837, 92
        %v4388 = vpop.permute.xlu0 %4387
        %4389 = vrot.lane.b32.xlu0 %v3838, 92
        %v4390 = vpop.permute.xlu0 %4389
        %4391 = vrot.lane.b32.xlu0 %v3849, 92
        %v4392 = vpop.permute.xlu0 %4391
        %v4393 = vsel %vm592, %v4322, %v4324
        %v4394 = vsel %vm592, %v4324, %v4326
        %v4395 = vsel %vm592, %v4326, %v4328
        %v4396 = vsel %vm592, %v4328, %v4330
        %v4397 = vsel %vm592, %v4330, %v4332
        %v4398 = vsel %vm592, %v4332, %v4334
        %v4399 = vsel %vm592, %v4334, %v4336
        %v4400 = vsel %vm592, %v4336, %v4338
        %v4401 = vsel %vm592, %v4340, %v4342
        %v4402 = vsel %vm592, %v4342, %v4344
        %v4403 = vsel %vm592, %v4344, %v4346
        %v4404 = vsel %vm592, %v4346, %v4348
        %v4405 = vsel %vm592, %v4348, %v4350
        %v4406 = vsel %vm592, %v4350, %v4352
        %v4407 = vsel %vm592, %v4352, %v4354
        %v4408 = vsel %vm592, %v4354, %v4356
        %v4409 = vsel %vm592, %v4358, %v4360
        %v4410 = vsel %vm592, %v4360, %v4362
        %v4411 = vsel %vm592, %v4362, %v4364
        %v4412 = vsel %vm592, %v4364, %v4366
        %v4413 = vsel %vm592, %v4366, %v4368
        %v4414 = vsel %vm592, %v4368, %v4370
        %v4415 = vsel %vm592, %v4370, %v4372
        %v4416 = vsel %vm592, %v4372, %v4374
        %v4417 = vsel %vm592, %v4376, %v4378
        %v4418 = vsel %vm592, %v4378, %v4380
        %v4419 = vsel %vm592, %v4380, %v4382
        %v4420 = vsel %vm592, %v4382, %v4384
        %v4421 = vsel %vm592, %v4384, %v4386
        %v4422 = vsel %vm592, %v4386, %v4388
        %v4423 = vsel %vm592, %v4388, %v4390
        %v4424 = vsel %vm592, %v4390, %v4392
        %4425 = vrot.lane.b32.xlu0 %v3804, 60
        %v4426 = vpop.permute.xlu0 %4425
        %4427 = vrot.lane.b32.xlu0 %v3805, 60
        %v4428 = vpop.permute.xlu0 %4427
        %4429 = vrot.lane.b32.xlu0 %v3806, 60
        %v4430 = vpop.permute.xlu0 %4429
        %4431 = vrot.lane.b32.xlu0 %v3807, 60
        %v4432 = vpop.permute.xlu0 %4431
        %4433 = vrot.lane.b32.xlu0 %v3808, 60
        %v4434 = vpop.permute.xlu0 %4433
        %4435 = vrot.lane.b32.xlu0 %v3809, 60
        %v4436 = vpop.permute.xlu0 %4435
        %4437 = vrot.lane.b32.xlu0 %v3810, 60
        %v4438 = vpop.permute.xlu0 %4437
        %4439 = vrot.lane.b32.xlu0 %v3811, 60
        %v4440 = vpop.permute.xlu0 %4439
        %4441 = vrot.lane.b32.xlu0 %v3843, 60
        %v4442 = vpop.permute.xlu0 %4441
        %4443 = vrot.lane.b32.xlu0 %v3813, 60
        %v4444 = vpop.permute.xlu0 %4443
        %4445 = vrot.lane.b32.xlu0 %v3814, 60
        %v4446 = vpop.permute.xlu0 %4445
        %4447 = vrot.lane.b32.xlu0 %v3815, 60
        %v4448 = vpop.permute.xlu0 %4447
        %4449 = vrot.lane.b32.xlu0 %v3816, 60
        %v4450 = vpop.permute.xlu0 %4449
        %4451 = vrot.lane.b32.xlu0 %v3817, 60
        %v4452 = vpop.permute.xlu0 %4451
        %4453 = vrot.lane.b32.xlu0 %v3818, 60
        %v4454 = vpop.permute.xlu0 %4453
        %4455 = vrot.lane.b32.xlu0 %v3819, 60
        %v4456 = vpop.permute.xlu0 %4455
        %4457 = vrot.lane.b32.xlu0 %v3820, 60
        %v4458 = vpop.permute.xlu0 %4457
        %4459 = vrot.lane.b32.xlu0 %v3845, 60
        %v4460 = vpop.permute.xlu0 %4459
        %4461 = vrot.lane.b32.xlu0 %v3822, 60
        %v4462 = vpop.permute.xlu0 %4461
        %4463 = vrot.lane.b32.xlu0 %v3823, 60
        %v4464 = vpop.permute.xlu0 %4463
        %4465 = vrot.lane.b32.xlu0 %v3824, 60
        %v4466 = vpop.permute.xlu0 %4465
        %4467 = vrot.lane.b32.xlu0 %v3825, 60
        %v4468 = vpop.permute.xlu0 %4467
        %4469 = vrot.lane.b32.xlu0 %v3826, 60
        %v4470 = vpop.permute.xlu0 %4469
        %4471 = vrot.lane.b32.xlu0 %v3827, 60
        %v4472 = vpop.permute.xlu0 %4471
        %4473 = vrot.lane.b32.xlu0 %v3828, 60
        %v4474 = vpop.permute.xlu0 %4473
        %4475 = vrot.lane.b32.xlu0 %v3829, 60
        %v4476 = vpop.permute.xlu0 %4475
        %4477 = vrot.lane.b32.xlu0 %v3847, 60
        %v4478 = vpop.permute.xlu0 %4477
        %4479 = vrot.lane.b32.xlu0 %v3831, 60
        %v4480 = vpop.permute.xlu0 %4479
        %4481 = vrot.lane.b32.xlu0 %v3832, 60
        %v4482 = vpop.permute.xlu0 %4481
        %4483 = vrot.lane.b32.xlu0 %v3833, 60
        %v4484 = vpop.permute.xlu0 %4483
        %4485 = vrot.lane.b32.xlu0 %v3834, 60
        %v4486 = vpop.permute.xlu0 %4485
        %4487 = vrot.lane.b32.xlu0 %v3835, 60
        %v4488 = vpop.permute.xlu0 %4487
        %4489 = vrot.lane.b32.xlu0 %v3836, 60
        %v4490 = vpop.permute.xlu0 %4489
        %4491 = vrot.lane.b32.xlu0 %v3837, 60
        %v4492 = vpop.permute.xlu0 %4491
        %4493 = vrot.lane.b32.xlu0 %v3838, 60
        %v4494 = vpop.permute.xlu0 %4493
        %4495 = vrot.lane.b32.xlu0 %v3849, 60
        %v4496 = vpop.permute.xlu0 %4495
        %v4497 = vsel %vm2469, %v4426, %v4428
        %v4498 = vsel %vm2469, %v4428, %v4430
        %v4499 = vsel %vm2469, %v4430, %v4432
        %v4500 = vsel %vm2469, %v4432, %v4434
        %v4501 = vsel %vm2469, %v4434, %v4436
        %v4502 = vsel %vm2469, %v4436, %v4438
        %v4503 = vsel %vm2469, %v4438, %v4440
        %v4504 = vsel %vm2469, %v4440, %v4442
        %v4505 = vsel %vm2469, %v4444, %v4446
        %v4506 = vsel %vm2469, %v4446, %v4448
        %v4507 = vsel %vm2469, %v4448, %v4450
        %v4508 = vsel %vm2469, %v4450, %v4452
        %v4509 = vsel %vm2469, %v4452, %v4454
        %v4510 = vsel %vm2469, %v4454, %v4456
        %v4511 = vsel %vm2469, %v4456, %v4458
        %v4512 = vsel %vm2469, %v4458, %v4460
        %v4513 = vsel %vm2469, %v4462, %v4464
        %v4514 = vsel %vm2469, %v4464, %v4466
        %v4515 = vsel %vm2469, %v4466, %v4468
        %v4516 = vsel %vm2469, %v4468, %v4470
        %v4517 = vsel %vm2469, %v4470, %v4472
        %v4518 = vsel %vm2469, %v4472, %v4474
        %v4519 = vsel %vm2469, %v4474, %v4476
        %v4520 = vsel %vm2469, %v4476, %v4478
        %v4521 = vsel %vm2469, %v4480, %v4482
        %v4522 = vsel %vm2469, %v4482, %v4484
        %v4523 = vsel %vm2469, %v4484, %v4486
        %v4524 = vsel %vm2469, %v4486, %v4488
        %v4525 = vsel %vm2469, %v4488, %v4490
        %v4526 = vsel %vm2469, %v4490, %v4492
        %v4527 = vsel %vm2469, %v4492, %v4494
        %v4528 = vsel %vm2469, %v4494, %v4496
        %4529 = vrot.lane.b32.xlu0 %v3804, 59
        %v4530 = vpop.permute.xlu0 %4529
        %4531 = vrot.lane.b32.xlu0 %v3805, 59
        %v4532 = vpop.permute.xlu0 %4531
        %4533 = vrot.lane.b32.xlu0 %v3806, 59
        %v4534 = vpop.permute.xlu0 %4533
        %4535 = vrot.lane.b32.xlu0 %v3807, 59
        %v4536 = vpop.permute.xlu0 %4535
        %4537 = vrot.lane.b32.xlu0 %v3808, 59
        %v4538 = vpop.permute.xlu0 %4537
        %4539 = vrot.lane.b32.xlu0 %v3809, 59
        %v4540 = vpop.permute.xlu0 %4539
        %4541 = vrot.lane.b32.xlu0 %v3810, 59
        %v4542 = vpop.permute.xlu0 %4541
        %4543 = vrot.lane.b32.xlu0 %v3811, 59
        %v4544 = vpop.permute.xlu0 %4543
        %4545 = vrot.lane.b32.xlu0 %v3843, 59
        %v4546 = vpop.permute.xlu0 %4545
        %4547 = vrot.lane.b32.xlu0 %v3813, 59
        %v4548 = vpop.permute.xlu0 %4547
        %4549 = vrot.lane.b32.xlu0 %v3814, 59
        %v4550 = vpop.permute.xlu0 %4549
        %4551 = vrot.lane.b32.xlu0 %v3815, 59
        %v4552 = vpop.permute.xlu0 %4551
        %4553 = vrot.lane.b32.xlu0 %v3816, 59
        %v4554 = vpop.permute.xlu0 %4553
        %4555 = vrot.lane.b32.xlu0 %v3817, 59
        %v4556 = vpop.permute.xlu0 %4555
        %4557 = vrot.lane.b32.xlu0 %v3818, 59
        %v4558 = vpop.permute.xlu0 %4557
        %4559 = vrot.lane.b32.xlu0 %v3819, 59
        %v4560 = vpop.permute.xlu0 %4559
        %4561 = vrot.lane.b32.xlu0 %v3820, 59
        %v4562 = vpop.permute.xlu0 %4561
        %4563 = vrot.lane.b32.xlu0 %v3845, 59
        %v4564 = vpop.permute.xlu0 %4563
        %4565 = vrot.lane.b32.xlu0 %v3822, 59
        %v4566 = vpop.permute.xlu0 %4565
        %4567 = vrot.lane.b32.xlu0 %v3823, 59
        %v4568 = vpop.permute.xlu0 %4567
        %4569 = vrot.lane.b32.xlu0 %v3824, 59
        %v4570 = vpop.permute.xlu0 %4569
        %4571 = vrot.lane.b32.xlu0 %v3825, 59
        %v4572 = vpop.permute.xlu0 %4571
        %4573 = vrot.lane.b32.xlu0 %v3826, 59
        %v4574 = vpop.permute.xlu0 %4573
        %4575 = vrot.lane.b32.xlu0 %v3827, 59
        %v4576 = vpop.permute.xlu0 %4575
        %4577 = vrot.lane.b32.xlu0 %v3828, 59
        %v4578 = vpop.permute.xlu0 %4577
        %4579 = vrot.lane.b32.xlu0 %v3829, 59
        %v4580 = vpop.permute.xlu0 %4579
        %4581 = vrot.lane.b32.xlu0 %v3847, 59
        %v4582 = vpop.permute.xlu0 %4581
        %4583 = vrot.lane.b32.xlu0 %v3831, 59
        %v4584 = vpop.permute.xlu0 %4583
        %4585 = vrot.lane.b32.xlu0 %v3832, 59
        %v4586 = vpop.permute.xlu0 %4585
        %4587 = vrot.lane.b32.xlu0 %v3833, 59
        %v4588 = vpop.permute.xlu0 %4587
        %4589 = vrot.lane.b32.xlu0 %v3834, 59
        %v4590 = vpop.permute.xlu0 %4589
        %4591 = vrot.lane.b32.xlu0 %v3835, 59
        %v4592 = vpop.permute.xlu0 %4591
        %4593 = vrot.lane.b32.xlu0 %v3836, 59
        %v4594 = vpop.permute.xlu0 %4593
        %4595 = vrot.lane.b32.xlu0 %v3837, 59
        %v4596 = vpop.permute.xlu0 %4595
        %4597 = vrot.lane.b32.xlu0 %v3838, 59
        %v4598 = vpop.permute.xlu0 %4597
        %4599 = vrot.lane.b32.xlu0 %v3849, 59
        %v4600 = vpop.permute.xlu0 %4599
        %v4601 = vsel %vm2496, %v4530, %v4532
        %v4602 = vsel %vm2496, %v4532, %v4534
        %v4603 = vsel %vm2496, %v4534, %v4536
        %v4604 = vsel %vm2496, %v4536, %v4538
        %v4605 = vsel %vm2496, %v4538, %v4540
        %v4606 = vsel %vm2496, %v4540, %v4542
        %v4607 = vsel %vm2496, %v4542, %v4544
        %v4608 = vsel %vm2496, %v4544, %v4546
        %v4609 = vsel %vm2496, %v4548, %v4550
        %v4610 = vsel %vm2496, %v4550, %v4552
        %v4611 = vsel %vm2496, %v4552, %v4554
        %v4612 = vsel %vm2496, %v4554, %v4556
        %v4613 = vsel %vm2496, %v4556, %v4558
        %v4614 = vsel %vm2496, %v4558, %v4560
        %v4615 = vsel %vm2496, %v4560, %v4562
        %v4616 = vsel %vm2496, %v4562, %v4564
        %v4617 = vsel %vm2496, %v4566, %v4568
        %v4618 = vsel %vm2496, %v4568, %v4570
        %v4619 = vsel %vm2496, %v4570, %v4572
        %v4620 = vsel %vm2496, %v4572, %v4574
        %v4621 = vsel %vm2496, %v4574, %v4576
        %v4622 = vsel %vm2496, %v4576, %v4578
        %v4623 = vsel %vm2496, %v4578, %v4580
        %v4624 = vsel %vm2496, %v4580, %v4582
        %v4625 = vsel %vm2496, %v4584, %v4586
        %v4626 = vsel %vm2496, %v4586, %v4588
        %v4627 = vsel %vm2496, %v4588, %v4590
        %v4628 = vsel %vm2496, %v4590, %v4592
        %v4629 = vsel %vm2496, %v4592, %v4594
        %v4630 = vsel %vm2496, %v4594, %v4596
        %v4631 = vsel %vm2496, %v4596, %v4598
        %v4632 = vsel %vm2496, %v4598, %v4600
        %4633 = vrot.lane.b32.xlu0 %v3804, 58
        %v4634 = vpop.permute.xlu0 %4633
        %4635 = vrot.lane.b32.xlu0 %v3805, 58
        %v4636 = vpop.permute.xlu0 %4635
        %4637 = vrot.lane.b32.xlu0 %v3806, 58
        %v4638 = vpop.permute.xlu0 %4637
        %4639 = vrot.lane.b32.xlu0 %v3807, 58
        %v4640 = vpop.permute.xlu0 %4639
        %4641 = vrot.lane.b32.xlu0 %v3808, 58
        %v4642 = vpop.permute.xlu0 %4641
        %4643 = vrot.lane.b32.xlu0 %v3809, 58
        %v4644 = vpop.permute.xlu0 %4643
        %4645 = vrot.lane.b32.xlu0 %v3810, 58
        %v4646 = vpop.permute.xlu0 %4645
        %4647 = vrot.lane.b32.xlu0 %v3811, 58
        %v4648 = vpop.permute.xlu0 %4647
        %4649 = vrot.lane.b32.xlu0 %v3843, 58
        %v4650 = vpop.permute.xlu0 %4649
        %4651 = vrot.lane.b32.xlu0 %v3813, 58
        %v4652 = vpop.permute.xlu0 %4651
        %4653 = vrot.lane.b32.xlu0 %v3814, 58
        %v4654 = vpop.permute.xlu0 %4653
        %4655 = vrot.lane.b32.xlu0 %v3815, 58
        %v4656 = vpop.permute.xlu0 %4655
        %4657 = vrot.lane.b32.xlu0 %v3816, 58
        %v4658 = vpop.permute.xlu0 %4657
        %4659 = vrot.lane.b32.xlu0 %v3817, 58
        %v4660 = vpop.permute.xlu0 %4659
        %4661 = vrot.lane.b32.xlu0 %v3818, 58
        %v4662 = vpop.permute.xlu0 %4661
        %4663 = vrot.lane.b32.xlu0 %v3819, 58
        %v4664 = vpop.permute.xlu0 %4663
        %4665 = vrot.lane.b32.xlu0 %v3820, 58
        %v4666 = vpop.permute.xlu0 %4665
        %4667 = vrot.lane.b32.xlu0 %v3845, 58
        %v4668 = vpop.permute.xlu0 %4667
        %4669 = vrot.lane.b32.xlu0 %v3822, 58
        %v4670 = vpop.permute.xlu0 %4669
        %4671 = vrot.lane.b32.xlu0 %v3823, 58
        %v4672 = vpop.permute.xlu0 %4671
        %4673 = vrot.lane.b32.xlu0 %v3824, 58
        %v4674 = vpop.permute.xlu0 %4673
        %4675 = vrot.lane.b32.xlu0 %v3825, 58
        %v4676 = vpop.permute.xlu0 %4675
        %4677 = vrot.lane.b32.xlu0 %v3826, 58
        %v4678 = vpop.permute.xlu0 %4677
        %4679 = vrot.lane.b32.xlu0 %v3827, 58
        %v4680 = vpop.permute.xlu0 %4679
        %4681 = vrot.lane.b32.xlu0 %v3828, 58
        %v4682 = vpop.permute.xlu0 %4681
        %4683 = vrot.lane.b32.xlu0 %v3829, 58
        %v4684 = vpop.permute.xlu0 %4683
        %4685 = vrot.lane.b32.xlu0 %v3847, 58
        %v4686 = vpop.permute.xlu0 %4685
        %4687 = vrot.lane.b32.xlu0 %v3831, 58
        %v4688 = vpop.permute.xlu0 %4687
        %4689 = vrot.lane.b32.xlu0 %v3832, 58
        %v4690 = vpop.permute.xlu0 %4689
        %4691 = vrot.lane.b32.xlu0 %v3833, 58
        %v4692 = vpop.permute.xlu0 %4691
        %4693 = vrot.lane.b32.xlu0 %v3834, 58
        %v4694 = vpop.permute.xlu0 %4693
        %4695 = vrot.lane.b32.xlu0 %v3835, 58
        %v4696 = vpop.permute.xlu0 %4695
        %4697 = vrot.lane.b32.xlu0 %v3836, 58
        %v4698 = vpop.permute.xlu0 %4697
        %4699 = vrot.lane.b32.xlu0 %v3837, 58
        %v4700 = vpop.permute.xlu0 %4699
        %4701 = vrot.lane.b32.xlu0 %v3838, 58
        %v4702 = vpop.permute.xlu0 %4701
        %4703 = vrot.lane.b32.xlu0 %v3849, 58
        %v4704 = vpop.permute.xlu0 %4703
        %v4705 = vsel %vm2523, %v4634, %v4636
        %v4706 = vsel %vm2523, %v4636, %v4638
        %v4707 = vsel %vm2523, %v4638, %v4640
        %v4708 = vsel %vm2523, %v4640, %v4642
        %v4709 = vsel %vm2523, %v4642, %v4644
        %v4710 = vsel %vm2523, %v4644, %v4646
        %v4711 = vsel %vm2523, %v4646, %v4648
        %v4712 = vsel %vm2523, %v4648, %v4650
        %v4713 = vsel %vm2523, %v4652, %v4654
        %v4714 = vsel %vm2523, %v4654, %v4656
        %v4715 = vsel %vm2523, %v4656, %v4658
        %v4716 = vsel %vm2523, %v4658, %v4660
        %v4717 = vsel %vm2523, %v4660, %v4662
        %v4718 = vsel %vm2523, %v4662, %v4664
        %v4719 = vsel %vm2523, %v4664, %v4666
        %v4720 = vsel %vm2523, %v4666, %v4668
        %v4721 = vsel %vm2523, %v4670, %v4672
        %v4722 = vsel %vm2523, %v4672, %v4674
        %v4723 = vsel %vm2523, %v4674, %v4676
        %v4724 = vsel %vm2523, %v4676, %v4678
        %v4725 = vsel %vm2523, %v4678, %v4680
        %v4726 = vsel %vm2523, %v4680, %v4682
        %v4727 = vsel %vm2523, %v4682, %v4684
        %v4728 = vsel %vm2523, %v4684, %v4686
        %v4729 = vsel %vm2523, %v4688, %v4690
        %v4730 = vsel %vm2523, %v4690, %v4692
        %v4731 = vsel %vm2523, %v4692, %v4694
        %v4732 = vsel %vm2523, %v4694, %v4696
        %v4733 = vsel %vm2523, %v4696, %v4698
        %v4734 = vsel %vm2523, %v4698, %v4700
        %v4735 = vsel %vm2523, %v4700, %v4702
        %v4736 = vsel %vm2523, %v4702, %v4704
        %v4737 = vld [vmem:[%s9] sm:$0xff]
        %v4738 = vld [vmem:[%s9 + $0x8] sm:$0xff]
        %v4739 = vld [vmem:[%s9 + $0x10] sm:$0xf]
        %v4740 = vld [vmem:[%s9 + $0x14] sm:$0xff]
        %v4741 = vld [vmem:[%s9 + $0x1c] sm:$0xff]
        %v4742 = vld [vmem:[%s9 + $0x24] sm:$0xf]
        %v4743 = vld [vmem:[%s9 + $0x28] sm:$0xff]
        %v4744 = vld [vmem:[%s9 + $0x30] sm:$0xff]
        %v4745 = vld [vmem:[%s9 + $0x38] sm:$0xf]
        %v4746 = vld [vmem:[%s9 + $0x3c] sm:$0xff]
        %v4747 = vld [vmem:[%s9 + $0x44] sm:$0xff]
        %v4748 = vld [vmem:[%s9 + $0x4c] sm:$0xf]
        %v4761 = vunpack.c.l.b16 %v4737
        %v4762 = vunpack.c.h.b16 %v4737
        %v4763 = vunpack.c.l.b16 %v4738
        %v4764 = vunpack.c.h.b16 %v4738
        %v4765 = vunpack.c.l.b16 %v4739
        %v4766 = vunpack.c.l.b16 %v4740
        %v4767 = vunpack.c.h.b16 %v4740
        %v4768 = vunpack.c.l.b16 %v4741
        %v4769 = vunpack.c.h.b16 %v4741
        %v4770 = vunpack.c.l.b16 %v4742
        %v4771 = vunpack.c.l.b16 %v4743
        %v4772 = vunpack.c.h.b16 %v4743
        %v4773 = vunpack.c.l.b16 %v4744
        %v4774 = vunpack.c.h.b16 %v4744
        %v4775 = vunpack.c.l.b16 %v4745
        %v4776 = vunpack.c.l.b16 %v4746
        %v4777 = vunpack.c.h.b16 %v4746
        %v4778 = vunpack.c.l.b16 %v4747
        %v4779 = vunpack.c.h.b16 %v4747
        %v4780 = vunpack.c.l.b16 %v4748
        %v4781 = vpack.c.b16 %v4766, %v4761
        %v4782 = vpack.c.b16 %v4767, %v4762
        %v4783 = vpack.c.b16 %v4768, %v4763
        %v4784 = vpack.c.b16 %v4769, %v4764
        %v4785 = vpack.c.b16 %v4770, %v4765
        %v4786 = vpack.c.b16 %v4776, %v4771
        %v4787 = vpack.c.b16 %v4777, %v4772
        %v4788 = vpack.c.b16 %v4778, %v4773
        %v4789 = vpack.c.b16 %v4779, %v4774
        %v4790 = vpack.c.b16 %v4780, %v4775
        %4799 = vrot.lane.b32.xlu0 0, 35
        %v4800 = vpop.permute.xlu0 %4799
        %4801 = vrot.lane.b32.xlu0 %v3804, 35
        %v4802 = vpop.permute.xlu0 %4801
        %4803 = vrot.lane.b32.xlu0 %v3805, 35
        %v4804 = vpop.permute.xlu0 %4803
        %4805 = vrot.lane.b32.xlu0 %v3806, 35
        %v4806 = vpop.permute.xlu0 %4805
        %4807 = vrot.lane.b32.xlu0 %v3807, 35
        %v4808 = vpop.permute.xlu0 %4807
        %4809 = vrot.lane.b32.xlu0 %v3808, 35
        %v4810 = vpop.permute.xlu0 %4809
        %4811 = vrot.lane.b32.xlu0 %v3809, 35
        %v4812 = vpop.permute.xlu0 %4811
        %4813 = vrot.lane.b32.xlu0 %v3810, 35
        %v4814 = vpop.permute.xlu0 %4813
        %4815 = vrot.lane.b32.xlu0 %v3811, 35
        %v4816 = vpop.permute.xlu0 %4815
        %4817 = vrot.lane.b32.xlu0 %v3843, 35
        %v4818 = vpop.permute.xlu0 %4817
        %4819 = vrot.lane.b32.xlu0 %v3813, 35
        %v4820 = vpop.permute.xlu0 %4819
        %4821 = vrot.lane.b32.xlu0 %v3814, 35
        %v4822 = vpop.permute.xlu0 %4821
        %4823 = vrot.lane.b32.xlu0 %v3815, 35
        %v4824 = vpop.permute.xlu0 %4823
        %4825 = vrot.lane.b32.xlu0 %v3816, 35
        %v4826 = vpop.permute.xlu0 %4825
        %4827 = vrot.lane.b32.xlu0 %v3817, 35
        %v4828 = vpop.permute.xlu0 %4827
        %4829 = vrot.lane.b32.xlu0 %v3818, 35
        %v4830 = vpop.permute.xlu0 %4829
        %4831 = vrot.lane.b32.xlu0 %v3819, 35
        %v4832 = vpop.permute.xlu0 %4831
        %4833 = vrot.lane.b32.xlu0 %v3820, 35
        %v4834 = vpop.permute.xlu0 %4833
        %4835 = vrot.lane.b32.xlu0 %v3845, 35
        %v4836 = vpop.permute.xlu0 %4835
        %4837 = vrot.lane.b32.xlu0 %v3822, 35
        %v4838 = vpop.permute.xlu0 %4837
        %4839 = vrot.lane.b32.xlu0 %v3823, 35
        %v4840 = vpop.permute.xlu0 %4839
        %4841 = vrot.lane.b32.xlu0 %v3824, 35
        %v4842 = vpop.permute.xlu0 %4841
        %4843 = vrot.lane.b32.xlu0 %v3825, 35
        %v4844 = vpop.permute.xlu0 %4843
        %4845 = vrot.lane.b32.xlu0 %v3826, 35
        %v4846 = vpop.permute.xlu0 %4845
        %4847 = vrot.lane.b32.xlu0 %v3827, 35
        %v4848 = vpop.permute.xlu0 %4847
        %4849 = vrot.lane.b32.xlu0 %v3828, 35
        %v4850 = vpop.permute.xlu0 %4849
        %4851 = vrot.lane.b32.xlu0 %v3829, 35
        %v4852 = vpop.permute.xlu0 %4851
        %4853 = vrot.lane.b32.xlu0 %v3847, 35
        %v4854 = vpop.permute.xlu0 %4853
        %4855 = vrot.lane.b32.xlu0 %v3831, 35
        %v4856 = vpop.permute.xlu0 %4855
        %4857 = vrot.lane.b32.xlu0 %v3832, 35
        %v4858 = vpop.permute.xlu0 %4857
        %4859 = vrot.lane.b32.xlu0 %v3833, 35
        %v4860 = vpop.permute.xlu0 %4859
        %4861 = vrot.lane.b32.xlu0 %v3834, 35
        %v4862 = vpop.permute.xlu0 %4861
        %4863 = vrot.lane.b32.xlu0 %v3835, 35
        %v4864 = vpop.permute.xlu0 %4863
        %4865 = vrot.lane.b32.xlu0 %v3836, 35
        %v4866 = vpop.permute.xlu0 %4865
        %4867 = vrot.lane.b32.xlu0 %v3837, 35
        %v4868 = vpop.permute.xlu0 %4867
        %4869 = vrot.lane.b32.xlu0 %v3838, 35
        %v4870 = vpop.permute.xlu0 %4869
        %4871 = vrot.lane.b32.xlu0 %v3849, 35
        %v4872 = vpop.permute.xlu0 %4871
        %4873 = vrot.lane.b32.xlu0 %v3961, 35
        %v4874 = vpop.permute.xlu0 %4873
        %4875 = vrot.lane.b32.xlu0 %v3962, 35
        %v4876 = vpop.permute.xlu0 %4875
        %4877 = vrot.lane.b32.xlu0 %v3963, 35
        %v4878 = vpop.permute.xlu0 %4877
        %4879 = vrot.lane.b32.xlu0 %v3964, 35
        %v4880 = vpop.permute.xlu0 %4879
        %4881 = vrot.lane.b32.xlu0 %v3965, 35
        %v4882 = vpop.permute.xlu0 %4881
        %4883 = vrot.lane.b32.xlu0 %v3966, 35
        %v4884 = vpop.permute.xlu0 %4883
        %4885 = vrot.lane.b32.xlu0 %v3967, 35
        %v4886 = vpop.permute.xlu0 %4885
        %4887 = vrot.lane.b32.xlu0 %v3968, 35
        %v4888 = vpop.permute.xlu0 %4887
        %4889 = vrot.lane.b32.xlu0 %v3969, 35
        %v4890 = vpop.permute.xlu0 %4889
        %4891 = vrot.lane.b32.xlu0 %v3906, 35
        %v4892 = vpop.permute.xlu0 %4891
        %4893 = vrot.lane.b32.xlu0 %v3970, 35
        %v4894 = vpop.permute.xlu0 %4893
        %4895 = vrot.lane.b32.xlu0 %v3971, 35
        %v4896 = vpop.permute.xlu0 %4895
        %4897 = vrot.lane.b32.xlu0 %v3972, 35
        %v4898 = vpop.permute.xlu0 %4897
        %4899 = vrot.lane.b32.xlu0 %v3973, 35
        %v4900 = vpop.permute.xlu0 %4899
        %4901 = vrot.lane.b32.xlu0 %v3974, 35
        %v4902 = vpop.permute.xlu0 %4901
        %4903 = vrot.lane.b32.xlu0 %v3975, 35
        %v4904 = vpop.permute.xlu0 %4903
        %4905 = vrot.lane.b32.xlu0 %v3976, 35
        %v4906 = vpop.permute.xlu0 %4905
        %4907 = vrot.lane.b32.xlu0 %v3977, 35
        %v4908 = vpop.permute.xlu0 %4907
        %4909 = vrot.lane.b32.xlu0 %v3978, 35
        %v4910 = vpop.permute.xlu0 %4909
        %4911 = vrot.lane.b32.xlu0 %v3924, 35
        %v4912 = vpop.permute.xlu0 %4911
        %4913 = vrot.lane.b32.xlu0 %v3979, 35
        %v4914 = vpop.permute.xlu0 %4913
        %4915 = vrot.lane.b32.xlu0 %v3980, 35
        %v4916 = vpop.permute.xlu0 %4915
        %4917 = vrot.lane.b32.xlu0 %v3981, 35
        %v4918 = vpop.permute.xlu0 %4917
        %4919 = vrot.lane.b32.xlu0 %v3982, 35
        %v4920 = vpop.permute.xlu0 %4919
        %4921 = vrot.lane.b32.xlu0 %v3983, 35
        %v4922 = vpop.permute.xlu0 %4921
        %4923 = vrot.lane.b32.xlu0 %v3984, 35
        %v4924 = vpop.permute.xlu0 %4923
        %4925 = vrot.lane.b32.xlu0 %v3985, 35
        %v4926 = vpop.permute.xlu0 %4925
        %4927 = vrot.lane.b32.xlu0 %v3986, 35
        %v4928 = vpop.permute.xlu0 %4927
        %4929 = vrot.lane.b32.xlu0 %v3987, 35
        %v4930 = vpop.permute.xlu0 %4929
        %4931 = vrot.lane.b32.xlu0 %v3942, 35
        %v4932 = vpop.permute.xlu0 %4931
        %4933 = vrot.lane.b32.xlu0 %v3988, 35
        %v4934 = vpop.permute.xlu0 %4933
        %4935 = vrot.lane.b32.xlu0 %v3989, 35
        %v4936 = vpop.permute.xlu0 %4935
        %4937 = vrot.lane.b32.xlu0 %v3990, 35
        %v4938 = vpop.permute.xlu0 %4937
        %4939 = vrot.lane.b32.xlu0 %v3991, 35
        %v4940 = vpop.permute.xlu0 %4939
        %4941 = vrot.lane.b32.xlu0 %v3992, 35
        %v4942 = vpop.permute.xlu0 %4941
        %4943 = vrot.lane.b32.xlu0 %v3993, 35
        %v4944 = vpop.permute.xlu0 %4943
        %4945 = vrot.lane.b32.xlu0 %v3994, 35
        %v4946 = vpop.permute.xlu0 %4945
        %4947 = vrot.lane.b32.xlu0 %v3995, 35
        %v4948 = vpop.permute.xlu0 %4947
        %4949 = vrot.lane.b32.xlu0 %v3996, 35
        %v4950 = vpop.permute.xlu0 %4949
        %4951 = vrot.lane.b32.xlu0 %v3960, 35
        %v4952 = vpop.permute.xlu0 %4951
        %4953 = vrot.lane.b32.xlu0 %v4071, 35
        %v4954 = vpop.permute.xlu0 %4953
        %4955 = vrot.lane.b32.xlu0 %v4072, 35
        %v4956 = vpop.permute.xlu0 %4955
        %4957 = vrot.lane.b32.xlu0 %v4073, 35
        %v4958 = vpop.permute.xlu0 %4957
        %4959 = vrot.lane.b32.xlu0 %v4074, 35
        %v4960 = vpop.permute.xlu0 %4959
        %4961 = vrot.lane.b32.xlu0 %v4075, 35
        %v4962 = vpop.permute.xlu0 %4961
        %4963 = vrot.lane.b32.xlu0 %v4076, 35
        %v4964 = vpop.permute.xlu0 %4963
        %4965 = vrot.lane.b32.xlu0 %v4077, 35
        %v4966 = vpop.permute.xlu0 %4965
        %4967 = vrot.lane.b32.xlu0 %v4078, 35
        %v4968 = vpop.permute.xlu0 %4967
        %4969 = vrot.lane.b32.xlu0 %v4079, 35
        %v4970 = vpop.permute.xlu0 %4969
        %4971 = vrot.lane.b32.xlu0 %v4016, 35
        %v4972 = vpop.permute.xlu0 %4971
        %4973 = vrot.lane.b32.xlu0 %v4080, 35
        %v4974 = vpop.permute.xlu0 %4973
        %4975 = vrot.lane.b32.xlu0 %v4081, 35
        %v4976 = vpop.permute.xlu0 %4975
        %4977 = vrot.lane.b32.xlu0 %v4082, 35
        %v4978 = vpop.permute.xlu0 %4977
        %4979 = vrot.lane.b32.xlu0 %v4083, 35
        %v4980 = vpop.permute.xlu0 %4979
        %4981 = vrot.lane.b32.xlu0 %v4084, 35
        %v4982 = vpop.permute.xlu0 %4981
        %4983 = vrot.lane.b32.xlu0 %v4085, 35
        %v4984 = vpop.permute.xlu0 %4983
        %4985 = vrot.lane.b32.xlu0 %v4086, 35
        %v4986 = vpop.permute.xlu0 %4985
        %4987 = vrot.lane.b32.xlu0 %v4087, 35
        %v4988 = vpop.permute.xlu0 %4987
        %4989 = vrot.lane.b32.xlu0 %v4088, 35
        %v4990 = vpop.permute.xlu0 %4989
        %4991 = vrot.lane.b32.xlu0 %v4034, 35
        %v4992 = vpop.permute.xlu0 %4991
        %4993 = vrot.lane.b32.xlu0 %v4089, 35
        %v4994 = vpop.permute.xlu0 %4993
        %4995 = vrot.lane.b32.xlu0 %v4090, 35
        %v4996 = vpop.permute.xlu0 %4995
        %4997 = vrot.lane.b32.xlu0 %v4091, 35
        %v4998 = vpop.permute.xlu0 %4997
        %4999 = vrot.lane.b32.xlu0 %v4092, 35
        %v5000 = vpop.permute.xlu0 %4999
        %5001 = vrot.lane.b32.xlu0 %v4093, 35
        %v5002 = vpop.permute.xlu0 %5001
        %5003 = vrot.lane.b32.xlu0 %v4094, 35
        %v5004 = vpop.permute.xlu0 %5003
        %5005 = vrot.lane.b32.xlu0 %v4095, 35
        %v5006 = vpop.permute.xlu0 %5005
        %5007 = vrot.lane.b32.xlu0 %v4096, 35
        %v5008 = vpop.permute.xlu0 %5007
        %5009 = vrot.lane.b32.xlu0 %v4097, 35
        %v5010 = vpop.permute.xlu0 %5009
        %5011 = vrot.lane.b32.xlu0 %v4052, 35
        %v5012 = vpop.permute.xlu0 %5011
        %5013 = vrot.lane.b32.xlu0 %v4098, 35
        %v5014 = vpop.permute.xlu0 %5013
        %5015 = vrot.lane.b32.xlu0 %v4099, 35
        %v5016 = vpop.permute.xlu0 %5015
        %5017 = vrot.lane.b32.xlu0 %v4100, 35
        %v5018 = vpop.permute.xlu0 %5017
        %5019 = vrot.lane.b32.xlu0 %v4101, 35
        %v5020 = vpop.permute.xlu0 %5019
        %5021 = vrot.lane.b32.xlu0 %v4102, 35
        %v5022 = vpop.permute.xlu0 %5021
        %5023 = vrot.lane.b32.xlu0 %v4103, 35
        %v5024 = vpop.permute.xlu0 %5023
        %5025 = vrot.lane.b32.xlu0 %v4104, 35
        %v5026 = vpop.permute.xlu0 %5025
        %5027 = vrot.lane.b32.xlu0 %v4105, 35
        %v5028 = vpop.permute.xlu0 %5027
        %5029 = vrot.lane.b32.xlu0 %v4106, 35
        %v5030 = vpop.permute.xlu0 %5029
        %5031 = vrot.lane.b32.xlu0 %v4070, 35
        %v5032 = vpop.permute.xlu0 %5031
        %5033 = vrot.lane.b32.xlu0 %v4181, 35
        %v5034 = vpop.permute.xlu0 %5033
        %5035 = vrot.lane.b32.xlu0 %v4182, 35
        %v5036 = vpop.permute.xlu0 %5035
        %5037 = vrot.lane.b32.xlu0 %v4183, 35
        %v5038 = vpop.permute.xlu0 %5037
        %5039 = vrot.lane.b32.xlu0 %v4184, 35
        %v5040 = vpop.permute.xlu0 %5039
        %5041 = vrot.lane.b32.xlu0 %v4185, 35
        %v5042 = vpop.permute.xlu0 %5041
        %5043 = vrot.lane.b32.xlu0 %v4186, 35
        %v5044 = vpop.permute.xlu0 %5043
        %5045 = vrot.lane.b32.xlu0 %v4187, 35
        %v5046 = vpop.permute.xlu0 %5045
        %5047 = vrot.lane.b32.xlu0 %v4188, 35
        %v5048 = vpop.permute.xlu0 %5047
        %5049 = vrot.lane.b32.xlu0 %v4189, 35
        %v5050 = vpop.permute.xlu0 %5049
        %5051 = vrot.lane.b32.xlu0 %v4126, 35
        %v5052 = vpop.permute.xlu0 %5051
        %5053 = vrot.lane.b32.xlu0 %v4190, 35
        %v5054 = vpop.permute.xlu0 %5053
        %5055 = vrot.lane.b32.xlu0 %v4191, 35
        %v5056 = vpop.permute.xlu0 %5055
        %5057 = vrot.lane.b32.xlu0 %v4192, 35
        %v5058 = vpop.permute.xlu0 %5057
        %5059 = vrot.lane.b32.xlu0 %v4193, 35
        %v5060 = vpop.permute.xlu0 %5059
        %5061 = vrot.lane.b32.xlu0 %v4194, 35
        %v5062 = vpop.permute.xlu0 %5061
        %5063 = vrot.lane.b32.xlu0 %v4195, 35
        %v5064 = vpop.permute.xlu0 %5063
        %5065 = vrot.lane.b32.xlu0 %v4196, 35
        %v5066 = vpop.permute.xlu0 %5065
        %5067 = vrot.lane.b32.xlu0 %v4197, 35
        %v5068 = vpop.permute.xlu0 %5067
        %5069 = vrot.lane.b32.xlu0 %v4198, 35
        %v5070 = vpop.permute.xlu0 %5069
        %5071 = vrot.lane.b32.xlu0 %v4144, 35
        %v5072 = vpop.permute.xlu0 %5071
        %5073 = vrot.lane.b32.xlu0 %v4199, 35
        %v5074 = vpop.permute.xlu0 %5073
        %5075 = vrot.lane.b32.xlu0 %v4200, 35
        %v5076 = vpop.permute.xlu0 %5075
        %5077 = vrot.lane.b32.xlu0 %v4201, 35
        %v5078 = vpop.permute.xlu0 %5077
        %5079 = vrot.lane.b32.xlu0 %v4202, 35
        %v5080 = vpop.permute.xlu0 %5079
        %5081 = vrot.lane.b32.xlu0 %v4203, 35
        %v5082 = vpop.permute.xlu0 %5081
        %5083 = vrot.lane.b32.xlu0 %v4204, 35
        %v5084 = vpop.permute.xlu0 %5083
        %5085 = vrot.lane.b32.xlu0 %v4205, 35
        %v5086 = vpop.permute.xlu0 %5085
        %5087 = vrot.lane.b32.xlu0 %v4206, 35
        %v5088 = vpop.permute.xlu0 %5087
        %5089 = vrot.lane.b32.xlu0 %v4207, 35
        %v5090 = vpop.permute.xlu0 %5089
        %5091 = vrot.lane.b32.xlu0 %v4162, 35
        %v5092 = vpop.permute.xlu0 %5091
        %5093 = vrot.lane.b32.xlu0 %v4208, 35
        %v5094 = vpop.permute.xlu0 %5093
        %5095 = vrot.lane.b32.xlu0 %v4209, 35
        %v5096 = vpop.permute.xlu0 %5095
        %5097 = vrot.lane.b32.xlu0 %v4210, 35
        %v5098 = vpop.permute.xlu0 %5097
        %5099 = vrot.lane.b32.xlu0 %v4211, 35
        %v5100 = vpop.permute.xlu0 %5099
        %5101 = vrot.lane.b32.xlu0 %v4212, 35
        %v5102 = vpop.permute.xlu0 %5101
        %5103 = vrot.lane.b32.xlu0 %v4213, 35
        %v5104 = vpop.permute.xlu0 %5103
        %5105 = vrot.lane.b32.xlu0 %v4214, 35
        %v5106 = vpop.permute.xlu0 %5105
        %5107 = vrot.lane.b32.xlu0 %v4215, 35
        %v5108 = vpop.permute.xlu0 %5107
        %5109 = vrot.lane.b32.xlu0 %v4216, 35
        %v5110 = vpop.permute.xlu0 %5109
        %5111 = vrot.lane.b32.xlu0 %v4180, 35
        %v5112 = vpop.permute.xlu0 %5111
        %5113 = vrot.lane.b32.xlu0 %v4218, 35
        %v5114 = vpop.permute.xlu0 %5113
        %5115 = vrot.lane.b32.xlu0 %v4289, 35
        %v5116 = vpop.permute.xlu0 %5115
        %5117 = vrot.lane.b32.xlu0 %v4290, 35
        %v5118 = vpop.permute.xlu0 %5117
        %5119 = vrot.lane.b32.xlu0 %v4291, 35
        %v5120 = vpop.permute.xlu0 %5119
        %5121 = vrot.lane.b32.xlu0 %v4292, 35
        %v5122 = vpop.permute.xlu0 %5121
        %5123 = vrot.lane.b32.xlu0 %v4293, 35
        %v5124 = vpop.permute.xlu0 %5123
        %5125 = vrot.lane.b32.xlu0 %v4294, 35
        %v5126 = vpop.permute.xlu0 %5125
        %5127 = vrot.lane.b32.xlu0 %v4295, 35
        %v5128 = vpop.permute.xlu0 %5127
        %5129 = vrot.lane.b32.xlu0 %v4296, 35
        %v5130 = vpop.permute.xlu0 %5129
        %5131 = vrot.lane.b32.xlu0 %v4234, 35
        %v5132 = vpop.permute.xlu0 %5131
        %5133 = vrot.lane.b32.xlu0 %v4236, 35
        %v5134 = vpop.permute.xlu0 %5133
        %5135 = vrot.lane.b32.xlu0 %v4297, 35
        %v5136 = vpop.permute.xlu0 %5135
        %5137 = vrot.lane.b32.xlu0 %v4298, 35
        %v5138 = vpop.permute.xlu0 %5137
        %5139 = vrot.lane.b32.xlu0 %v4299, 35
        %v5140 = vpop.permute.xlu0 %5139
        %5141 = vrot.lane.b32.xlu0 %v4300, 35
        %v5142 = vpop.permute.xlu0 %5141
        %5143 = vrot.lane.b32.xlu0 %v4301, 35
        %v5144 = vpop.permute.xlu0 %5143
        %5145 = vrot.lane.b32.xlu0 %v4302, 35
        %v5146 = vpop.permute.xlu0 %5145
        %5147 = vrot.lane.b32.xlu0 %v4303, 35
        %v5148 = vpop.permute.xlu0 %5147
        %5149 = vrot.lane.b32.xlu0 %v4304, 35
        %v5150 = vpop.permute.xlu0 %5149
        %5151 = vrot.lane.b32.xlu0 %v4252, 35
        %v5152 = vpop.permute.xlu0 %5151
        %5153 = vrot.lane.b32.xlu0 %v4254, 35
        %v5154 = vpop.permute.xlu0 %5153
        %5155 = vrot.lane.b32.xlu0 %v4305, 35
        %v5156 = vpop.permute.xlu0 %5155
        %5157 = vrot.lane.b32.xlu0 %v4306, 35
        %v5158 = vpop.permute.xlu0 %5157
        %5159 = vrot.lane.b32.xlu0 %v4307, 35
        %v5160 = vpop.permute.xlu0 %5159
        %5161 = vrot.lane.b32.xlu0 %v4308, 35
        %v5162 = vpop.permute.xlu0 %5161
        %5163 = vrot.lane.b32.xlu0 %v4309, 35
        %v5164 = vpop.permute.xlu0 %5163
        %5165 = vrot.lane.b32.xlu0 %v4310, 35
        %v5166 = vpop.permute.xlu0 %5165
        %5167 = vrot.lane.b32.xlu0 %v4311, 35
        %v5168 = vpop.permute.xlu0 %5167
        %5169 = vrot.lane.b32.xlu0 %v4312, 35
        %v5170 = vpop.permute.xlu0 %5169
        %5171 = vrot.lane.b32.xlu0 %v4270, 35
        %v5172 = vpop.permute.xlu0 %5171
        %5173 = vrot.lane.b32.xlu0 %v4272, 35
        %v5174 = vpop.permute.xlu0 %5173
        %5175 = vrot.lane.b32.xlu0 %v4313, 35
        %v5176 = vpop.permute.xlu0 %5175
        %5177 = vrot.lane.b32.xlu0 %v4314, 35
        %v5178 = vpop.permute.xlu0 %5177
        %5179 = vrot.lane.b32.xlu0 %v4315, 35
        %v5180 = vpop.permute.xlu0 %5179
        %5181 = vrot.lane.b32.xlu0 %v4316, 35
        %v5182 = vpop.permute.xlu0 %5181
        %5183 = vrot.lane.b32.xlu0 %v4317, 35
        %v5184 = vpop.permute.xlu0 %5183
        %5185 = vrot.lane.b32.xlu0 %v4318, 35
        %v5186 = vpop.permute.xlu0 %5185
        %5187 = vrot.lane.b32.xlu0 %v4319, 35
        %v5188 = vpop.permute.xlu0 %5187
        %5189 = vrot.lane.b32.xlu0 %v4320, 35
        %v5190 = vpop.permute.xlu0 %5189
        %5191 = vrot.lane.b32.xlu0 %v4288, 35
        %v5192 = vpop.permute.xlu0 %5191
        %5193 = vrot.lane.b32.xlu0 %v4322, 35
        %v5194 = vpop.permute.xlu0 %5193
        %5195 = vrot.lane.b32.xlu0 %v4393, 35
        %v5196 = vpop.permute.xlu0 %5195
        %5197 = vrot.lane.b32.xlu0 %v4394, 35
        %v5198 = vpop.permute.xlu0 %5197
        %5199 = vrot.lane.b32.xlu0 %v4395, 35
        %v5200 = vpop.permute.xlu0 %5199
        %5201 = vrot.lane.b32.xlu0 %v4396, 35
        %v5202 = vpop.permute.xlu0 %5201
        %5203 = vrot.lane.b32.xlu0 %v4397, 35
        %v5204 = vpop.permute.xlu0 %5203
        %5205 = vrot.lane.b32.xlu0 %v4398, 35
        %v5206 = vpop.permute.xlu0 %5205
        %5207 = vrot.lane.b32.xlu0 %v4399, 35
        %v5208 = vpop.permute.xlu0 %5207
        %5209 = vrot.lane.b32.xlu0 %v4400, 35
        %v5210 = vpop.permute.xlu0 %5209
        %5211 = vrot.lane.b32.xlu0 %v4338, 35
        %v5212 = vpop.permute.xlu0 %5211
        %5213 = vrot.lane.b32.xlu0 %v4340, 35
        %v5214 = vpop.permute.xlu0 %5213
        %5215 = vrot.lane.b32.xlu0 %v4401, 35
        %v5216 = vpop.permute.xlu0 %5215
        %5217 = vrot.lane.b32.xlu0 %v4402, 35
        %v5218 = vpop.permute.xlu0 %5217
        %5219 = vrot.lane.b32.xlu0 %v4403, 35
        %v5220 = vpop.permute.xlu0 %5219
        %5221 = vrot.lane.b32.xlu0 %v4404, 35
        %v5222 = vpop.permute.xlu0 %5221
        %5223 = vrot.lane.b32.xlu0 %v4405, 35
        %v5224 = vpop.permute.xlu0 %5223
        %5225 = vrot.lane.b32.xlu0 %v4406, 35
        %v5226 = vpop.permute.xlu0 %5225
        %5227 = vrot.lane.b32.xlu0 %v4407, 35
        %v5228 = vpop.permute.xlu0 %5227
        %5229 = vrot.lane.b32.xlu0 %v4408, 35
        %v5230 = vpop.permute.xlu0 %5229
        %5231 = vrot.lane.b32.xlu0 %v4356, 35
        %v5232 = vpop.permute.xlu0 %5231
        %5233 = vrot.lane.b32.xlu0 %v4358, 35
        %v5234 = vpop.permute.xlu0 %5233
        %5235 = vrot.lane.b32.xlu0 %v4409, 35
        %v5236 = vpop.permute.xlu0 %5235
        %5237 = vrot.lane.b32.xlu0 %v4410, 35
        %v5238 = vpop.permute.xlu0 %5237
        %5239 = vrot.lane.b32.xlu0 %v4411, 35
        %v5240 = vpop.permute.xlu0 %5239
        %5241 = vrot.lane.b32.xlu0 %v4412, 35
        %v5242 = vpop.permute.xlu0 %5241
        %5243 = vrot.lane.b32.xlu0 %v4413, 35
        %v5244 = vpop.permute.xlu0 %5243
        %5245 = vrot.lane.b32.xlu0 %v4414, 35
        %v5246 = vpop.permute.xlu0 %5245
        %5247 = vrot.lane.b32.xlu0 %v4415, 35
        %v5248 = vpop.permute.xlu0 %5247
        %5249 = vrot.lane.b32.xlu0 %v4416, 35
        %v5250 = vpop.permute.xlu0 %5249
        %5251 = vrot.lane.b32.xlu0 %v4374, 35
        %v5252 = vpop.permute.xlu0 %5251
        %5253 = vrot.lane.b32.xlu0 %v4376, 35
        %v5254 = vpop.permute.xlu0 %5253
        %5255 = vrot.lane.b32.xlu0 %v4417, 35
        %v5256 = vpop.permute.xlu0 %5255
        %5257 = vrot.lane.b32.xlu0 %v4418, 35
        %v5258 = vpop.permute.xlu0 %5257
        %5259 = vrot.lane.b32.xlu0 %v4419, 35
        %v5260 = vpop.permute.xlu0 %5259
        %5261 = vrot.lane.b32.xlu0 %v4420, 35
        %v5262 = vpop.permute.xlu0 %5261
        %5263 = vrot.lane.b32.xlu0 %v4421, 35
        %v5264 = vpop.permute.xlu0 %5263
        %5265 = vrot.lane.b32.xlu0 %v4422, 35
        %v5266 = vpop.permute.xlu0 %5265
        %5267 = vrot.lane.b32.xlu0 %v4423, 35
        %v5268 = vpop.permute.xlu0 %5267
        %5269 = vrot.lane.b32.xlu0 %v4424, 35
        %v5270 = vpop.permute.xlu0 %5269
        %5271 = vrot.lane.b32.xlu0 %v4392, 35
        %v5272 = vpop.permute.xlu0 %5271
        %5273 = vrot.lane.b32.xlu0 %v4426, 35
        %v5274 = vpop.permute.xlu0 %5273
        %5275 = vrot.lane.b32.xlu0 %v4497, 35
        %v5276 = vpop.permute.xlu0 %5275
        %5277 = vrot.lane.b32.xlu0 %v4498, 35
        %v5278 = vpop.permute.xlu0 %5277
        %5279 = vrot.lane.b32.xlu0 %v4499, 35
        %v5280 = vpop.permute.xlu0 %5279
        %5281 = vrot.lane.b32.xlu0 %v4500, 35
        %v5282 = vpop.permute.xlu0 %5281
        %5283 = vrot.lane.b32.xlu0 %v4501, 35
        %v5284 = vpop.permute.xlu0 %5283
        %5285 = vrot.lane.b32.xlu0 %v4502, 35
        %v5286 = vpop.permute.xlu0 %5285
        %5287 = vrot.lane.b32.xlu0 %v4503, 35
        %v5288 = vpop.permute.xlu0 %5287
        %5289 = vrot.lane.b32.xlu0 %v4504, 35
        %v5290 = vpop.permute.xlu0 %5289
        %5291 = vrot.lane.b32.xlu0 %v4442, 35
        %v5292 = vpop.permute.xlu0 %5291
        %5293 = vrot.lane.b32.xlu0 %v4444, 35
        %v5294 = vpop.permute.xlu0 %5293
        %5295 = vrot.lane.b32.xlu0 %v4505, 35
        %v5296 = vpop.permute.xlu0 %5295
        %5297 = vrot.lane.b32.xlu0 %v4506, 35
        %v5298 = vpop.permute.xlu0 %5297
        %5299 = vrot.lane.b32.xlu0 %v4507, 35
        %v5300 = vpop.permute.xlu0 %5299
        %5301 = vrot.lane.b32.xlu0 %v4508, 35
        %v5302 = vpop.permute.xlu0 %5301
        %5303 = vrot.lane.b32.xlu0 %v4509, 35
        %v5304 = vpop.permute.xlu0 %5303
        %5305 = vrot.lane.b32.xlu0 %v4510, 35
        %v5306 = vpop.permute.xlu0 %5305
        %5307 = vrot.lane.b32.xlu0 %v4511, 35
        %v5308 = vpop.permute.xlu0 %5307
        %5309 = vrot.lane.b32.xlu0 %v4512, 35
        %v5310 = vpop.permute.xlu0 %5309
        %5311 = vrot.lane.b32.xlu0 %v4460, 35
        %v5312 = vpop.permute.xlu0 %5311
        %5313 = vrot.lane.b32.xlu0 %v4462, 35
        %v5314 = vpop.permute.xlu0 %5313
        %5315 = vrot.lane.b32.xlu0 %v4513, 35
        %v5316 = vpop.permute.xlu0 %5315
        %5317 = vrot.lane.b32.xlu0 %v4514, 35
        %v5318 = vpop.permute.xlu0 %5317
        %5319 = vrot.lane.b32.xlu0 %v4515, 35
        %v5320 = vpop.permute.xlu0 %5319
        %5321 = vrot.lane.b32.xlu0 %v4516, 35
        %v5322 = vpop.permute.xlu0 %5321
        %5323 = vrot.lane.b32.xlu0 %v4517, 35
        %v5324 = vpop.permute.xlu0 %5323
        %5325 = vrot.lane.b32.xlu0 %v4518, 35
        %v5326 = vpop.permute.xlu0 %5325
        %5327 = vrot.lane.b32.xlu0 %v4519, 35
        %v5328 = vpop.permute.xlu0 %5327
        %5329 = vrot.lane.b32.xlu0 %v4520, 35
        %v5330 = vpop.permute.xlu0 %5329
        %5331 = vrot.lane.b32.xlu0 %v4478, 35
        %v5332 = vpop.permute.xlu0 %5331
        %5333 = vrot.lane.b32.xlu0 %v4480, 35
        %v5334 = vpop.permute.xlu0 %5333
        %5335 = vrot.lane.b32.xlu0 %v4521, 35
        %v5336 = vpop.permute.xlu0 %5335
        %5337 = vrot.lane.b32.xlu0 %v4522, 35
        %v5338 = vpop.permute.xlu0 %5337
        %5339 = vrot.lane.b32.xlu0 %v4523, 35
        %v5340 = vpop.permute.xlu0 %5339
        %5341 = vrot.lane.b32.xlu0 %v4524, 35
        %v5342 = vpop.permute.xlu0 %5341
        %5343 = vrot.lane.b32.xlu0 %v4525, 35
        %v5344 = vpop.permute.xlu0 %5343
        %5345 = vrot.lane.b32.xlu0 %v4526, 35
        %v5346 = vpop.permute.xlu0 %5345
        %5347 = vrot.lane.b32.xlu0 %v4527, 35
        %v5348 = vpop.permute.xlu0 %5347
        %5349 = vrot.lane.b32.xlu0 %v4528, 35
        %v5350 = vpop.permute.xlu0 %5349
        %5351 = vrot.lane.b32.xlu0 %v4496, 35
        %v5352 = vpop.permute.xlu0 %5351
        %5353 = vrot.lane.b32.xlu0 %v4530, 35
        %v5354 = vpop.permute.xlu0 %5353
        %5355 = vrot.lane.b32.xlu0 %v4601, 35
        %v5356 = vpop.permute.xlu0 %5355
        %5357 = vrot.lane.b32.xlu0 %v4602, 35
        %v5358 = vpop.permute.xlu0 %5357
        %5359 = vrot.lane.b32.xlu0 %v4603, 35
        %v5360 = vpop.permute.xlu0 %5359
        %5361 = vrot.lane.b32.xlu0 %v4604, 35
        %v5362 = vpop.permute.xlu0 %5361
        %5363 = vrot.lane.b32.xlu0 %v4605, 35
        %v5364 = vpop.permute.xlu0 %5363
        %5365 = vrot.lane.b32.xlu0 %v4606, 35
        %v5366 = vpop.permute.xlu0 %5365
        %5367 = vrot.lane.b32.xlu0 %v4607, 35
        %v5368 = vpop.permute.xlu0 %5367
        %5369 = vrot.lane.b32.xlu0 %v4608, 35
        %v5370 = vpop.permute.xlu0 %5369
        %5371 = vrot.lane.b32.xlu0 %v4546, 35
        %v5372 = vpop.permute.xlu0 %5371
        %5373 = vrot.lane.b32.xlu0 %v4548, 35
        %v5374 = vpop.permute.xlu0 %5373
        %5375 = vrot.lane.b32.xlu0 %v4609, 35
        %v5376 = vpop.permute.xlu0 %5375
        %5377 = vrot.lane.b32.xlu0 %v4610, 35
        %v5378 = vpop.permute.xlu0 %5377
        %5379 = vrot.lane.b32.xlu0 %v4611, 35
        %v5380 = vpop.permute.xlu0 %5379
        %5381 = vrot.lane.b32.xlu0 %v4612, 35
        %v5382 = vpop.permute.xlu0 %5381
        %5383 = vrot.lane.b32.xlu0 %v4613, 35
        %v5384 = vpop.permute.xlu0 %5383
        %5385 = vrot.lane.b32.xlu0 %v4614, 35
        %v5386 = vpop.permute.xlu0 %5385
        %5387 = vrot.lane.b32.xlu0 %v4615, 35
        %v5388 = vpop.permute.xlu0 %5387
        %5389 = vrot.lane.b32.xlu0 %v4616, 35
        %v5390 = vpop.permute.xlu0 %5389
        %5391 = vrot.lane.b32.xlu0 %v4564, 35
        %v5392 = vpop.permute.xlu0 %5391
        %5393 = vrot.lane.b32.xlu0 %v4566, 35
        %v5394 = vpop.permute.xlu0 %5393
        %5395 = vrot.lane.b32.xlu0 %v4617, 35
        %v5396 = vpop.permute.xlu0 %5395
        %5397 = vrot.lane.b32.xlu0 %v4618, 35
        %v5398 = vpop.permute.xlu0 %5397
        %5399 = vrot.lane.b32.xlu0 %v4619, 35
        %v5400 = vpop.permute.xlu0 %5399
        %5401 = vrot.lane.b32.xlu0 %v4620, 35
        %v5402 = vpop.permute.xlu0 %5401
        %5403 = vrot.lane.b32.xlu0 %v4621, 35
        %v5404 = vpop.permute.xlu0 %5403
        %5405 = vrot.lane.b32.xlu0 %v4622, 35
        %v5406 = vpop.permute.xlu0 %5405
        %5407 = vrot.lane.b32.xlu0 %v4623, 35
        %v5408 = vpop.permute.xlu0 %5407
        %5409 = vrot.lane.b32.xlu0 %v4624, 35
        %v5410 = vpop.permute.xlu0 %5409
        %5411 = vrot.lane.b32.xlu0 %v4582, 35
        %v5412 = vpop.permute.xlu0 %5411
        %5413 = vrot.lane.b32.xlu0 %v4584, 35
        %v5414 = vpop.permute.xlu0 %5413
        %5415 = vrot.lane.b32.xlu0 %v4625, 35
        %v5416 = vpop.permute.xlu0 %5415
        %5417 = vrot.lane.b32.xlu0 %v4626, 35
        %v5418 = vpop.permute.xlu0 %5417
        %5419 = vrot.lane.b32.xlu0 %v4627, 35
        %v5420 = vpop.permute.xlu0 %5419
        %5421 = vrot.lane.b32.xlu0 %v4628, 35
        %v5422 = vpop.permute.xlu0 %5421
        %5423 = vrot.lane.b32.xlu0 %v4629, 35
        %v5424 = vpop.permute.xlu0 %5423
        %5425 = vrot.lane.b32.xlu0 %v4630, 35
        %v5426 = vpop.permute.xlu0 %5425
        %5427 = vrot.lane.b32.xlu0 %v4631, 35
        %v5428 = vpop.permute.xlu0 %5427
        %5429 = vrot.lane.b32.xlu0 %v4632, 35
        %v5430 = vpop.permute.xlu0 %5429
        %5431 = vrot.lane.b32.xlu0 %v4600, 35
        %v5432 = vpop.permute.xlu0 %5431
        %5433 = vrot.lane.b32.xlu0 %v4634, 35
        %v5434 = vpop.permute.xlu0 %5433
        %5435 = vrot.lane.b32.xlu0 %v4705, 35
        %v5436 = vpop.permute.xlu0 %5435
        %5437 = vrot.lane.b32.xlu0 %v4706, 35
        %v5438 = vpop.permute.xlu0 %5437
        %5439 = vrot.lane.b32.xlu0 %v4707, 35
        %v5440 = vpop.permute.xlu0 %5439
        %5441 = vrot.lane.b32.xlu0 %v4708, 35
        %v5442 = vpop.permute.xlu0 %5441
        %5443 = vrot.lane.b32.xlu0 %v4709, 35
        %v5444 = vpop.permute.xlu0 %5443
        %5445 = vrot.lane.b32.xlu0 %v4710, 35
        %v5446 = vpop.permute.xlu0 %5445
        %5447 = vrot.lane.b32.xlu0 %v4711, 35
        %v5448 = vpop.permute.xlu0 %5447
        %5449 = vrot.lane.b32.xlu0 %v4712, 35
        %v5450 = vpop.permute.xlu0 %5449
        %5451 = vrot.lane.b32.xlu0 %v4650, 35
        %v5452 = vpop.permute.xlu0 %5451
        %5453 = vrot.lane.b32.xlu0 %v4652, 35
        %v5454 = vpop.permute.xlu0 %5453
        %5455 = vrot.lane.b32.xlu0 %v4713, 35
        %v5456 = vpop.permute.xlu0 %5455
        %5457 = vrot.lane.b32.xlu0 %v4714, 35
        %v5458 = vpop.permute.xlu0 %5457
        %5459 = vrot.lane.b32.xlu0 %v4715, 35
        %v5460 = vpop.permute.xlu0 %5459
        %5461 = vrot.lane.b32.xlu0 %v4716, 35
        %v5462 = vpop.permute.xlu0 %5461
        %5463 = vrot.lane.b32.xlu0 %v4717, 35
        %v5464 = vpop.permute.xlu0 %5463
        %5465 = vrot.lane.b32.xlu0 %v4718, 35
        %v5466 = vpop.permute.xlu0 %5465
        %5467 = vrot.lane.b32.xlu0 %v4719, 35
        %v5468 = vpop.permute.xlu0 %5467
        %5469 = vrot.lane.b32.xlu0 %v4720, 35
        %v5470 = vpop.permute.xlu0 %5469
        %5471 = vrot.lane.b32.xlu0 %v4668, 35
        %v5472 = vpop.permute.xlu0 %5471
        %5473 = vrot.lane.b32.xlu0 %v4670, 35
        %v5474 = vpop.permute.xlu0 %5473
        %5475 = vrot.lane.b32.xlu0 %v4721, 35
        %v5476 = vpop.permute.xlu0 %5475
        %5477 = vrot.lane.b32.xlu0 %v4722, 35
        %v5478 = vpop.permute.xlu0 %5477
        %5479 = vrot.lane.b32.xlu0 %v4723, 35
        %v5480 = vpop.permute.xlu0 %5479
        %5481 = vrot.lane.b32.xlu0 %v4724, 35
        %v5482 = vpop.permute.xlu0 %5481
        %5483 = vrot.lane.b32.xlu0 %v4725, 35
        %v5484 = vpop.permute.xlu0 %5483
        %5485 = vrot.lane.b32.xlu0 %v4726, 35
        %v5486 = vpop.permute.xlu0 %5485
        %5487 = vrot.lane.b32.xlu0 %v4727, 35
        %v5488 = vpop.permute.xlu0 %5487
        %5489 = vrot.lane.b32.xlu0 %v4728, 35
        %v5490 = vpop.permute.xlu0 %5489
        %5491 = vrot.lane.b32.xlu0 %v4686, 35
        %v5492 = vpop.permute.xlu0 %5491
        %5493 = vrot.lane.b32.xlu0 %v4688, 35
        %v5494 = vpop.permute.xlu0 %5493
        %5495 = vrot.lane.b32.xlu0 %v4729, 35
        %v5496 = vpop.permute.xlu0 %5495
        %5497 = vrot.lane.b32.xlu0 %v4730, 35
        %v5498 = vpop.permute.xlu0 %5497
        %5499 = vrot.lane.b32.xlu0 %v4731, 35
        %v5500 = vpop.permute.xlu0 %5499
        %5501 = vrot.lane.b32.xlu0 %v4732, 35
        %v5502 = vpop.permute.xlu0 %5501
        %5503 = vrot.lane.b32.xlu0 %v4733, 35
        %v5504 = vpop.permute.xlu0 %5503
        %5505 = vrot.lane.b32.xlu0 %v4734, 35
        %v5506 = vpop.permute.xlu0 %5505
        %5507 = vrot.lane.b32.xlu0 %v4735, 35
        %v5508 = vpop.permute.xlu0 %5507
        %5509 = vrot.lane.b32.xlu0 %v4736, 35
        %v5510 = vpop.permute.xlu0 %5509
        %5511 = vrot.lane.b32.xlu0 %v4704, 35
        %v5512 = vpop.permute.xlu0 %5511
        %v5513 = vsel %vm2820, %v4800, %v4802
        %v5514 = vsel %vm2820, %v4802, %v4804
        %v5515 = vsel %vm2820, %v4804, %v4806
        %v5516 = vsel %vm2820, %v4806, %v4808
        %v5517 = vsel %vm2820, %v4808, %v4810
        %v5518 = vsel %vm2820, %v4810, %v4812
        %v5519 = vsel %vm2820, %v4812, %v4814
        %v5520 = vsel %vm2820, %v4814, %v4816
        %v5521 = vsel %vm2820, %v4816, %v4818
        %v5522 = vsel %vm2820, %v4800, %v4820
        %v5523 = vsel %vm2820, %v4820, %v4822
        %v5524 = vsel %vm2820, %v4822, %v4824
        %v5525 = vsel %vm2820, %v4824, %v4826
        %v5526 = vsel %vm2820, %v4826, %v4828
        %v5527 = vsel %vm2820, %v4828, %v4830
        %v5528 = vsel %vm2820, %v4830, %v4832
        %v5529 = vsel %vm2820, %v4832, %v4834
        %v5530 = vsel %vm2820, %v4834, %v4836
        %v5531 = vsel %vm2820, %v4800, %v4838
        %v5532 = vsel %vm2820, %v4838, %v4840
        %v5533 = vsel %vm2820, %v4840, %v4842
        %v5534 = vsel %vm2820, %v4842, %v4844
        %v5535 = vsel %vm2820, %v4844, %v4846
        %v5536 = vsel %vm2820, %v4846, %v4848
        %v5537 = vsel %vm2820, %v4848, %v4850
        %v5538 = vsel %vm2820, %v4850, %v4852
        %v5539 = vsel %vm2820, %v4852, %v4854
        %v5540 = vsel %vm2820, %v4800, %v4856
        %v5541 = vsel %vm2820, %v4856, %v4858
        %v5542 = vsel %vm2820, %v4858, %v4860
        %v5543 = vsel %vm2820, %v4860, %v4862
        %v5544 = vsel %vm2820, %v4862, %v4864
        %v5545 = vsel %vm2820, %v4864, %v4866
        %v5546 = vsel %vm2820, %v4866, %v4868
        %v5547 = vsel %vm2820, %v4868, %v4870
        %v5548 = vsel %vm2820, %v4870, %v4872
        %v5549 = vsel %vm2820, %v4874, %v4876
        %v5550 = vsel %vm2820, %v4876, %v4878
        %v5551 = vsel %vm2820, %v4878, %v4880
        %v5552 = vsel %vm2820, %v4880, %v4882
        %v5553 = vsel %vm2820, %v4882, %v4884
        %v5554 = vsel %vm2820, %v4884, %v4886
        %v5555 = vsel %vm2820, %v4886, %v4888
        %v5556 = vsel %vm2820, %v4888, %v4890
        %v5557 = vsel %vm2820, %v4890, %v4892
        %v5558 = vsel %vm2820, %v4894, %v4896
        %v5559 = vsel %vm2820, %v4896, %v4898
        %v5560 = vsel %vm2820, %v4898, %v4900
        %v5561 = vsel %vm2820, %v4900, %v4902
        %v5562 = vsel %vm2820, %v4902, %v4904
        %v5563 = vsel %vm2820, %v4904, %v4906
        %v5564 = vsel %vm2820, %v4906, %v4908
        %v5565 = vsel %vm2820, %v4908, %v4910
        %v5566 = vsel %vm2820, %v4910, %v4912
        %v5567 = vsel %vm2820, %v4914, %v4916
        %v5568 = vsel %vm2820, %v4916, %v4918
        %v5569 = vsel %vm2820, %v4918, %v4920
        %v5570 = vsel %vm2820, %v4920, %v4922
        %v5571 = vsel %vm2820, %v4922, %v4924
        %v5572 = vsel %vm2820, %v4924, %v4926
        %v5573 = vsel %vm2820, %v4926, %v4928
        %v5574 = vsel %vm2820, %v4928, %v4930
        %v5575 = vsel %vm2820, %v4930, %v4932
        %v5576 = vsel %vm2820, %v4934, %v4936
        %v5577 = vsel %vm2820, %v4936, %v4938
        %v5578 = vsel %vm2820, %v4938, %v4940
        %v5579 = vsel %vm2820, %v4940, %v4942
        %v5580 = vsel %vm2820, %v4942, %v4944
        %v5581 = vsel %vm2820, %v4944, %v4946
        %v5582 = vsel %vm2820, %v4946, %v4948
        %v5583 = vsel %vm2820, %v4948, %v4950
        %v5584 = vsel %vm2820, %v4950, %v4952
        %v5585 = vsel %vm2820, %v4954, %v4956
        %v5586 = vsel %vm2820, %v4956, %v4958
        %v5587 = vsel %vm2820, %v4958, %v4960
        %v5588 = vsel %vm2820, %v4960, %v4962
        %v5589 = vsel %vm2820, %v4962, %v4964
        %v5590 = vsel %vm2820, %v4964, %v4966
        %v5591 = vsel %vm2820, %v4966, %v4968
        %v5592 = vsel %vm2820, %v4968, %v4970
        %v5593 = vsel %vm2820, %v4970, %v4972
        %v5594 = vsel %vm2820, %v4974, %v4976
        %v5595 = vsel %vm2820, %v4976, %v4978
        %v5596 = vsel %vm2820, %v4978, %v4980
        %v5597 = vsel %vm2820, %v4980, %v4982
        %v5598 = vsel %vm2820, %v4982, %v4984
        %v5599 = vsel %vm2820, %v4984, %v4986
        %v5600 = vsel %vm2820, %v4986, %v4988
        %v5601 = vsel %vm2820, %v4988, %v4990
        %v5602 = vsel %vm2820, %v4990, %v4992
        %v5603 = vsel %vm2820, %v4994, %v4996
        %v5604 = vsel %vm2820, %v4996, %v4998
        %v5605 = vsel %vm2820, %v4998, %v5000
        %v5606 = vsel %vm2820, %v5000, %v5002
        %v5607 = vsel %vm2820, %v5002, %v5004
        %v5608 = vsel %vm2820, %v5004, %v5006
        %v5609 = vsel %vm2820, %v5006, %v5008
        %v5610 = vsel %vm2820, %v5008, %v5010
        %v5611 = vsel %vm2820, %v5010, %v5012
        %v5612 = vsel %vm2820, %v5014, %v5016
        %v5613 = vsel %vm2820, %v5016, %v5018
        %v5614 = vsel %vm2820, %v5018, %v5020
        %v5615 = vsel %vm2820, %v5020, %v5022
        %v5616 = vsel %vm2820, %v5022, %v5024
        %v5617 = vsel %vm2820, %v5024, %v5026
        %v5618 = vsel %vm2820, %v5026, %v5028
        %v5619 = vsel %vm2820, %v5028, %v5030
        %v5620 = vsel %vm2820, %v5030, %v5032
        %v5621 = vsel %vm2820, %v5034, %v5036
        %v5622 = vsel %vm2820, %v5036, %v5038
        %v5623 = vsel %vm2820, %v5038, %v5040
        %v5624 = vsel %vm2820, %v5040, %v5042
        %v5625 = vsel %vm2820, %v5042, %v5044
        %v5626 = vsel %vm2820, %v5044, %v5046
        %v5627 = vsel %vm2820, %v5046, %v5048
        %v5628 = vsel %vm2820, %v5048, %v5050
        %v5629 = vsel %vm2820, %v5050, %v5052
        %v5630 = vsel %vm2820, %v5054, %v5056
        %v5631 = vsel %vm2820, %v5056, %v5058
        %v5632 = vsel %vm2820, %v5058, %v5060
        %v5633 = vsel %vm2820, %v5060, %v5062
        %v5634 = vsel %vm2820, %v5062, %v5064
        %v5635 = vsel %vm2820, %v5064, %v5066
        %v5636 = vsel %vm2820, %v5066, %v5068
        %v5637 = vsel %vm2820, %v5068, %v5070
        %v5638 = vsel %vm2820, %v5070, %v5072
        %v5639 = vsel %vm2820, %v5074, %v5076
        %v5640 = vsel %vm2820, %v5076, %v5078
        %v5641 = vsel %vm2820, %v5078, %v5080
        %v5642 = vsel %vm2820, %v5080, %v5082
        %v5643 = vsel %vm2820, %v5082, %v5084
        %v5644 = vsel %vm2820, %v5084, %v5086
        %v5645 = vsel %vm2820, %v5086, %v5088
        %v5646 = vsel %vm2820, %v5088, %v5090
        %v5647 = vsel %vm2820, %v5090, %v5092
        %v5648 = vsel %vm2820, %v5094, %v5096
        %v5649 = vsel %vm2820, %v5096, %v5098
        %v5650 = vsel %vm2820, %v5098, %v5100
        %v5651 = vsel %vm2820, %v5100, %v5102
        %v5652 = vsel %vm2820, %v5102, %v5104
        %v5653 = vsel %vm2820, %v5104, %v5106
        %v5654 = vsel %vm2820, %v5106, %v5108
        %v5655 = vsel %vm2820, %v5108, %v5110
        %v5656 = vsel %vm2820, %v5110, %v5112
        %v5657 = vsel %vm2820, %v5114, %v5116
        %v5658 = vsel %vm2820, %v5116, %v5118
        %v5659 = vsel %vm2820, %v5118, %v5120
        %v5660 = vsel %vm2820, %v5120, %v5122
        %v5661 = vsel %vm2820, %v5122, %v5124
        %v5662 = vsel %vm2820, %v5124, %v5126
        %v5663 = vsel %vm2820, %v5126, %v5128
        %v5664 = vsel %vm2820, %v5128, %v5130
        %v5665 = vsel %vm2820, %v5130, %v5132
        %v5666 = vsel %vm2820, %v5134, %v5136
        %v5667 = vsel %vm2820, %v5136, %v5138
        %v5668 = vsel %vm2820, %v5138, %v5140
        %v5669 = vsel %vm2820, %v5140, %v5142
        %v5670 = vsel %vm2820, %v5142, %v5144
        %v5671 = vsel %vm2820, %v5144, %v5146
        %v5672 = vsel %vm2820, %v5146, %v5148
        %v5673 = vsel %vm2820, %v5148, %v5150
        %v5674 = vsel %vm2820, %v5150, %v5152
        %v5675 = vsel %vm2820, %v5154, %v5156
        %v5676 = vsel %vm2820, %v5156, %v5158
        %v5677 = vsel %vm2820, %v5158, %v5160
        %v5678 = vsel %vm2820, %v5160, %v5162
        %v5679 = vsel %vm2820, %v5162, %v5164
        %v5680 = vsel %vm2820, %v5164, %v5166
        %v5681 = vsel %vm2820, %v5166, %v5168
        %v5682 = vsel %vm2820, %v5168, %v5170
        %v5683 = vsel %vm2820, %v5170, %v5172
        %v5684 = vsel %vm2820, %v5174, %v5176
        %v5685 = vsel %vm2820, %v5176, %v5178
        %v5686 = vsel %vm2820, %v5178, %v5180
        %v5687 = vsel %vm2820, %v5180, %v5182
        %v5688 = vsel %vm2820, %v5182, %v5184
        %v5689 = vsel %vm2820, %v5184, %v5186
        %v5690 = vsel %vm2820, %v5186, %v5188
        %v5691 = vsel %vm2820, %v5188, %v5190
        %v5692 = vsel %vm2820, %v5190, %v5192
        %v5693 = vsel %vm2820, %v5194, %v5196
        %v5694 = vsel %vm2820, %v5196, %v5198
        %v5695 = vsel %vm2820, %v5198, %v5200
        %v5696 = vsel %vm2820, %v5200, %v5202
        %v5697 = vsel %vm2820, %v5202, %v5204
        %v5698 = vsel %vm2820, %v5204, %v5206
        %v5699 = vsel %vm2820, %v5206, %v5208
        %v5700 = vsel %vm2820, %v5208, %v5210
        %v5701 = vsel %vm2820, %v5210, %v5212
        %v5702 = vsel %vm2820, %v5214, %v5216
        %v5703 = vsel %vm2820, %v5216, %v5218
        %v5704 = vsel %vm2820, %v5218, %v5220
        %v5705 = vsel %vm2820, %v5220, %v5222
        %v5706 = vsel %vm2820, %v5222, %v5224
        %v5707 = vsel %vm2820, %v5224, %v5226
        %v5708 = vsel %vm2820, %v5226, %v5228
        %v5709 = vsel %vm2820, %v5228, %v5230
        %v5710 = vsel %vm2820, %v5230, %v5232
        %v5711 = vsel %vm2820, %v5234, %v5236
        %v5712 = vsel %vm2820, %v5236, %v5238
        %v5713 = vsel %vm2820, %v5238, %v5240
        %v5714 = vsel %vm2820, %v5240, %v5242
        %v5715 = vsel %vm2820, %v5242, %v5244
        %v5716 = vsel %vm2820, %v5244, %v5246
        %v5717 = vsel %vm2820, %v5246, %v5248
        %v5718 = vsel %vm2820, %v5248, %v5250
        %v5719 = vsel %vm2820, %v5250, %v5252
        %v5720 = vsel %vm2820, %v5254, %v5256
        %v5721 = vsel %vm2820, %v5256, %v5258
        %v5722 = vsel %vm2820, %v5258, %v5260
        %v5723 = vsel %vm2820, %v5260, %v5262
        %v5724 = vsel %vm2820, %v5262, %v5264
        %v5725 = vsel %vm2820, %v5264, %v5266
        %v5726 = vsel %vm2820, %v5266, %v5268
        %v5727 = vsel %vm2820, %v5268, %v5270
        %v5728 = vsel %vm2820, %v5270, %v5272
        %v5729 = vsel %vm2820, %v5274, %v5276
        %v5730 = vsel %vm2820, %v5276, %v5278
        %v5731 = vsel %vm2820, %v5278, %v5280
        %v5732 = vsel %vm2820, %v5280, %v5282
        %v5733 = vsel %vm2820, %v5282, %v5284
        %v5734 = vsel %vm2820, %v5284, %v5286
        %v5735 = vsel %vm2820, %v5286, %v5288
        %v5736 = vsel %vm2820, %v5288, %v5290
        %v5737 = vsel %vm2820, %v5290, %v5292
        %v5738 = vsel %vm2820, %v5294, %v5296
        %v5739 = vsel %vm2820, %v5296, %v5298
        %v5740 = vsel %vm2820, %v5298, %v5300
        %v5741 = vsel %vm2820, %v5300, %v5302
        %v5742 = vsel %vm2820, %v5302, %v5304
        %v5743 = vsel %vm2820, %v5304, %v5306
        %v5744 = vsel %vm2820, %v5306, %v5308
        %v5745 = vsel %vm2820, %v5308, %v5310
        %v5746 = vsel %vm2820, %v5310, %v5312
        %v5747 = vsel %vm2820, %v5314, %v5316
        %v5748 = vsel %vm2820, %v5316, %v5318
        %v5749 = vsel %vm2820, %v5318, %v5320
        %v5750 = vsel %vm2820, %v5320, %v5322
        %v5751 = vsel %vm2820, %v5322, %v5324
        %v5752 = vsel %vm2820, %v5324, %v5326
        %v5753 = vsel %vm2820, %v5326, %v5328
        %v5754 = vsel %vm2820, %v5328, %v5330
        %v5755 = vsel %vm2820, %v5330, %v5332
        %v5756 = vsel %vm2820, %v5334, %v5336
        %v5757 = vsel %vm2820, %v5336, %v5338
        %v5758 = vsel %vm2820, %v5338, %v5340
        %v5759 = vsel %vm2820, %v5340, %v5342
        %v5760 = vsel %vm2820, %v5342, %v5344
        %v5761 = vsel %vm2820, %v5344, %v5346
        %v5762 = vsel %vm2820, %v5346, %v5348
        %v5763 = vsel %vm2820, %v5348, %v5350
        %v5764 = vsel %vm2820, %v5350, %v5352
        %v5765 = vsel %vm2820, %v5354, %v5356
        %v5766 = vsel %vm2820, %v5356, %v5358
        %v5767 = vsel %vm2820, %v5358, %v5360
        %v5768 = vsel %vm2820, %v5360, %v5362
        %v5769 = vsel %vm2820, %v5362, %v5364
        %v5770 = vsel %vm2820, %v5364, %v5366
        %v5771 = vsel %vm2820, %v5366, %v5368
        %v5772 = vsel %vm2820, %v5368, %v5370
        %v5773 = vsel %vm2820, %v5370, %v5372
        %v5774 = vsel %vm2820, %v5374, %v5376
        %v5775 = vsel %vm2820, %v5376, %v5378
        %v5776 = vsel %vm2820, %v5378, %v5380
        %v5777 = vsel %vm2820, %v5380, %v5382
        %v5778 = vsel %vm2820, %v5382, %v5384
        %v5779 = vsel %vm2820, %v5384, %v5386
        %v5780 = vsel %vm2820, %v5386, %v5388
        %v5781 = vsel %vm2820, %v5388, %v5390
        %v5782 = vsel %vm2820, %v5390, %v5392
        %v5783 = vsel %vm2820, %v5394, %v5396
        %v5784 = vsel %vm2820, %v5396, %v5398
        %v5785 = vsel %vm2820, %v5398, %v5400
        %v5786 = vsel %vm2820, %v5400, %v5402
        %v5787 = vsel %vm2820, %v5402, %v5404
        %v5788 = vsel %vm2820, %v5404, %v5406
        %v5789 = vsel %vm2820, %v5406, %v5408
        %v5790 = vsel %vm2820, %v5408, %v5410
        %v5791 = vsel %vm2820, %v5410, %v5412
        %v5792 = vsel %vm2820, %v5414, %v5416
        %v5793 = vsel %vm2820, %v5416, %v5418
        %v5794 = vsel %vm2820, %v5418, %v5420
        %v5795 = vsel %vm2820, %v5420, %v5422
        %v5796 = vsel %vm2820, %v5422, %v5424
        %v5797 = vsel %vm2820, %v5424, %v5426
        %v5798 = vsel %vm2820, %v5426, %v5428
        %v5799 = vsel %vm2820, %v5428, %v5430
        %v5800 = vsel %vm2820, %v5430, %v5432
        %v5801 = vsel %vm2820, %v5434, %v5436
        %v5802 = vsel %vm2820, %v5436, %v5438
        %v5803 = vsel %vm2820, %v5438, %v5440
        %v5804 = vsel %vm2820, %v5440, %v5442
        %v5805 = vsel %vm2820, %v5442, %v5444
        %v5806 = vsel %vm2820, %v5444, %v5446
        %v5807 = vsel %vm2820, %v5446, %v5448
        %v5808 = vsel %vm2820, %v5448, %v5450
        %v5809 = vsel %vm2820, %v5450, %v5452
        %v5810 = vsel %vm2820, %v5454, %v5456
        %v5811 = vsel %vm2820, %v5456, %v5458
        %v5812 = vsel %vm2820, %v5458, %v5460
        %v5813 = vsel %vm2820, %v5460, %v5462
        %v5814 = vsel %vm2820, %v5462, %v5464
        %v5815 = vsel %vm2820, %v5464, %v5466
        %v5816 = vsel %vm2820, %v5466, %v5468
        %v5817 = vsel %vm2820, %v5468, %v5470
        %v5818 = vsel %vm2820, %v5470, %v5472
        %v5819 = vsel %vm2820, %v5474, %v5476
        %v5820 = vsel %vm2820, %v5476, %v5478
        %v5821 = vsel %vm2820, %v5478, %v5480
        %v5822 = vsel %vm2820, %v5480, %v5482
        %v5823 = vsel %vm2820, %v5482, %v5484
        %v5824 = vsel %vm2820, %v5484, %v5486
        %v5825 = vsel %vm2820, %v5486, %v5488
        %v5826 = vsel %vm2820, %v5488, %v5490
        %v5827 = vsel %vm2820, %v5490, %v5492
        %v5828 = vsel %vm2820, %v5494, %v5496
        %v5829 = vsel %vm2820, %v5496, %v5498
        %v5830 = vsel %vm2820, %v5498, %v5500
        %v5831 = vsel %vm2820, %v5500, %v5502
        %v5832 = vsel %vm2820, %v5502, %v5504
        %v5833 = vsel %vm2820, %v5504, %v5506
        %v5834 = vsel %vm2820, %v5506, %v5508
        %v5835 = vsel %vm2820, %v5508, %v5510
        %v5836 = vsel %vm2820, %v5510, %v5512
        %v6162 = vsel %vm3840, %v4785, 0
        %v6165 = vsel %vm3840, %v4790, 0
        %6167 = vmatprep.subr.bf16.mxu0 %v5577
        %6168 = vmatpush1.bf16.msra.mxu0 %v5576
        %6169 = vmatprep.subr.bf16.mxu0 %v5568
        %6170 = vmatpush1.bf16.msra.mxu0 %v5567
        %6171 = vmatprep.subr.bf16.mxu0 %v5559
        %6172 = vmatpush1.bf16.msra.mxu0 %v5558
        %6173 = vmatprep.subr.bf16.mxu0 %v5550
        %6174 = vmatpush1.bf16.msra.mxu0 %v5549
        %6175 = vmatprep.subr.bf16.mxu0 %v5541
        %6176 = vmatpush1.bf16.msra.mxu0 %v5540
        %6177 = vmatprep.subr.bf16.mxu0 %v5532
        %6178 = vmatpush1.bf16.msra.mxu0 %v5531
        %6179 = vmatprep.subr.bf16.mxu0 %v5523
        %6180 = vmatpush1.bf16.msra.mxu0 %v5522
        %6181 = vmatprep.subr.bf16.mxu0 %v5514
        %6182 = vmatpush1.bf16.msra.mxu0 %v5513
        %6183 = vmatprep.subr.bf16.mxu0 %v5649
        %6184 = vmatpush2.bf16.msra.mxu0 %v5648
        %6185 = vmatprep.subr.bf16.mxu0 %v5640
        %6186 = vmatpush2.bf16.msra.mxu0 %v5639
        %6187 = vmatprep.subr.bf16.mxu0 %v5631
        %6188 = vmatpush2.bf16.msra.mxu0 %v5630
        %6189 = vmatprep.subr.bf16.mxu0 %v5622
        %6190 = vmatpush2.bf16.msra.mxu0 %v5621
        %6191 = vmatprep.subr.bf16.mxu0 %v5613
        %6192 = vmatpush2.bf16.msra.mxu0 %v5612
        %6193 = vmatprep.subr.bf16.mxu0 %v5604
        %6194 = vmatpush2.bf16.msra.mxu0 %v5603
        %6195 = vmatprep.subr.bf16.mxu0 %v5595
        %6196 = vmatpush2.bf16.msra.mxu0 %v5594
        %6197 = vmatprep.subr.bf16.mxu0 %v5586
        %6198 = vmatpush2.bf16.msra.mxu0 %v5585
        %6199 = vmatprep.mubr.bf16.mxu0 %v4782
        %6200 = vmatmul.mubr.bf16.gmra.mxu0 %v4781
        %v6201 = vpop.f32.mrf.mxu0
        %v6202 = vadd.f32 0.0, %v6201
        %v6203 = vpop.f32.mrf.mxu0
        %v6204 = vadd.f32 0.0, %v6203
        %v6205 = vpop.f32.mrf.mxu0
        %v6206 = vadd.f32 0.0, %v6205
        %v6207 = vpop.f32.mrf.mxu0
        %v6208 = vadd.f32 0.0, %v6207
        %6209 = vmatprep.mubr.bf16.mxu0 %v4787
        %6210 = vmatmul.mubr.bf16.gmra.mxu0 %v4786
        %v6211 = vpop.f32.mrf.mxu0
        %v6212 = vadd.f32 0.0, %v6211
        %v6213 = vpop.f32.mrf.mxu0
        %v6214 = vadd.f32 0.0, %v6213
        %v6215 = vpop.f32.mrf.mxu0
        %v6216 = vadd.f32 0.0, %v6215
        %v6217 = vpop.f32.mrf.mxu0
        %v6218 = vadd.f32 0.0, %v6217
        %6219 = vdwg.mxu0
        %6220 = vmatprep.subr.bf16.mxu0 %v5721
        %6221 = vmatpush1.bf16.msra.mxu0 %v5720
        %6222 = vmatprep.subr.bf16.mxu0 %v5712
        %6223 = vmatpush1.bf16.msra.mxu0 %v5711
        %6224 = vmatprep.subr.bf16.mxu0 %v5703
        %6225 = vmatpush1.bf16.msra.mxu0 %v5702
        %6226 = vmatprep.subr.bf16.mxu0 %v5694
        %6227 = vmatpush1.bf16.msra.mxu0 %v5693
        %6228 = vmatprep.subr.bf16.mxu0 %v5685
        %6229 = vmatpush1.bf16.msra.mxu0 %v5684
        %6230 = vmatprep.subr.bf16.mxu0 %v5676
        %6231 = vmatpush1.bf16.msra.mxu0 %v5675
        %6232 = vmatprep.subr.bf16.mxu0 %v5667
        %6233 = vmatpush1.bf16.msra.mxu0 %v5666
        %6234 = vmatprep.subr.bf16.mxu0 %v5658
        %6235 = vmatpush1.bf16.msra.mxu0 %v5657
        %6236 = vmatprep.subr.bf16.mxu0 %v5793
        %6237 = vmatpush2.bf16.msra.mxu0 %v5792
        %6238 = vmatprep.subr.bf16.mxu0 %v5784
        %6239 = vmatpush2.bf16.msra.mxu0 %v5783
        %6240 = vmatprep.subr.bf16.mxu0 %v5775
        %6241 = vmatpush2.bf16.msra.mxu0 %v5774
        %6242 = vmatprep.subr.bf16.mxu0 %v5766
        %6243 = vmatpush2.bf16.msra.mxu0 %v5765
        %6244 = vmatprep.subr.bf16.mxu0 %v5757
        %6245 = vmatpush2.bf16.msra.mxu0 %v5756
        %6246 = vmatprep.subr.bf16.mxu0 %v5748
        %6247 = vmatpush2.bf16.msra.mxu0 %v5747
        %6248 = vmatprep.subr.bf16.mxu0 %v5739
        %6249 = vmatpush2.bf16.msra.mxu0 %v5738
        %6250 = vmatprep.subr.bf16.mxu0 %v5730
        %6251 = vmatpush2.bf16.msra.mxu0 %v5729
        %6252 = vmatprep.mubr.bf16.mxu0 %v4784
        %6253 = vmatmul.mubr.bf16.gmra.mxu0 %v4783
        %v6254 = vpop.f32.mrf.mxu0
        %v6255 = vadd.f32 %v6202, %v6254
        %v6256 = vpop.f32.mrf.mxu0
        %v6257 = vadd.f32 %v6204, %v6256
        %v6258 = vpop.f32.mrf.mxu0
        %v6259 = vadd.f32 %v6206, %v6258
        %v6260 = vpop.f32.mrf.mxu0
        %v6261 = vadd.f32 %v6208, %v6260
        %6262 = vmatprep.mubr.bf16.mxu0 %v4789
        %6263 = vmatmul.mubr.bf16.gmra.mxu0 %v4788
        %v6264 = vpop.f32.mrf.mxu0
        %v6265 = vadd.f32 %v6212, %v6264
        %v6266 = vpop.f32.mrf.mxu0
        %v6267 = vadd.f32 %v6214, %v6266
        %v6268 = vpop.f32.mrf.mxu0
        %v6269 = vadd.f32 %v6216, %v6268
        %v6270 = vpop.f32.mrf.mxu0
        %v6271 = vadd.f32 %v6218, %v6270
        %6272 = vdwg.mxu0
        %6273 = vmatprep.subr.bf16.mxu0 0
        %6274 = vmatpush1.bf16.msra.mxu0 0
        %6275 = vmatprep.subr.bf16.mxu0 0
        %6276 = vmatpush1.bf16.msra.mxu0 0
        %6277 = vmatprep.subr.bf16.mxu0 0
        %6278 = vmatpush1.bf16.msra.mxu0 0
        %6279 = vmatprep.subr.bf16.mxu0 0
        %6280 = vmatpush1.bf16.msra.mxu0 0
        %6281 = vmatprep.subr.bf16.mxu0 %v5829
        %6282 = vmatpush1.bf16.msra.mxu0 %v5828
        %6283 = vmatprep.subr.bf16.mxu0 %v5820
        %6284 = vmatpush1.bf16.msra.mxu0 %v5819
        %6285 = vmatprep.subr.bf16.mxu0 %v5811
        %6286 = vmatpush1.bf16.msra.mxu0 %v5810
        %6287 = vmatprep.subr.bf16.mxu0 %v5802
        %6288 = vmatpush1.bf16.msra.mxu0 %v5801
        %6289 = vmatprep.subr.bf16.mxu0 0
        %6290 = vmatpush2.bf16.msra.mxu0 0
        %6291 = vmatprep.subr.bf16.mxu0 0
        %6292 = vmatpush2.bf16.msra.mxu0 0
        %6293 = vmatprep.subr.bf16.mxu0 0
        %6294 = vmatpush2.bf16.msra.mxu0 0
        %6295 = vmatprep.subr.bf16.mxu0 0
        %6296 = vmatpush2.bf16.msra.mxu0 0
        %6297 = vmatprep.subr.bf16.mxu0 0
        %6298 = vmatpush2.bf16.msra.mxu0 0
        %6299 = vmatprep.subr.bf16.mxu0 0
        %6300 = vmatpush2.bf16.msra.mxu0 0
        %6301 = vmatprep.subr.bf16.mxu0 0
        %6302 = vmatpush2.bf16.msra.mxu0 0
        %6303 = vmatprep.subr.bf16.mxu0 0
        %6304 = vmatpush2.bf16.msra.mxu0 0
        %6305 = vmatprep.mubr.bf16.mxu0 0
        %6306 = vmatmul.mubr.bf16.gmra.mxu0 %v6162
        %v6307 = vpop.f32.mrf.mxu0
        %v6308 = vadd.f32 %v6255, %v6307
        %v6309 = vpop.f32.mrf.mxu0
        %v6310 = vadd.f32 %v6257, %v6309
        %v6311 = vpop.f32.mrf.mxu0
        %v6312 = vadd.f32 %v6259, %v6311
        %v6313 = vpop.f32.mrf.mxu0
        %v6314 = vadd.f32 %v6261, %v6313
        %6315 = vmatprep.mubr.bf16.mxu0 0
        %6316 = vmatmul.mubr.bf16.gmra.mxu0 %v6165
        %v6317 = vpop.f32.mrf.mxu0
        %v6318 = vadd.f32 %v6265, %v6317
        %v6319 = vpop.f32.mrf.mxu0
        %v6320 = vadd.f32 %v6267, %v6319
        %v6321 = vpop.f32.mrf.mxu0
        %v6322 = vadd.f32 %v6269, %v6321
        %v6323 = vpop.f32.mrf.mxu0
        %v6324 = vadd.f32 %v6271, %v6323
        %6325 = vdwg.mxu0
        %6326 = vmatprep.subr.bf16.mxu0 %v5579
        %6327 = vmatpush1.bf16.msra.mxu0 %v5578
        %6328 = vmatprep.subr.bf16.mxu0 %v5570
        %6329 = vmatpush1.bf16.msra.mxu0 %v5569
        %6330 = vmatprep.subr.bf16.mxu0 %v5561
        %6331 = vmatpush1.bf16.msra.mxu0 %v5560
        %6332 = vmatprep.subr.bf16.mxu0 %v5552
        %6333 = vmatpush1.bf16.msra.mxu0 %v5551
        %6334 = vmatprep.subr.bf16.mxu0 %v5543
        %6335 = vmatpush1.bf16.msra.mxu0 %v5542
        %6336 = vmatprep.subr.bf16.mxu0 %v5534
        %6337 = vmatpush1.bf16.msra.mxu0 %v5533
        %6338 = vmatprep.subr.bf16.mxu0 %v5525
        %6339 = vmatpush1.bf16.msra.mxu0 %v5524
        %6340 = vmatprep.subr.bf16.mxu0 %v5516
        %6341 = vmatpush1.bf16.msra.mxu0 %v5515
        %6342 = vmatprep.subr.bf16.mxu0 %v5651
        %6343 = vmatpush2.bf16.msra.mxu0 %v5650
        %6344 = vmatprep.subr.bf16.mxu0 %v5642
        %6345 = vmatpush2.bf16.msra.mxu0 %v5641
        %6346 = vmatprep.subr.bf16.mxu0 %v5633
        %6347 = vmatpush2.bf16.msra.mxu0 %v5632
        %6348 = vmatprep.subr.bf16.mxu0 %v5624
        %6349 = vmatpush2.bf16.msra.mxu0 %v5623
        %6350 = vmatprep.subr.bf16.mxu0 %v5615
        %6351 = vmatpush2.bf16.msra.mxu0 %v5614
        %6352 = vmatprep.subr.bf16.mxu0 %v5606
        %6353 = vmatpush2.bf16.msra.mxu0 %v5605
        %6354 = vmatprep.subr.bf16.mxu0 %v5597
        %6355 = vmatpush2.bf16.msra.mxu0 %v5596
        %6356 = vmatprep.subr.bf16.mxu0 %v5588
        %6357 = vmatpush2.bf16.msra.mxu0 %v5587
        %6358 = vmatprep.mubr.bf16.mxu0 %v4782
        %6359 = vmatmul.mubr.bf16.gmra.mxu0 %v4781
        %v6360 = vpop.f32.mrf.mxu0
        %v6361 = vadd.f32 0.0, %v6360
        %v6362 = vpop.f32.mrf.mxu0
        %v6363 = vadd.f32 0.0, %v6362
        %v6364 = vpop.f32.mrf.mxu0
        %v6365 = vadd.f32 0.0, %v6364
        %v6366 = vpop.f32.mrf.mxu0
        %v6367 = vadd.f32 0.0, %v6366
        %6368 = vmatprep.mubr.bf16.mxu0 %v4787
        %6369 = vmatmul.mubr.bf16.gmra.mxu0 %v4786
        %v6370 = vpop.f32.mrf.mxu0
        %v6371 = vadd.f32 0.0, %v6370
        %v6372 = vpop.f32.mrf.mxu0
        %v6373 = vadd.f32 0.0, %v6372
        %v6374 = vpop.f32.mrf.mxu0
        %v6375 = vadd.f32 0.0, %v6374
        %v6376 = vpop.f32.mrf.mxu0
        %v6377 = vadd.f32 0.0, %v6376
        %6378 = vdwg.mxu0
        %6379 = vmatprep.subr.bf16.mxu0 %v5723
        %6380 = vmatpush1.bf16.msra.mxu0 %v5722
        %6381 = vmatprep.subr.bf16.mxu0 %v5714
        %6382 = vmatpush1.bf16.msra.mxu0 %v5713
        %6383 = vmatprep.subr.bf16.mxu0 %v5705
        %6384 = vmatpush1.bf16.msra.mxu0 %v5704
        %6385 = vmatprep.subr.bf16.mxu0 %v5696
        %6386 = vmatpush1.bf16.msra.mxu0 %v5695
        %6387 = vmatprep.subr.bf16.mxu0 %v5687
        %6388 = vmatpush1.bf16.msra.mxu0 %v5686
        %6389 = vmatprep.subr.bf16.mxu0 %v5678
        %6390 = vmatpush1.bf16.msra.mxu0 %v5677
        %6391 = vmatprep.subr.bf16.mxu0 %v5669
        %6392 = vmatpush1.bf16.msra.mxu0 %v5668
        %6393 = vmatprep.subr.bf16.mxu0 %v5660
        %6394 = vmatpush1.bf16.msra.mxu0 %v5659
        %6395 = vmatprep.subr.bf16.mxu0 %v5795
        %6396 = vmatpush2.bf16.msra.mxu0 %v5794
        %6397 = vmatprep.subr.bf16.mxu0 %v5786
        %6398 = vmatpush2.bf16.msra.mxu0 %v5785
        %6399 = vmatprep.subr.bf16.mxu0 %v5777
        %6400 = vmatpush2.bf16.msra.mxu0 %v5776
        %6401 = vmatprep.subr.bf16.mxu0 %v5768
        %6402 = vmatpush2.bf16.msra.mxu0 %v5767
        %6403 = vmatprep.subr.bf16.mxu0 %v5759
        %6404 = vmatpush2.bf16.msra.mxu0 %v5758
        %6405 = vmatprep.subr.bf16.mxu0 %v5750
        %6406 = vmatpush2.bf16.msra.mxu0 %v5749
        %6407 = vmatprep.subr.bf16.mxu0 %v5741
        %6408 = vmatpush2.bf16.msra.mxu0 %v5740
        %6409 = vmatprep.subr.bf16.mxu0 %v5732
        %6410 = vmatpush2.bf16.msra.mxu0 %v5731
        %6411 = vmatprep.mubr.bf16.mxu0 %v4784
        %6412 = vmatmul.mubr.bf16.gmra.mxu0 %v4783
        %v6413 = vpop.f32.mrf.mxu0
        %v6414 = vadd.f32 %v6361, %v6413
        %v6415 = vpop.f32.mrf.mxu0
        %v6416 = vadd.f32 %v6363, %v6415
        %v6417 = vpop.f32.mrf.mxu0
        %v6418 = vadd.f32 %v6365, %v6417
        %v6419 = vpop.f32.mrf.mxu0
        %v6420 = vadd.f32 %v6367, %v6419
        %6421 = vmatprep.mubr.bf16.mxu0 %v4789
        %6422 = vmatmul.mubr.bf16.gmra.mxu0 %v4788
        %v6423 = vpop.f32.mrf.mxu0
        %v6424 = vadd.f32 %v6371, %v6423
        %v6425 = vpop.f32.mrf.mxu0
        %v6426 = vadd.f32 %v6373, %v6425
        %v6427 = vpop.f32.mrf.mxu0
        %v6428 = vadd.f32 %v6375, %v6427
        %v6429 = vpop.f32.mrf.mxu0
        %v6430 = vadd.f32 %v6377, %v6429
        %6431 = vdwg.mxu0
        %6432 = vmatprep.subr.bf16.mxu0 0
        %6433 = vmatpush1.bf16.msra.mxu0 0
        %6434 = vmatprep.subr.bf16.mxu0 0
        %6435 = vmatpush1.bf16.msra.mxu0 0
        %6436 = vmatprep.subr.bf16.mxu0 0
        %6437 = vmatpush1.bf16.msra.mxu0 0
        %6438 = vmatprep.subr.bf16.mxu0 0
        %6439 = vmatpush1.bf16.msra.mxu0 0
        %6440 = vmatprep.subr.bf16.mxu0 %v5831
        %6441 = vmatpush1.bf16.msra.mxu0 %v5830
        %6442 = vmatprep.subr.bf16.mxu0 %v5822
        %6443 = vmatpush1.bf16.msra.mxu0 %v5821
        %6444 = vmatprep.subr.bf16.mxu0 %v5813
        %6445 = vmatpush1.bf16.msra.mxu0 %v5812
        %6446 = vmatprep.subr.bf16.mxu0 %v5804
        %6447 = vmatpush1.bf16.msra.mxu0 %v5803
        %6448 = vmatprep.subr.bf16.mxu0 0
        %6449 = vmatpush2.bf16.msra.mxu0 0
        %6450 = vmatprep.subr.bf16.mxu0 0
        %6451 = vmatpush2.bf16.msra.mxu0 0
        %6452 = vmatprep.subr.bf16.mxu0 0
        %6453 = vmatpush2.bf16.msra.mxu0 0
        %6454 = vmatprep.subr.bf16.mxu0 0
        %6455 = vmatpush2.bf16.msra.mxu0 0
        %6456 = vmatprep.subr.bf16.mxu0 0
        %6457 = vmatpush2.bf16.msra.mxu0 0
        %6458 = vmatprep.subr.bf16.mxu0 0
        %6459 = vmatpush2.bf16.msra.mxu0 0
        %6460 = vmatprep.subr.bf16.mxu0 0
        %6461 = vmatpush2.bf16.msra.mxu0 0
        %6462 = vmatprep.subr.bf16.mxu0 0
        %6463 = vmatpush2.bf16.msra.mxu0 0
        %6464 = vmatprep.mubr.bf16.mxu0 0
        %6465 = vmatmul.mubr.bf16.gmra.mxu0 %v6162
        %v6466 = vpop.f32.mrf.mxu0
        %v6467 = vadd.f32 %v6414, %v6466
        %v6468 = vpop.f32.mrf.mxu0
        %v6469 = vadd.f32 %v6416, %v6468
        %v6470 = vpop.f32.mrf.mxu0
        %v6471 = vadd.f32 %v6418, %v6470
        %v6472 = vpop.f32.mrf.mxu0
        %v6473 = vadd.f32 %v6420, %v6472
        %6474 = vmatprep.mubr.bf16.mxu0 0
        %6475 = vmatmul.mubr.bf16.gmra.mxu0 %v6165
        %v6476 = vpop.f32.mrf.mxu0
        %v6477 = vadd.f32 %v6424, %v6476
        %v6478 = vpop.f32.mrf.mxu0
        %v6479 = vadd.f32 %v6426, %v6478
        %v6480 = vpop.f32.mrf.mxu0
        %v6481 = vadd.f32 %v6428, %v6480
        %v6482 = vpop.f32.mrf.mxu0
        %v6483 = vadd.f32 %v6430, %v6482
        %6484 = vdwg.mxu0
        %6485 = vmatprep.subr.bf16.mxu0 %v5581
        %6486 = vmatpush1.bf16.msra.mxu0 %v5580
        %6487 = vmatprep.subr.bf16.mxu0 %v5572
        %6488 = vmatpush1.bf16.msra.mxu0 %v5571
        %6489 = vmatprep.subr.bf16.mxu0 %v5563
        %6490 = vmatpush1.bf16.msra.mxu0 %v5562
        %6491 = vmatprep.subr.bf16.mxu0 %v5554
        %6492 = vmatpush1.bf16.msra.mxu0 %v5553
        %6493 = vmatprep.subr.bf16.mxu0 %v5545
        %6494 = vmatpush1.bf16.msra.mxu0 %v5544
        %6495 = vmatprep.subr.bf16.mxu0 %v5536
        %6496 = vmatpush1.bf16.msra.mxu0 %v5535
        %6497 = vmatprep.subr.bf16.mxu0 %v5527
        %6498 = vmatpush1.bf16.msra.mxu0 %v5526
        %6499 = vmatprep.subr.bf16.mxu0 %v5518
        %6500 = vmatpush1.bf16.msra.mxu0 %v5517
        %6501 = vmatprep.subr.bf16.mxu0 %v5653
        %6502 = vmatpush2.bf16.msra.mxu0 %v5652
        %6503 = vmatprep.subr.bf16.mxu0 %v5644
        %6504 = vmatpush2.bf16.msra.mxu0 %v5643
        %6505 = vmatprep.subr.bf16.mxu0 %v5635
        %6506 = vmatpush2.bf16.msra.mxu0 %v5634
        %6507 = vmatprep.subr.bf16.mxu0 %v5626
        %6508 = vmatpush2.bf16.msra.mxu0 %v5625
        %6509 = vmatprep.subr.bf16.mxu0 %v5617
        %6510 = vmatpush2.bf16.msra.mxu0 %v5616
        %6511 = vmatprep.subr.bf16.mxu0 %v5608
        %6512 = vmatpush2.bf16.msra.mxu0 %v5607
        %6513 = vmatprep.subr.bf16.mxu0 %v5599
        %6514 = vmatpush2.bf16.msra.mxu0 %v5598
        %6515 = vmatprep.subr.bf16.mxu0 %v5590
        %6516 = vmatpush2.bf16.msra.mxu0 %v5589
        %6517 = vmatprep.mubr.bf16.mxu0 %v4782
        %6518 = vmatmul.mubr.bf16.gmra.mxu0 %v4781
        %v6519 = vpop.f32.mrf.mxu0
        %v6520 = vadd.f32 0.0, %v6519
        %v6521 = vpop.f32.mrf.mxu0
        %v6522 = vadd.f32 0.0, %v6521
        %v6523 = vpop.f32.mrf.mxu0
        %v6524 = vadd.f32 0.0, %v6523
        %v6525 = vpop.f32.mrf.mxu0
        %v6526 = vadd.f32 0.0, %v6525
        %6527 = vmatprep.mubr.bf16.mxu0 %v4787
        %6528 = vmatmul.mubr.bf16.gmra.mxu0 %v4786
        %v6529 = vpop.f32.mrf.mxu0
        %v6530 = vadd.f32 0.0, %v6529
        %v6531 = vpop.f32.mrf.mxu0
        %v6532 = vadd.f32 0.0, %v6531
        %v6533 = vpop.f32.mrf.mxu0
        %v6534 = vadd.f32 0.0, %v6533
        %v6535 = vpop.f32.mrf.mxu0
        %v6536 = vadd.f32 0.0, %v6535
        %6537 = vdwg.mxu0
        %6538 = vmatprep.subr.bf16.mxu0 %v5725
        %6539 = vmatpush1.bf16.msra.mxu0 %v5724
        %6540 = vmatprep.subr.bf16.mxu0 %v5716
        %6541 = vmatpush1.bf16.msra.mxu0 %v5715
        %6542 = vmatprep.subr.bf16.mxu0 %v5707
        %6543 = vmatpush1.bf16.msra.mxu0 %v5706
        %6544 = vmatprep.subr.bf16.mxu0 %v5698
        %6545 = vmatpush1.bf16.msra.mxu0 %v5697
        %6546 = vmatprep.subr.bf16.mxu0 %v5689
        %6547 = vmatpush1.bf16.msra.mxu0 %v5688
        %6548 = vmatprep.subr.bf16.mxu0 %v5680
        %6549 = vmatpush1.bf16.msra.mxu0 %v5679
        %6550 = vmatprep.subr.bf16.mxu0 %v5671
        %6551 = vmatpush1.bf16.msra.mxu0 %v5670
        %6552 = vmatprep.subr.bf16.mxu0 %v5662
        %6553 = vmatpush1.bf16.msra.mxu0 %v5661
        %6554 = vmatprep.subr.bf16.mxu0 %v5797
        %6555 = vmatpush2.bf16.msra.mxu0 %v5796
        %6556 = vmatprep.subr.bf16.mxu0 %v5788
        %6557 = vmatpush2.bf16.msra.mxu0 %v5787
        %6558 = vmatprep.subr.bf16.mxu0 %v5779
        %6559 = vmatpush2.bf16.msra.mxu0 %v5778
        %6560 = vmatprep.subr.bf16.mxu0 %v5770
        %6561 = vmatpush2.bf16.msra.mxu0 %v5769
        %6562 = vmatprep.subr.bf16.mxu0 %v5761
        %6563 = vmatpush2.bf16.msra.mxu0 %v5760
        %6564 = vmatprep.subr.bf16.mxu0 %v5752
        %6565 = vmatpush2.bf16.msra.mxu0 %v5751
        %6566 = vmatprep.subr.bf16.mxu0 %v5743
        %6567 = vmatpush2.bf16.msra.mxu0 %v5742
        %6568 = vmatprep.subr.bf16.mxu0 %v5734
        %6569 = vmatpush2.bf16.msra.mxu0 %v5733
        %6570 = vmatprep.mubr.bf16.mxu0 %v4784
        %6571 = vmatmul.mubr.bf16.gmra.mxu0 %v4783
        %v6572 = vpop.f32.mrf.mxu0
        %v6573 = vadd.f32 %v6520, %v6572
        %v6574 = vpop.f32.mrf.mxu0
        %v6575 = vadd.f32 %v6522, %v6574
        %v6576 = vpop.f32.mrf.mxu0
        %v6577 = vadd.f32 %v6524, %v6576
        %v6578 = vpop.f32.mrf.mxu0
        %v6579 = vadd.f32 %v6526, %v6578
        %6580 = vmatprep.mubr.bf16.mxu0 %v4789
        %6581 = vmatmul.mubr.bf16.gmra.mxu0 %v4788
        %v6582 = vpop.f32.mrf.mxu0
        %v6583 = vadd.f32 %v6530, %v6582
        %v6584 = vpop.f32.mrf.mxu0
        %v6585 = vadd.f32 %v6532, %v6584
        %v6586 = vpop.f32.mrf.mxu0
        %v6587 = vadd.f32 %v6534, %v6586
        %v6588 = vpop.f32.mrf.mxu0
        %v6589 = vadd.f32 %v6536, %v6588
        %6590 = vdwg.mxu0
        %6591 = vmatprep.subr.bf16.mxu0 0
        %6592 = vmatpush1.bf16.msra.mxu0 0
        %6593 = vmatprep.subr.bf16.mxu0 0
        %6594 = vmatpush1.bf16.msra.mxu0 0
        %6595 = vmatprep.subr.bf16.mxu0 0
        %6596 = vmatpush1.bf16.msra.mxu0 0
        %6597 = vmatprep.subr.bf16.mxu0 0
        %6598 = vmatpush1.bf16.msra.mxu0 0
        %6599 = vmatprep.subr.bf16.mxu0 %v5833
        %6600 = vmatpush1.bf16.msra.mxu0 %v5832
        %6601 = vmatprep.subr.bf16.mxu0 %v5824
        %6602 = vmatpush1.bf16.msra.mxu0 %v5823
        %6603 = vmatprep.subr.bf16.mxu0 %v5815
        %6604 = vmatpush1.bf16.msra.mxu0 %v5814
        %6605 = vmatprep.subr.bf16.mxu0 %v5806
        %6606 = vmatpush1.bf16.msra.mxu0 %v5805
        %6607 = vmatprep.subr.bf16.mxu0 0
        %6608 = vmatpush2.bf16.msra.mxu0 0
        %6609 = vmatprep.subr.bf16.mxu0 0
        %6610 = vmatpush2.bf16.msra.mxu0 0
        %6611 = vmatprep.subr.bf16.mxu0 0
        %6612 = vmatpush2.bf16.msra.mxu0 0
        %6613 = vmatprep.subr.bf16.mxu0 0
        %6614 = vmatpush2.bf16.msra.mxu0 0
        %6615 = vmatprep.subr.bf16.mxu0 0
        %6616 = vmatpush2.bf16.msra.mxu0 0
        %6617 = vmatprep.subr.bf16.mxu0 0
        %6618 = vmatpush2.bf16.msra.mxu0 0
        %6619 = vmatprep.subr.bf16.mxu0 0
        %6620 = vmatpush2.bf16.msra.mxu0 0
        %6621 = vmatprep.subr.bf16.mxu0 0
        %6622 = vmatpush2.bf16.msra.mxu0 0
        %6623 = vmatprep.mubr.bf16.mxu0 0
        %6624 = vmatmul.mubr.bf16.gmra.mxu0 %v6162
        %v6625 = vpop.f32.mrf.mxu0
        %v6626 = vadd.f32 %v6573, %v6625
        %v6627 = vpop.f32.mrf.mxu0
        %v6628 = vadd.f32 %v6575, %v6627
        %v6629 = vpop.f32.mrf.mxu0
        %v6630 = vadd.f32 %v6577, %v6629
        %v6631 = vpop.f32.mrf.mxu0
        %v6632 = vadd.f32 %v6579, %v6631
        %6633 = vmatprep.mubr.bf16.mxu0 0
        %6634 = vmatmul.mubr.bf16.gmra.mxu0 %v6165
        %v6635 = vpop.f32.mrf.mxu0
        %v6636 = vadd.f32 %v6583, %v6635
        %v6637 = vpop.f32.mrf.mxu0
        %v6638 = vadd.f32 %v6585, %v6637
        %v6639 = vpop.f32.mrf.mxu0
        %v6640 = vadd.f32 %v6587, %v6639
        %v6641 = vpop.f32.mrf.mxu0
        %v6642 = vadd.f32 %v6589, %v6641
        %6643 = vdwg.mxu0
        %6644 = vmatprep.subr.bf16.mxu0 %v5583
        %6645 = vmatpush1.bf16.msra.mxu0 %v5582
        %6646 = vmatprep.subr.bf16.mxu0 %v5574
        %6647 = vmatpush1.bf16.msra.mxu0 %v5573
        %6648 = vmatprep.subr.bf16.mxu0 %v5565
        %6649 = vmatpush1.bf16.msra.mxu0 %v5564
        %6650 = vmatprep.subr.bf16.mxu0 %v5556
        %6651 = vmatpush1.bf16.msra.mxu0 %v5555
        %6652 = vmatprep.subr.bf16.mxu0 %v5547
        %6653 = vmatpush1.bf16.msra.mxu0 %v5546
        %6654 = vmatprep.subr.bf16.mxu0 %v5538
        %6655 = vmatpush1.bf16.msra.mxu0 %v5537
        %6656 = vmatprep.subr.bf16.mxu0 %v5529
        %6657 = vmatpush1.bf16.msra.mxu0 %v5528
        %6658 = vmatprep.subr.bf16.mxu0 %v5520
        %6659 = vmatpush1.bf16.msra.mxu0 %v5519
        %6660 = vmatprep.subr.bf16.mxu0 %v5655
        %6661 = vmatpush2.bf16.msra.mxu0 %v5654
        %6662 = vmatprep.subr.bf16.mxu0 %v5646
        %6663 = vmatpush2.bf16.msra.mxu0 %v5645
        %6664 = vmatprep.subr.bf16.mxu0 %v5637
        %6665 = vmatpush2.bf16.msra.mxu0 %v5636
        %6666 = vmatprep.subr.bf16.mxu0 %v5628
        %6667 = vmatpush2.bf16.msra.mxu0 %v5627
        %6668 = vmatprep.subr.bf16.mxu0 %v5619
        %6669 = vmatpush2.bf16.msra.mxu0 %v5618
        %6670 = vmatprep.subr.bf16.mxu0 %v5610
        %6671 = vmatpush2.bf16.msra.mxu0 %v5609
        %6672 = vmatprep.subr.bf16.mxu0 %v5601
        %6673 = vmatpush2.bf16.msra.mxu0 %v5600
        %6674 = vmatprep.subr.bf16.mxu0 %v5592
        %6675 = vmatpush2.bf16.msra.mxu0 %v5591
        %6676 = vmatprep.mubr.bf16.mxu0 %v4782
        %6677 = vmatmul.mubr.bf16.gmra.mxu0 %v4781
        %v6678 = vpop.f32.mrf.mxu0
        %v6679 = vadd.f32 0.0, %v6678
        %v6680 = vpop.f32.mrf.mxu0
        %v6681 = vadd.f32 0.0, %v6680
        %v6682 = vpop.f32.mrf.mxu0
        %v6683 = vadd.f32 0.0, %v6682
        %v6684 = vpop.f32.mrf.mxu0
        %v6685 = vadd.f32 0.0, %v6684
        %6686 = vmatprep.mubr.bf16.mxu0 %v4787
        %6687 = vmatmul.mubr.bf16.gmra.mxu0 %v4786
        %v6688 = vpop.f32.mrf.mxu0
        %v6689 = vadd.f32 0.0, %v6688
        %v6690 = vpop.f32.mrf.mxu0
        %v6691 = vadd.f32 0.0, %v6690
        %v6692 = vpop.f32.mrf.mxu0
        %v6693 = vadd.f32 0.0, %v6692
        %v6694 = vpop.f32.mrf.mxu0
        %v6695 = vadd.f32 0.0, %v6694
        %6696 = vdwg.mxu0
        %6697 = vmatprep.subr.bf16.mxu0 %v5727
        %6698 = vmatpush1.bf16.msra.mxu0 %v5726
        %6699 = vmatprep.subr.bf16.mxu0 %v5718
        %6700 = vmatpush1.bf16.msra.mxu0 %v5717
        %6701 = vmatprep.subr.bf16.mxu0 %v5709
        %6702 = vmatpush1.bf16.msra.mxu0 %v5708
        %6703 = vmatprep.subr.bf16.mxu0 %v5700
        %6704 = vmatpush1.bf16.msra.mxu0 %v5699
        %6705 = vmatprep.subr.bf16.mxu0 %v5691
        %6706 = vmatpush1.bf16.msra.mxu0 %v5690
        %6707 = vmatprep.subr.bf16.mxu0 %v5682
        %6708 = vmatpush1.bf16.msra.mxu0 %v5681
        %6709 = vmatprep.subr.bf16.mxu0 %v5673
        %6710 = vmatpush1.bf16.msra.mxu0 %v5672
        %6711 = vmatprep.subr.bf16.mxu0 %v5664
        %6712 = vmatpush1.bf16.msra.mxu0 %v5663
        %6713 = vmatprep.subr.bf16.mxu0 %v5799
        %6714 = vmatpush2.bf16.msra.mxu0 %v5798
        %6715 = vmatprep.subr.bf16.mxu0 %v5790
        %6716 = vmatpush2.bf16.msra.mxu0 %v5789
        %6717 = vmatprep.subr.bf16.mxu0 %v5781
        %6718 = vmatpush2.bf16.msra.mxu0 %v5780
        %6719 = vmatprep.subr.bf16.mxu0 %v5772
        %6720 = vmatpush2.bf16.msra.mxu0 %v5771
        %6721 = vmatprep.subr.bf16.mxu0 %v5763
        %6722 = vmatpush2.bf16.msra.mxu0 %v5762
        %6723 = vmatprep.subr.bf16.mxu0 %v5754
        %6724 = vmatpush2.bf16.msra.mxu0 %v5753
        %6725 = vmatprep.subr.bf16.mxu0 %v5745
        %6726 = vmatpush2.bf16.msra.mxu0 %v5744
        %6727 = vmatprep.subr.bf16.mxu0 %v5736
        %6728 = vmatpush2.bf16.msra.mxu0 %v5735
        %6729 = vmatprep.mubr.bf16.mxu0 %v4784
        %6730 = vmatmul.mubr.bf16.gmra.mxu0 %v4783
        %v6731 = vpop.f32.mrf.mxu0
        %v6732 = vadd.f32 %v6679, %v6731
        %v6733 = vpop.f32.mrf.mxu0
        %v6734 = vadd.f32 %v6681, %v6733
        %v6735 = vpop.f32.mrf.mxu0
        %v6736 = vadd.f32 %v6683, %v6735
        %v6737 = vpop.f32.mrf.mxu0
        %v6738 = vadd.f32 %v6685, %v6737
        %6739 = vmatprep.mubr.bf16.mxu0 %v4789
        %6740 = vmatmul.mubr.bf16.gmra.mxu0 %v4788
        %v6741 = vpop.f32.mrf.mxu0
        %v6742 = vadd.f32 %v6689, %v6741
        %v6743 = vpop.f32.mrf.mxu0
        %v6744 = vadd.f32 %v6691, %v6743
        %v6745 = vpop.f32.mrf.mxu0
        %v6746 = vadd.f32 %v6693, %v6745
        %v6747 = vpop.f32.mrf.mxu0
        %v6748 = vadd.f32 %v6695, %v6747
        %6749 = vdwg.mxu0
        %6750 = vmatprep.subr.bf16.mxu0 0
        %6751 = vmatpush1.bf16.msra.mxu0 0
        %6752 = vmatprep.subr.bf16.mxu0 0
        %6753 = vmatpush1.bf16.msra.mxu0 0
        %6754 = vmatprep.subr.bf16.mxu0 0
        %6755 = vmatpush1.bf16.msra.mxu0 0
        %6756 = vmatprep.subr.bf16.mxu0 0
        %6757 = vmatpush1.bf16.msra.mxu0 0
        %6758 = vmatprep.subr.bf16.mxu0 %v5835
        %6759 = vmatpush1.bf16.msra.mxu0 %v5834
        %6760 = vmatprep.subr.bf16.mxu0 %v5826
        %6761 = vmatpush1.bf16.msra.mxu0 %v5825
        %6762 = vmatprep.subr.bf16.mxu0 %v5817
        %6763 = vmatpush1.bf16.msra.mxu0 %v5816
        %6764 = vmatprep.subr.bf16.mxu0 %v5808
        %6765 = vmatpush1.bf16.msra.mxu0 %v5807
        %6766 = vmatprep.subr.bf16.mxu0 0
        %6767 = vmatpush2.bf16.msra.mxu0 0
        %6768 = vmatprep.subr.bf16.mxu0 0
        %6769 = vmatpush2.bf16.msra.mxu0 0
        %6770 = vmatprep.subr.bf16.mxu0 0
        %6771 = vmatpush2.bf16.msra.mxu0 0
        %6772 = vmatprep.subr.bf16.mxu0 0
        %6773 = vmatpush2.bf16.msra.mxu0 0
        %6774 = vmatprep.subr.bf16.mxu0 0
        %6775 = vmatpush2.bf16.msra.mxu0 0
        %6776 = vmatprep.subr.bf16.mxu0 0
        %6777 = vmatpush2.bf16.msra.mxu0 0
        %6778 = vmatprep.subr.bf16.mxu0 0
        %6779 = vmatpush2.bf16.msra.mxu0 0
        %6780 = vmatprep.subr.bf16.mxu0 0
        %6781 = vmatpush2.bf16.msra.mxu0 0
        %6782 = vmatprep.mubr.bf16.mxu0 0
        %6783 = vmatmul.mubr.bf16.gmra.mxu0 %v6162
        %v6784 = vpop.f32.mrf.mxu0
        %v6785 = vadd.f32 %v6732, %v6784
        %v6786 = vpop.f32.mrf.mxu0
        %v6787 = vadd.f32 %v6734, %v6786
        %v6788 = vpop.f32.mrf.mxu0
        %v6789 = vadd.f32 %v6736, %v6788
        %v6790 = vpop.f32.mrf.mxu0
        %v6791 = vadd.f32 %v6738, %v6790
        %6792 = vmatprep.mubr.bf16.mxu0 0
        %6793 = vmatmul.mubr.bf16.gmra.mxu0 %v6165
        %v6794 = vpop.f32.mrf.mxu0
        %v6795 = vadd.f32 %v6742, %v6794
        %v6796 = vpop.f32.mrf.mxu0
        %v6797 = vadd.f32 %v6744, %v6796
        %v6798 = vpop.f32.mrf.mxu0
        %v6799 = vadd.f32 %v6746, %v6798
        %v6800 = vpop.f32.mrf.mxu0
        %v6801 = vadd.f32 %v6748, %v6800
        %6802 = vdwg.mxu0
        %6803 = vmatprep.subr.bf16.mxu0 0
        %6804 = vmatpush1.bf16.msra.mxu0 %v5584
        %6805 = vmatprep.subr.bf16.mxu0 0
        %6806 = vmatpush1.bf16.msra.mxu0 %v5575
        %6807 = vmatprep.subr.bf16.mxu0 0
        %6808 = vmatpush1.bf16.msra.mxu0 %v5566
        %6809 = vmatprep.subr.bf16.mxu0 0
        %6810 = vmatpush1.bf16.msra.mxu0 %v5557
        %6811 = vmatprep.subr.bf16.mxu0 0
        %6812 = vmatpush1.bf16.msra.mxu0 %v5548
        %6813 = vmatprep.subr.bf16.mxu0 0
        %6814 = vmatpush1.bf16.msra.mxu0 %v5539
        %6815 = vmatprep.subr.bf16.mxu0 0
        %6816 = vmatpush1.bf16.msra.mxu0 %v5530
        %6817 = vmatprep.subr.bf16.mxu0 0
        %6818 = vmatpush1.bf16.msra.mxu0 %v5521
        %6819 = vmatprep.subr.bf16.mxu0 0
        %6820 = vmatpush2.bf16.msra.mxu0 %v5656
        %6821 = vmatprep.subr.bf16.mxu0 0
        %6822 = vmatpush2.bf16.msra.mxu0 %v5647
        %6823 = vmatprep.subr.bf16.mxu0 0
        %6824 = vmatpush2.bf16.msra.mxu0 %v5638
        %6825 = vmatprep.subr.bf16.mxu0 0
        %6826 = vmatpush2.bf16.msra.mxu0 %v5629
        %6827 = vmatprep.subr.bf16.mxu0 0
        %6828 = vmatpush2.bf16.msra.mxu0 %v5620
        %6829 = vmatprep.subr.bf16.mxu0 0
        %6830 = vmatpush2.bf16.msra.mxu0 %v5611
        %6831 = vmatprep.subr.bf16.mxu0 0
        %6832 = vmatpush2.bf16.msra.mxu0 %v5602
        %6833 = vmatprep.subr.bf16.mxu0 0
        %6834 = vmatpush2.bf16.msra.mxu0 %v5593
        %6835 = vmatprep.mubr.bf16.mxu0 %v4782
        %6836 = vmatmul.mubr.bf16.gmra.mxu0 %v4781
        %v6837 = vpop.f32.mrf.mxu0
        %v6838 = vadd.f32 0.0, %v6837
        %v6839 = vpop.f32.mrf.mxu0
        %v6840 = vpop.f32.mrf.mxu0
        %v6841 = vadd.f32 0.0, %v6840
        %v6842 = vpop.f32.mrf.mxu0
        %6843 = vmatprep.mubr.bf16.mxu0 %v4787
        %6844 = vmatmul.mubr.bf16.gmra.mxu0 %v4786
        %v6845 = vpop.f32.mrf.mxu0
        %v6846 = vadd.f32 0.0, %v6845
        %v6847 = vpop.f32.mrf.mxu0
        %v6848 = vpop.f32.mrf.mxu0
        %v6849 = vadd.f32 0.0, %v6848
        %v6850 = vpop.f32.mrf.mxu0
        %6851 = vdwg.mxu0
        %6852 = vmatprep.subr.bf16.mxu0 0
        %6853 = vmatpush1.bf16.msra.mxu0 %v5728
        %6854 = vmatprep.subr.bf16.mxu0 0
        %6855 = vmatpush1.bf16.msra.mxu0 %v5719
        %6856 = vmatprep.subr.bf16.mxu0 0
        %6857 = vmatpush1.bf16.msra.mxu0 %v5710
        %6858 = vmatprep.subr.bf16.mxu0 0
        %6859 = vmatpush1.bf16.msra.mxu0 %v5701
        %6860 = vmatprep.subr.bf16.mxu0 0
        %6861 = vmatpush1.bf16.msra.mxu0 %v5692
        %6862 = vmatprep.subr.bf16.mxu0 0
        %6863 = vmatpush1.bf16.msra.mxu0 %v5683
        %6864 = vmatprep.subr.bf16.mxu0 0
        %6865 = vmatpush1.bf16.msra.mxu0 %v5674
        %6866 = vmatprep.subr.bf16.mxu0 0
        %6867 = vmatpush1.bf16.msra.mxu0 %v5665
        %6868 = vmatprep.subr.bf16.mxu0 0
        %6869 = vmatpush2.bf16.msra.mxu0 %v5800
        %6870 = vmatprep.subr.bf16.mxu0 0
        %6871 = vmatpush2.bf16.msra.mxu0 %v5791
        %6872 = vmatprep.subr.bf16.mxu0 0
        %6873 = vmatpush2.bf16.msra.mxu0 %v5782
        %6874 = vmatprep.subr.bf16.mxu0 0
        %6875 = vmatpush2.bf16.msra.mxu0 %v5773
        %6876 = vmatprep.subr.bf16.mxu0 0
        %6877 = vmatpush2.bf16.msra.mxu0 %v5764
        %6878 = vmatprep.subr.bf16.mxu0 0
        %6879 = vmatpush2.bf16.msra.mxu0 %v5755
        %6880 = vmatprep.subr.bf16.mxu0 0
        %6881 = vmatpush2.bf16.msra.mxu0 %v5746
        %6882 = vmatprep.subr.bf16.mxu0 0
        %6883 = vmatpush2.bf16.msra.mxu0 %v5737
        %6884 = vmatprep.mubr.bf16.mxu0 %v4784
        %6885 = vmatmul.mubr.bf16.gmra.mxu0 %v4783
        %v6886 = vpop.f32.mrf.mxu0
        %v6887 = vadd.f32 %v6838, %v6886
        %v6888 = vpop.f32.mrf.mxu0
        %v6889 = vpop.f32.mrf.mxu0
        %v6890 = vadd.f32 %v6841, %v6889
        %v6891 = vpop.f32.mrf.mxu0
        %6892 = vmatprep.mubr.bf16.mxu0 %v4789
        %6893 = vmatmul.mubr.bf16.gmra.mxu0 %v4788
        %v6894 = vpop.f32.mrf.mxu0
        %v6895 = vadd.f32 %v6846, %v6894
        %v6896 = vpop.f32.mrf.mxu0
        %v6897 = vpop.f32.mrf.mxu0
        %v6898 = vadd.f32 %v6849, %v6897
        %v6899 = vpop.f32.mrf.mxu0
        %6900 = vdwg.mxu0
        %6901 = vmatprep.subr.bf16.mxu0 0
        %6902 = vmatpush1.bf16.msra.mxu0 0
        %6903 = vmatprep.subr.bf16.mxu0 0
        %6904 = vmatpush1.bf16.msra.mxu0 0
        %6905 = vmatprep.subr.bf16.mxu0 0
        %6906 = vmatpush1.bf16.msra.mxu0 0
        %6907 = vmatprep.subr.bf16.mxu0 0
        %6908 = vmatpush1.bf16.msra.mxu0 0
        %6909 = vmatprep.subr.bf16.mxu0 0
        %6910 = vmatpush1.bf16.msra.mxu0 %v5836
        %6911 = vmatprep.subr.bf16.mxu0 0
        %6912 = vmatpush1.bf16.msra.mxu0 %v5827
        %6913 = vmatprep.subr.bf16.mxu0 0
        %6914 = vmatpush1.bf16.msra.mxu0 %v5818
        %6915 = vmatprep.subr.bf16.mxu0 0
        %6916 = vmatpush1.bf16.msra.mxu0 %v5809
        %6917 = vmatprep.subr.bf16.mxu0 0
        %6918 = vmatpush2.bf16.msra.mxu0 0
        %6919 = vmatprep.subr.bf16.mxu0 0
        %6920 = vmatpush2.bf16.msra.mxu0 0
        %6921 = vmatprep.subr.bf16.mxu0 0
        %6922 = vmatpush2.bf16.msra.mxu0 0
        %6923 = vmatprep.subr.bf16.mxu0 0
        %6924 = vmatpush2.bf16.msra.mxu0 0
        %6925 = vmatprep.subr.bf16.mxu0 0
        %6926 = vmatpush2.bf16.msra.mxu0 0
        %6927 = vmatprep.subr.bf16.mxu0 0
        %6928 = vmatpush2.bf16.msra.mxu0 0
        %6929 = vmatprep.subr.bf16.mxu0 0
        %6930 = vmatpush2.bf16.msra.mxu0 0
        %6931 = vmatprep.subr.bf16.mxu0 0
        %6932 = vmatpush2.bf16.msra.mxu0 0
        %6933 = vmatprep.mubr.bf16.mxu0 0
        %6934 = vmatmul.mubr.bf16.gmra.mxu0 %v6162
        %v6935 = vpop.f32.mrf.mxu0
        %v6936 = vadd.f32 %v6887, %v6935
        %v6937 = vpop.f32.mrf.mxu0
        %v6938 = vpop.f32.mrf.mxu0
        %v6939 = vadd.f32 %v6890, %v6938
        %v6940 = vpop.f32.mrf.mxu0
        %6941 = vmatprep.mubr.bf16.mxu0 0
        %6942 = vmatmul.mubr.bf16.gmra.mxu0 %v6165
        %v6943 = vpop.f32.mrf.mxu0
        %v6944 = vadd.f32 %v6895, %v6943
        %v6945 = vpop.f32.mrf.mxu0
        %v6946 = vpop.f32.mrf.mxu0
        %v6947 = vadd.f32 %v6898, %v6946
        %v6948 = vpop.f32.mrf.mxu0
        %6949 = vdwg.mxu0
        %v6950 = vld [vmem:[%s10] sm:$0xff]
        %v6951 = vld [vmem:[%s10 + $0x8] sm:$0xff]
        %v6952 = vld [vmem:[%s10 + $0x10] sm:$0xff]
        %v6953 = vld [vmem:[%s10 + $0x18] sm:$0xff]
        %6955 = vset.pattern.permute.xlu0 0
        %6956 = vperm.xlu0 %6955, %v6950
        %v6957 = vpop.permute.xlu0 %6956
        %6960 = vset.pattern.permute.xlu0 0
        %6961 = vperm.xlu0 %6960, %v6951
        %v6962 = vpop.permute.xlu0 %6961
        %6965 = vset.pattern.permute.xlu0 0
        %6966 = vperm.xlu0 %6965, %v6952
        %v6967 = vpop.permute.xlu0 %6966
        %6970 = vset.pattern.permute.xlu0 0
        %6971 = vperm.xlu0 %6970, %v6953
        %v6972 = vpop.permute.xlu0 %6971
        %v6974 = vmul.f32 %v6308, %v6957
        %v6975 = vmul.f32 %v6310, %v6957
        %v6976 = vmul.f32 %v6467, %v6957
        %v6977 = vmul.f32 %v6469, %v6957
        %v6978 = vmul.f32 %v6626, %v6957
        %v6979 = vmul.f32 %v6628, %v6957
        %v6980 = vmul.f32 %v6785, %v6957
        %v6981 = vmul.f32 %v6787, %v6957
        %v6982 = vmul.f32 %v6936, %v6957
        %v6983 = vmul.f32 %v6312, %v6962
        %v6984 = vmul.f32 %v6314, %v6962
        %v6985 = vmul.f32 %v6471, %v6962
        %v6986 = vmul.f32 %v6473, %v6962
        %v6987 = vmul.f32 %v6630, %v6962
        %v6988 = vmul.f32 %v6632, %v6962
        %v6989 = vmul.f32 %v6789, %v6962
        %v6990 = vmul.f32 %v6791, %v6962
        %v6991 = vmul.f32 %v6939, %v6962
        %v6992 = vmul.f32 %v6318, %v6967
        %v6993 = vmul.f32 %v6320, %v6967
        %v6994 = vmul.f32 %v6477, %v6967
        %v6995 = vmul.f32 %v6479, %v6967
        %v6996 = vmul.f32 %v6636, %v6967
        %v6997 = vmul.f32 %v6638, %v6967
        %v6998 = vmul.f32 %v6795, %v6967
        %v6999 = vmul.f32 %v6797, %v6967
        %v7000 = vmul.f32 %v6944, %v6967
        %v7001 = vmul.f32 %v6322, %v6972
        %v7002 = vmul.f32 %v6324, %v6972
        %v7003 = vmul.f32 %v6481, %v6972
        %v7004 = vmul.f32 %v6483, %v6972
        %v7005 = vmul.f32 %v6640, %v6972
        %v7006 = vmul.f32 %v6642, %v6972
        %v7007 = vmul.f32 %v6799, %v6972
        %v7008 = vmul.f32 %v6801, %v6972
        %v7009 = vmul.f32 %v6947, %v6972
        %v7010 = vld [vmem:[%s11] sm:$0xff]
        %v7011 = vld [vmem:[%s11 + $0x8] sm:$0xff]
        %v7012 = vld [vmem:[%s11 + $0x10] sm:$0xff]
        %v7013 = vld [vmem:[%s11 + $0x18] sm:$0xff]
        %7015 = vset.pattern.permute.xlu0 0
        %7016 = vperm.xlu0 %7015, %v7010
        %v7017 = vpop.permute.xlu0 %7016
        %7020 = vset.pattern.permute.xlu0 0
        %7021 = vperm.xlu0 %7020, %v7011
        %v7022 = vpop.permute.xlu0 %7021
        %7025 = vset.pattern.permute.xlu0 0
        %7026 = vperm.xlu0 %7025, %v7012
        %v7027 = vpop.permute.xlu0 %7026
        %7030 = vset.pattern.permute.xlu0 0
        %7031 = vperm.xlu0 %7030, %v7013
        %v7032 = vpop.permute.xlu0 %7031
        %v7034 = vadd.f32 %v6974, %v7017
        %v7035 = vadd.f32 %v6975, %v7017
        %v7036 = vadd.f32 %v6976, %v7017
        %v7037 = vadd.f32 %v6977, %v7017
        %v7038 = vadd.f32 %v6978, %v7017
        %v7039 = vadd.f32 %v6979, %v7017
        %v7040 = vadd.f32 %v6980, %v7017
        %v7041 = vadd.f32 %v6981, %v7017
        %v7042 = vadd.f32 %v6982, %v7017
        %v7043 = vadd.f32 %v6983, %v7022
        %v7044 = vadd.f32 %v6984, %v7022
        %v7045 = vadd.f32 %v6985, %v7022
        %v7046 = vadd.f32 %v6986, %v7022
        %v7047 = vadd.f32 %v6987, %v7022
        %v7048 = vadd.f32 %v6988, %v7022
        %v7049 = vadd.f32 %v6989, %v7022
        %v7050 = vadd.f32 %v6990, %v7022
        %v7051 = vadd.f32 %v6991, %v7022
        %v7052 = vadd.f32 %v6992, %v7027
        %v7053 = vadd.f32 %v6993, %v7027
        %v7054 = vadd.f32 %v6994, %v7027
        %v7055 = vadd.f32 %v6995, %v7027
        %v7056 = vadd.f32 %v6996, %v7027
        %v7057 = vadd.f32 %v6997, %v7027
        %v7058 = vadd.f32 %v6998, %v7027
        %v7059 = vadd.f32 %v6999, %v7027
        %v7060 = vadd.f32 %v7000, %v7027
        %v7061 = vadd.f32 %v7001, %v7032
        %v7062 = vadd.f32 %v7002, %v7032
        %v7063 = vadd.f32 %v7003, %v7032
        %v7064 = vadd.f32 %v7004, %v7032
        %v7065 = vadd.f32 %v7005, %v7032
        %v7066 = vadd.f32 %v7006, %v7032
        %v7067 = vadd.f32 %v7007, %v7032
        %v7068 = vadd.f32 %v7008, %v7032
        %v7069 = vadd.f32 %v7009, %v7032
        %v7070 = vmul.f32 %v7034, %v3690
        %v7071 = vmul.f32 %v7035, %v3694
        %v7072 = vmul.f32 %v7036, %v3698
        %v7073 = vmul.f32 %v7037, %v3702
        %v7074 = vmul.f32 %v7038, %v3706
        %v7075 = vmul.f32 %v7039, %v3710
        %v7076 = vmul.f32 %v7040, %v3714
        %v7077 = vmul.f32 %v7041, %v3718
        %v7078 = vmul.f32 %v7042, %v3722
        %v7079 = vmul.f32 %v7043, %v3690
        %v7080 = vmul.f32 %v7044, %v3694
        %v7081 = vmul.f32 %v7045, %v3698
        %v7082 = vmul.f32 %v7046, %v3702
        %v7083 = vmul.f32 %v7047, %v3706
        %v7084 = vmul.f32 %v7048, %v3710
        %v7085 = vmul.f32 %v7049, %v3714
        %v7086 = vmul.f32 %v7050, %v3718
        %v7087 = vmul.f32 %v7051, %v3722
        %v7088 = vmul.f32 %v7052, %v3690
        %v7089 = vmul.f32 %v7053, %v3694
        %v7090 = vmul.f32 %v7054, %v3698
        %v7091 = vmul.f32 %v7055, %v3702
        %v7092 = vmul.f32 %v7056, %v3706
        %v7093 = vmul.f32 %v7057, %v3710
        %v7094 = vmul.f32 %v7058, %v3714
        %v7095 = vmul.f32 %v7059, %v3718
        %v7096 = vmul.f32 %v7060, %v3722
        %v7097 = vmul.f32 %v7061, %v3690
        %v7098 = vmul.f32 %v7062, %v3694
        %v7099 = vmul.f32 %v7063, %v3698
        %v7100 = vmul.f32 %v7064, %v3702
        %v7101 = vmul.f32 %v7065, %v3706
        %v7102 = vmul.f32 %v7066, %v3710
        %v7103 = vmul.f32 %v7067, %v3714
        %v7104 = vmul.f32 %v7068, %v3718
        %v7105 = vmul.f32 %v7069, %v3722
        %v7106 = vpack.c.bf16 %v7079, %v7070
        %v7107 = vpack.c.bf16 %v7080, %v7071
        %v7108 = vpack.c.bf16 %v7081, %v7072
        %v7109 = vpack.c.bf16 %v7082, %v7073
        %v7110 = vpack.c.bf16 %v7083, %v7074
        %v7111 = vpack.c.bf16 %v7084, %v7075
        %v7112 = vpack.c.bf16 %v7085, %v7076
        %v7113 = vpack.c.bf16 %v7086, %v7077
        %v7114 = vpack.c.bf16 %v7087, %v7078
        %v7115 = vpack.c.bf16 %v7097, %v7088
        %v7116 = vpack.c.bf16 %v7098, %v7089
        %v7117 = vpack.c.bf16 %v7099, %v7090
        %v7118 = vpack.c.bf16 %v7100, %v7091
        %v7119 = vpack.c.bf16 %v7101, %v7092
        %v7120 = vpack.c.bf16 %v7102, %v7093
        %v7121 = vpack.c.bf16 %v7103, %v7094
        %v7122 = vpack.c.bf16 %v7104, %v7095
        %v7123 = vpack.c.bf16 %v7105, %v7096
        %v7125 = vsel %vm3840, %v7114, 0
        %v7127 = vsel %vm3840, %v7123, 0
        %7146 = vrot.lane.b32.xlu0 %v7106, 127
        %v7147 = vpop.permute.xlu0 %7146
        %7148 = vrot.lane.b32.xlu0 %v7107, 127
        %v7149 = vpop.permute.xlu0 %7148
        %7150 = vrot.lane.b32.xlu0 %v7108, 127
        %v7151 = vpop.permute.xlu0 %7150
        %7152 = vrot.lane.b32.xlu0 %v7109, 127
        %v7153 = vpop.permute.xlu0 %7152
        %7154 = vrot.lane.b32.xlu0 %v7110, 127
        %v7155 = vpop.permute.xlu0 %7154
        %7156 = vrot.lane.b32.xlu0 %v7111, 127
        %v7157 = vpop.permute.xlu0 %7156
        %7158 = vrot.lane.b32.xlu0 %v7112, 127
        %v7159 = vpop.permute.xlu0 %7158
        %7160 = vrot.lane.b32.xlu0 %v7113, 127
        %v7161 = vpop.permute.xlu0 %7160
        %7162 = vrot.lane.b32.xlu0 %v7125, 127
        %v7163 = vpop.permute.xlu0 %7162
        %7164 = vrot.lane.b32.xlu0 %v7115, 127
        %v7165 = vpop.permute.xlu0 %7164
        %7166 = vrot.lane.b32.xlu0 %v7116, 127
        %v7167 = vpop.permute.xlu0 %7166
        %7168 = vrot.lane.b32.xlu0 %v7117, 127
        %v7169 = vpop.permute.xlu0 %7168
        %7170 = vrot.lane.b32.xlu0 %v7118, 127
        %v7171 = vpop.permute.xlu0 %7170
        %7172 = vrot.lane.b32.xlu0 %v7119, 127
        %v7173 = vpop.permute.xlu0 %7172
        %7174 = vrot.lane.b32.xlu0 %v7120, 127
        %v7175 = vpop.permute.xlu0 %7174
        %7176 = vrot.lane.b32.xlu0 %v7121, 127
        %v7177 = vpop.permute.xlu0 %7176
        %7178 = vrot.lane.b32.xlu0 %v7122, 127
        %v7179 = vpop.permute.xlu0 %7178
        %7180 = vrot.lane.b32.xlu0 %v7127, 127
        %v7181 = vpop.permute.xlu0 %7180
        %v7182 = vsel %vm544, %v3888, %v7147
        %v7183 = vsel %vm544, %v7147, %v7149
        %v7184 = vsel %vm544, %v7149, %v7151
        %v7185 = vsel %vm544, %v7151, %v7153
        %v7186 = vsel %vm544, %v7153, %v7155
        %v7187 = vsel %vm544, %v7155, %v7157
        %v7188 = vsel %vm544, %v7157, %v7159
        %v7189 = vsel %vm544, %v7159, %v7161
        %v7190 = vsel %vm544, %v7161, %v7163
        %v7191 = vsel %vm544, %v3888, %v7165
        %v7192 = vsel %vm544, %v7165, %v7167
        %v7193 = vsel %vm544, %v7167, %v7169
        %v7194 = vsel %vm544, %v7169, %v7171
        %v7195 = vsel %vm544, %v7171, %v7173
        %v7196 = vsel %vm544, %v7173, %v7175
        %v7197 = vsel %vm544, %v7175, %v7177
        %v7198 = vsel %vm544, %v7177, %v7179
        %v7199 = vsel %vm544, %v7179, %v7181
        %7200 = vrot.lane.b32.xlu0 %v7106, 126
        %v7201 = vpop.permute.xlu0 %7200
        %7202 = vrot.lane.b32.xlu0 %v7107, 126
        %v7203 = vpop.permute.xlu0 %7202
        %7204 = vrot.lane.b32.xlu0 %v7108, 126
        %v7205 = vpop.permute.xlu0 %7204
        %7206 = vrot.lane.b32.xlu0 %v7109, 126
        %v7207 = vpop.permute.xlu0 %7206
        %7208 = vrot.lane.b32.xlu0 %v7110, 126
        %v7209 = vpop.permute.xlu0 %7208
        %7210 = vrot.lane.b32.xlu0 %v7111, 126
        %v7211 = vpop.permute.xlu0 %7210
        %7212 = vrot.lane.b32.xlu0 %v7112, 126
        %v7213 = vpop.permute.xlu0 %7212
        %7214 = vrot.lane.b32.xlu0 %v7113, 126
        %v7215 = vpop.permute.xlu0 %7214
        %7216 = vrot.lane.b32.xlu0 %v7125, 126
        %v7217 = vpop.permute.xlu0 %7216
        %7218 = vrot.lane.b32.xlu0 %v7115, 126
        %v7219 = vpop.permute.xlu0 %7218
        %7220 = vrot.lane.b32.xlu0 %v7116, 126
        %v7221 = vpop.permute.xlu0 %7220
        %7222 = vrot.lane.b32.xlu0 %v7117, 126
        %v7223 = vpop.permute.xlu0 %7222
        %7224 = vrot.lane.b32.xlu0 %v7118, 126
        %v7225 = vpop.permute.xlu0 %7224
        %7226 = vrot.lane.b32.xlu0 %v7119, 126
        %v7227 = vpop.permute.xlu0 %7226
        %7228 = vrot.lane.b32.xlu0 %v7120, 126
        %v7229 = vpop.permute.xlu0 %7228
        %7230 = vrot.lane.b32.xlu0 %v7121, 126
        %v7231 = vpop.permute.xlu0 %7230
        %7232 = vrot.lane.b32.xlu0 %v7122, 126
        %v7233 = vpop.permute.xlu0 %7232
        %7234 = vrot.lane.b32.xlu0 %v7127, 126
        %v7235 = vpop.permute.xlu0 %7234
        %v7236 = vsel %vm555, %v3998, %v7201
        %v7237 = vsel %vm555, %v7201, %v7203
        %v7238 = vsel %vm555, %v7203, %v7205
        %v7239 = vsel %vm555, %v7205, %v7207
        %v7240 = vsel %vm555, %v7207, %v7209
        %v7241 = vsel %vm555, %v7209, %v7211
        %v7242 = vsel %vm555, %v7211, %v7213
        %v7243 = vsel %vm555, %v7213, %v7215
        %v7244 = vsel %vm555, %v7215, %v7217
        %v7245 = vsel %vm555, %v3998, %v7219
        %v7246 = vsel %vm555, %v7219, %v7221
        %v7247 = vsel %vm555, %v7221, %v7223
        %v7248 = vsel %vm555, %v7223, %v7225
        %v7249 = vsel %vm555, %v7225, %v7227
        %v7250 = vsel %vm555, %v7227, %v7229
        %v7251 = vsel %vm555, %v7229, %v7231
        %v7252 = vsel %vm555, %v7231, %v7233
        %v7253 = vsel %vm555, %v7233, %v7235
        %7254 = vrot.lane.b32.xlu0 %v7106, 94
        %v7255 = vpop.permute.xlu0 %7254
        %7256 = vrot.lane.b32.xlu0 %v7107, 94
        %v7257 = vpop.permute.xlu0 %7256
        %7258 = vrot.lane.b32.xlu0 %v7108, 94
        %v7259 = vpop.permute.xlu0 %7258
        %7260 = vrot.lane.b32.xlu0 %v7109, 94
        %v7261 = vpop.permute.xlu0 %7260
        %7262 = vrot.lane.b32.xlu0 %v7110, 94
        %v7263 = vpop.permute.xlu0 %7262
        %7264 = vrot.lane.b32.xlu0 %v7111, 94
        %v7265 = vpop.permute.xlu0 %7264
        %7266 = vrot.lane.b32.xlu0 %v7112, 94
        %v7267 = vpop.permute.xlu0 %7266
        %7268 = vrot.lane.b32.xlu0 %v7113, 94
        %v7269 = vpop.permute.xlu0 %7268
        %7270 = vrot.lane.b32.xlu0 %v7125, 94
        %v7271 = vpop.permute.xlu0 %7270
        %7272 = vrot.lane.b32.xlu0 %v7115, 94
        %v7273 = vpop.permute.xlu0 %7272
        %7274 = vrot.lane.b32.xlu0 %v7116, 94
        %v7275 = vpop.permute.xlu0 %7274
        %7276 = vrot.lane.b32.xlu0 %v7117, 94
        %v7277 = vpop.permute.xlu0 %7276
        %7278 = vrot.lane.b32.xlu0 %v7118, 94
        %v7279 = vpop.permute.xlu0 %7278
        %7280 = vrot.lane.b32.xlu0 %v7119, 94
        %v7281 = vpop.permute.xlu0 %7280
        %7282 = vrot.lane.b32.xlu0 %v7120, 94
        %v7283 = vpop.permute.xlu0 %7282
        %7284 = vrot.lane.b32.xlu0 %v7121, 94
        %v7285 = vpop.permute.xlu0 %7284
        %7286 = vrot.lane.b32.xlu0 %v7122, 94
        %v7287 = vpop.permute.xlu0 %7286
        %7288 = vrot.lane.b32.xlu0 %v7127, 94
        %v7289 = vpop.permute.xlu0 %7288
        %v7290 = vsel %vm2388, %v4108, %v7255
        %v7291 = vsel %vm2388, %v7255, %v7257
        %v7292 = vsel %vm2388, %v7257, %v7259
        %v7293 = vsel %vm2388, %v7259, %v7261
        %v7294 = vsel %vm2388, %v7261, %v7263
        %v7295 = vsel %vm2388, %v7263, %v7265
        %v7296 = vsel %vm2388, %v7265, %v7267
        %v7297 = vsel %vm2388, %v7267, %v7269
        %v7298 = vsel %vm2388, %v7269, %v7271
        %v7299 = vsel %vm2388, %v4108, %v7273
        %v7300 = vsel %vm2388, %v7273, %v7275
        %v7301 = vsel %vm2388, %v7275, %v7277
        %v7302 = vsel %vm2388, %v7277, %v7279
        %v7303 = vsel %vm2388, %v7279, %v7281
        %v7304 = vsel %vm2388, %v7281, %v7283
        %v7305 = vsel %vm2388, %v7283, %v7285
        %v7306 = vsel %vm2388, %v7285, %v7287
        %v7307 = vsel %vm2388, %v7287, %v7289
        %7308 = vrot.lane.b32.xlu0 %v7106, 93
        %v7309 = vpop.permute.xlu0 %7308
        %7310 = vrot.lane.b32.xlu0 %v7107, 93
        %v7311 = vpop.permute.xlu0 %7310
        %7312 = vrot.lane.b32.xlu0 %v7108, 93
        %v7313 = vpop.permute.xlu0 %7312
        %7314 = vrot.lane.b32.xlu0 %v7109, 93
        %v7315 = vpop.permute.xlu0 %7314
        %7316 = vrot.lane.b32.xlu0 %v7110, 93
        %v7317 = vpop.permute.xlu0 %7316
        %7318 = vrot.lane.b32.xlu0 %v7111, 93
        %v7319 = vpop.permute.xlu0 %7318
        %7320 = vrot.lane.b32.xlu0 %v7112, 93
        %v7321 = vpop.permute.xlu0 %7320
        %7322 = vrot.lane.b32.xlu0 %v7113, 93
        %v7323 = vpop.permute.xlu0 %7322
        %7324 = vrot.lane.b32.xlu0 %v7125, 93
        %v7325 = vpop.permute.xlu0 %7324
        %7326 = vrot.lane.b32.xlu0 %v7115, 93
        %v7327 = vpop.permute.xlu0 %7326
        %7328 = vrot.lane.b32.xlu0 %v7116, 93
        %v7329 = vpop.permute.xlu0 %7328
        %7330 = vrot.lane.b32.xlu0 %v7117, 93
        %v7331 = vpop.permute.xlu0 %7330
        %7332 = vrot.lane.b32.xlu0 %v7118, 93
        %v7333 = vpop.permute.xlu0 %7332
        %7334 = vrot.lane.b32.xlu0 %v7119, 93
        %v7335 = vpop.permute.xlu0 %7334
        %7336 = vrot.lane.b32.xlu0 %v7120, 93
        %v7337 = vpop.permute.xlu0 %7336
        %7338 = vrot.lane.b32.xlu0 %v7121, 93
        %v7339 = vpop.permute.xlu0 %7338
        %7340 = vrot.lane.b32.xlu0 %v7122, 93
        %v7341 = vpop.permute.xlu0 %7340
        %7342 = vrot.lane.b32.xlu0 %v7127, 93
        %v7343 = vpop.permute.xlu0 %7342
        %v7344 = vsel %vm2416, %v7309, %v7311
        %v7345 = vsel %vm2416, %v7311, %v7313
        %v7346 = vsel %vm2416, %v7313, %v7315
        %v7347 = vsel %vm2416, %v7315, %v7317
        %v7348 = vsel %vm2416, %v7317, %v7319
        %v7349 = vsel %vm2416, %v7319, %v7321
        %v7350 = vsel %vm2416, %v7321, %v7323
        %v7351 = vsel %vm2416, %v7323, %v7325
        %v7352 = vsel %vm2416, %v7327, %v7329
        %v7353 = vsel %vm2416, %v7329, %v7331
        %v7354 = vsel %vm2416, %v7331, %v7333
        %v7355 = vsel %vm2416, %v7333, %v7335
        %v7356 = vsel %vm2416, %v7335, %v7337
        %v7357 = vsel %vm2416, %v7337, %v7339
        %v7358 = vsel %vm2416, %v7339, %v7341
        %v7359 = vsel %vm2416, %v7341, %v7343
        %7360 = vrot.lane.b32.xlu0 %v7106, 92
        %v7361 = vpop.permute.xlu0 %7360
        %7362 = vrot.lane.b32.xlu0 %v7107, 92
        %v7363 = vpop.permute.xlu0 %7362
        %7364 = vrot.lane.b32.xlu0 %v7108, 92
        %v7365 = vpop.permute.xlu0 %7364
        %7366 = vrot.lane.b32.xlu0 %v7109, 92
        %v7367 = vpop.permute.xlu0 %7366
        %7368 = vrot.lane.b32.xlu0 %v7110, 92
        %v7369 = vpop.permute.xlu0 %7368
        %7370 = vrot.lane.b32.xlu0 %v7111, 92
        %v7371 = vpop.permute.xlu0 %7370
        %7372 = vrot.lane.b32.xlu0 %v7112, 92
        %v7373 = vpop.permute.xlu0 %7372
        %7374 = vrot.lane.b32.xlu0 %v7113, 92
        %v7375 = vpop.permute.xlu0 %7374
        %7376 = vrot.lane.b32.xlu0 %v7125, 92
        %v7377 = vpop.permute.xlu0 %7376
        %7378 = vrot.lane.b32.xlu0 %v7115, 92
        %v7379 = vpop.permute.xlu0 %7378
        %7380 = vrot.lane.b32.xlu0 %v7116, 92
        %v7381 = vpop.permute.xlu0 %7380
        %7382 = vrot.lane.b32.xlu0 %v7117, 92
        %v7383 = vpop.permute.xlu0 %7382
        %7384 = vrot.lane.b32.xlu0 %v7118, 92
        %v7385 = vpop.permute.xlu0 %7384
        %7386 = vrot.lane.b32.xlu0 %v7119, 92
        %v7387 = vpop.permute.xlu0 %7386
        %7388 = vrot.lane.b32.xlu0 %v7120, 92
        %v7389 = vpop.permute.xlu0 %7388
        %7390 = vrot.lane.b32.xlu0 %v7121, 92
        %v7391 = vpop.permute.xlu0 %7390
        %7392 = vrot.lane.b32.xlu0 %v7122, 92
        %v7393 = vpop.permute.xlu0 %7392
        %7394 = vrot.lane.b32.xlu0 %v7127, 92
        %v7395 = vpop.permute.xlu0 %7394
        %v7396 = vsel %vm592, %v7361, %v7363
        %v7397 = vsel %vm592, %v7363, %v7365
        %v7398 = vsel %vm592, %v7365, %v7367
        %v7399 = vsel %vm592, %v7367, %v7369
        %v7400 = vsel %vm592, %v7369, %v7371
        %v7401 = vsel %vm592, %v7371, %v7373
        %v7402 = vsel %vm592, %v7373, %v7375
        %v7403 = vsel %vm592, %v7375, %v7377
        %v7404 = vsel %vm592, %v7379, %v7381
        %v7405 = vsel %vm592, %v7381, %v7383
        %v7406 = vsel %vm592, %v7383, %v7385
        %v7407 = vsel %vm592, %v7385, %v7387
        %v7408 = vsel %vm592, %v7387, %v7389
        %v7409 = vsel %vm592, %v7389, %v7391
        %v7410 = vsel %vm592, %v7391, %v7393
        %v7411 = vsel %vm592, %v7393, %v7395
        %7412 = vrot.lane.b32.xlu0 %v7106, 60
        %v7413 = vpop.permute.xlu0 %7412
        %7414 = vrot.lane.b32.xlu0 %v7107, 60
        %v7415 = vpop.permute.xlu0 %7414
        %7416 = vrot.lane.b32.xlu0 %v7108, 60
        %v7417 = vpop.permute.xlu0 %7416
        %7418 = vrot.lane.b32.xlu0 %v7109, 60
        %v7419 = vpop.permute.xlu0 %7418
        %7420 = vrot.lane.b32.xlu0 %v7110, 60
        %v7421 = vpop.permute.xlu0 %7420
        %7422 = vrot.lane.b32.xlu0 %v7111, 60
        %v7423 = vpop.permute.xlu0 %7422
        %7424 = vrot.lane.b32.xlu0 %v7112, 60
        %v7425 = vpop.permute.xlu0 %7424
        %7426 = vrot.lane.b32.xlu0 %v7113, 60
        %v7427 = vpop.permute.xlu0 %7426
        %7428 = vrot.lane.b32.xlu0 %v7125, 60
        %v7429 = vpop.permute.xlu0 %7428
        %7430 = vrot.lane.b32.xlu0 %v7115, 60
        %v7431 = vpop.permute.xlu0 %7430
        %7432 = vrot.lane.b32.xlu0 %v7116, 60
        %v7433 = vpop.permute.xlu0 %7432
        %7434 = vrot.lane.b32.xlu0 %v7117, 60
        %v7435 = vpop.permute.xlu0 %7434
        %7436 = vrot.lane.b32.xlu0 %v7118, 60
        %v7437 = vpop.permute.xlu0 %7436
        %7438 = vrot.lane.b32.xlu0 %v7119, 60
        %v7439 = vpop.permute.xlu0 %7438
        %7440 = vrot.lane.b32.xlu0 %v7120, 60
        %v7441 = vpop.permute.xlu0 %7440
        %7442 = vrot.lane.b32.xlu0 %v7121, 60
        %v7443 = vpop.permute.xlu0 %7442
        %7444 = vrot.lane.b32.xlu0 %v7122, 60
        %v7445 = vpop.permute.xlu0 %7444
        %7446 = vrot.lane.b32.xlu0 %v7127, 60
        %v7447 = vpop.permute.xlu0 %7446
        %v7448 = vsel %vm2469, %v7413, %v7415
        %v7449 = vsel %vm2469, %v7415, %v7417
        %v7450 = vsel %vm2469, %v7417, %v7419
        %v7451 = vsel %vm2469, %v7419, %v7421
        %v7452 = vsel %vm2469, %v7421, %v7423
        %v7453 = vsel %vm2469, %v7423, %v7425
        %v7454 = vsel %vm2469, %v7425, %v7427
        %v7455 = vsel %vm2469, %v7427, %v7429
        %v7456 = vsel %vm2469, %v7431, %v7433
        %v7457 = vsel %vm2469, %v7433, %v7435
        %v7458 = vsel %vm2469, %v7435, %v7437
        %v7459 = vsel %vm2469, %v7437, %v7439
        %v7460 = vsel %vm2469, %v7439, %v7441
        %v7461 = vsel %vm2469, %v7441, %v7443
        %v7462 = vsel %vm2469, %v7443, %v7445
        %v7463 = vsel %vm2469, %v7445, %v7447
        %7464 = vrot.lane.b32.xlu0 %v7106, 59
        %v7465 = vpop.permute.xlu0 %7464
        %7466 = vrot.lane.b32.xlu0 %v7107, 59
        %v7467 = vpop.permute.xlu0 %7466
        %7468 = vrot.lane.b32.xlu0 %v7108, 59
        %v7469 = vpop.permute.xlu0 %7468
        %7470 = vrot.lane.b32.xlu0 %v7109, 59
        %v7471 = vpop.permute.xlu0 %7470
        %7472 = vrot.lane.b32.xlu0 %v7110, 59
        %v7473 = vpop.permute.xlu0 %7472
        %7474 = vrot.lane.b32.xlu0 %v7111, 59
        %v7475 = vpop.permute.xlu0 %7474
        %7476 = vrot.lane.b32.xlu0 %v7112, 59
        %v7477 = vpop.permute.xlu0 %7476
        %7478 = vrot.lane.b32.xlu0 %v7113, 59
        %v7479 = vpop.permute.xlu0 %7478
        %7480 = vrot.lane.b32.xlu0 %v7125, 59
        %v7481 = vpop.permute.xlu0 %7480
        %7482 = vrot.lane.b32.xlu0 %v7115, 59
        %v7483 = vpop.permute.xlu0 %7482
        %7484 = vrot.lane.b32.xlu0 %v7116, 59
        %v7485 = vpop.permute.xlu0 %7484
        %7486 = vrot.lane.b32.xlu0 %v7117, 59
        %v7487 = vpop.permute.xlu0 %7486
        %7488 = vrot.lane.b32.xlu0 %v7118, 59
        %v7489 = vpop.permute.xlu0 %7488
        %7490 = vrot.lane.b32.xlu0 %v7119, 59
        %v7491 = vpop.permute.xlu0 %7490
        %7492 = vrot.lane.b32.xlu0 %v7120, 59
        %v7493 = vpop.permute.xlu0 %7492
        %7494 = vrot.lane.b32.xlu0 %v7121, 59
        %v7495 = vpop.permute.xlu0 %7494
        %7496 = vrot.lane.b32.xlu0 %v7122, 59
        %v7497 = vpop.permute.xlu0 %7496
        %7498 = vrot.lane.b32.xlu0 %v7127, 59
        %v7499 = vpop.permute.xlu0 %7498
        %v7500 = vsel %vm2496, %v7465, %v7467
        %v7501 = vsel %vm2496, %v7467, %v7469
        %v7502 = vsel %vm2496, %v7469, %v7471
        %v7503 = vsel %vm2496, %v7471, %v7473
        %v7504 = vsel %vm2496, %v7473, %v7475
        %v7505 = vsel %vm2496, %v7475, %v7477
        %v7506 = vsel %vm2496, %v7477, %v7479
        %v7507 = vsel %vm2496, %v7479, %v7481
        %v7508 = vsel %vm2496, %v7483, %v7485
        %v7509 = vsel %vm2496, %v7485, %v7487
        %v7510 = vsel %vm2496, %v7487, %v7489
        %v7511 = vsel %vm2496, %v7489, %v7491
        %v7512 = vsel %vm2496, %v7491, %v7493
        %v7513 = vsel %vm2496, %v7493, %v7495
        %v7514 = vsel %vm2496, %v7495, %v7497
        %v7515 = vsel %vm2496, %v7497, %v7499
        %7516 = vrot.lane.b32.xlu0 %v7106, 58
        %v7517 = vpop.permute.xlu0 %7516
        %7518 = vrot.lane.b32.xlu0 %v7107, 58
        %v7519 = vpop.permute.xlu0 %7518
        %7520 = vrot.lane.b32.xlu0 %v7108, 58
        %v7521 = vpop.permute.xlu0 %7520
        %7522 = vrot.lane.b32.xlu0 %v7109, 58
        %v7523 = vpop.permute.xlu0 %7522
        %7524 = vrot.lane.b32.xlu0 %v7110, 58
        %v7525 = vpop.permute.xlu0 %7524
        %7526 = vrot.lane.b32.xlu0 %v7111, 58
        %v7527 = vpop.permute.xlu0 %7526
        %7528 = vrot.lane.b32.xlu0 %v7112, 58
        %v7529 = vpop.permute.xlu0 %7528
        %7530 = vrot.lane.b32.xlu0 %v7113, 58
        %v7531 = vpop.permute.xlu0 %7530
        %7532 = vrot.lane.b32.xlu0 %v7125, 58
        %v7533 = vpop.permute.xlu0 %7532
        %7534 = vrot.lane.b32.xlu0 %v7115, 58
        %v7535 = vpop.permute.xlu0 %7534
        %7536 = vrot.lane.b32.xlu0 %v7116, 58
        %v7537 = vpop.permute.xlu0 %7536
        %7538 = vrot.lane.b32.xlu0 %v7117, 58
        %v7539 = vpop.permute.xlu0 %7538
        %7540 = vrot.lane.b32.xlu0 %v7118, 58
        %v7541 = vpop.permute.xlu0 %7540
        %7542 = vrot.lane.b32.xlu0 %v7119, 58
        %v7543 = vpop.permute.xlu0 %7542
        %7544 = vrot.lane.b32.xlu0 %v7120, 58
        %v7545 = vpop.permute.xlu0 %7544
        %7546 = vrot.lane.b32.xlu0 %v7121, 58
        %v7547 = vpop.permute.xlu0 %7546
        %7548 = vrot.lane.b32.xlu0 %v7122, 58
        %v7549 = vpop.permute.xlu0 %7548
        %7550 = vrot.lane.b32.xlu0 %v7127, 58
        %v7551 = vpop.permute.xlu0 %7550
        %v7552 = vsel %vm2523, %v7517, %v7519
        %v7553 = vsel %vm2523, %v7519, %v7521
        %v7554 = vsel %vm2523, %v7521, %v7523
        %v7555 = vsel %vm2523, %v7523, %v7525
        %v7556 = vsel %vm2523, %v7525, %v7527
        %v7557 = vsel %vm2523, %v7527, %v7529
        %v7558 = vsel %vm2523, %v7529, %v7531
        %v7559 = vsel %vm2523, %v7531, %v7533
        %v7560 = vsel %vm2523, %v7535, %v7537
        %v7561 = vsel %vm2523, %v7537, %v7539
        %v7562 = vsel %vm2523, %v7539, %v7541
        %v7563 = vsel %vm2523, %v7541, %v7543
        %v7564 = vsel %vm2523, %v7543, %v7545
        %v7565 = vsel %vm2523, %v7545, %v7547
        %v7566 = vsel %vm2523, %v7547, %v7549
        %v7567 = vsel %vm2523, %v7549, %v7551
        %v7568 = vld [vmem:[%s12] sm:$0x3f]
        %v7570 = vcombine.high %v7568, %v7568
        %v7572 = vunpack.c.l.s4 1983009808
        %v7573 = vunpack.c.0.s8 %v7572
        %v7574 = vlaneseq
        %v7575 = vshrl.u32 %v7574, 7
        %v7576 = vsub.s32 %v7573, %v7575
        %v7577 = vrot.slane %v7568, %v7576
        %v7579 = vunpack.c.l.s4 1983009808
        %v7580 = vunpack.c.0.s8 %v7579
        %v7581 = vlaneseq
        %v7582 = vshrl.u32 %v7581, 7
        %v7583 = vsub.s32 %v7580, %v7582
        %v7584 = vrot.slane %v7570, %v7583
        %v7585 = vcombine.high %v7577, %v7577
        %7588 = vrot.lane.b32.xlu0 %v7106, 35
        %v7589 = vpop.permute.xlu0 %7588
        %7590 = vrot.lane.b32.xlu0 %v7107, 35
        %v7591 = vpop.permute.xlu0 %7590
        %7592 = vrot.lane.b32.xlu0 %v7108, 35
        %v7593 = vpop.permute.xlu0 %7592
        %7594 = vrot.lane.b32.xlu0 %v7109, 35
        %v7595 = vpop.permute.xlu0 %7594
        %7596 = vrot.lane.b32.xlu0 %v7110, 35
        %v7597 = vpop.permute.xlu0 %7596
        %7598 = vrot.lane.b32.xlu0 %v7111, 35
        %v7599 = vpop.permute.xlu0 %7598
        %7600 = vrot.lane.b32.xlu0 %v7112, 35
        %v7601 = vpop.permute.xlu0 %7600
        %7602 = vrot.lane.b32.xlu0 %v7113, 35
        %v7603 = vpop.permute.xlu0 %7602
        %7604 = vrot.lane.b32.xlu0 %v7125, 35
        %v7605 = vpop.permute.xlu0 %7604
        %7606 = vrot.lane.b32.xlu0 %v7115, 35
        %v7607 = vpop.permute.xlu0 %7606
        %7608 = vrot.lane.b32.xlu0 %v7116, 35
        %v7609 = vpop.permute.xlu0 %7608
        %7610 = vrot.lane.b32.xlu0 %v7117, 35
        %v7611 = vpop.permute.xlu0 %7610
        %7612 = vrot.lane.b32.xlu0 %v7118, 35
        %v7613 = vpop.permute.xlu0 %7612
        %7614 = vrot.lane.b32.xlu0 %v7119, 35
        %v7615 = vpop.permute.xlu0 %7614
        %7616 = vrot.lane.b32.xlu0 %v7120, 35
        %v7617 = vpop.permute.xlu0 %7616
        %7618 = vrot.lane.b32.xlu0 %v7121, 35
        %v7619 = vpop.permute.xlu0 %7618
        %7620 = vrot.lane.b32.xlu0 %v7122, 35
        %v7621 = vpop.permute.xlu0 %7620
        %7622 = vrot.lane.b32.xlu0 %v7127, 35
        %v7623 = vpop.permute.xlu0 %7622
        %7624 = vrot.lane.b32.xlu0 %v7182, 35
        %v7625 = vpop.permute.xlu0 %7624
        %7626 = vrot.lane.b32.xlu0 %v7183, 35
        %v7627 = vpop.permute.xlu0 %7626
        %7628 = vrot.lane.b32.xlu0 %v7184, 35
        %v7629 = vpop.permute.xlu0 %7628
        %7630 = vrot.lane.b32.xlu0 %v7185, 35
        %v7631 = vpop.permute.xlu0 %7630
        %7632 = vrot.lane.b32.xlu0 %v7186, 35
        %v7633 = vpop.permute.xlu0 %7632
        %7634 = vrot.lane.b32.xlu0 %v7187, 35
        %v7635 = vpop.permute.xlu0 %7634
        %7636 = vrot.lane.b32.xlu0 %v7188, 35
        %v7637 = vpop.permute.xlu0 %7636
        %7638 = vrot.lane.b32.xlu0 %v7189, 35
        %v7639 = vpop.permute.xlu0 %7638
        %7640 = vrot.lane.b32.xlu0 %v7190, 35
        %v7641 = vpop.permute.xlu0 %7640
        %7642 = vrot.lane.b32.xlu0 %v7163, 35
        %v7643 = vpop.permute.xlu0 %7642
        %7644 = vrot.lane.b32.xlu0 %v7191, 35
        %v7645 = vpop.permute.xlu0 %7644
        %7646 = vrot.lane.b32.xlu0 %v7192, 35
        %v7647 = vpop.permute.xlu0 %7646
        %7648 = vrot.lane.b32.xlu0 %v7193, 35
        %v7649 = vpop.permute.xlu0 %7648
        %7650 = vrot.lane.b32.xlu0 %v7194, 35
        %v7651 = vpop.permute.xlu0 %7650
        %7652 = vrot.lane.b32.xlu0 %v7195, 35
        %v7653 = vpop.permute.xlu0 %7652
        %7654 = vrot.lane.b32.xlu0 %v7196, 35
        %v7655 = vpop.permute.xlu0 %7654
        %7656 = vrot.lane.b32.xlu0 %v7197, 35
        %v7657 = vpop.permute.xlu0 %7656
        %7658 = vrot.lane.b32.xlu0 %v7198, 35
        %v7659 = vpop.permute.xlu0 %7658
        %7660 = vrot.lane.b32.xlu0 %v7199, 35
        %v7661 = vpop.permute.xlu0 %7660
        %7662 = vrot.lane.b32.xlu0 %v7181, 35
        %v7663 = vpop.permute.xlu0 %7662
        %7664 = vrot.lane.b32.xlu0 %v7236, 35
        %v7665 = vpop.permute.xlu0 %7664
        %7666 = vrot.lane.b32.xlu0 %v7237, 35
        %v7667 = vpop.permute.xlu0 %7666
        %7668 = vrot.lane.b32.xlu0 %v7238, 35
        %v7669 = vpop.permute.xlu0 %7668
        %7670 = vrot.lane.b32.xlu0 %v7239, 35
        %v7671 = vpop.permute.xlu0 %7670
        %7672 = vrot.lane.b32.xlu0 %v7240, 35
        %v7673 = vpop.permute.xlu0 %7672
        %7674 = vrot.lane.b32.xlu0 %v7241, 35
        %v7675 = vpop.permute.xlu0 %7674
        %7676 = vrot.lane.b32.xlu0 %v7242, 35
        %v7677 = vpop.permute.xlu0 %7676
        %7678 = vrot.lane.b32.xlu0 %v7243, 35
        %v7679 = vpop.permute.xlu0 %7678
        %7680 = vrot.lane.b32.xlu0 %v7244, 35
        %v7681 = vpop.permute.xlu0 %7680
        %7682 = vrot.lane.b32.xlu0 %v7217, 35
        %v7683 = vpop.permute.xlu0 %7682
        %7684 = vrot.lane.b32.xlu0 %v7245, 35
        %v7685 = vpop.permute.xlu0 %7684
        %7686 = vrot.lane.b32.xlu0 %v7246, 35
        %v7687 = vpop.permute.xlu0 %7686
        %7688 = vrot.lane.b32.xlu0 %v7247, 35
        %v7689 = vpop.permute.xlu0 %7688
        %7690 = vrot.lane.b32.xlu0 %v7248, 35
        %v7691 = vpop.permute.xlu0 %7690
        %7692 = vrot.lane.b32.xlu0 %v7249, 35
        %v7693 = vpop.permute.xlu0 %7692
        %7694 = vrot.lane.b32.xlu0 %v7250, 35
        %v7695 = vpop.permute.xlu0 %7694
        %7696 = vrot.lane.b32.xlu0 %v7251, 35
        %v7697 = vpop.permute.xlu0 %7696
        %7698 = vrot.lane.b32.xlu0 %v7252, 35
        %v7699 = vpop.permute.xlu0 %7698
        %7700 = vrot.lane.b32.xlu0 %v7253, 35
        %v7701 = vpop.permute.xlu0 %7700
        %7702 = vrot.lane.b32.xlu0 %v7235, 35
        %v7703 = vpop.permute.xlu0 %7702
        %7704 = vrot.lane.b32.xlu0 %v7290, 35
        %v7705 = vpop.permute.xlu0 %7704
        %7706 = vrot.lane.b32.xlu0 %v7291, 35
        %v7707 = vpop.permute.xlu0 %7706
        %7708 = vrot.lane.b32.xlu0 %v7292, 35
        %v7709 = vpop.permute.xlu0 %7708
        %7710 = vrot.lane.b32.xlu0 %v7293, 35
        %v7711 = vpop.permute.xlu0 %7710
        %7712 = vrot.lane.b32.xlu0 %v7294, 35
        %v7713 = vpop.permute.xlu0 %7712
        %7714 = vrot.lane.b32.xlu0 %v7295, 35
        %v7715 = vpop.permute.xlu0 %7714
        %7716 = vrot.lane.b32.xlu0 %v7296, 35
        %v7717 = vpop.permute.xlu0 %7716
        %7718 = vrot.lane.b32.xlu0 %v7297, 35
        %v7719 = vpop.permute.xlu0 %7718
        %7720 = vrot.lane.b32.xlu0 %v7298, 35
        %v7721 = vpop.permute.xlu0 %7720
        %7722 = vrot.lane.b32.xlu0 %v7271, 35
        %v7723 = vpop.permute.xlu0 %7722
        %7724 = vrot.lane.b32.xlu0 %v7299, 35
        %v7725 = vpop.permute.xlu0 %7724
        %7726 = vrot.lane.b32.xlu0 %v7300, 35
        %v7727 = vpop.permute.xlu0 %7726
        %7728 = vrot.lane.b32.xlu0 %v7301, 35
        %v7729 = vpop.permute.xlu0 %7728
        %7730 = vrot.lane.b32.xlu0 %v7302, 35
        %v7731 = vpop.permute.xlu0 %7730
        %7732 = vrot.lane.b32.xlu0 %v7303, 35
        %v7733 = vpop.permute.xlu0 %7732
        %7734 = vrot.lane.b32.xlu0 %v7304, 35
        %v7735 = vpop.permute.xlu0 %7734
        %7736 = vrot.lane.b32.xlu0 %v7305, 35
        %v7737 = vpop.permute.xlu0 %7736
        %7738 = vrot.lane.b32.xlu0 %v7306, 35
        %v7739 = vpop.permute.xlu0 %7738
        %7740 = vrot.lane.b32.xlu0 %v7307, 35
        %v7741 = vpop.permute.xlu0 %7740
        %7742 = vrot.lane.b32.xlu0 %v7289, 35
        %v7743 = vpop.permute.xlu0 %7742
        %7744 = vrot.lane.b32.xlu0 %v7309, 35
        %v7745 = vpop.permute.xlu0 %7744
        %7746 = vrot.lane.b32.xlu0 %v7344, 35
        %v7747 = vpop.permute.xlu0 %7746
        %7748 = vrot.lane.b32.xlu0 %v7345, 35
        %v7749 = vpop.permute.xlu0 %7748
        %7750 = vrot.lane.b32.xlu0 %v7346, 35
        %v7751 = vpop.permute.xlu0 %7750
        %7752 = vrot.lane.b32.xlu0 %v7347, 35
        %v7753 = vpop.permute.xlu0 %7752
        %7754 = vrot.lane.b32.xlu0 %v7348, 35
        %v7755 = vpop.permute.xlu0 %7754
        %7756 = vrot.lane.b32.xlu0 %v7349, 35
        %v7757 = vpop.permute.xlu0 %7756
        %7758 = vrot.lane.b32.xlu0 %v7350, 35
        %v7759 = vpop.permute.xlu0 %7758
        %7760 = vrot.lane.b32.xlu0 %v7351, 35
        %v7761 = vpop.permute.xlu0 %7760
        %7762 = vrot.lane.b32.xlu0 %v7325, 35
        %v7763 = vpop.permute.xlu0 %7762
        %7764 = vrot.lane.b32.xlu0 %v7327, 35
        %v7765 = vpop.permute.xlu0 %7764
        %7766 = vrot.lane.b32.xlu0 %v7352, 35
        %v7767 = vpop.permute.xlu0 %7766
        %7768 = vrot.lane.b32.xlu0 %v7353, 35
        %v7769 = vpop.permute.xlu0 %7768
        %7770 = vrot.lane.b32.xlu0 %v7354, 35
        %v7771 = vpop.permute.xlu0 %7770
        %7772 = vrot.lane.b32.xlu0 %v7355, 35
        %v7773 = vpop.permute.xlu0 %7772
        %7774 = vrot.lane.b32.xlu0 %v7356, 35
        %v7775 = vpop.permute.xlu0 %7774
        %7776 = vrot.lane.b32.xlu0 %v7357, 35
        %v7777 = vpop.permute.xlu0 %7776
        %7778 = vrot.lane.b32.xlu0 %v7358, 35
        %v7779 = vpop.permute.xlu0 %7778
        %7780 = vrot.lane.b32.xlu0 %v7359, 35
        %v7781 = vpop.permute.xlu0 %7780
        %7782 = vrot.lane.b32.xlu0 %v7343, 35
        %v7783 = vpop.permute.xlu0 %7782
        %7784 = vrot.lane.b32.xlu0 %v7361, 35
        %v7785 = vpop.permute.xlu0 %7784
        %7786 = vrot.lane.b32.xlu0 %v7396, 35
        %v7787 = vpop.permute.xlu0 %7786
        %7788 = vrot.lane.b32.xlu0 %v7397, 35
        %v7789 = vpop.permute.xlu0 %7788
        %7790 = vrot.lane.b32.xlu0 %v7398, 35
        %v7791 = vpop.permute.xlu0 %7790
        %7792 = vrot.lane.b32.xlu0 %v7399, 35
        %v7793 = vpop.permute.xlu0 %7792
        %7794 = vrot.lane.b32.xlu0 %v7400, 35
        %v7795 = vpop.permute.xlu0 %7794
        %7796 = vrot.lane.b32.xlu0 %v7401, 35
        %v7797 = vpop.permute.xlu0 %7796
        %7798 = vrot.lane.b32.xlu0 %v7402, 35
        %v7799 = vpop.permute.xlu0 %7798
        %7800 = vrot.lane.b32.xlu0 %v7403, 35
        %v7801 = vpop.permute.xlu0 %7800
        %7802 = vrot.lane.b32.xlu0 %v7377, 35
        %v7803 = vpop.permute.xlu0 %7802
        %7804 = vrot.lane.b32.xlu0 %v7379, 35
        %v7805 = vpop.permute.xlu0 %7804
        %7806 = vrot.lane.b32.xlu0 %v7404, 35
        %v7807 = vpop.permute.xlu0 %7806
        %7808 = vrot.lane.b32.xlu0 %v7405, 35
        %v7809 = vpop.permute.xlu0 %7808
        %7810 = vrot.lane.b32.xlu0 %v7406, 35
        %v7811 = vpop.permute.xlu0 %7810
        %7812 = vrot.lane.b32.xlu0 %v7407, 35
        %v7813 = vpop.permute.xlu0 %7812
        %7814 = vrot.lane.b32.xlu0 %v7408, 35
        %v7815 = vpop.permute.xlu0 %7814
        %7816 = vrot.lane.b32.xlu0 %v7409, 35
        %v7817 = vpop.permute.xlu0 %7816
        %7818 = vrot.lane.b32.xlu0 %v7410, 35
        %v7819 = vpop.permute.xlu0 %7818
        %7820 = vrot.lane.b32.xlu0 %v7411, 35
        %v7821 = vpop.permute.xlu0 %7820
        %7822 = vrot.lane.b32.xlu0 %v7395, 35
        %v7823 = vpop.permute.xlu0 %7822
        %7824 = vrot.lane.b32.xlu0 %v7413, 35
        %v7825 = vpop.permute.xlu0 %7824
        %7826 = vrot.lane.b32.xlu0 %v7448, 35
        %v7827 = vpop.permute.xlu0 %7826
        %7828 = vrot.lane.b32.xlu0 %v7449, 35
        %v7829 = vpop.permute.xlu0 %7828
        %7830 = vrot.lane.b32.xlu0 %v7450, 35
        %v7831 = vpop.permute.xlu0 %7830
        %7832 = vrot.lane.b32.xlu0 %v7451, 35
        %v7833 = vpop.permute.xlu0 %7832
        %7834 = vrot.lane.b32.xlu0 %v7452, 35
        %v7835 = vpop.permute.xlu0 %7834
        %7836 = vrot.lane.b32.xlu0 %v7453, 35
        %v7837 = vpop.permute.xlu0 %7836
        %7838 = vrot.lane.b32.xlu0 %v7454, 35
        %v7839 = vpop.permute.xlu0 %7838
        %7840 = vrot.lane.b32.xlu0 %v7455, 35
        %v7841 = vpop.permute.xlu0 %7840
        %7842 = vrot.lane.b32.xlu0 %v7429, 35
        %v7843 = vpop.permute.xlu0 %7842
        %7844 = vrot.lane.b32.xlu0 %v7431, 35
        %v7845 = vpop.permute.xlu0 %7844
        %7846 = vrot.lane.b32.xlu0 %v7456, 35
        %v7847 = vpop.permute.xlu0 %7846
        %7848 = vrot.lane.b32.xlu0 %v7457, 35
        %v7849 = vpop.permute.xlu0 %7848
        %7850 = vrot.lane.b32.xlu0 %v7458, 35
        %v7851 = vpop.permute.xlu0 %7850
        %7852 = vrot.lane.b32.xlu0 %v7459, 35
        %v7853 = vpop.permute.xlu0 %7852
        %7854 = vrot.lane.b32.xlu0 %v7460, 35
        %v7855 = vpop.permute.xlu0 %7854
        %7856 = vrot.lane.b32.xlu0 %v7461, 35
        %v7857 = vpop.permute.xlu0 %7856
        %7858 = vrot.lane.b32.xlu0 %v7462, 35
        %v7859 = vpop.permute.xlu0 %7858
        %7860 = vrot.lane.b32.xlu0 %v7463, 35
        %v7861 = vpop.permute.xlu0 %7860
        %7862 = vrot.lane.b32.xlu0 %v7447, 35
        %v7863 = vpop.permute.xlu0 %7862
        %7864 = vrot.lane.b32.xlu0 %v7465, 35
        %v7865 = vpop.permute.xlu0 %7864
        %7866 = vrot.lane.b32.xlu0 %v7500, 35
        %v7867 = vpop.permute.xlu0 %7866
        %7868 = vrot.lane.b32.xlu0 %v7501, 35
        %v7869 = vpop.permute.xlu0 %7868
        %7870 = vrot.lane.b32.xlu0 %v7502, 35
        %v7871 = vpop.permute.xlu0 %7870
        %7872 = vrot.lane.b32.xlu0 %v7503, 35
        %v7873 = vpop.permute.xlu0 %7872
        %7874 = vrot.lane.b32.xlu0 %v7504, 35
        %v7875 = vpop.permute.xlu0 %7874
        %7876 = vrot.lane.b32.xlu0 %v7505, 35
        %v7877 = vpop.permute.xlu0 %7876
        %7878 = vrot.lane.b32.xlu0 %v7506, 35
        %v7879 = vpop.permute.xlu0 %7878
        %7880 = vrot.lane.b32.xlu0 %v7507, 35
        %v7881 = vpop.permute.xlu0 %7880
        %7882 = vrot.lane.b32.xlu0 %v7481, 35
        %v7883 = vpop.permute.xlu0 %7882
        %7884 = vrot.lane.b32.xlu0 %v7483, 35
        %v7885 = vpop.permute.xlu0 %7884
        %7886 = vrot.lane.b32.xlu0 %v7508, 35
        %v7887 = vpop.permute.xlu0 %7886
        %7888 = vrot.lane.b32.xlu0 %v7509, 35
        %v7889 = vpop.permute.xlu0 %7888
        %7890 = vrot.lane.b32.xlu0 %v7510, 35
        %v7891 = vpop.permute.xlu0 %7890
        %7892 = vrot.lane.b32.xlu0 %v7511, 35
        %v7893 = vpop.permute.xlu0 %7892
        %7894 = vrot.lane.b32.xlu0 %v7512, 35
        %v7895 = vpop.permute.xlu0 %7894
        %7896 = vrot.lane.b32.xlu0 %v7513, 35
        %v7897 = vpop.permute.xlu0 %7896
        %7898 = vrot.lane.b32.xlu0 %v7514, 35
        %v7899 = vpop.permute.xlu0 %7898
        %7900 = vrot.lane.b32.xlu0 %v7515, 35
        %v7901 = vpop.permute.xlu0 %7900
        %7902 = vrot.lane.b32.xlu0 %v7499, 35
        %v7903 = vpop.permute.xlu0 %7902
        %7904 = vrot.lane.b32.xlu0 %v7517, 35
        %v7905 = vpop.permute.xlu0 %7904
        %7906 = vrot.lane.b32.xlu0 %v7552, 35
        %v7907 = vpop.permute.xlu0 %7906
        %7908 = vrot.lane.b32.xlu0 %v7553, 35
        %v7909 = vpop.permute.xlu0 %7908
        %7910 = vrot.lane.b32.xlu0 %v7554, 35
        %v7911 = vpop.permute.xlu0 %7910
        %7912 = vrot.lane.b32.xlu0 %v7555, 35
        %v7913 = vpop.permute.xlu0 %7912
        %7914 = vrot.lane.b32.xlu0 %v7556, 35
        %v7915 = vpop.permute.xlu0 %7914
        %7916 = vrot.lane.b32.xlu0 %v7557, 35
        %v7917 = vpop.permute.xlu0 %7916
        %7918 = vrot.lane.b32.xlu0 %v7558, 35
        %v7919 = vpop.permute.xlu0 %7918
        %7920 = vrot.lane.b32.xlu0 %v7559, 35
        %v7921 = vpop.permute.xlu0 %7920
        %7922 = vrot.lane.b32.xlu0 %v7533, 35
        %v7923 = vpop.permute.xlu0 %7922
        %7924 = vrot.lane.b32.xlu0 %v7535, 35
        %v7925 = vpop.permute.xlu0 %7924
        %7926 = vrot.lane.b32.xlu0 %v7560, 35
        %v7927 = vpop.permute.xlu0 %7926
        %7928 = vrot.lane.b32.xlu0 %v7561, 35
        %v7929 = vpop.permute.xlu0 %7928
        %7930 = vrot.lane.b32.xlu0 %v7562, 35
        %v7931 = vpop.permute.xlu0 %7930
        %7932 = vrot.lane.b32.xlu0 %v7563, 35
        %v7933 = vpop.permute.xlu0 %7932
        %7934 = vrot.lane.b32.xlu0 %v7564, 35
        %v7935 = vpop.permute.xlu0 %7934
        %7936 = vrot.lane.b32.xlu0 %v7565, 35
        %v7937 = vpop.permute.xlu0 %7936
        %7938 = vrot.lane.b32.xlu0 %v7566, 35
        %v7939 = vpop.permute.xlu0 %7938
        %7940 = vrot.lane.b32.xlu0 %v7567, 35
        %v7941 = vpop.permute.xlu0 %7940
        %7942 = vrot.lane.b32.xlu0 %v7551, 35
        %v7943 = vpop.permute.xlu0 %7942
        %v7944 = vsel %vm2820, %v4800, %v7589
        %v7945 = vsel %vm2820, %v7589, %v7591
        %v7946 = vsel %vm2820, %v7591, %v7593
        %v7947 = vsel %vm2820, %v7593, %v7595
        %v7948 = vsel %vm2820, %v7595, %v7597
        %v7949 = vsel %vm2820, %v7597, %v7599
        %v7950 = vsel %vm2820, %v7599, %v7601
        %v7951 = vsel %vm2820, %v7601, %v7603
        %v7952 = vsel %vm2820, %v7603, %v7605
        %v7953 = vsel %vm2820, %v4800, %v7607
        %v7954 = vsel %vm2820, %v7607, %v7609
        %v7955 = vsel %vm2820, %v7609, %v7611
        %v7956 = vsel %vm2820, %v7611, %v7613
        %v7957 = vsel %vm2820, %v7613, %v7615
        %v7958 = vsel %vm2820, %v7615, %v7617
        %v7959 = vsel %vm2820, %v7617, %v7619
        %v7960 = vsel %vm2820, %v7619, %v7621
        %v7961 = vsel %vm2820, %v7621, %v7623
        %v7962 = vsel %vm2820, %v7625, %v7627
        %v7963 = vsel %vm2820, %v7627, %v7629
        %v7964 = vsel %vm2820, %v7629, %v7631
        %v7965 = vsel %vm2820, %v7631, %v7633
        %v7966 = vsel %vm2820, %v7633, %v7635
        %v7967 = vsel %vm2820, %v7635, %v7637
        %v7968 = vsel %vm2820, %v7637, %v7639
        %v7969 = vsel %vm2820, %v7639, %v7641
        %v7970 = vsel %vm2820, %v7641, %v7643
        %v7971 = vsel %vm2820, %v7645, %v7647
        %v7972 = vsel %vm2820, %v7647, %v7649
        %v7973 = vsel %vm2820, %v7649, %v7651
        %v7974 = vsel %vm2820, %v7651, %v7653
        %v7975 = vsel %vm2820, %v7653, %v7655
        %v7976 = vsel %vm2820, %v7655, %v7657
        %v7977 = vsel %vm2820, %v7657, %v7659
        %v7978 = vsel %vm2820, %v7659, %v7661
        %v7979 = vsel %vm2820, %v7661, %v7663
        %v7980 = vsel %vm2820, %v7665, %v7667
        %v7981 = vsel %vm2820, %v7667, %v7669
        %v7982 = vsel %vm2820, %v7669, %v7671
        %v7983 = vsel %vm2820, %v7671, %v7673
        %v7984 = vsel %vm2820, %v7673, %v7675
        %v7985 = vsel %vm2820, %v7675, %v7677
        %v7986 = vsel %vm2820, %v7677, %v7679
        %v7987 = vsel %vm2820, %v7679, %v7681
        %v7988 = vsel %vm2820, %v7681, %v7683
        %v7989 = vsel %vm2820, %v7685, %v7687
        %v7990 = vsel %vm2820, %v7687, %v7689
        %v7991 = vsel %vm2820, %v7689, %v7691
        %v7992 = vsel %vm2820, %v7691, %v7693
        %v7993 = vsel %vm2820, %v7693, %v7695
        %v7994 = vsel %vm2820, %v7695, %v7697
        %v7995 = vsel %vm2820, %v7697, %v7699
        %v7996 = vsel %vm2820, %v7699, %v7701
        %v7997 = vsel %vm2820, %v7701, %v7703
        %v7998 = vsel %vm2820, %v7705, %v7707
        %v7999 = vsel %vm2820, %v7707, %v7709
        %v8000 = vsel %vm2820, %v7709, %v7711
        %v8001 = vsel %vm2820, %v7711, %v7713
        %v8002 = vsel %vm2820, %v7713, %v7715
        %v8003 = vsel %vm2820, %v7715, %v7717
        %v8004 = vsel %vm2820, %v7717, %v7719
        %v8005 = vsel %vm2820, %v7719, %v7721
        %v8006 = vsel %vm2820, %v7721, %v7723
        %v8007 = vsel %vm2820, %v7725, %v7727
        %v8008 = vsel %vm2820, %v7727, %v7729
        %v8009 = vsel %vm2820, %v7729, %v7731
        %v8010 = vsel %vm2820, %v7731, %v7733
        %v8011 = vsel %vm2820, %v7733, %v7735
        %v8012 = vsel %vm2820, %v7735, %v7737
        %v8013 = vsel %vm2820, %v7737, %v7739
        %v8014 = vsel %vm2820, %v7739, %v7741
        %v8015 = vsel %vm2820, %v7741, %v7743
        %v8016 = vsel %vm2820, %v7745, %v7747
        %v8017 = vsel %vm2820, %v7747, %v7749
        %v8018 = vsel %vm2820, %v7749, %v7751
        %v8019 = vsel %vm2820, %v7751, %v7753
        %v8020 = vsel %vm2820, %v7753, %v7755
        %v8021 = vsel %vm2820, %v7755, %v7757
        %v8022 = vsel %vm2820, %v7757, %v7759
        %v8023 = vsel %vm2820, %v7759, %v7761
        %v8024 = vsel %vm2820, %v7761, %v7763
        %v8025 = vsel %vm2820, %v7765, %v7767
        %v8026 = vsel %vm2820, %v7767, %v7769
        %v8027 = vsel %vm2820, %v7769, %v7771
        %v8028 = vsel %vm2820, %v7771, %v7773
        %v8029 = vsel %vm2820, %v7773, %v7775
        %v8030 = vsel %vm2820, %v7775, %v7777
        %v8031 = vsel %vm2820, %v7777, %v7779
        %v8032 = vsel %vm2820, %v7779, %v7781
        %v8033 = vsel %vm2820, %v7781, %v7783
        %v8034 = vsel %vm2820, %v7785, %v7787
        %v8035 = vsel %vm2820, %v7787, %v7789
        %v8036 = vsel %vm2820, %v7789, %v7791
        %v8037 = vsel %vm2820, %v7791, %v7793
        %v8038 = vsel %vm2820, %v7793, %v7795
        %v8039 = vsel %vm2820, %v7795, %v7797
        %v8040 = vsel %vm2820, %v7797, %v7799
        %v8041 = vsel %vm2820, %v7799, %v7801
        %v8042 = vsel %vm2820, %v7801, %v7803
        %v8043 = vsel %vm2820, %v7805, %v7807
        %v8044 = vsel %vm2820, %v7807, %v7809
        %v8045 = vsel %vm2820, %v7809, %v7811
        %v8046 = vsel %vm2820, %v7811, %v7813
        %v8047 = vsel %vm2820, %v7813, %v7815
        %v8048 = vsel %vm2820, %v7815, %v7817
        %v8049 = vsel %vm2820, %v7817, %v7819
        %v8050 = vsel %vm2820, %v7819, %v7821
        %v8051 = vsel %vm2820, %v7821, %v7823
        %v8052 = vsel %vm2820, %v7825, %v7827
        %v8053 = vsel %vm2820, %v7827, %v7829
        %v8054 = vsel %vm2820, %v7829, %v7831
        %v8055 = vsel %vm2820, %v7831, %v7833
        %v8056 = vsel %vm2820, %v7833, %v7835
        %v8057 = vsel %vm2820, %v7835, %v7837
        %v8058 = vsel %vm2820, %v7837, %v7839
        %v8059 = vsel %vm2820, %v7839, %v7841
        %v8060 = vsel %vm2820, %v7841, %v7843
        %v8061 = vsel %vm2820, %v7845, %v7847
        %v8062 = vsel %vm2820, %v7847, %v7849
        %v8063 = vsel %vm2820, %v7849, %v7851
        %v8064 = vsel %vm2820, %v7851, %v7853
        %v8065 = vsel %vm2820, %v7853, %v7855
        %v8066 = vsel %vm2820, %v7855, %v7857
        %v8067 = vsel %vm2820, %v7857, %v7859
        %v8068 = vsel %vm2820, %v7859, %v7861
        %v8069 = vsel %vm2820, %v7861, %v7863
        %v8070 = vsel %vm2820, %v7865, %v7867
        %v8071 = vsel %vm2820, %v7867, %v7869
        %v8072 = vsel %vm2820, %v7869, %v7871
        %v8073 = vsel %vm2820, %v7871, %v7873
        %v8074 = vsel %vm2820, %v7873, %v7875
        %v8075 = vsel %vm2820, %v7875, %v7877
        %v8076 = vsel %vm2820, %v7877, %v7879
        %v8077 = vsel %vm2820, %v7879, %v7881
        %v8078 = vsel %vm2820, %v7881, %v7883
        %v8079 = vsel %vm2820, %v7885, %v7887
        %v8080 = vsel %vm2820, %v7887, %v7889
        %v8081 = vsel %vm2820, %v7889, %v7891
        %v8082 = vsel %vm2820, %v7891, %v7893
        %v8083 = vsel %vm2820, %v7893, %v7895
        %v8084 = vsel %vm2820, %v7895, %v7897
        %v8085 = vsel %vm2820, %v7897, %v7899
        %v8086 = vsel %vm2820, %v7899, %v7901
        %v8087 = vsel %vm2820, %v7901, %v7903
        %v8088 = vsel %vm2820, %v7905, %v7907
        %v8089 = vsel %vm2820, %v7907, %v7909
        %v8090 = vsel %vm2820, %v7909, %v7911
        %v8091 = vsel %vm2820, %v7911, %v7913
        %v8092 = vsel %vm2820, %v7913, %v7915
        %v8093 = vsel %vm2820, %v7915, %v7917
        %v8094 = vsel %vm2820, %v7917, %v7919
        %v8095 = vsel %vm2820, %v7919, %v7921
        %v8096 = vsel %vm2820, %v7921, %v7923
        %v8097 = vsel %vm2820, %v7925, %v7927
        %v8098 = vsel %vm2820, %v7927, %v7929
        %v8099 = vsel %vm2820, %v7929, %v7931
        %v8100 = vsel %vm2820, %v7931, %v7933
        %v8101 = vsel %vm2820, %v7933, %v7935
        %v8102 = vsel %vm2820, %v7935, %v7937
        %v8103 = vsel %vm2820, %v7937, %v7939
        %v8104 = vsel %vm2820, %v7939, %v7941
        %v8105 = vsel %vm2820, %v7941, %v7943
        %v8269 = vsel %vm1866, %v7584, 0
        %8271 = vmatprep.subr.bf16.mxu0 %v8008
        %8272 = vmatpush1.bf16.msra.mxu0 %v8007
        %8273 = vmatprep.subr.bf16.mxu0 %v7999
        %8274 = vmatpush1.bf16.msra.mxu0 %v7998
        %8275 = vmatprep.subr.bf16.mxu0 %v7990
        %8276 = vmatpush1.bf16.msra.mxu0 %v7989
        %8277 = vmatprep.subr.bf16.mxu0 %v7981
        %8278 = vmatpush1.bf16.msra.mxu0 %v7980
        %8279 = vmatprep.subr.bf16.mxu0 %v7972
        %8280 = vmatpush1.bf16.msra.mxu0 %v7971
        %8281 = vmatprep.subr.bf16.mxu0 %v7963
        %8282 = vmatpush1.bf16.msra.mxu0 %v7962
        %8283 = vmatprep.subr.bf16.mxu0 %v7954
        %8284 = vmatpush1.bf16.msra.mxu0 %v7953
        %8285 = vmatprep.subr.bf16.mxu0 %v7945
        %8286 = vmatpush1.bf16.msra.mxu0 %v7944
        %8287 = vmatprep.subr.bf16.mxu0 %v8080
        %8288 = vmatpush2.bf16.msra.mxu0 %v8079
        %8289 = vmatprep.subr.bf16.mxu0 %v8071
        %8290 = vmatpush2.bf16.msra.mxu0 %v8070
        %8291 = vmatprep.subr.bf16.mxu0 %v8062
        %8292 = vmatpush2.bf16.msra.mxu0 %v8061
        %8293 = vmatprep.subr.bf16.mxu0 %v8053
        %8294 = vmatpush2.bf16.msra.mxu0 %v8052
        %8295 = vmatprep.subr.bf16.mxu0 %v8044
        %8296 = vmatpush2.bf16.msra.mxu0 %v8043
        %8297 = vmatprep.subr.bf16.mxu0 %v8035
        %8298 = vmatpush2.bf16.msra.mxu0 %v8034
        %8299 = vmatprep.subr.bf16.mxu0 %v8026
        %8300 = vmatpush2.bf16.msra.mxu0 %v8025
        %8301 = vmatprep.subr.bf16.mxu0 %v8017
        %8302 = vmatpush2.bf16.msra.mxu0 %v8016
        %8303 = vmatprep.mubr.bf16.mxu0 %v7585
        %8304 = vmatmul.mubr.bf16.gmra.mxu0 %v7577
        %v8305 = vpop.f32.mrf.mxu0
        %v8306 = vadd.f32 0.0, %v8305
        %v8307 = vpop.f32.mrf.mxu0
        %v8308 = vadd.f32 0.0, %v8307
        %v8309 = vpop.f32.mrf.mxu0
        %v8310 = vpop.f32.mrf.mxu0
        %8311 = vdwg.mxu0
        %8312 = vmatprep.subr.bf16.mxu0 0
        %8313 = vmatpush1.bf16.msra.mxu0 0
        %8314 = vmatprep.subr.bf16.mxu0 0
        %8315 = vmatpush1.bf16.msra.mxu0 0
        %8316 = vmatprep.subr.bf16.mxu0 0
        %8317 = vmatpush1.bf16.msra.mxu0 0
        %8318 = vmatprep.subr.bf16.mxu0 0
        %8319 = vmatpush1.bf16.msra.mxu0 0
        %8320 = vmatprep.subr.bf16.mxu0 0
        %8321 = vmatpush1.bf16.msra.mxu0 0
        %8322 = vmatprep.subr.bf16.mxu0 0
        %8323 = vmatpush1.bf16.msra.mxu0 0
        %8324 = vmatprep.subr.bf16.mxu0 %v8098
        %8325 = vmatpush1.bf16.msra.mxu0 %v8097
        %8326 = vmatprep.subr.bf16.mxu0 %v8089
        %8327 = vmatpush1.bf16.msra.mxu0 %v8088
        %8328 = vmatprep.subr.bf16.mxu0 0
        %8329 = vmatpush2.bf16.msra.mxu0 0
        %8330 = vmatprep.subr.bf16.mxu0 0
        %8331 = vmatpush2.bf16.msra.mxu0 0
        %8332 = vmatprep.subr.bf16.mxu0 0
        %8333 = vmatpush2.bf16.msra.mxu0 0
        %8334 = vmatprep.subr.bf16.mxu0 0
        %8335 = vmatpush2.bf16.msra.mxu0 0
        %8336 = vmatprep.subr.bf16.mxu0 0
        %8337 = vmatpush2.bf16.msra.mxu0 0
        %8338 = vmatprep.subr.bf16.mxu0 0
        %8339 = vmatpush2.bf16.msra.mxu0 0
        %8340 = vmatprep.subr.bf16.mxu0 0
        %8341 = vmatpush2.bf16.msra.mxu0 0
        %8342 = vmatprep.subr.bf16.mxu0 0
        %8343 = vmatpush2.bf16.msra.mxu0 0
        %8344 = vmatprep.mubr.bf16.mxu0 0
        %8345 = vmatmul.mubr.bf16.gmra.mxu0 %v8269
        %v8346 = vpop.f32.mrf.mxu0
        %v8347 = vadd.f32 %v8306, %v8346
        %v8348 = vpop.f32.mrf.mxu0
        %v8349 = vadd.f32 %v8308, %v8348
        %v8350 = vpop.f32.mrf.mxu0
        %v8351 = vpop.f32.mrf.mxu0
        %8352 = vdwg.mxu0
        %8353 = vmatprep.subr.bf16.mxu0 %v8010
        %8354 = vmatpush1.bf16.msra.mxu0 %v8009
        %8355 = vmatprep.subr.bf16.mxu0 %v8001
        %8356 = vmatpush1.bf16.msra.mxu0 %v8000
        %8357 = vmatprep.subr.bf16.mxu0 %v7992
        %8358 = vmatpush1.bf16.msra.mxu0 %v7991
        %8359 = vmatprep.subr.bf16.mxu0 %v7983
        %8360 = vmatpush1.bf16.msra.mxu0 %v7982
        %8361 = vmatprep.subr.bf16.mxu0 %v7974
        %8362 = vmatpush1.bf16.msra.mxu0 %v7973
        %8363 = vmatprep.subr.bf16.mxu0 %v7965
        %8364 = vmatpush1.bf16.msra.mxu0 %v7964
        %8365 = vmatprep.subr.bf16.mxu0 %v7956
        %8366 = vmatpush1.bf16.msra.mxu0 %v7955
        %8367 = vmatprep.subr.bf16.mxu0 %v7947
        %8368 = vmatpush1.bf16.msra.mxu0 %v7946
        %8369 = vmatprep.subr.bf16.mxu0 %v8082
        %8370 = vmatpush2.bf16.msra.mxu0 %v8081
        %8371 = vmatprep.subr.bf16.mxu0 %v8073
        %8372 = vmatpush2.bf16.msra.mxu0 %v8072
        %8373 = vmatprep.subr.bf16.mxu0 %v8064
        %8374 = vmatpush2.bf16.msra.mxu0 %v8063
        %8375 = vmatprep.subr.bf16.mxu0 %v8055
        %8376 = vmatpush2.bf16.msra.mxu0 %v8054
        %8377 = vmatprep.subr.bf16.mxu0 %v8046
        %8378 = vmatpush2.bf16.msra.mxu0 %v8045
        %8379 = vmatprep.subr.bf16.mxu0 %v8037
        %8380 = vmatpush2.bf16.msra.mxu0 %v8036
        %8381 = vmatprep.subr.bf16.mxu0 %v8028
        %8382 = vmatpush2.bf16.msra.mxu0 %v8027
        %8383 = vmatprep.subr.bf16.mxu0 %v8019
        %8384 = vmatpush2.bf16.msra.mxu0 %v8018
        %8385 = vmatprep.mubr.bf16.mxu0 %v7585
        %8386 = vmatmul.mubr.bf16.gmra.mxu0 %v7577
        %v8387 = vpop.f32.mrf.mxu0
        %v8388 = vadd.f32 0.0, %v8387
        %v8389 = vpop.f32.mrf.mxu0
        %v8390 = vadd.f32 0.0, %v8389
        %v8391 = vpop.f32.mrf.mxu0
        %v8392 = vpop.f32.mrf.mxu0
        %8393 = vdwg.mxu0
        %8394 = vmatprep.subr.bf16.mxu0 0
        %8395 = vmatpush1.bf16.msra.mxu0 0
        %8396 = vmatprep.subr.bf16.mxu0 0
        %8397 = vmatpush1.bf16.msra.mxu0 0
        %8398 = vmatprep.subr.bf16.mxu0 0
        %8399 = vmatpush1.bf16.msra.mxu0 0
        %8400 = vmatprep.subr.bf16.mxu0 0
        %8401 = vmatpush1.bf16.msra.mxu0 0
        %8402 = vmatprep.subr.bf16.mxu0 0
        %8403 = vmatpush1.bf16.msra.mxu0 0
        %8404 = vmatprep.subr.bf16.mxu0 0
        %8405 = vmatpush1.bf16.msra.mxu0 0
        %8406 = vmatprep.subr.bf16.mxu0 %v8100
        %8407 = vmatpush1.bf16.msra.mxu0 %v8099
        %8408 = vmatprep.subr.bf16.mxu0 %v8091
        %8409 = vmatpush1.bf16.msra.mxu0 %v8090
        %8410 = vmatprep.subr.bf16.mxu0 0
        %8411 = vmatpush2.bf16.msra.mxu0 0
        %8412 = vmatprep.subr.bf16.mxu0 0
        %8413 = vmatpush2.bf16.msra.mxu0 0
        %8414 = vmatprep.subr.bf16.mxu0 0
        %8415 = vmatpush2.bf16.msra.mxu0 0
        %8416 = vmatprep.subr.bf16.mxu0 0
        %8417 = vmatpush2.bf16.msra.mxu0 0
        %8418 = vmatprep.subr.bf16.mxu0 0
        %8419 = vmatpush2.bf16.msra.mxu0 0
        %8420 = vmatprep.subr.bf16.mxu0 0
        %8421 = vmatpush2.bf16.msra.mxu0 0
        %8422 = vmatprep.subr.bf16.mxu0 0
        %8423 = vmatpush2.bf16.msra.mxu0 0
        %8424 = vmatprep.subr.bf16.mxu0 0
        %8425 = vmatpush2.bf16.msra.mxu0 0
        %8426 = vmatprep.mubr.bf16.mxu0 0
        %8427 = vmatmul.mubr.bf16.gmra.mxu0 %v8269
        %v8428 = vpop.f32.mrf.mxu0
        %v8429 = vadd.f32 %v8388, %v8428
        %v8430 = vpop.f32.mrf.mxu0
        %v8431 = vadd.f32 %v8390, %v8430
        %v8432 = vpop.f32.mrf.mxu0
        %v8433 = vpop.f32.mrf.mxu0
        %8434 = vdwg.mxu0
        %8435 = vmatprep.subr.bf16.mxu0 %v8012
        %8436 = vmatpush1.bf16.msra.mxu0 %v8011
        %8437 = vmatprep.subr.bf16.mxu0 %v8003
        %8438 = vmatpush1.bf16.msra.mxu0 %v8002
        %8439 = vmatprep.subr.bf16.mxu0 %v7994
        %8440 = vmatpush1.bf16.msra.mxu0 %v7993
        %8441 = vmatprep.subr.bf16.mxu0 %v7985
        %8442 = vmatpush1.bf16.msra.mxu0 %v7984
        %8443 = vmatprep.subr.bf16.mxu0 %v7976
        %8444 = vmatpush1.bf16.msra.mxu0 %v7975
        %8445 = vmatprep.subr.bf16.mxu0 %v7967
        %8446 = vmatpush1.bf16.msra.mxu0 %v7966
        %8447 = vmatprep.subr.bf16.mxu0 %v7958
        %8448 = vmatpush1.bf16.msra.mxu0 %v7957
        %8449 = vmatprep.subr.bf16.mxu0 %v7949
        %8450 = vmatpush1.bf16.msra.mxu0 %v7948
        %8451 = vmatprep.subr.bf16.mxu0 %v8084
        %8452 = vmatpush2.bf16.msra.mxu0 %v8083
        %8453 = vmatprep.subr.bf16.mxu0 %v8075
        %8454 = vmatpush2.bf16.msra.mxu0 %v8074
        %8455 = vmatprep.subr.bf16.mxu0 %v8066
        %8456 = vmatpush2.bf16.msra.mxu0 %v8065
        %8457 = vmatprep.subr.bf16.mxu0 %v8057
        %8458 = vmatpush2.bf16.msra.mxu0 %v8056
        %8459 = vmatprep.subr.bf16.mxu0 %v8048
        %8460 = vmatpush2.bf16.msra.mxu0 %v8047
        %8461 = vmatprep.subr.bf16.mxu0 %v8039
        %8462 = vmatpush2.bf16.msra.mxu0 %v8038
        %8463 = vmatprep.subr.bf16.mxu0 %v8030
        %8464 = vmatpush2.bf16.msra.mxu0 %v8029
        %8465 = vmatprep.subr.bf16.mxu0 %v8021
        %8466 = vmatpush2.bf16.msra.mxu0 %v8020
        %8467 = vmatprep.mubr.bf16.mxu0 %v7585
        %8468 = vmatmul.mubr.bf16.gmra.mxu0 %v7577
        %v8469 = vpop.f32.mrf.mxu0
        %v8470 = vadd.f32 0.0, %v8469
        %v8471 = vpop.f32.mrf.mxu0
        %v8472 = vadd.f32 0.0, %v8471
        %v8473 = vpop.f32.mrf.mxu0
        %v8474 = vpop.f32.mrf.mxu0
        %8475 = vdwg.mxu0
        %8476 = vmatprep.subr.bf16.mxu0 0
        %8477 = vmatpush1.bf16.msra.mxu0 0
        %8478 = vmatprep.subr.bf16.mxu0 0
        %8479 = vmatpush1.bf16.msra.mxu0 0
        %8480 = vmatprep.subr.bf16.mxu0 0
        %8481 = vmatpush1.bf16.msra.mxu0 0
        %8482 = vmatprep.subr.bf16.mxu0 0
        %8483 = vmatpush1.bf16.msra.mxu0 0
        %8484 = vmatprep.subr.bf16.mxu0 0
        %8485 = vmatpush1.bf16.msra.mxu0 0
        %8486 = vmatprep.subr.bf16.mxu0 0
        %8487 = vmatpush1.bf16.msra.mxu0 0
        %8488 = vmatprep.subr.bf16.mxu0 %v8102
        %8489 = vmatpush1.bf16.msra.mxu0 %v8101
        %8490 = vmatprep.subr.bf16.mxu0 %v8093
        %8491 = vmatpush1.bf16.msra.mxu0 %v8092
        %8492 = vmatprep.subr.bf16.mxu0 0
        %8493 = vmatpush2.bf16.msra.mxu0 0
        %8494 = vmatprep.subr.bf16.mxu0 0
        %8495 = vmatpush2.bf16.msra.mxu0 0
        %8496 = vmatprep.subr.bf16.mxu0 0
        %8497 = vmatpush2.bf16.msra.mxu0 0
        %8498 = vmatprep.subr.bf16.mxu0 0
        %8499 = vmatpush2.bf16.msra.mxu0 0
        %8500 = vmatprep.subr.bf16.mxu0 0
        %8501 = vmatpush2.bf16.msra.mxu0 0
        %8502 = vmatprep.subr.bf16.mxu0 0
        %8503 = vmatpush2.bf16.msra.mxu0 0
        %8504 = vmatprep.subr.bf16.mxu0 0
        %8505 = vmatpush2.bf16.msra.mxu0 0
        %8506 = vmatprep.subr.bf16.mxu0 0
        %8507 = vmatpush2.bf16.msra.mxu0 0
        %8508 = vmatprep.mubr.bf16.mxu0 0
        %8509 = vmatmul.mubr.bf16.gmra.mxu0 %v8269
        %v8510 = vpop.f32.mrf.mxu0
        %v8511 = vadd.f32 %v8470, %v8510
        %v8512 = vpop.f32.mrf.mxu0
        %v8513 = vadd.f32 %v8472, %v8512
        %v8514 = vpop.f32.mrf.mxu0
        %v8515 = vpop.f32.mrf.mxu0
        %8516 = vdwg.mxu0
        %8517 = vmatprep.subr.bf16.mxu0 %v8014
        %8518 = vmatpush1.bf16.msra.mxu0 %v8013
        %8519 = vmatprep.subr.bf16.mxu0 %v8005
        %8520 = vmatpush1.bf16.msra.mxu0 %v8004
        %8521 = vmatprep.subr.bf16.mxu0 %v7996
        %8522 = vmatpush1.bf16.msra.mxu0 %v7995
        %8523 = vmatprep.subr.bf16.mxu0 %v7987
        %8524 = vmatpush1.bf16.msra.mxu0 %v7986
        %8525 = vmatprep.subr.bf16.mxu0 %v7978
        %8526 = vmatpush1.bf16.msra.mxu0 %v7977
        %8527 = vmatprep.subr.bf16.mxu0 %v7969
        %8528 = vmatpush1.bf16.msra.mxu0 %v7968
        %8529 = vmatprep.subr.bf16.mxu0 %v7960
        %8530 = vmatpush1.bf16.msra.mxu0 %v7959
        %8531 = vmatprep.subr.bf16.mxu0 %v7951
        %8532 = vmatpush1.bf16.msra.mxu0 %v7950
        %8533 = vmatprep.subr.bf16.mxu0 %v8086
        %8534 = vmatpush2.bf16.msra.mxu0 %v8085
        %8535 = vmatprep.subr.bf16.mxu0 %v8077
        %8536 = vmatpush2.bf16.msra.mxu0 %v8076
        %8537 = vmatprep.subr.bf16.mxu0 %v8068
        %8538 = vmatpush2.bf16.msra.mxu0 %v8067
        %8539 = vmatprep.subr.bf16.mxu0 %v8059
        %8540 = vmatpush2.bf16.msra.mxu0 %v8058
        %8541 = vmatprep.subr.bf16.mxu0 %v8050
        %8542 = vmatpush2.bf16.msra.mxu0 %v8049
        %8543 = vmatprep.subr.bf16.mxu0 %v8041
        %8544 = vmatpush2.bf16.msra.mxu0 %v8040
        %8545 = vmatprep.subr.bf16.mxu0 %v8032
        %8546 = vmatpush2.bf16.msra.mxu0 %v8031
        %8547 = vmatprep.subr.bf16.mxu0 %v8023
        %8548 = vmatpush2.bf16.msra.mxu0 %v8022
        %8549 = vmatprep.mubr.bf16.mxu0 %v7585
        %8550 = vmatmul.mubr.bf16.gmra.mxu0 %v7577
        %v8551 = vpop.f32.mrf.mxu0
        %v8552 = vadd.f32 0.0, %v8551
        %v8553 = vpop.f32.mrf.mxu0
        %v8554 = vadd.f32 0.0, %v8553
        %v8555 = vpop.f32.mrf.mxu0
        %v8556 = vpop.f32.mrf.mxu0
        %8557 = vdwg.mxu0
        %8558 = vmatprep.subr.bf16.mxu0 0
        %8559 = vmatpush1.bf16.msra.mxu0 0
        %8560 = vmatprep.subr.bf16.mxu0 0
        %8561 = vmatpush1.bf16.msra.mxu0 0
        %8562 = vmatprep.subr.bf16.mxu0 0
        %8563 = vmatpush1.bf16.msra.mxu0 0
        %8564 = vmatprep.subr.bf16.mxu0 0
        %8565 = vmatpush1.bf16.msra.mxu0 0
        %8566 = vmatprep.subr.bf16.mxu0 0
        %8567 = vmatpush1.bf16.msra.mxu0 0
        %8568 = vmatprep.subr.bf16.mxu0 0
        %8569 = vmatpush1.bf16.msra.mxu0 0
        %8570 = vmatprep.subr.bf16.mxu0 %v8104
        %8571 = vmatpush1.bf16.msra.mxu0 %v8103
        %8572 = vmatprep.subr.bf16.mxu0 %v8095
        %8573 = vmatpush1.bf16.msra.mxu0 %v8094
        %8574 = vmatprep.subr.bf16.mxu0 0
        %8575 = vmatpush2.bf16.msra.mxu0 0
        %8576 = vmatprep.subr.bf16.mxu0 0
        %8577 = vmatpush2.bf16.msra.mxu0 0
        %8578 = vmatprep.subr.bf16.mxu0 0
        %8579 = vmatpush2.bf16.msra.mxu0 0
        %8580 = vmatprep.subr.bf16.mxu0 0
        %8581 = vmatpush2.bf16.msra.mxu0 0
        %8582 = vmatprep.subr.bf16.mxu0 0
        %8583 = vmatpush2.bf16.msra.mxu0 0
        %8584 = vmatprep.subr.bf16.mxu0 0
        %8585 = vmatpush2.bf16.msra.mxu0 0
        %8586 = vmatprep.subr.bf16.mxu0 0
        %8587 = vmatpush2.bf16.msra.mxu0 0
        %8588 = vmatprep.subr.bf16.mxu0 0
        %8589 = vmatpush2.bf16.msra.mxu0 0
        %8590 = vmatprep.mubr.bf16.mxu0 0
        %8591 = vmatmul.mubr.bf16.gmra.mxu0 %v8269
        %v8592 = vpop.f32.mrf.mxu0
        %v8593 = vadd.f32 %v8552, %v8592
        %v8594 = vpop.f32.mrf.mxu0
        %v8595 = vadd.f32 %v8554, %v8594
        %v8596 = vpop.f32.mrf.mxu0
        %v8597 = vpop.f32.mrf.mxu0
        %8598 = vdwg.mxu0
        %8599 = vmatprep.subr.bf16.mxu0 0
        %8600 = vmatpush1.bf16.msra.mxu0 %v8015
        %8601 = vmatprep.subr.bf16.mxu0 0
        %8602 = vmatpush1.bf16.msra.mxu0 %v8006
        %8603 = vmatprep.subr.bf16.mxu0 0
        %8604 = vmatpush1.bf16.msra.mxu0 %v7997
        %8605 = vmatprep.subr.bf16.mxu0 0
        %8606 = vmatpush1.bf16.msra.mxu0 %v7988
        %8607 = vmatprep.subr.bf16.mxu0 0
        %8608 = vmatpush1.bf16.msra.mxu0 %v7979
        %8609 = vmatprep.subr.bf16.mxu0 0
        %8610 = vmatpush1.bf16.msra.mxu0 %v7970
        %8611 = vmatprep.subr.bf16.mxu0 0
        %8612 = vmatpush1.bf16.msra.mxu0 %v7961
        %8613 = vmatprep.subr.bf16.mxu0 0
        %8614 = vmatpush1.bf16.msra.mxu0 %v7952
        %8615 = vmatprep.subr.bf16.mxu0 0
        %8616 = vmatpush2.bf16.msra.mxu0 %v8087
        %8617 = vmatprep.subr.bf16.mxu0 0
        %8618 = vmatpush2.bf16.msra.mxu0 %v8078
        %8619 = vmatprep.subr.bf16.mxu0 0
        %8620 = vmatpush2.bf16.msra.mxu0 %v8069
        %8621 = vmatprep.subr.bf16.mxu0 0
        %8622 = vmatpush2.bf16.msra.mxu0 %v8060
        %8623 = vmatprep.subr.bf16.mxu0 0
        %8624 = vmatpush2.bf16.msra.mxu0 %v8051
        %8625 = vmatprep.subr.bf16.mxu0 0
        %8626 = vmatpush2.bf16.msra.mxu0 %v8042
        %8627 = vmatprep.subr.bf16.mxu0 0
        %8628 = vmatpush2.bf16.msra.mxu0 %v8033
        %8629 = vmatprep.subr.bf16.mxu0 0
        %8630 = vmatpush2.bf16.msra.mxu0 %v8024
        %8631 = vmatprep.mubr.bf16.mxu0 %v7585
        %8632 = vmatmul.mubr.bf16.gmra.mxu0 %v7577
        %v8633 = vpop.f32.mrf.mxu0
        %v8634 = vadd.f32 0.0, %v8633
        %v8635 = vpop.f32.mrf.mxu0
        %v8636 = vpop.f32.mrf.mxu0
        %v8637 = vpop.f32.mrf.mxu0
        %8638 = vdwg.mxu0
        %8639 = vmatprep.subr.bf16.mxu0 0
        %8640 = vmatpush1.bf16.msra.mxu0 0
        %8641 = vmatprep.subr.bf16.mxu0 0
        %8642 = vmatpush1.bf16.msra.mxu0 0
        %8643 = vmatprep.subr.bf16.mxu0 0
        %8644 = vmatpush1.bf16.msra.mxu0 0
        %8645 = vmatprep.subr.bf16.mxu0 0
        %8646 = vmatpush1.bf16.msra.mxu0 0
        %8647 = vmatprep.subr.bf16.mxu0 0
        %8648 = vmatpush1.bf16.msra.mxu0 0
        %8649 = vmatprep.subr.bf16.mxu0 0
        %8650 = vmatpush1.bf16.msra.mxu0 0
        %8651 = vmatprep.subr.bf16.mxu0 0
        %8652 = vmatpush1.bf16.msra.mxu0 %v8105
        %8653 = vmatprep.subr.bf16.mxu0 0
        %8654 = vmatpush1.bf16.msra.mxu0 %v8096
        %8655 = vmatprep.subr.bf16.mxu0 0
        %8656 = vmatpush2.bf16.msra.mxu0 0
        %8657 = vmatprep.subr.bf16.mxu0 0
        %8658 = vmatpush2.bf16.msra.mxu0 0
        %8659 = vmatprep.subr.bf16.mxu0 0
        %8660 = vmatpush2.bf16.msra.mxu0 0
        %8661 = vmatprep.subr.bf16.mxu0 0
        %8662 = vmatpush2.bf16.msra.mxu0 0
        %8663 = vmatprep.subr.bf16.mxu0 0
        %8664 = vmatpush2.bf16.msra.mxu0 0
        %8665 = vmatprep.subr.bf16.mxu0 0
        %8666 = vmatpush2.bf16.msra.mxu0 0
        %8667 = vmatprep.subr.bf16.mxu0 0
        %8668 = vmatpush2.bf16.msra.mxu0 0
        %8669 = vmatprep.subr.bf16.mxu0 0
        %8670 = vmatpush2.bf16.msra.mxu0 0
        %8671 = vmatprep.mubr.bf16.mxu0 0
        %8672 = vmatmul.mubr.bf16.gmra.mxu0 %v8269
        %v8673 = vpop.f32.mrf.mxu0
        %v8674 = vadd.f32 %v8634, %v8673
        %v8675 = vpop.f32.mrf.mxu0
        %v8676 = vpop.f32.mrf.mxu0
        %v8677 = vpop.f32.mrf.mxu0
        %8678 = vdwg.mxu0
        %v8679 = vld [vmem:[%s13] sm:$0x7]
        %8681 = vset.pattern.permute.xlu0 0
        %8682 = vperm.xlu0 %8681, %v8679
        %v8683 = vpop.permute.xlu0 %8682
        %v8685 = vmul.f32 %v8347, %v8683
        %v8686 = vmul.f32 %v8349, %v8683
        %v8687 = vmul.f32 %v8429, %v8683
        %v8688 = vmul.f32 %v8431, %v8683
        %v8689 = vmul.f32 %v8511, %v8683
        %v8690 = vmul.f32 %v8513, %v8683
        %v8691 = vmul.f32 %v8593, %v8683
        %v8692 = vmul.f32 %v8595, %v8683
        %v8693 = vmul.f32 %v8674, %v8683
        %v8694 = vld [vmem:[%s14] sm:$0x7]
        %8696 = vset.pattern.permute.xlu0 0
        %8697 = vperm.xlu0 %8696, %v8694
        %v8698 = vpop.permute.xlu0 %8697
        %v8700 = vadd.f32 %v8685, %v8698
        %v8701 = vadd.f32 %v8686, %v8698
        %v8702 = vadd.f32 %v8687, %v8698
        %v8703 = vadd.f32 %v8688, %v8698
        %v8704 = vadd.f32 %v8689, %v8698
        %v8705 = vadd.f32 %v8690, %v8698
        %v8706 = vadd.f32 %v8691, %v8698
        %v8707 = vadd.f32 %v8692, %v8698
        %v8708 = vadd.f32 %v8693, %v8698
        %v8717 = vcombine.low %v8700, %v8701
        %v8718 = vcombine.low %v8702, %v8703
        %v8719 = vcombine.low %v8704, %v8705
        %v8720 = vcombine.low %v8706, %v8707
        %8725 = vst [vmem:[%s509] sm:$0x77] %v8717
        %8726 = vst [vmem:[%s509 + $0x8] sm:$0x77] %v8718
        %8727 = vst [vmem:[%s509 + $0x10] sm:$0x77] %v8719
        %8728 = vst [vmem:[%s509 + $0x18] sm:$0x77] %v8720
        %vm8729 = vcmask 518144
        %8730 = vst.msk [vmem:[%s509 + $0x20] sm:$0x7] %vm8729, %v8708
        %p8731 = scmp.lt.s32.totalorder %s27, 1
        %s8732 = scalar_select %p8731, %s27, 1
        %s8733 = smul.addr %s8732, 9
        %s8734 = smul.addr %s8733, 4
        %s8735 = scalar_lea.vmem %s15, %s8734
        // Predicated region
        $region85: #{decoder_forward.1} parent=79 // pred_check
          %p8736 = pneg %p365
        $region86: #{decoder_forward.1} parent=79 // pred_check_branch
          %8738 = sbr.rel (%p8736) target = $region88
        $region87: #{decoder_forward.1} parent=79 // pred_region
          _
        $region88: #{decoder_forward.1} parent=79 // pred_fallthru
          _
      $region80: #{decoder_forward.1} parent=5 // pred_fallthru
        _
      %p8739 = scmp.le.s32.totalorder 2, %s22
      // Predicated region
      $region89: #{decoder_forward.1} parent=5 // pred_check
        %p8740 = pneg %p8739
      $region90: #{decoder_forward.1} parent=5 // pred_check_branch
        %8742 = sbr.rel (%p8740) target = $region92
      $region91: #{decoder_forward.1} parent=5 // pred_region
        %s8743 = ssub.s32 %s22, 2
        // Predicated region
        $region93: #{decoder_forward.1} parent=91 // pred_check
          %p8744 = pneg %p371
        $region94: #{decoder_forward.1} parent=91 // pred_check_branch
          %8746 = sbr.rel (%p8744) target = $region96
        $region95: #{decoder_forward.1} parent=91 // pred_region
          %p8747 = scmp.lt.s32.totalorder %s28, 1
          %s8748 = scalar_select %p8747, %s28, 1
          %s8749 = smul.addr %s8748, 9
          %s8750 = smul.addr %s8749, 4
          %s8751 = scalar_lea.vmem %s15, %s8750
        $region96: #{decoder_forward.1} parent=91 // pred_fallthru
          _
      $region92: #{decoder_forward.1} parent=5 // pred_fallthru
        _
    $region6: #{decoder_forward.1} parent=1 // loop_footer
      %s26 = sadd.s32 1, %s22
    $region7: #{decoder_forward.1} parent=1 // loop_footer_branch
      %21 = sbr.rel target = $region3
    $region8: #{decoder_forward.1} parent=1 // loop_exit
      _
    %8752 = vsyncpa [#allocation3], 1
    %s8753 = scalar_lea.sflag [#allocation3], 1
    %8754 = vsyncpa %s8753, 1

</llo_original>
